<compile_context>
chip_gen: v7x
topology: tpu7x:2x2x1
jax: 0.10.0
libtpu: 0.0.40
codegen_flags: <defaults>
</compile_context>

<pallas_src>
import functools

import jax
import jax.numpy as jnp
from jax.experimental import pallas as pl
from jax.experimental.pallas import tpu as pltpu


# ------------------------------ kernel helpers ------------------------------

def _layernorm(x, gamma, beta, eps=1e-5):
    mu = jnp.mean(x, axis=-1, keepdims=True)
    var = jnp.mean(jnp.square(x - mu), axis=-1, keepdims=True)
    return (x - mu) * jax.lax.rsqrt(var + eps) * gamma + beta


def _mm(x, w):
    # MXU matmul: bf16 operands, f32 accumulate (w is stored bf16).
    return jnp.dot(x.astype(jnp.bfloat16), w, preferred_element_type=jnp.float32)


# ------------------------------- fused kernel -------------------------------

def _fused_patchtst_kernel(x_ref, w_emb_ref, b_emb_ref, pos_ref,
                           wqkv_ref, wo_ref, w1_ref, b1_ref, w2_ref,
                           small_ref, w_fc_ref, b_fc_ref,
                           o_ref,
                           *, n_heads, num_patches, num_layers):
    NB = x_ref.shape[0]
    d = w_emb_ref.shape[1]
    S = NB // num_patches                   # attention sequence length (= B)
    hd = d // n_heads
    scale = 1.0 / (float(hd) ** 0.5)

    # ---- patch embedding + positional encoding (broadcast pos over batch) --
    emb = _mm(x_ref[...], w_emb_ref[...]) + b_emb_ref[...]          # (NB, d)
    pos = pos_ref[...]                                              # (N, d)
    xf = (emb.reshape(num_patches, S, d) + pos[:, None, :]).reshape(NB, d)

    # ---- unrolled encoder layers (all weights resident in VMEM) -----------
    for l in range(num_layers):
        sp = small_ref[l]                         # (9, d): packed tiny params
        # rows: 0-2 qkv bias (q,k,v), 3 out-proj bias, 4 ln1_g, 5 ln1_b,
        #       6 ffn bias2, 7 ln2_g, 8 ln2_b

        # Fused QKV projection across heads: one (NB, d) @ (d, 3d) matmul.
        qkv = _mm(xf, wqkv_ref[l])                                  # (NB, 3d)
        q = qkv[:, 0:d] + sp[0:1]
        k = qkv[:, d:2 * d] + sp[1:2]
        v = qkv[:, 2 * d:3 * d] + sp[2:3]

        # Per-head score/softmax (hd=16 contraction is inherently per-head);
        # attention runs over the original batch axis (batch_first=False).
        # Head outputs are concatenated in registers (no VMEM scratch, no
        # masked partial stores).
        heads = []
        for hh in range(n_heads):
            sl = slice(hh * hd, (hh + 1) * hd)
            qh = q[:, sl].reshape(num_patches, S, hd)
            kh = k[:, sl].reshape(num_patches, S, hd)
            vh = v[:, sl].reshape(num_patches, S, hd)
            s = jnp.einsum('bqc,bkc->bqk', qh, kh,
                           preferred_element_type=jnp.float32) * scale
            m = jnp.max(s, axis=-1, keepdims=True)
            e = jnp.exp(s - m)
            p = e * pl.reciprocal(jnp.sum(e, axis=-1, keepdims=True),
                                  approx=True)
            oh = jnp.einsum('bqk,bkc->bqc', p, vh,
                            preferred_element_type=jnp.float32)
            heads.append(oh.reshape(NB, hd))
        attn = jnp.concatenate(heads, axis=-1)                      # (NB, d)

        # Fused output projection across heads: one (NB, d) @ (d, d) matmul.
        attn = _mm(attn, wo_ref[l]) + sp[3:4]

        # Post-norm residual blocks (norm_first=False, relu FFN). f32 VPU math.
        h1 = _layernorm(xf + attn, sp[4:5], sp[5:6])
        f = jnp.maximum(_mm(h1, w1_ref[l]) + b1_ref[l], 0.0)
        f = _mm(f, w2_ref[l]) + sp[6:7]
        xf = _layernorm(h1 + f, sp[7:8], sp[8:9])

    # ---- mean over patches + classifier head (lane-dense 128-wide output) --
    pooled = jnp.mean(xf.reshape(num_patches, S, d), axis=0)        # (B, d)
    o_ref[...] = _mm(pooled, w_fc_ref[...]) + b_fc_ref[...]         # (B, Cpad)


# --------------------------- parameters & forward ---------------------------

def init_params(key, input_dim, patch_size, d_model, n_heads, num_layers,
                num_classes, dim_ff, classes_pad=128):
    keys = jax.random.split(key, 8)

    def nrm(k, shape, scale=0.05):
        return (scale * jax.random.normal(k, shape)).astype(jnp.float32)

    c_pad = max(classes_pad, num_classes)
    w_fc = jnp.zeros((d_model, c_pad), jnp.float32)
    w_fc = w_fc.at[:, :num_classes].set(nrm(keys[2], (d_model, num_classes)))

    # Packed tiny per-layer params: (L, 9, d_model)
    #   rows 0-2: qkv bias (q,k,v) = 0 ; row 3: out-proj bias = 0
    #   row 4: ln1_gamma = 1 ; row 5: ln1_beta = 0
    #   row 6: ffn bias2 = 0 ; row 7: ln2_gamma = 1 ; row 8: ln2_beta = 0
    small = jnp.zeros((num_layers, 9, d_model), jnp.float32)
    small = small.at[:, 4, :].set(1.0)
    small = small.at[:, 7, :].set(1.0)

    return {
        # matmul weights stored bf16; biases / norms / pos table stay f32
        'w_emb': nrm(keys[0], (patch_size * input_dim, d_model)).astype(jnp.bfloat16),
        'b_emb': jnp.zeros((1, d_model), jnp.float32),
        'pos': nrm(keys[1], (500, d_model), scale=0.1),
        'w_fc': w_fc.astype(jnp.bfloat16),                     # lane-dense pad
        'b_fc': jnp.zeros((1, c_pad), jnp.float32),
        # per-layer weights stacked on a leading layer axis
        'wqkv': nrm(keys[3], (num_layers, d_model, 3 * d_model)).astype(jnp.bfloat16),
        'wo': nrm(keys[4], (num_layers, d_model, d_model)).astype(jnp.bfloat16),
        'w1': nrm(keys[5], (num_layers, d_model, dim_ff)).astype(jnp.bfloat16),
        'b1': jnp.zeros((num_layers, 1, dim_ff), jnp.float32),
        'w2': nrm(keys[6], (num_layers, dim_ff, d_model)).astype(jnp.bfloat16),
        'small': small,
    }


def patchtst_forward(params, x, *, patch_size, n_heads, num_classes):
    B, T, D = x.shape
    N = T // patch_size
    NB = N * B
    PD = patch_size * D
    d_model = params['w_emb'].shape[1]
    dim_ff = params['w1'].shape[2]
    L = params['wqkv'].shape[0]
    c_pad = params['w_fc'].shape[1]
    hd = d_model // n_heads

    # Patching (plain-JAX glue, same semantics as torch .view), then patch-major
    # flat layout (N*B, P*D): attention batch (patch) is the slow axis.
    xp = x[:, :N * patch_size, :].reshape(B, N, PD)
    x_flat = jnp.transpose(xp, (1, 0, 2)).reshape(NB, PD)
    pos_n = params['pos'][:N, :]                               # (N, d_model)

    kernel = functools.partial(_fused_patchtst_kernel,
                               n_heads=n_heads, num_patches=N, num_layers=L)

    kernel_args = (x_flat, params['w_emb'], params['b_emb'], pos_n,
                   params['wqkv'], params['wo'],
                   params['w1'], params['b1'], params['w2'],
                   params['small'],
                   params['w_fc'], params['b_fc'])

    # Advisory cost estimate so XLA schedules this tiny custom call sensibly.
    flops = 2 * NB * PD * d_model
    flops += L * (2 * NB * d_model * 3 * d_model        # fused QKV
                  + 4 * N * n_heads * B * B * hd         # scores + p@v
                  + 2 * NB * d_model * d_model           # out proj
                  + 4 * NB * d_model * dim_ff)           # FFN
    flops += 2 * B * d_model * c_pad
    transcendentals = L * (n_heads * N * B * B + 3 * NB)
    bytes_accessed = sum(int(a.size) * a.dtype.itemsize for a in kernel_args)
    bytes_accessed += B * c_pad * 4

    out = pl.pallas_call(
        kernel,
        out_shape=jax.ShapeDtypeStruct((B, c_pad), jnp.float32),
        compiler_params=pltpu.CompilerParams(
            vmem_limit_bytes=32 * 1024 * 1024),
        cost_estimate=pl.CostEstimate(flops=flops,
                                      transcendentals=transcendentals,
                                      bytes_accessed=bytes_accessed),
    )(*kernel_args)

    return out[:, :num_classes]


# ----------------------------------- main ------------------------------------

if __name__ == "__main__":
    B, T, D = 2, 25, 4          # batch, time steps, input_dim
    patch_size = 10             # -> num_patches = 2
    d_model = 64
    n_heads = 4
    num_layers = 3
    num_classes = 5
    dim_ff = 2048               # PyTorch TransformerEncoderLayer default

    key = jax.random.PRNGKey(0)
    kx, kp = jax.random.split(key)
    x = jax.random.normal(kx, (B, T, D), dtype=jnp.float32)
    params = init_params(kp, D, patch_size, d_model, n_heads, num_layers,
                         num_classes, dim_ff)

    fwd = jax.jit(functools.partial(patchtst_forward,
                                    patch_size=patch_size,
                                    n_heads=n_heads,
                                    num_classes=num_classes))
    out = fwd(params, x)
    out = jax.block_until_ready(out)

    assert out.shape == (B, num_classes), out.shape
    assert bool(jnp.all(jnp.isfinite(out)))
    print("KERNEL_OK")
</pallas_src>

<mosaic_0001>
module attributes {stable_mosaic.version = 11 : i64} {
  func.func @_fused_patchtst_kernel(%arg0: memref<4x40xf32, #tpu.memory_space<vmem>>, %arg1: memref<40x64xbf16, #tpu.memory_space<vmem>>, %arg2: memref<1x64xf32, #tpu.memory_space<vmem>>, %arg3: memref<2x64xf32, #tpu.memory_space<vmem>>, %arg4: memref<3x64x192xbf16, #tpu.memory_space<vmem>>, %arg5: memref<3x64x64xbf16, #tpu.memory_space<vmem>>, %arg6: memref<3x64x2048xbf16, #tpu.memory_space<vmem>>, %arg7: memref<3x1x2048xf32, #tpu.memory_space<vmem>>, %arg8: memref<3x2048x64xbf16, #tpu.memory_space<vmem>>, %arg9: memref<3x9x64xf32, #tpu.memory_space<vmem>>, %arg10: memref<64x128xbf16, #tpu.memory_space<vmem>>, %arg11: memref<1x128xf32, #tpu.memory_space<vmem>>, %arg12: memref<2x128xf32, #tpu.memory_space<vmem>>) attributes {dimension_semantics = [], scalar_prefetch = 0 : i64, scratch_operands = 0 : i64, tpu.core_type = #tpu.core_type<tc>} {
    %c0 = arith.constant 0 : index
    %c0_0 = arith.constant 0 : index
    %0 = vector.load %arg0[%c0, %c0_0] : memref<4x40xf32, #tpu.memory_space<vmem>>, vector<4x40xf32>
    %c0_1 = arith.constant 0 : index
    %c0_2 = arith.constant 0 : index
    %1 = vector.load %arg1[%c0_1, %c0_2] : memref<40x64xbf16, #tpu.memory_space<vmem>>, vector<40x64xbf16>
    %2 = arith.truncf %0 : vector<4x40xf32> to vector<4x40xbf16>
    %cst = arith.constant dense<0.000000e+00> : vector<4x64xf32>
    %3 = tpu.matmul %2, %1, %cst {dimension_numbers = #tpu.dot_dimension_numbers<[1], [0], [0], [1], [0, 0, 1, 1], [], []>} : vector<4x40xbf16>, vector<40x64xbf16>, vector<4x64xf32> -> vector<4x64xf32>
    %c0_3 = arith.constant 0 : index
    %c0_4 = arith.constant 0 : index
    %4 = vector.load %arg2[%c0_3, %c0_4] : memref<1x64xf32, #tpu.memory_space<vmem>>, vector<1x64xf32>
    %5 = vector.broadcast %4 : vector<1x64xf32> to vector<4x64xf32>
    %6 = arith.addf %3, %5 : vector<4x64xf32>
    %c0_5 = arith.constant 0 : index
    %c0_6 = arith.constant 0 : index
    %7 = vector.load %arg3[%c0_5, %c0_6] : memref<2x64xf32, #tpu.memory_space<vmem>>, vector<2x64xf32>
    %8 = vector.shape_cast %6 : vector<4x64xf32> to vector<2x2x64xf32>
    %9 = vector.shape_cast %7 : vector<2x64xf32> to vector<2x1x64xf32>
    %10 = vector.broadcast %9 : vector<2x1x64xf32> to vector<2x2x64xf32>
    %11 = arith.addf %8, %10 : vector<2x2x64xf32>
    %12 = vector.shape_cast %11 : vector<2x2x64xf32> to vector<4x64xf32>
    %c0_7 = arith.constant 0 : index
    %c0_8 = arith.constant 0 : index
    %c0_9 = arith.constant 0 : index
    %13 = vector.load %arg9[%c0_7, %c0_8, %c0_9] : memref<3x9x64xf32, #tpu.memory_space<vmem>>, vector<1x9x64xf32>
    %14 = vector.shape_cast %13 : vector<1x9x64xf32> to vector<9x64xf32>
    %c0_10 = arith.constant 0 : index
    %c0_11 = arith.constant 0 : index
    %c0_12 = arith.constant 0 : index
    %15 = vector.load %arg4[%c0_10, %c0_11, %c0_12] : memref<3x64x192xbf16, #tpu.memory_space<vmem>>, vector<1x64x192xbf16>
    %16 = vector.shape_cast %15 : vector<1x64x192xbf16> to vector<64x192xbf16>
    %17 = arith.truncf %12 : vector<4x64xf32> to vector<4x64xbf16>
    %cst_13 = arith.constant dense<0.000000e+00> : vector<4x192xf32>
    %18 = tpu.matmul %17, %16, %cst_13 {dimension_numbers = #tpu.dot_dimension_numbers<[1], [0], [0], [1], [0, 0, 1, 1], [], []>} : vector<4x64xbf16>, vector<64x192xbf16>, vector<4x192xf32> -> vector<4x192xf32>
    %19 = vector.extract_strided_slice %18 {offsets = [0, 0], sizes = [4, 64], strides = [1, 1]} : vector<4x192xf32> to vector<4x64xf32>
    %20 = vector.extract_strided_slice %14 {offsets = [0, 0], sizes = [1, 64], strides = [1, 1]} : vector<9x64xf32> to vector<1x64xf32>
    %21 = vector.broadcast %20 : vector<1x64xf32> to vector<4x64xf32>
    %22 = arith.addf %19, %21 : vector<4x64xf32>
    %23 = vector.extract_strided_slice %18 {offsets = [0, 64], sizes = [4, 64], strides = [1, 1]} : vector<4x192xf32> to vector<4x64xf32>
    %24 = vector.extract_strided_slice %14 {offsets = [1, 0], sizes = [1, 64], strides = [1, 1]} : vector<9x64xf32> to vector<1x64xf32>
    %25 = vector.broadcast %24 : vector<1x64xf32> to vector<4x64xf32>
    %26 = arith.addf %23, %25 : vector<4x64xf32>
    %27 = vector.extract_strided_slice %18 {offsets = [0, 128], sizes = [4, 64], strides = [1, 1]} : vector<4x192xf32> to vector<4x64xf32>
    %28 = vector.extract_strided_slice %14 {offsets = [2, 0], sizes = [1, 64], strides = [1, 1]} : vector<9x64xf32> to vector<1x64xf32>
    %29 = vector.broadcast %28 : vector<1x64xf32> to vector<4x64xf32>
    %30 = arith.addf %27, %29 : vector<4x64xf32>
    %31 = vector.extract_strided_slice %22 {offsets = [0, 0], sizes = [4, 16], strides = [1, 1]} : vector<4x64xf32> to vector<4x16xf32>
    %32 = vector.shape_cast %31 : vector<4x16xf32> to vector<2x2x16xf32>
    %33 = vector.extract_strided_slice %26 {offsets = [0, 0], sizes = [4, 16], strides = [1, 1]} : vector<4x64xf32> to vector<4x16xf32>
    %34 = vector.shape_cast %33 : vector<4x16xf32> to vector<2x2x16xf32>
    %35 = vector.extract_strided_slice %30 {offsets = [0, 0], sizes = [4, 16], strides = [1, 1]} : vector<4x64xf32> to vector<4x16xf32>
    %36 = vector.shape_cast %35 : vector<4x16xf32> to vector<2x2x16xf32>
    "tpu.trace_start"() <{level = 10 : i32, message = "bqc,bkc->bqk"}> : () -> ()
    %cst_14 = arith.constant dense<0.000000e+00> : vector<2x2x2xf32>
    %37 = tpu.matmul %32, %34, %cst_14 {dimension_numbers = #tpu.dot_dimension_numbers<[2], [2], [1], [1], [0, 0, 0, 1, 1, 1], [0], [0]>} : vector<2x2x16xf32>, vector<2x2x16xf32>, vector<2x2x2xf32> -> vector<2x2x2xf32>
    "tpu.trace_stop"() : () -> ()
    %cst_15 = arith.constant 2.500000e-01 : f32
    %38 = vector.broadcast %cst_15 : f32 to vector<2x2x2xf32>
    %39 = arith.mulf %37, %38 : vector<2x2x2xf32>
    %cst_16 = arith.constant dense<0xFF800000> : vector<2x2xf32>
    %40 = vector.multi_reduction <maximumf>, %39, %cst_16 [2] : vector<2x2x2xf32> to vector<2x2xf32>
    %41 = vector.shape_cast %40 : vector<2x2xf32> to vector<2x2x1xf32>
    %42 = vector.broadcast %41 : vector<2x2x1xf32> to vector<2x2x2xf32>
    %43 = arith.subf %39, %42 : vector<2x2x2xf32>
    %44 = math.exp %43 : vector<2x2x2xf32>
    %cst_17 = arith.constant dense<0.000000e+00> : vector<2x2xf32>
    %45 = vector.multi_reduction <add>, %44, %cst_17 [2] : vector<2x2x2xf32> to vector<2x2xf32>
    %46 = vector.shape_cast %45 : vector<2x2xf32> to vector<2x2x1xf32>
    %47 = tpu.reciprocal %46 {approx = true} : vector<2x2x1xf32> -> vector<2x2x1xf32>
    %48 = vector.broadcast %47 : vector<2x2x1xf32> to vector<2x2x2xf32>
    %49 = arith.mulf %44, %48 : vector<2x2x2xf32>
    "tpu.trace_start"() <{level = 10 : i32, message = "bqk,bkc->bqc"}> : () -> ()
    %cst_18 = arith.constant dense<0.000000e+00> : vector<2x2x16xf32>
    %50 = tpu.matmul %49, %36, %cst_18 {dimension_numbers = #tpu.dot_dimension_numbers<[2], [1], [1], [2], [0, 0, 0, 1, 1, 2], [0], [0]>} : vector<2x2x2xf32>, vector<2x2x16xf32>, vector<2x2x16xf32> -> vector<2x2x16xf32>
    "tpu.trace_stop"() : () -> ()
    %51 = vector.shape_cast %50 : vector<2x2x16xf32> to vector<4x16xf32>
    %52 = vector.extract_strided_slice %22 {offsets = [0, 16], sizes = [4, 16], strides = [1, 1]} : vector<4x64xf32> to vector<4x16xf32>
    %53 = vector.shape_cast %52 : vector<4x16xf32> to vector<2x2x16xf32>
    %54 = vector.extract_strided_slice %26 {offsets = [0, 16], sizes = [4, 16], strides = [1, 1]} : vector<4x64xf32> to vector<4x16xf32>
    %55 = vector.shape_cast %54 : vector<4x16xf32> to vector<2x2x16xf32>
    %56 = vector.extract_strided_slice %30 {offsets = [0, 16], sizes = [4, 16], strides = [1, 1]} : vector<4x64xf32> to vector<4x16xf32>
    %57 = vector.shape_cast %56 : vector<4x16xf32> to vector<2x2x16xf32>
    "tpu.trace_start"() <{level = 10 : i32, message = "bqc,bkc->bqk"}> : () -> ()
    %cst_19 = arith.constant dense<0.000000e+00> : vector<2x2x2xf32>
    %58 = tpu.matmul %53, %55, %cst_19 {dimension_numbers = #tpu.dot_dimension_numbers<[2], [2], [1], [1], [0, 0, 0, 1, 1, 1], [0], [0]>} : vector<2x2x16xf32>, vector<2x2x16xf32>, vector<2x2x2xf32> -> vector<2x2x2xf32>
    "tpu.trace_stop"() : () -> ()
    %cst_20 = arith.constant 2.500000e-01 : f32
    %59 = vector.broadcast %cst_20 : f32 to vector<2x2x2xf32>
    %60 = arith.mulf %58, %59 : vector<2x2x2xf32>
    %cst_21 = arith.constant dense<0xFF800000> : vector<2x2xf32>
    %61 = vector.multi_reduction <maximumf>, %60, %cst_21 [2] : vector<2x2x2xf32> to vector<2x2xf32>
    %62 = vector.shape_cast %61 : vector<2x2xf32> to vector<2x2x1xf32>
    %63 = vector.broadcast %62 : vector<2x2x1xf32> to vector<2x2x2xf32>
    %64 = arith.subf %60, %63 : vector<2x2x2xf32>
    %65 = math.exp %64 : vector<2x2x2xf32>
    %cst_22 = arith.constant dense<0.000000e+00> : vector<2x2xf32>
    %66 = vector.multi_reduction <add>, %65, %cst_22 [2] : vector<2x2x2xf32> to vector<2x2xf32>
    %67 = vector.shape_cast %66 : vector<2x2xf32> to vector<2x2x1xf32>
    %68 = tpu.reciprocal %67 {approx = true} : vector<2x2x1xf32> -> vector<2x2x1xf32>
    %69 = vector.broadcast %68 : vector<2x2x1xf32> to vector<2x2x2xf32>
    %70 = arith.mulf %65, %69 : vector<2x2x2xf32>
    "tpu.trace_start"() <{level = 10 : i32, message = "bqk,bkc->bqc"}> : () -> ()
    %cst_23 = arith.constant dense<0.000000e+00> : vector<2x2x16xf32>
    %71 = tpu.matmul %70, %57, %cst_23 {dimension_numbers = #tpu.dot_dimension_numbers<[2], [1], [1], [2], [0, 0, 0, 1, 1, 2], [0], [0]>} : vector<2x2x2xf32>, vector<2x2x16xf32>, vector<2x2x16xf32> -> vector<2x2x16xf32>
    "tpu.trace_stop"() : () -> ()
    %72 = vector.shape_cast %71 : vector<2x2x16xf32> to vector<4x16xf32>
    %73 = vector.extract_strided_slice %22 {offsets = [0, 32], sizes = [4, 16], strides = [1, 1]} : vector<4x64xf32> to vector<4x16xf32>
    %74 = vector.shape_cast %73 : vector<4x16xf32> to vector<2x2x16xf32>
    %75 = vector.extract_strided_slice %26 {offsets = [0, 32], sizes = [4, 16], strides = [1, 1]} : vector<4x64xf32> to vector<4x16xf32>
    %76 = vector.shape_cast %75 : vector<4x16xf32> to vector<2x2x16xf32>
    %77 = vector.extract_strided_slice %30 {offsets = [0, 32], sizes = [4, 16], strides = [1, 1]} : vector<4x64xf32> to vector<4x16xf32>
    %78 = vector.shape_cast %77 : vector<4x16xf32> to vector<2x2x16xf32>
    "tpu.trace_start"() <{level = 10 : i32, message = "bqc,bkc->bqk"}> : () -> ()
    %cst_24 = arith.constant dense<0.000000e+00> : vector<2x2x2xf32>
    %79 = tpu.matmul %74, %76, %cst_24 {dimension_numbers = #tpu.dot_dimension_numbers<[2], [2], [1], [1], [0, 0, 0, 1, 1, 1], [0], [0]>} : vector<2x2x16xf32>, vector<2x2x16xf32>, vector<2x2x2xf32> -> vector<2x2x2xf32>
    "tpu.trace_stop"() : () -> ()
    %cst_25 = arith.constant 2.500000e-01 : f32
    %80 = vector.broadcast %cst_25 : f32 to vector<2x2x2xf32>
    %81 = arith.mulf %79, %80 : vector<2x2x2xf32>
    %cst_26 = arith.constant dense<0xFF800000> : vector<2x2xf32>
    %82 = vector.multi_reduction <maximumf>, %81, %cst_26 [2] : vector<2x2x2xf32> to vector<2x2xf32>
    %83 = vector.shape_cast %82 : vector<2x2xf32> to vector<2x2x1xf32>
    %84 = vector.broadcast %83 : vector<2x2x1xf32> to vector<2x2x2xf32>
    %85 = arith.subf %81, %84 : vector<2x2x2xf32>
    %86 = math.exp %85 : vector<2x2x2xf32>
    %cst_27 = arith.constant dense<0.000000e+00> : vector<2x2xf32>
    %87 = vector.multi_reduction <add>, %86, %cst_27 [2] : vector<2x2x2xf32> to vector<2x2xf32>
    %88 = vector.shape_cast %87 : vector<2x2xf32> to vector<2x2x1xf32>
    %89 = tpu.reciprocal %88 {approx = true} : vector<2x2x1xf32> -> vector<2x2x1xf32>
    %90 = vector.broadcast %89 : vector<2x2x1xf32> to vector<2x2x2xf32>
    %91 = arith.mulf %86, %90 : vector<2x2x2xf32>
    "tpu.trace_start"() <{level = 10 : i32, message = "bqk,bkc->bqc"}> : () -> ()
    %cst_28 = arith.constant dense<0.000000e+00> : vector<2x2x16xf32>
    %92 = tpu.matmul %91, %78, %cst_28 {dimension_numbers = #tpu.dot_dimension_numbers<[2], [1], [1], [2], [0, 0, 0, 1, 1, 2], [0], [0]>} : vector<2x2x2xf32>, vector<2x2x16xf32>, vector<2x2x16xf32> -> vector<2x2x16xf32>
    "tpu.trace_stop"() : () -> ()
    %93 = vector.shape_cast %92 : vector<2x2x16xf32> to vector<4x16xf32>
    %94 = vector.extract_strided_slice %22 {offsets = [0, 48], sizes = [4, 16], strides = [1, 1]} : vector<4x64xf32> to vector<4x16xf32>
    %95 = vector.shape_cast %94 : vector<4x16xf32> to vector<2x2x16xf32>
    %96 = vector.extract_strided_slice %26 {offsets = [0, 48], sizes = [4, 16], strides = [1, 1]} : vector<4x64xf32> to vector<4x16xf32>
    %97 = vector.shape_cast %96 : vector<4x16xf32> to vector<2x2x16xf32>
    %98 = vector.extract_strided_slice %30 {offsets = [0, 48], sizes = [4, 16], strides = [1, 1]} : vector<4x64xf32> to vector<4x16xf32>
    %99 = vector.shape_cast %98 : vector<4x16xf32> to vector<2x2x16xf32>
    "tpu.trace_start"() <{level = 10 : i32, message = "bqc,bkc->bqk"}> : () -> ()
    %cst_29 = arith.constant dense<0.000000e+00> : vector<2x2x2xf32>
    %100 = tpu.matmul %95, %97, %cst_29 {dimension_numbers = #tpu.dot_dimension_numbers<[2], [2], [1], [1], [0, 0, 0, 1, 1, 1], [0], [0]>} : vector<2x2x16xf32>, vector<2x2x16xf32>, vector<2x2x2xf32> -> vector<2x2x2xf32>
    "tpu.trace_stop"() : () -> ()
    %cst_30 = arith.constant 2.500000e-01 : f32
    %101 = vector.broadcast %cst_30 : f32 to vector<2x2x2xf32>
    %102 = arith.mulf %100, %101 : vector<2x2x2xf32>
    %cst_31 = arith.constant dense<0xFF800000> : vector<2x2xf32>
    %103 = vector.multi_reduction <maximumf>, %102, %cst_31 [2] : vector<2x2x2xf32> to vector<2x2xf32>
    %104 = vector.shape_cast %103 : vector<2x2xf32> to vector<2x2x1xf32>
    %105 = vector.broadcast %104 : vector<2x2x1xf32> to vector<2x2x2xf32>
    %106 = arith.subf %102, %105 : vector<2x2x2xf32>
    %107 = math.exp %106 : vector<2x2x2xf32>
    %cst_32 = arith.constant dense<0.000000e+00> : vector<2x2xf32>
    %108 = vector.multi_reduction <add>, %107, %cst_32 [2] : vector<2x2x2xf32> to vector<2x2xf32>
    %109 = vector.shape_cast %108 : vector<2x2xf32> to vector<2x2x1xf32>
    %110 = tpu.reciprocal %109 {approx = true} : vector<2x2x1xf32> -> vector<2x2x1xf32>
    %111 = vector.broadcast %110 : vector<2x2x1xf32> to vector<2x2x2xf32>
    %112 = arith.mulf %107, %111 : vector<2x2x2xf32>
    "tpu.trace_start"() <{level = 10 : i32, message = "bqk,bkc->bqc"}> : () -> ()
    %cst_33 = arith.constant dense<0.000000e+00> : vector<2x2x16xf32>
    %113 = tpu.matmul %112, %99, %cst_33 {dimension_numbers = #tpu.dot_dimension_numbers<[2], [1], [1], [2], [0, 0, 0, 1, 1, 2], [0], [0]>} : vector<2x2x2xf32>, vector<2x2x16xf32>, vector<2x2x16xf32> -> vector<2x2x16xf32>
    "tpu.trace_stop"() : () -> ()
    %114 = vector.shape_cast %113 : vector<2x2x16xf32> to vector<4x16xf32>
    %115 = tpu.concatenate %51, %72, %93, %114 in 1 : vector<4x16xf32>, vector<4x16xf32>, vector<4x16xf32>, vector<4x16xf32> -> vector<4x64xf32>
    %c0_34 = arith.constant 0 : index
    %c0_35 = arith.constant 0 : index
    %c0_36 = arith.constant 0 : index
    %116 = vector.load %arg5[%c0_34, %c0_35, %c0_36] : memref<3x64x64xbf16, #tpu.memory_space<vmem>>, vector<1x64x64xbf16>
    %117 = vector.shape_cast %116 : vector<1x64x64xbf16> to vector<64x64xbf16>
    %118 = arith.truncf %115 : vector<4x64xf32> to vector<4x64xbf16>
    %cst_37 = arith.constant dense<0.000000e+00> : vector<4x64xf32>
    %119 = tpu.matmul %118, %117, %cst_37 {dimension_numbers = #tpu.dot_dimension_numbers<[1], [0], [0], [1], [0, 0, 1, 1], [], []>} : vector<4x64xbf16>, vector<64x64xbf16>, vector<4x64xf32> -> vector<4x64xf32>
    %120 = vector.extract_strided_slice %14 {offsets = [3, 0], sizes = [1, 64], strides = [1, 1]} : vector<9x64xf32> to vector<1x64xf32>
    %121 = vector.broadcast %120 : vector<1x64xf32> to vector<4x64xf32>
    %122 = arith.addf %119, %121 : vector<4x64xf32>
    %123 = arith.addf %12, %122 : vector<4x64xf32>
    %124 = vector.extract_strided_slice %14 {offsets = [4, 0], sizes = [1, 64], strides = [1, 1]} : vector<9x64xf32> to vector<1x64xf32>
    %125 = vector.extract_strided_slice %14 {offsets = [5, 0], sizes = [1, 64], strides = [1, 1]} : vector<9x64xf32> to vector<1x64xf32>
    %cst_38 = arith.constant dense<0.000000e+00> : vector<4xf32>
    %126 = vector.multi_reduction <add>, %123, %cst_38 [1] : vector<4x64xf32> to vector<4xf32>
    %127 = vector.shape_cast %126 : vector<4xf32> to vector<4x1xf32>
    %cst_39 = arith.constant 6.400000e+01 : f32
    %128 = vector.broadcast %cst_39 : f32 to vector<4x1xf32>
    %129 = arith.divf %127, %128 : vector<4x1xf32>
    %130 = vector.broadcast %129 : vector<4x1xf32> to vector<4x64xf32>
    %131 = arith.subf %123, %130 : vector<4x64xf32>
    %132 = arith.mulf %131, %131 : vector<4x64xf32>
    %cst_40 = arith.constant dense<0.000000e+00> : vector<4xf32>
    %133 = vector.multi_reduction <add>, %132, %cst_40 [1] : vector<4x64xf32> to vector<4xf32>
    %134 = vector.shape_cast %133 : vector<4xf32> to vector<4x1xf32>
    %cst_41 = arith.constant 6.400000e+01 : f32
    %135 = vector.broadcast %cst_41 : f32 to vector<4x1xf32>
    %136 = arith.divf %134, %135 : vector<4x1xf32>
    %137 = vector.broadcast %129 : vector<4x1xf32> to vector<4x64xf32>
    %138 = arith.subf %123, %137 : vector<4x64xf32>
    %cst_42 = arith.constant 9.99999974E-6 : f32
    %139 = vector.broadcast %cst_42 : f32 to vector<4x1xf32>
    %140 = arith.addf %136, %139 : vector<4x1xf32>
    %141 = math.rsqrt %140 : vector<4x1xf32>
    %142 = vector.broadcast %141 : vector<4x1xf32> to vector<4x64xf32>
    %143 = arith.mulf %138, %142 : vector<4x64xf32>
    %144 = vector.broadcast %124 : vector<1x64xf32> to vector<4x64xf32>
    %145 = arith.mulf %143, %144 : vector<4x64xf32>
    %146 = vector.broadcast %125 : vector<1x64xf32> to vector<4x64xf32>
    %147 = arith.addf %145, %146 : vector<4x64xf32>
    %c0_43 = arith.constant 0 : index
    %c0_44 = arith.constant 0 : index
    %c0_45 = arith.constant 0 : index
    %148 = vector.load %arg6[%c0_43, %c0_44, %c0_45] : memref<3x64x2048xbf16, #tpu.memory_space<vmem>>, vector<1x64x2048xbf16>
    %149 = vector.shape_cast %148 : vector<1x64x2048xbf16> to vector<64x2048xbf16>
    %150 = arith.truncf %147 : vector<4x64xf32> to vector<4x64xbf16>
    %cst_46 = arith.constant dense<0.000000e+00> : vector<4x2048xf32>
    %151 = tpu.matmul %150, %149, %cst_46 {dimension_numbers = #tpu.dot_dimension_numbers<[1], [0], [0], [1], [0, 0, 1, 1], [], []>} : vector<4x64xbf16>, vector<64x2048xbf16>, vector<4x2048xf32> -> vector<4x2048xf32>
    %c0_47 = arith.constant 0 : index
    %c0_48 = arith.constant 0 : index
    %c0_49 = arith.constant 0 : index
    %152 = vector.load %arg7[%c0_47, %c0_48, %c0_49] : memref<3x1x2048xf32, #tpu.memory_space<vmem>>, vector<1x1x2048xf32>
    %153 = vector.shape_cast %152 : vector<1x1x2048xf32> to vector<1x2048xf32>
    %154 = vector.broadcast %153 : vector<1x2048xf32> to vector<4x2048xf32>
    %155 = arith.addf %151, %154 : vector<4x2048xf32>
    %cst_50 = arith.constant 0.000000e+00 : f32
    %156 = vector.broadcast %cst_50 : f32 to vector<4x2048xf32>
    %157 = arith.maximumf %155, %156 : vector<4x2048xf32>
    %c0_51 = arith.constant 0 : index
    %c0_52 = arith.constant 0 : index
    %c0_53 = arith.constant 0 : index
    %158 = vector.load %arg8[%c0_51, %c0_52, %c0_53] : memref<3x2048x64xbf16, #tpu.memory_space<vmem>>, vector<1x2048x64xbf16>
    %159 = vector.shape_cast %158 : vector<1x2048x64xbf16> to vector<2048x64xbf16>
    %160 = arith.truncf %157 : vector<4x2048xf32> to vector<4x2048xbf16>
    %cst_54 = arith.constant dense<0.000000e+00> : vector<4x64xf32>
    %161 = tpu.matmul %160, %159, %cst_54 {dimension_numbers = #tpu.dot_dimension_numbers<[1], [0], [0], [1], [0, 0, 1, 1], [], []>} : vector<4x2048xbf16>, vector<2048x64xbf16>, vector<4x64xf32> -> vector<4x64xf32>
    %162 = vector.extract_strided_slice %14 {offsets = [6, 0], sizes = [1, 64], strides = [1, 1]} : vector<9x64xf32> to vector<1x64xf32>
    %163 = vector.broadcast %162 : vector<1x64xf32> to vector<4x64xf32>
    %164 = arith.addf %161, %163 : vector<4x64xf32>
    %165 = arith.addf %147, %164 : vector<4x64xf32>
    %166 = vector.extract_strided_slice %14 {offsets = [7, 0], sizes = [1, 64], strides = [1, 1]} : vector<9x64xf32> to vector<1x64xf32>
    %167 = vector.extract_strided_slice %14 {offsets = [8, 0], sizes = [1, 64], strides = [1, 1]} : vector<9x64xf32> to vector<1x64xf32>
    %cst_55 = arith.constant dense<0.000000e+00> : vector<4xf32>
    %168 = vector.multi_reduction <add>, %165, %cst_55 [1] : vector<4x64xf32> to vector<4xf32>
    %169 = vector.shape_cast %168 : vector<4xf32> to vector<4x1xf32>
    %cst_56 = arith.constant 6.400000e+01 : f32
    %170 = vector.broadcast %cst_56 : f32 to vector<4x1xf32>
    %171 = arith.divf %169, %170 : vector<4x1xf32>
    %172 = vector.broadcast %171 : vector<4x1xf32> to vector<4x64xf32>
    %173 = arith.subf %165, %172 : vector<4x64xf32>
    %174 = arith.mulf %173, %173 : vector<4x64xf32>
    %cst_57 = arith.constant dense<0.000000e+00> : vector<4xf32>
    %175 = vector.multi_reduction <add>, %174, %cst_57 [1] : vector<4x64xf32> to vector<4xf32>
    %176 = vector.shape_cast %175 : vector<4xf32> to vector<4x1xf32>
    %cst_58 = arith.constant 6.400000e+01 : f32
    %177 = vector.broadcast %cst_58 : f32 to vector<4x1xf32>
    %178 = arith.divf %176, %177 : vector<4x1xf32>
    %179 = vector.broadcast %171 : vector<4x1xf32> to vector<4x64xf32>
    %180 = arith.subf %165, %179 : vector<4x64xf32>
    %cst_59 = arith.constant 9.99999974E-6 : f32
    %181 = vector.broadcast %cst_59 : f32 to vector<4x1xf32>
    %182 = arith.addf %178, %181 : vector<4x1xf32>
    %183 = math.rsqrt %182 : vector<4x1xf32>
    %184 = vector.broadcast %183 : vector<4x1xf32> to vector<4x64xf32>
    %185 = arith.mulf %180, %184 : vector<4x64xf32>
    %186 = vector.broadcast %166 : vector<1x64xf32> to vector<4x64xf32>
    %187 = arith.mulf %185, %186 : vector<4x64xf32>
    %188 = vector.broadcast %167 : vector<1x64xf32> to vector<4x64xf32>
    %189 = arith.addf %187, %188 : vector<4x64xf32>
    %c1 = arith.constant 1 : index
    %c0_60 = arith.constant 0 : index
    %c0_61 = arith.constant 0 : index
    %190 = vector.load %arg9[%c1, %c0_60, %c0_61] : memref<3x9x64xf32, #tpu.memory_space<vmem>>, vector<1x9x64xf32>
    %191 = vector.shape_cast %190 : vector<1x9x64xf32> to vector<9x64xf32>
    %c1_62 = arith.constant 1 : index
    %c0_63 = arith.constant 0 : index
    %c0_64 = arith.constant 0 : index
    %192 = vector.load %arg4[%c1_62, %c0_63, %c0_64] : memref<3x64x192xbf16, #tpu.memory_space<vmem>>, vector<1x64x192xbf16>
    %193 = vector.shape_cast %192 : vector<1x64x192xbf16> to vector<64x192xbf16>
    %194 = arith.truncf %189 : vector<4x64xf32> to vector<4x64xbf16>
    %cst_65 = arith.constant dense<0.000000e+00> : vector<4x192xf32>
    %195 = tpu.matmul %194, %193, %cst_65 {dimension_numbers = #tpu.dot_dimension_numbers<[1], [0], [0], [1], [0, 0, 1, 1], [], []>} : vector<4x64xbf16>, vector<64x192xbf16>, vector<4x192xf32> -> vector<4x192xf32>
    %196 = vector.extract_strided_slice %195 {offsets = [0, 0], sizes = [4, 64], strides = [1, 1]} : vector<4x192xf32> to vector<4x64xf32>
    %197 = vector.extract_strided_slice %191 {offsets = [0, 0], sizes = [1, 64], strides = [1, 1]} : vector<9x64xf32> to vector<1x64xf32>
    %198 = vector.broadcast %197 : vector<1x64xf32> to vector<4x64xf32>
    %199 = arith.addf %196, %198 : vector<4x64xf32>
    %200 = vector.extract_strided_slice %195 {offsets = [0, 64], sizes = [4, 64], strides = [1, 1]} : vector<4x192xf32> to vector<4x64xf32>
    %201 = vector.extract_strided_slice %191 {offsets = [1, 0], sizes = [1, 64], strides = [1, 1]} : vector<9x64xf32> to vector<1x64xf32>
    %202 = vector.broadcast %201 : vector<1x64xf32> to vector<4x64xf32>
    %203 = arith.addf %200, %202 : vector<4x64xf32>
    %204 = vector.extract_strided_slice %195 {offsets = [0, 128], sizes = [4, 64], strides = [1, 1]} : vector<4x192xf32> to vector<4x64xf32>
    %205 = vector.extract_strided_slice %191 {offsets = [2, 0], sizes = [1, 64], strides = [1, 1]} : vector<9x64xf32> to vector<1x64xf32>
    %206 = vector.broadcast %205 : vector<1x64xf32> to vector<4x64xf32>
    %207 = arith.addf %204, %206 : vector<4x64xf32>
    %208 = vector.extract_strided_slice %199 {offsets = [0, 0], sizes = [4, 16], strides = [1, 1]} : vector<4x64xf32> to vector<4x16xf32>
    %209 = vector.shape_cast %208 : vector<4x16xf32> to vector<2x2x16xf32>
    %210 = vector.extract_strided_slice %203 {offsets = [0, 0], sizes = [4, 16], strides = [1, 1]} : vector<4x64xf32> to vector<4x16xf32>
    %211 = vector.shape_cast %210 : vector<4x16xf32> to vector<2x2x16xf32>
    %212 = vector.extract_strided_slice %207 {offsets = [0, 0], sizes = [4, 16], strides = [1, 1]} : vector<4x64xf32> to vector<4x16xf32>
    %213 = vector.shape_cast %212 : vector<4x16xf32> to vector<2x2x16xf32>
    "tpu.trace_start"() <{level = 10 : i32, message = "bqc,bkc->bqk"}> : () -> ()
    %cst_66 = arith.constant dense<0.000000e+00> : vector<2x2x2xf32>
    %214 = tpu.matmul %209, %211, %cst_66 {dimension_numbers = #tpu.dot_dimension_numbers<[2], [2], [1], [1], [0, 0, 0, 1, 1, 1], [0], [0]>} : vector<2x2x16xf32>, vector<2x2x16xf32>, vector<2x2x2xf32> -> vector<2x2x2xf32>
    "tpu.trace_stop"() : () -> ()
    %cst_67 = arith.constant 2.500000e-01 : f32
    %215 = vector.broadcast %cst_67 : f32 to vector<2x2x2xf32>
    %216 = arith.mulf %214, %215 : vector<2x2x2xf32>
    %cst_68 = arith.constant dense<0xFF800000> : vector<2x2xf32>
    %217 = vector.multi_reduction <maximumf>, %216, %cst_68 [2] : vector<2x2x2xf32> to vector<2x2xf32>
    %218 = vector.shape_cast %217 : vector<2x2xf32> to vector<2x2x1xf32>
    %219 = vector.broadcast %218 : vector<2x2x1xf32> to vector<2x2x2xf32>
    %220 = arith.subf %216, %219 : vector<2x2x2xf32>
    %221 = math.exp %220 : vector<2x2x2xf32>
    %cst_69 = arith.constant dense<0.000000e+00> : vector<2x2xf32>
    %222 = vector.multi_reduction <add>, %221, %cst_69 [2] : vector<2x2x2xf32> to vector<2x2xf32>
    %223 = vector.shape_cast %222 : vector<2x2xf32> to vector<2x2x1xf32>
    %224 = tpu.reciprocal %223 {approx = true} : vector<2x2x1xf32> -> vector<2x2x1xf32>
    %225 = vector.broadcast %224 : vector<2x2x1xf32> to vector<2x2x2xf32>
    %226 = arith.mulf %221, %225 : vector<2x2x2xf32>
    "tpu.trace_start"() <{level = 10 : i32, message = "bqk,bkc->bqc"}> : () -> ()
    %cst_70 = arith.constant dense<0.000000e+00> : vector<2x2x16xf32>
    %227 = tpu.matmul %226, %213, %cst_70 {dimension_numbers = #tpu.dot_dimension_numbers<[2], [1], [1], [2], [0, 0, 0, 1, 1, 2], [0], [0]>} : vector<2x2x2xf32>, vector<2x2x16xf32>, vector<2x2x16xf32> -> vector<2x2x16xf32>
    "tpu.trace_stop"() : () -> ()
    %228 = vector.shape_cast %227 : vector<2x2x16xf32> to vector<4x16xf32>
    %229 = vector.extract_strided_slice %199 {offsets = [0, 16], sizes = [4, 16], strides = [1, 1]} : vector<4x64xf32> to vector<4x16xf32>
    %230 = vector.shape_cast %229 : vector<4x16xf32> to vector<2x2x16xf32>
    %231 = vector.extract_strided_slice %203 {offsets = [0, 16], sizes = [4, 16], strides = [1, 1]} : vector<4x64xf32> to vector<4x16xf32>
    %232 = vector.shape_cast %231 : vector<4x16xf32> to vector<2x2x16xf32>
    %233 = vector.extract_strided_slice %207 {offsets = [0, 16], sizes = [4, 16], strides = [1, 1]} : vector<4x64xf32> to vector<4x16xf32>
    %234 = vector.shape_cast %233 : vector<4x16xf32> to vector<2x2x16xf32>
    "tpu.trace_start"() <{level = 10 : i32, message = "bqc,bkc->bqk"}> : () -> ()
    %cst_71 = arith.constant dense<0.000000e+00> : vector<2x2x2xf32>
    %235 = tpu.matmul %230, %232, %cst_71 {dimension_numbers = #tpu.dot_dimension_numbers<[2], [2], [1], [1], [0, 0, 0, 1, 1, 1], [0], [0]>} : vector<2x2x16xf32>, vector<2x2x16xf32>, vector<2x2x2xf32> -> vector<2x2x2xf32>
    "tpu.trace_stop"() : () -> ()
    %cst_72 = arith.constant 2.500000e-01 : f32
    %236 = vector.broadcast %cst_72 : f32 to vector<2x2x2xf32>
    %237 = arith.mulf %235, %236 : vector<2x2x2xf32>
    %cst_73 = arith.constant dense<0xFF800000> : vector<2x2xf32>
    %238 = vector.multi_reduction <maximumf>, %237, %cst_73 [2] : vector<2x2x2xf32> to vector<2x2xf32>
    %239 = vector.shape_cast %238 : vector<2x2xf32> to vector<2x2x1xf32>
    %240 = vector.broadcast %239 : vector<2x2x1xf32> to vector<2x2x2xf32>
    %241 = arith.subf %237, %240 : vector<2x2x2xf32>
    %242 = math.exp %241 : vector<2x2x2xf32>
    %cst_74 = arith.constant dense<0.000000e+00> : vector<2x2xf32>
    %243 = vector.multi_reduction <add>, %242, %cst_74 [2] : vector<2x2x2xf32> to vector<2x2xf32>
    %244 = vector.shape_cast %243 : vector<2x2xf32> to vector<2x2x1xf32>
    %245 = tpu.reciprocal %244 {approx = true} : vector<2x2x1xf32> -> vector<2x2x1xf32>
    %246 = vector.broadcast %245 : vector<2x2x1xf32> to vector<2x2x2xf32>
    %247 = arith.mulf %242, %246 : vector<2x2x2xf32>
    "tpu.trace_start"() <{level = 10 : i32, message = "bqk,bkc->bqc"}> : () -> ()
    %cst_75 = arith.constant dense<0.000000e+00> : vector<2x2x16xf32>
    %248 = tpu.matmul %247, %234, %cst_75 {dimension_numbers = #tpu.dot_dimension_numbers<[2], [1], [1], [2], [0, 0, 0, 1, 1, 2], [0], [0]>} : vector<2x2x2xf32>, vector<2x2x16xf32>, vector<2x2x16xf32> -> vector<2x2x16xf32>
    "tpu.trace_stop"() : () -> ()
    %249 = vector.shape_cast %248 : vector<2x2x16xf32> to vector<4x16xf32>
    %250 = vector.extract_strided_slice %199 {offsets = [0, 32], sizes = [4, 16], strides = [1, 1]} : vector<4x64xf32> to vector<4x16xf32>
    %251 = vector.shape_cast %250 : vector<4x16xf32> to vector<2x2x16xf32>
    %252 = vector.extract_strided_slice %203 {offsets = [0, 32], sizes = [4, 16], strides = [1, 1]} : vector<4x64xf32> to vector<4x16xf32>
    %253 = vector.shape_cast %252 : vector<4x16xf32> to vector<2x2x16xf32>
    %254 = vector.extract_strided_slice %207 {offsets = [0, 32], sizes = [4, 16], strides = [1, 1]} : vector<4x64xf32> to vector<4x16xf32>
    %255 = vector.shape_cast %254 : vector<4x16xf32> to vector<2x2x16xf32>
    "tpu.trace_start"() <{level = 10 : i32, message = "bqc,bkc->bqk"}> : () -> ()
    %cst_76 = arith.constant dense<0.000000e+00> : vector<2x2x2xf32>
    %256 = tpu.matmul %251, %253, %cst_76 {dimension_numbers = #tpu.dot_dimension_numbers<[2], [2], [1], [1], [0, 0, 0, 1, 1, 1], [0], [0]>} : vector<2x2x16xf32>, vector<2x2x16xf32>, vector<2x2x2xf32> -> vector<2x2x2xf32>
    "tpu.trace_stop"() : () -> ()
    %cst_77 = arith.constant 2.500000e-01 : f32
    %257 = vector.broadcast %cst_77 : f32 to vector<2x2x2xf32>
    %258 = arith.mulf %256, %257 : vector<2x2x2xf32>
    %cst_78 = arith.constant dense<0xFF800000> : vector<2x2xf32>
    %259 = vector.multi_reduction <maximumf>, %258, %cst_78 [2] : vector<2x2x2xf32> to vector<2x2xf32>
    %260 = vector.shape_cast %259 : vector<2x2xf32> to vector<2x2x1xf32>
    %261 = vector.broadcast %260 : vector<2x2x1xf32> to vector<2x2x2xf32>
    %262 = arith.subf %258, %261 : vector<2x2x2xf32>
    %263 = math.exp %262 : vector<2x2x2xf32>
    %cst_79 = arith.constant dense<0.000000e+00> : vector<2x2xf32>
    %264 = vector.multi_reduction <add>, %263, %cst_79 [2] : vector<2x2x2xf32> to vector<2x2xf32>
    %265 = vector.shape_cast %264 : vector<2x2xf32> to vector<2x2x1xf32>
    %266 = tpu.reciprocal %265 {approx = true} : vector<2x2x1xf32> -> vector<2x2x1xf32>
    %267 = vector.broadcast %266 : vector<2x2x1xf32> to vector<2x2x2xf32>
    %268 = arith.mulf %263, %267 : vector<2x2x2xf32>
    "tpu.trace_start"() <{level = 10 : i32, message = "bqk,bkc->bqc"}> : () -> ()
    %cst_80 = arith.constant dense<0.000000e+00> : vector<2x2x16xf32>
    %269 = tpu.matmul %268, %255, %cst_80 {dimension_numbers = #tpu.dot_dimension_numbers<[2], [1], [1], [2], [0, 0, 0, 1, 1, 2], [0], [0]>} : vector<2x2x2xf32>, vector<2x2x16xf32>, vector<2x2x16xf32> -> vector<2x2x16xf32>
    "tpu.trace_stop"() : () -> ()
    %270 = vector.shape_cast %269 : vector<2x2x16xf32> to vector<4x16xf32>
    %271 = vector.extract_strided_slice %199 {offsets = [0, 48], sizes = [4, 16], strides = [1, 1]} : vector<4x64xf32> to vector<4x16xf32>
    %272 = vector.shape_cast %271 : vector<4x16xf32> to vector<2x2x16xf32>
    %273 = vector.extract_strided_slice %203 {offsets = [0, 48], sizes = [4, 16], strides = [1, 1]} : vector<4x64xf32> to vector<4x16xf32>
    %274 = vector.shape_cast %273 : vector<4x16xf32> to vector<2x2x16xf32>
    %275 = vector.extract_strided_slice %207 {offsets = [0, 48], sizes = [4, 16], strides = [1, 1]} : vector<4x64xf32> to vector<4x16xf32>
    %276 = vector.shape_cast %275 : vector<4x16xf32> to vector<2x2x16xf32>
    "tpu.trace_start"() <{level = 10 : i32, message = "bqc,bkc->bqk"}> : () -> ()
    %cst_81 = arith.constant dense<0.000000e+00> : vector<2x2x2xf32>
    %277 = tpu.matmul %272, %274, %cst_81 {dimension_numbers = #tpu.dot_dimension_numbers<[2], [2], [1], [1], [0, 0, 0, 1, 1, 1], [0], [0]>} : vector<2x2x16xf32>, vector<2x2x16xf32>, vector<2x2x2xf32> -> vector<2x2x2xf32>
    "tpu.trace_stop"() : () -> ()
    %cst_82 = arith.constant 2.500000e-01 : f32
    %278 = vector.broadcast %cst_82 : f32 to vector<2x2x2xf32>
    %279 = arith.mulf %277, %278 : vector<2x2x2xf32>
    %cst_83 = arith.constant dense<0xFF800000> : vector<2x2xf32>
    %280 = vector.multi_reduction <maximumf>, %279, %cst_83 [2] : vector<2x2x2xf32> to vector<2x2xf32>
    %281 = vector.shape_cast %280 : vector<2x2xf32> to vector<2x2x1xf32>
    %282 = vector.broadcast %281 : vector<2x2x1xf32> to vector<2x2x2xf32>
    %283 = arith.subf %279, %282 : vector<2x2x2xf32>
    %284 = math.exp %283 : vector<2x2x2xf32>
    %cst_84 = arith.constant dense<0.000000e+00> : vector<2x2xf32>
    %285 = vector.multi_reduction <add>, %284, %cst_84 [2] : vector<2x2x2xf32> to vector<2x2xf32>
    %286 = vector.shape_cast %285 : vector<2x2xf32> to vector<2x2x1xf32>
    %287 = tpu.reciprocal %286 {approx = true} : vector<2x2x1xf32> -> vector<2x2x1xf32>
    %288 = vector.broadcast %287 : vector<2x2x1xf32> to vector<2x2x2xf32>
    %289 = arith.mulf %284, %288 : vector<2x2x2xf32>
    "tpu.trace_start"() <{level = 10 : i32, message = "bqk,bkc->bqc"}> : () -> ()
    %cst_85 = arith.constant dense<0.000000e+00> : vector<2x2x16xf32>
    %290 = tpu.matmul %289, %276, %cst_85 {dimension_numbers = #tpu.dot_dimension_numbers<[2], [1], [1], [2], [0, 0, 0, 1, 1, 2], [0], [0]>} : vector<2x2x2xf32>, vector<2x2x16xf32>, vector<2x2x16xf32> -> vector<2x2x16xf32>
    "tpu.trace_stop"() : () -> ()
    %291 = vector.shape_cast %290 : vector<2x2x16xf32> to vector<4x16xf32>
    %292 = tpu.concatenate %228, %249, %270, %291 in 1 : vector<4x16xf32>, vector<4x16xf32>, vector<4x16xf32>, vector<4x16xf32> -> vector<4x64xf32>
    %c1_86 = arith.constant 1 : index
    %c0_87 = arith.constant 0 : index
    %c0_88 = arith.constant 0 : index
    %293 = vector.load %arg5[%c1_86, %c0_87, %c0_88] : memref<3x64x64xbf16, #tpu.memory_space<vmem>>, vector<1x64x64xbf16>
    %294 = vector.shape_cast %293 : vector<1x64x64xbf16> to vector<64x64xbf16>
    %295 = arith.truncf %292 : vector<4x64xf32> to vector<4x64xbf16>
    %cst_89 = arith.constant dense<0.000000e+00> : vector<4x64xf32>
    %296 = tpu.matmul %295, %294, %cst_89 {dimension_numbers = #tpu.dot_dimension_numbers<[1], [0], [0], [1], [0, 0, 1, 1], [], []>} : vector<4x64xbf16>, vector<64x64xbf16>, vector<4x64xf32> -> vector<4x64xf32>
    %297 = vector.extract_strided_slice %191 {offsets = [3, 0], sizes = [1, 64], strides = [1, 1]} : vector<9x64xf32> to vector<1x64xf32>
    %298 = vector.broadcast %297 : vector<1x64xf32> to vector<4x64xf32>
    %299 = arith.addf %296, %298 : vector<4x64xf32>
    %300 = arith.addf %189, %299 : vector<4x64xf32>
    %301 = vector.extract_strided_slice %191 {offsets = [4, 0], sizes = [1, 64], strides = [1, 1]} : vector<9x64xf32> to vector<1x64xf32>
    %302 = vector.extract_strided_slice %191 {offsets = [5, 0], sizes = [1, 64], strides = [1, 1]} : vector<9x64xf32> to vector<1x64xf32>
    %cst_90 = arith.constant dense<0.000000e+00> : vector<4xf32>
    %303 = vector.multi_reduction <add>, %300, %cst_90 [1] : vector<4x64xf32> to vector<4xf32>
    %304 = vector.shape_cast %303 : vector<4xf32> to vector<4x1xf32>
    %cst_91 = arith.constant 6.400000e+01 : f32
    %305 = vector.broadcast %cst_91 : f32 to vector<4x1xf32>
    %306 = arith.divf %304, %305 : vector<4x1xf32>
    %307 = vector.broadcast %306 : vector<4x1xf32> to vector<4x64xf32>
    %308 = arith.subf %300, %307 : vector<4x64xf32>
    %309 = arith.mulf %308, %308 : vector<4x64xf32>
    %cst_92 = arith.constant dense<0.000000e+00> : vector<4xf32>
    %310 = vector.multi_reduction <add>, %309, %cst_92 [1] : vector<4x64xf32> to vector<4xf32>
    %311 = vector.shape_cast %310 : vector<4xf32> to vector<4x1xf32>
    %cst_93 = arith.constant 6.400000e+01 : f32
    %312 = vector.broadcast %cst_93 : f32 to vector<4x1xf32>
    %313 = arith.divf %311, %312 : vector<4x1xf32>
    %314 = vector.broadcast %306 : vector<4x1xf32> to vector<4x64xf32>
    %315 = arith.subf %300, %314 : vector<4x64xf32>
    %cst_94 = arith.constant 9.99999974E-6 : f32
    %316 = vector.broadcast %cst_94 : f32 to vector<4x1xf32>
    %317 = arith.addf %313, %316 : vector<4x1xf32>
    %318 = math.rsqrt %317 : vector<4x1xf32>
    %319 = vector.broadcast %318 : vector<4x1xf32> to vector<4x64xf32>
    %320 = arith.mulf %315, %319 : vector<4x64xf32>
    %321 = vector.broadcast %301 : vector<1x64xf32> to vector<4x64xf32>
    %322 = arith.mulf %320, %321 : vector<4x64xf32>
    %323 = vector.broadcast %302 : vector<1x64xf32> to vector<4x64xf32>
    %324 = arith.addf %322, %323 : vector<4x64xf32>
    %c1_95 = arith.constant 1 : index
    %c0_96 = arith.constant 0 : index
    %c0_97 = arith.constant 0 : index
    %325 = vector.load %arg6[%c1_95, %c0_96, %c0_97] : memref<3x64x2048xbf16, #tpu.memory_space<vmem>>, vector<1x64x2048xbf16>
    %326 = vector.shape_cast %325 : vector<1x64x2048xbf16> to vector<64x2048xbf16>
    %327 = arith.truncf %324 : vector<4x64xf32> to vector<4x64xbf16>
    %cst_98 = arith.constant dense<0.000000e+00> : vector<4x2048xf32>
    %328 = tpu.matmul %327, %326, %cst_98 {dimension_numbers = #tpu.dot_dimension_numbers<[1], [0], [0], [1], [0, 0, 1, 1], [], []>} : vector<4x64xbf16>, vector<64x2048xbf16>, vector<4x2048xf32> -> vector<4x2048xf32>
    %c1_99 = arith.constant 1 : index
    %c0_100 = arith.constant 0 : index
    %c0_101 = arith.constant 0 : index
    %329 = vector.load %arg7[%c1_99, %c0_100, %c0_101] : memref<3x1x2048xf32, #tpu.memory_space<vmem>>, vector<1x1x2048xf32>
    %330 = vector.shape_cast %329 : vector<1x1x2048xf32> to vector<1x2048xf32>
    %331 = vector.broadcast %330 : vector<1x2048xf32> to vector<4x2048xf32>
    %332 = arith.addf %328, %331 : vector<4x2048xf32>
    %cst_102 = arith.constant 0.000000e+00 : f32
    %333 = vector.broadcast %cst_102 : f32 to vector<4x2048xf32>
    %334 = arith.maximumf %332, %333 : vector<4x2048xf32>
    %c1_103 = arith.constant 1 : index
    %c0_104 = arith.constant 0 : index
    %c0_105 = arith.constant 0 : index
    %335 = vector.load %arg8[%c1_103, %c0_104, %c0_105] : memref<3x2048x64xbf16, #tpu.memory_space<vmem>>, vector<1x2048x64xbf16>
    %336 = vector.shape_cast %335 : vector<1x2048x64xbf16> to vector<2048x64xbf16>
    %337 = arith.truncf %334 : vector<4x2048xf32> to vector<4x2048xbf16>
    %cst_106 = arith.constant dense<0.000000e+00> : vector<4x64xf32>
    %338 = tpu.matmul %337, %336, %cst_106 {dimension_numbers = #tpu.dot_dimension_numbers<[1], [0], [0], [1], [0, 0, 1, 1], [], []>} : vector<4x2048xbf16>, vector<2048x64xbf16>, vector<4x64xf32> -> vector<4x64xf32>
    %339 = vector.extract_strided_slice %191 {offsets = [6, 0], sizes = [1, 64], strides = [1, 1]} : vector<9x64xf32> to vector<1x64xf32>
    %340 = vector.broadcast %339 : vector<1x64xf32> to vector<4x64xf32>
    %341 = arith.addf %338, %340 : vector<4x64xf32>
    %342 = arith.addf %324, %341 : vector<4x64xf32>
    %343 = vector.extract_strided_slice %191 {offsets = [7, 0], sizes = [1, 64], strides = [1, 1]} : vector<9x64xf32> to vector<1x64xf32>
    %344 = vector.extract_strided_slice %191 {offsets = [8, 0], sizes = [1, 64], strides = [1, 1]} : vector<9x64xf32> to vector<1x64xf32>
    %cst_107 = arith.constant dense<0.000000e+00> : vector<4xf32>
    %345 = vector.multi_reduction <add>, %342, %cst_107 [1] : vector<4x64xf32> to vector<4xf32>
    %346 = vector.shape_cast %345 : vector<4xf32> to vector<4x1xf32>
    %cst_108 = arith.constant 6.400000e+01 : f32
    %347 = vector.broadcast %cst_108 : f32 to vector<4x1xf32>
    %348 = arith.divf %346, %347 : vector<4x1xf32>
    %349 = vector.broadcast %348 : vector<4x1xf32> to vector<4x64xf32>
    %350 = arith.subf %342, %349 : vector<4x64xf32>
    %351 = arith.mulf %350, %350 : vector<4x64xf32>
    %cst_109 = arith.constant dense<0.000000e+00> : vector<4xf32>
    %352 = vector.multi_reduction <add>, %351, %cst_109 [1] : vector<4x64xf32> to vector<4xf32>
    %353 = vector.shape_cast %352 : vector<4xf32> to vector<4x1xf32>
    %cst_110 = arith.constant 6.400000e+01 : f32
    %354 = vector.broadcast %cst_110 : f32 to vector<4x1xf32>
    %355 = arith.divf %353, %354 : vector<4x1xf32>
    %356 = vector.broadcast %348 : vector<4x1xf32> to vector<4x64xf32>
    %357 = arith.subf %342, %356 : vector<4x64xf32>
    %cst_111 = arith.constant 9.99999974E-6 : f32
    %358 = vector.broadcast %cst_111 : f32 to vector<4x1xf32>
    %359 = arith.addf %355, %358 : vector<4x1xf32>
    %360 = math.rsqrt %359 : vector<4x1xf32>
    %361 = vector.broadcast %360 : vector<4x1xf32> to vector<4x64xf32>
    %362 = arith.mulf %357, %361 : vector<4x64xf32>
    %363 = vector.broadcast %343 : vector<1x64xf32> to vector<4x64xf32>
    %364 = arith.mulf %362, %363 : vector<4x64xf32>
    %365 = vector.broadcast %344 : vector<1x64xf32> to vector<4x64xf32>
    %366 = arith.addf %364, %365 : vector<4x64xf32>
    %c2 = arith.constant 2 : index
    %c0_112 = arith.constant 0 : index
    %c0_113 = arith.constant 0 : index
    %367 = vector.load %arg9[%c2, %c0_112, %c0_113] : memref<3x9x64xf32, #tpu.memory_space<vmem>>, vector<1x9x64xf32>
    %368 = vector.shape_cast %367 : vector<1x9x64xf32> to vector<9x64xf32>
    %c2_114 = arith.constant 2 : index
    %c0_115 = arith.constant 0 : index
    %c0_116 = arith.constant 0 : index
    %369 = vector.load %arg4[%c2_114, %c0_115, %c0_116] : memref<3x64x192xbf16, #tpu.memory_space<vmem>>, vector<1x64x192xbf16>
    %370 = vector.shape_cast %369 : vector<1x64x192xbf16> to vector<64x192xbf16>
    %371 = arith.truncf %366 : vector<4x64xf32> to vector<4x64xbf16>
    %cst_117 = arith.constant dense<0.000000e+00> : vector<4x192xf32>
    %372 = tpu.matmul %371, %370, %cst_117 {dimension_numbers = #tpu.dot_dimension_numbers<[1], [0], [0], [1], [0, 0, 1, 1], [], []>} : vector<4x64xbf16>, vector<64x192xbf16>, vector<4x192xf32> -> vector<4x192xf32>
    %373 = vector.extract_strided_slice %372 {offsets = [0, 0], sizes = [4, 64], strides = [1, 1]} : vector<4x192xf32> to vector<4x64xf32>
    %374 = vector.extract_strided_slice %368 {offsets = [0, 0], sizes = [1, 64], strides = [1, 1]} : vector<9x64xf32> to vector<1x64xf32>
    %375 = vector.broadcast %374 : vector<1x64xf32> to vector<4x64xf32>
    %376 = arith.addf %373, %375 : vector<4x64xf32>
    %377 = vector.extract_strided_slice %372 {offsets = [0, 64], sizes = [4, 64], strides = [1, 1]} : vector<4x192xf32> to vector<4x64xf32>
    %378 = vector.extract_strided_slice %368 {offsets = [1, 0], sizes = [1, 64], strides = [1, 1]} : vector<9x64xf32> to vector<1x64xf32>
    %379 = vector.broadcast %378 : vector<1x64xf32> to vector<4x64xf32>
    %380 = arith.addf %377, %379 : vector<4x64xf32>
    %381 = vector.extract_strided_slice %372 {offsets = [0, 128], sizes = [4, 64], strides = [1, 1]} : vector<4x192xf32> to vector<4x64xf32>
    %382 = vector.extract_strided_slice %368 {offsets = [2, 0], sizes = [1, 64], strides = [1, 1]} : vector<9x64xf32> to vector<1x64xf32>
    %383 = vector.broadcast %382 : vector<1x64xf32> to vector<4x64xf32>
    %384 = arith.addf %381, %383 : vector<4x64xf32>
    %385 = vector.extract_strided_slice %376 {offsets = [0, 0], sizes = [4, 16], strides = [1, 1]} : vector<4x64xf32> to vector<4x16xf32>
    %386 = vector.shape_cast %385 : vector<4x16xf32> to vector<2x2x16xf32>
    %387 = vector.extract_strided_slice %380 {offsets = [0, 0], sizes = [4, 16], strides = [1, 1]} : vector<4x64xf32> to vector<4x16xf32>
    %388 = vector.shape_cast %387 : vector<4x16xf32> to vector<2x2x16xf32>
    %389 = vector.extract_strided_slice %384 {offsets = [0, 0], sizes = [4, 16], strides = [1, 1]} : vector<4x64xf32> to vector<4x16xf32>
    %390 = vector.shape_cast %389 : vector<4x16xf32> to vector<2x2x16xf32>
    "tpu.trace_start"() <{level = 10 : i32, message = "bqc,bkc->bqk"}> : () -> ()
    %cst_118 = arith.constant dense<0.000000e+00> : vector<2x2x2xf32>
    %391 = tpu.matmul %386, %388, %cst_118 {dimension_numbers = #tpu.dot_dimension_numbers<[2], [2], [1], [1], [0, 0, 0, 1, 1, 1], [0], [0]>} : vector<2x2x16xf32>, vector<2x2x16xf32>, vector<2x2x2xf32> -> vector<2x2x2xf32>
    "tpu.trace_stop"() : () -> ()
    %cst_119 = arith.constant 2.500000e-01 : f32
    %392 = vector.broadcast %cst_119 : f32 to vector<2x2x2xf32>
    %393 = arith.mulf %391, %392 : vector<2x2x2xf32>
    %cst_120 = arith.constant dense<0xFF800000> : vector<2x2xf32>
    %394 = vector.multi_reduction <maximumf>, %393, %cst_120 [2] : vector<2x2x2xf32> to vector<2x2xf32>
    %395 = vector.shape_cast %394 : vector<2x2xf32> to vector<2x2x1xf32>
    %396 = vector.broadcast %395 : vector<2x2x1xf32> to vector<2x2x2xf32>
    %397 = arith.subf %393, %396 : vector<2x2x2xf32>
    %398 = math.exp %397 : vector<2x2x2xf32>
    %cst_121 = arith.constant dense<0.000000e+00> : vector<2x2xf32>
    %399 = vector.multi_reduction <add>, %398, %cst_121 [2] : vector<2x2x2xf32> to vector<2x2xf32>
    %400 = vector.shape_cast %399 : vector<2x2xf32> to vector<2x2x1xf32>
    %401 = tpu.reciprocal %400 {approx = true} : vector<2x2x1xf32> -> vector<2x2x1xf32>
    %402 = vector.broadcast %401 : vector<2x2x1xf32> to vector<2x2x2xf32>
    %403 = arith.mulf %398, %402 : vector<2x2x2xf32>
    "tpu.trace_start"() <{level = 10 : i32, message = "bqk,bkc->bqc"}> : () -> ()
    %cst_122 = arith.constant dense<0.000000e+00> : vector<2x2x16xf32>
    %404 = tpu.matmul %403, %390, %cst_122 {dimension_numbers = #tpu.dot_dimension_numbers<[2], [1], [1], [2], [0, 0, 0, 1, 1, 2], [0], [0]>} : vector<2x2x2xf32>, vector<2x2x16xf32>, vector<2x2x16xf32> -> vector<2x2x16xf32>
    "tpu.trace_stop"() : () -> ()
    %405 = vector.shape_cast %404 : vector<2x2x16xf32> to vector<4x16xf32>
    %406 = vector.extract_strided_slice %376 {offsets = [0, 16], sizes = [4, 16], strides = [1, 1]} : vector<4x64xf32> to vector<4x16xf32>
    %407 = vector.shape_cast %406 : vector<4x16xf32> to vector<2x2x16xf32>
    %408 = vector.extract_strided_slice %380 {offsets = [0, 16], sizes = [4, 16], strides = [1, 1]} : vector<4x64xf32> to vector<4x16xf32>
    %409 = vector.shape_cast %408 : vector<4x16xf32> to vector<2x2x16xf32>
    %410 = vector.extract_strided_slice %384 {offsets = [0, 16], sizes = [4, 16], strides = [1, 1]} : vector<4x64xf32> to vector<4x16xf32>
    %411 = vector.shape_cast %410 : vector<4x16xf32> to vector<2x2x16xf32>
    "tpu.trace_start"() <{level = 10 : i32, message = "bqc,bkc->bqk"}> : () -> ()
    %cst_123 = arith.constant dense<0.000000e+00> : vector<2x2x2xf32>
    %412 = tpu.matmul %407, %409, %cst_123 {dimension_numbers = #tpu.dot_dimension_numbers<[2], [2], [1], [1], [0, 0, 0, 1, 1, 1], [0], [0]>} : vector<2x2x16xf32>, vector<2x2x16xf32>, vector<2x2x2xf32> -> vector<2x2x2xf32>
    "tpu.trace_stop"() : () -> ()
    %cst_124 = arith.constant 2.500000e-01 : f32
    %413 = vector.broadcast %cst_124 : f32 to vector<2x2x2xf32>
    %414 = arith.mulf %412, %413 : vector<2x2x2xf32>
    %cst_125 = arith.constant dense<0xFF800000> : vector<2x2xf32>
    %415 = vector.multi_reduction <maximumf>, %414, %cst_125 [2] : vector<2x2x2xf32> to vector<2x2xf32>
    %416 = vector.shape_cast %415 : vector<2x2xf32> to vector<2x2x1xf32>
    %417 = vector.broadcast %416 : vector<2x2x1xf32> to vector<2x2x2xf32>
    %418 = arith.subf %414, %417 : vector<2x2x2xf32>
    %419 = math.exp %418 : vector<2x2x2xf32>
    %cst_126 = arith.constant dense<0.000000e+00> : vector<2x2xf32>
    %420 = vector.multi_reduction <add>, %419, %cst_126 [2] : vector<2x2x2xf32> to vector<2x2xf32>
    %421 = vector.shape_cast %420 : vector<2x2xf32> to vector<2x2x1xf32>
    %422 = tpu.reciprocal %421 {approx = true} : vector<2x2x1xf32> -> vector<2x2x1xf32>
    %423 = vector.broadcast %422 : vector<2x2x1xf32> to vector<2x2x2xf32>
    %424 = arith.mulf %419, %423 : vector<2x2x2xf32>
    "tpu.trace_start"() <{level = 10 : i32, message = "bqk,bkc->bqc"}> : () -> ()
    %cst_127 = arith.constant dense<0.000000e+00> : vector<2x2x16xf32>
    %425 = tpu.matmul %424, %411, %cst_127 {dimension_numbers = #tpu.dot_dimension_numbers<[2], [1], [1], [2], [0, 0, 0, 1, 1, 2], [0], [0]>} : vector<2x2x2xf32>, vector<2x2x16xf32>, vector<2x2x16xf32> -> vector<2x2x16xf32>
    "tpu.trace_stop"() : () -> ()
    %426 = vector.shape_cast %425 : vector<2x2x16xf32> to vector<4x16xf32>
    %427 = vector.extract_strided_slice %376 {offsets = [0, 32], sizes = [4, 16], strides = [1, 1]} : vector<4x64xf32> to vector<4x16xf32>
    %428 = vector.shape_cast %427 : vector<4x16xf32> to vector<2x2x16xf32>
    %429 = vector.extract_strided_slice %380 {offsets = [0, 32], sizes = [4, 16], strides = [1, 1]} : vector<4x64xf32> to vector<4x16xf32>
    %430 = vector.shape_cast %429 : vector<4x16xf32> to vector<2x2x16xf32>
    %431 = vector.extract_strided_slice %384 {offsets = [0, 32], sizes = [4, 16], strides = [1, 1]} : vector<4x64xf32> to vector<4x16xf32>
    %432 = vector.shape_cast %431 : vector<4x16xf32> to vector<2x2x16xf32>
    "tpu.trace_start"() <{level = 10 : i32, message = "bqc,bkc->bqk"}> : () -> ()
    %cst_128 = arith.constant dense<0.000000e+00> : vector<2x2x2xf32>
    %433 = tpu.matmul %428, %430, %cst_128 {dimension_numbers = #tpu.dot_dimension_numbers<[2], [2], [1], [1], [0, 0, 0, 1, 1, 1], [0], [0]>} : vector<2x2x16xf32>, vector<2x2x16xf32>, vector<2x2x2xf32> -> vector<2x2x2xf32>
    "tpu.trace_stop"() : () -> ()
    %cst_129 = arith.constant 2.500000e-01 : f32
    %434 = vector.broadcast %cst_129 : f32 to vector<2x2x2xf32>
    %435 = arith.mulf %433, %434 : vector<2x2x2xf32>
    %cst_130 = arith.constant dense<0xFF800000> : vector<2x2xf32>
    %436 = vector.multi_reduction <maximumf>, %435, %cst_130 [2] : vector<2x2x2xf32> to vector<2x2xf32>
    %437 = vector.shape_cast %436 : vector<2x2xf32> to vector<2x2x1xf32>
    %438 = vector.broadcast %437 : vector<2x2x1xf32> to vector<2x2x2xf32>
    %439 = arith.subf %435, %438 : vector<2x2x2xf32>
    %440 = math.exp %439 : vector<2x2x2xf32>
    %cst_131 = arith.constant dense<0.000000e+00> : vector<2x2xf32>
    %441 = vector.multi_reduction <add>, %440, %cst_131 [2] : vector<2x2x2xf32> to vector<2x2xf32>
    %442 = vector.shape_cast %441 : vector<2x2xf32> to vector<2x2x1xf32>
    %443 = tpu.reciprocal %442 {approx = true} : vector<2x2x1xf32> -> vector<2x2x1xf32>
    %444 = vector.broadcast %443 : vector<2x2x1xf32> to vector<2x2x2xf32>
    %445 = arith.mulf %440, %444 : vector<2x2x2xf32>
    "tpu.trace_start"() <{level = 10 : i32, message = "bqk,bkc->bqc"}> : () -> ()
    %cst_132 = arith.constant dense<0.000000e+00> : vector<2x2x16xf32>
    %446 = tpu.matmul %445, %432, %cst_132 {dimension_numbers = #tpu.dot_dimension_numbers<[2], [1], [1], [2], [0, 0, 0, 1, 1, 2], [0], [0]>} : vector<2x2x2xf32>, vector<2x2x16xf32>, vector<2x2x16xf32> -> vector<2x2x16xf32>
    "tpu.trace_stop"() : () -> ()
    %447 = vector.shape_cast %446 : vector<2x2x16xf32> to vector<4x16xf32>
    %448 = vector.extract_strided_slice %376 {offsets = [0, 48], sizes = [4, 16], strides = [1, 1]} : vector<4x64xf32> to vector<4x16xf32>
    %449 = vector.shape_cast %448 : vector<4x16xf32> to vector<2x2x16xf32>
    %450 = vector.extract_strided_slice %380 {offsets = [0, 48], sizes = [4, 16], strides = [1, 1]} : vector<4x64xf32> to vector<4x16xf32>
    %451 = vector.shape_cast %450 : vector<4x16xf32> to vector<2x2x16xf32>
    %452 = vector.extract_strided_slice %384 {offsets = [0, 48], sizes = [4, 16], strides = [1, 1]} : vector<4x64xf32> to vector<4x16xf32>
    %453 = vector.shape_cast %452 : vector<4x16xf32> to vector<2x2x16xf32>
    "tpu.trace_start"() <{level = 10 : i32, message = "bqc,bkc->bqk"}> : () -> ()
    %cst_133 = arith.constant dense<0.000000e+00> : vector<2x2x2xf32>
    %454 = tpu.matmul %449, %451, %cst_133 {dimension_numbers = #tpu.dot_dimension_numbers<[2], [2], [1], [1], [0, 0, 0, 1, 1, 1], [0], [0]>} : vector<2x2x16xf32>, vector<2x2x16xf32>, vector<2x2x2xf32> -> vector<2x2x2xf32>
    "tpu.trace_stop"() : () -> ()
    %cst_134 = arith.constant 2.500000e-01 : f32
    %455 = vector.broadcast %cst_134 : f32 to vector<2x2x2xf32>
    %456 = arith.mulf %454, %455 : vector<2x2x2xf32>
    %cst_135 = arith.constant dense<0xFF800000> : vector<2x2xf32>
    %457 = vector.multi_reduction <maximumf>, %456, %cst_135 [2] : vector<2x2x2xf32> to vector<2x2xf32>
    %458 = vector.shape_cast %457 : vector<2x2xf32> to vector<2x2x1xf32>
    %459 = vector.broadcast %458 : vector<2x2x1xf32> to vector<2x2x2xf32>
    %460 = arith.subf %456, %459 : vector<2x2x2xf32>
    %461 = math.exp %460 : vector<2x2x2xf32>
    %cst_136 = arith.constant dense<0.000000e+00> : vector<2x2xf32>
    %462 = vector.multi_reduction <add>, %461, %cst_136 [2] : vector<2x2x2xf32> to vector<2x2xf32>
    %463 = vector.shape_cast %462 : vector<2x2xf32> to vector<2x2x1xf32>
    %464 = tpu.reciprocal %463 {approx = true} : vector<2x2x1xf32> -> vector<2x2x1xf32>
    %465 = vector.broadcast %464 : vector<2x2x1xf32> to vector<2x2x2xf32>
    %466 = arith.mulf %461, %465 : vector<2x2x2xf32>
    "tpu.trace_start"() <{level = 10 : i32, message = "bqk,bkc->bqc"}> : () -> ()
    %cst_137 = arith.constant dense<0.000000e+00> : vector<2x2x16xf32>
    %467 = tpu.matmul %466, %453, %cst_137 {dimension_numbers = #tpu.dot_dimension_numbers<[2], [1], [1], [2], [0, 0, 0, 1, 1, 2], [0], [0]>} : vector<2x2x2xf32>, vector<2x2x16xf32>, vector<2x2x16xf32> -> vector<2x2x16xf32>
    "tpu.trace_stop"() : () -> ()
    %468 = vector.shape_cast %467 : vector<2x2x16xf32> to vector<4x16xf32>
    %469 = tpu.concatenate %405, %426, %447, %468 in 1 : vector<4x16xf32>, vector<4x16xf32>, vector<4x16xf32>, vector<4x16xf32> -> vector<4x64xf32>
    %c2_138 = arith.constant 2 : index
    %c0_139 = arith.constant 0 : index
    %c0_140 = arith.constant 0 : index
    %470 = vector.load %arg5[%c2_138, %c0_139, %c0_140] : memref<3x64x64xbf16, #tpu.memory_space<vmem>>, vector<1x64x64xbf16>
    %471 = vector.shape_cast %470 : vector<1x64x64xbf16> to vector<64x64xbf16>
    %472 = arith.truncf %469 : vector<4x64xf32> to vector<4x64xbf16>
    %cst_141 = arith.constant dense<0.000000e+00> : vector<4x64xf32>
    %473 = tpu.matmul %472, %471, %cst_141 {dimension_numbers = #tpu.dot_dimension_numbers<[1], [0], [0], [1], [0, 0, 1, 1], [], []>} : vector<4x64xbf16>, vector<64x64xbf16>, vector<4x64xf32> -> vector<4x64xf32>
    %474 = vector.extract_strided_slice %368 {offsets = [3, 0], sizes = [1, 64], strides = [1, 1]} : vector<9x64xf32> to vector<1x64xf32>
    %475 = vector.broadcast %474 : vector<1x64xf32> to vector<4x64xf32>
    %476 = arith.addf %473, %475 : vector<4x64xf32>
    %477 = arith.addf %366, %476 : vector<4x64xf32>
    %478 = vector.extract_strided_slice %368 {offsets = [4, 0], sizes = [1, 64], strides = [1, 1]} : vector<9x64xf32> to vector<1x64xf32>
    %479 = vector.extract_strided_slice %368 {offsets = [5, 0], sizes = [1, 64], strides = [1, 1]} : vector<9x64xf32> to vector<1x64xf32>
    %cst_142 = arith.constant dense<0.000000e+00> : vector<4xf32>
    %480 = vector.multi_reduction <add>, %477, %cst_142 [1] : vector<4x64xf32> to vector<4xf32>
    %481 = vector.shape_cast %480 : vector<4xf32> to vector<4x1xf32>
    %cst_143 = arith.constant 6.400000e+01 : f32
    %482 = vector.broadcast %cst_143 : f32 to vector<4x1xf32>
    %483 = arith.divf %481, %482 : vector<4x1xf32>
    %484 = vector.broadcast %483 : vector<4x1xf32> to vector<4x64xf32>
    %485 = arith.subf %477, %484 : vector<4x64xf32>
    %486 = arith.mulf %485, %485 : vector<4x64xf32>
    %cst_144 = arith.constant dense<0.000000e+00> : vector<4xf32>
    %487 = vector.multi_reduction <add>, %486, %cst_144 [1] : vector<4x64xf32> to vector<4xf32>
    %488 = vector.shape_cast %487 : vector<4xf32> to vector<4x1xf32>
    %cst_145 = arith.constant 6.400000e+01 : f32
    %489 = vector.broadcast %cst_145 : f32 to vector<4x1xf32>
    %490 = arith.divf %488, %489 : vector<4x1xf32>
    %491 = vector.broadcast %483 : vector<4x1xf32> to vector<4x64xf32>
    %492 = arith.subf %477, %491 : vector<4x64xf32>
    %cst_146 = arith.constant 9.99999974E-6 : f32
    %493 = vector.broadcast %cst_146 : f32 to vector<4x1xf32>
    %494 = arith.addf %490, %493 : vector<4x1xf32>
    %495 = math.rsqrt %494 : vector<4x1xf32>
    %496 = vector.broadcast %495 : vector<4x1xf32> to vector<4x64xf32>
    %497 = arith.mulf %492, %496 : vector<4x64xf32>
    %498 = vector.broadcast %478 : vector<1x64xf32> to vector<4x64xf32>
    %499 = arith.mulf %497, %498 : vector<4x64xf32>
    %500 = vector.broadcast %479 : vector<1x64xf32> to vector<4x64xf32>
    %501 = arith.addf %499, %500 : vector<4x64xf32>
    %c2_147 = arith.constant 2 : index
    %c0_148 = arith.constant 0 : index
    %c0_149 = arith.constant 0 : index
    %502 = vector.load %arg6[%c2_147, %c0_148, %c0_149] : memref<3x64x2048xbf16, #tpu.memory_space<vmem>>, vector<1x64x2048xbf16>
    %503 = vector.shape_cast %502 : vector<1x64x2048xbf16> to vector<64x2048xbf16>
    %504 = arith.truncf %501 : vector<4x64xf32> to vector<4x64xbf16>
    %cst_150 = arith.constant dense<0.000000e+00> : vector<4x2048xf32>
    %505 = tpu.matmul %504, %503, %cst_150 {dimension_numbers = #tpu.dot_dimension_numbers<[1], [0], [0], [1], [0, 0, 1, 1], [], []>} : vector<4x64xbf16>, vector<64x2048xbf16>, vector<4x2048xf32> -> vector<4x2048xf32>
    %c2_151 = arith.constant 2 : index
    %c0_152 = arith.constant 0 : index
    %c0_153 = arith.constant 0 : index
    %506 = vector.load %arg7[%c2_151, %c0_152, %c0_153] : memref<3x1x2048xf32, #tpu.memory_space<vmem>>, vector<1x1x2048xf32>
    %507 = vector.shape_cast %506 : vector<1x1x2048xf32> to vector<1x2048xf32>
    %508 = vector.broadcast %507 : vector<1x2048xf32> to vector<4x2048xf32>
    %509 = arith.addf %505, %508 : vector<4x2048xf32>
    %cst_154 = arith.constant 0.000000e+00 : f32
    %510 = vector.broadcast %cst_154 : f32 to vector<4x2048xf32>
    %511 = arith.maximumf %509, %510 : vector<4x2048xf32>
    %c2_155 = arith.constant 2 : index
    %c0_156 = arith.constant 0 : index
    %c0_157 = arith.constant 0 : index
    %512 = vector.load %arg8[%c2_155, %c0_156, %c0_157] : memref<3x2048x64xbf16, #tpu.memory_space<vmem>>, vector<1x2048x64xbf16>
    %513 = vector.shape_cast %512 : vector<1x2048x64xbf16> to vector<2048x64xbf16>
    %514 = arith.truncf %511 : vector<4x2048xf32> to vector<4x2048xbf16>
    %cst_158 = arith.constant dense<0.000000e+00> : vector<4x64xf32>
    %515 = tpu.matmul %514, %513, %cst_158 {dimension_numbers = #tpu.dot_dimension_numbers<[1], [0], [0], [1], [0, 0, 1, 1], [], []>} : vector<4x2048xbf16>, vector<2048x64xbf16>, vector<4x64xf32> -> vector<4x64xf32>
    %516 = vector.extract_strided_slice %368 {offsets = [6, 0], sizes = [1, 64], strides = [1, 1]} : vector<9x64xf32> to vector<1x64xf32>
    %517 = vector.broadcast %516 : vector<1x64xf32> to vector<4x64xf32>
    %518 = arith.addf %515, %517 : vector<4x64xf32>
    %519 = arith.addf %501, %518 : vector<4x64xf32>
    %520 = vector.extract_strided_slice %368 {offsets = [7, 0], sizes = [1, 64], strides = [1, 1]} : vector<9x64xf32> to vector<1x64xf32>
    %521 = vector.extract_strided_slice %368 {offsets = [8, 0], sizes = [1, 64], strides = [1, 1]} : vector<9x64xf32> to vector<1x64xf32>
    %cst_159 = arith.constant dense<0.000000e+00> : vector<4xf32>
    %522 = vector.multi_reduction <add>, %519, %cst_159 [1] : vector<4x64xf32> to vector<4xf32>
    %523 = vector.shape_cast %522 : vector<4xf32> to vector<4x1xf32>
    %cst_160 = arith.constant 6.400000e+01 : f32
    %524 = vector.broadcast %cst_160 : f32 to vector<4x1xf32>
    %525 = arith.divf %523, %524 : vector<4x1xf32>
    %526 = vector.broadcast %525 : vector<4x1xf32> to vector<4x64xf32>
    %527 = arith.subf %519, %526 : vector<4x64xf32>
    %528 = arith.mulf %527, %527 : vector<4x64xf32>
    %cst_161 = arith.constant dense<0.000000e+00> : vector<4xf32>
    %529 = vector.multi_reduction <add>, %528, %cst_161 [1] : vector<4x64xf32> to vector<4xf32>
    %530 = vector.shape_cast %529 : vector<4xf32> to vector<4x1xf32>
    %cst_162 = arith.constant 6.400000e+01 : f32
    %531 = vector.broadcast %cst_162 : f32 to vector<4x1xf32>
    %532 = arith.divf %530, %531 : vector<4x1xf32>
    %533 = vector.broadcast %525 : vector<4x1xf32> to vector<4x64xf32>
    %534 = arith.subf %519, %533 : vector<4x64xf32>
    %cst_163 = arith.constant 9.99999974E-6 : f32
    %535 = vector.broadcast %cst_163 : f32 to vector<4x1xf32>
    %536 = arith.addf %532, %535 : vector<4x1xf32>
    %537 = math.rsqrt %536 : vector<4x1xf32>
    %538 = vector.broadcast %537 : vector<4x1xf32> to vector<4x64xf32>
    %539 = arith.mulf %534, %538 : vector<4x64xf32>
    %540 = vector.broadcast %520 : vector<1x64xf32> to vector<4x64xf32>
    %541 = arith.mulf %539, %540 : vector<4x64xf32>
    %542 = vector.broadcast %521 : vector<1x64xf32> to vector<4x64xf32>
    %543 = arith.addf %541, %542 : vector<4x64xf32>
    %544 = vector.shape_cast %543 : vector<4x64xf32> to vector<2x2x64xf32>
    %cst_164 = arith.constant dense<0.000000e+00> : vector<2x64xf32>
    %545 = vector.multi_reduction <add>, %544, %cst_164 [0] : vector<2x2x64xf32> to vector<2x64xf32>
    %cst_165 = arith.constant 2.000000e+00 : f32
    %546 = vector.broadcast %cst_165 : f32 to vector<2x64xf32>
    %547 = arith.divf %545, %546 : vector<2x64xf32>
    %c0_166 = arith.constant 0 : index
    %c0_167 = arith.constant 0 : index
    %548 = vector.load %arg10[%c0_166, %c0_167] : memref<64x128xbf16, #tpu.memory_space<vmem>>, vector<64x128xbf16>
    %549 = arith.truncf %547 : vector<2x64xf32> to vector<2x64xbf16>
    %cst_168 = arith.constant dense<0.000000e+00> : vector<2x128xf32>
    %550 = tpu.matmul %549, %548, %cst_168 {dimension_numbers = #tpu.dot_dimension_numbers<[1], [0], [0], [1], [0, 0, 1, 1], [], []>} : vector<2x64xbf16>, vector<64x128xbf16>, vector<2x128xf32> -> vector<2x128xf32>
    %c0_169 = arith.constant 0 : index
    %c0_170 = arith.constant 0 : index
    %551 = vector.load %arg11[%c0_169, %c0_170] : memref<1x128xf32, #tpu.memory_space<vmem>>, vector<1x128xf32>
    %552 = vector.broadcast %551 : vector<1x128xf32> to vector<2x128xf32>
    %553 = arith.addf %550, %552 : vector<2x128xf32>
    %c0_171 = arith.constant 0 : index
    %c0_172 = arith.constant 0 : index
    %554 = vector.load %arg12[%c0_171, %c0_172] : memref<2x128xf32, #tpu.memory_space<vmem>>, vector<2x128xf32>
    tpu.vector_store %arg12[%c0_171, %c0_172], %553 {strides = array<i32>} : memref<2x128xf32, #tpu.memory_space<vmem>>, vector<2x128xf32>,
    return
  }
}

</mosaic_0001>

<llo_original>
// kernel: patchtst_forward.1
$region0: #{patchtst_forward.1}
  #allocation0 [shape = 'u32[]', space=smem, size = 0x4, offset = 0x4, fixed_abs, tag = 'smem constant byte address 0x4 - core index']
  #allocation1 [shape = 'u32[144,128]{1,0:T(1,128)}', space=vmem, size = 0x12000, scoped, tag = 'internal scratch']
  %s0 = inlined_call_operand.vmem [shape: f32[4,40], index: 0, kind: input, shape index: {}]
  %s1 = inlined_call_operand.vmem [shape: bf16[40,64], index: 1, kind: input, shape index: {}]
  %s2 = inlined_call_operand.vmem [shape: f32[1,64], index: 2, kind: input, shape index: {}]
  %s3 = inlined_call_operand.vmem [shape: f32[2,64], index: 3, kind: input, shape index: {}]
  %s4 = inlined_call_operand.vmem [shape: bf16[3,64,192], index: 4, kind: input, shape index: {}]
  %s5 = inlined_call_operand.vmem [shape: bf16[3,64,64], index: 5, kind: input, shape index: {}]
  %s6 = inlined_call_operand.vmem [shape: bf16[3,64,2048], index: 6, kind: input, shape index: {}]
  %s7 = inlined_call_operand.vmem [shape: f32[3,1,2048], index: 7, kind: input, shape index: {}]
  %s8 = inlined_call_operand.vmem [shape: bf16[3,2048,64], index: 8, kind: input, shape index: {}]
  %s9 = inlined_call_operand.vmem [shape: f32[3,9,64], index: 9, kind: input, shape index: {}]
  %s10 = inlined_call_operand.vmem [shape: bf16[64,128], index: 10, kind: input, shape index: {}]
  %s11 = inlined_call_operand.vmem [shape: f32[1,128], index: 11, kind: input, shape index: {}]
  %s12 = inlined_call_operand.hbm [shape: f32[2,128], index: 12, kind: output, shape index: {}]
  %s13 = sld [smem:[#allocation0]]
  $region58: #{patchtst_forward.1} parent=0
    _
  %s15 = ssub.s32 1, %s13
  %s16 = scalar_select 0, %s15, %s13
  $region1: #{patchtst_forward.1} parent=0
    #allocation2 [shape = 'u8[1024]{0}', space=vmem, size = 0x400, scoped, tag = 'output window, operand 0, single buffered']
    #allocation3 [shape = 's32[1]{0}', space=sflag, size = 0x4, scoped, tag = 'scoped memory for patchtst_forward.1']
    %17 = vsyncpa [#allocation3], 0
    // Predicated region
    $region2: #{patchtst_forward.1} parent=1 // pred_check
      _
    $region3: #{patchtst_forward.1} parent=1 // pred_check_branch
      %19 = sbr.rel (0) target = $region5
    $region4: #{patchtst_forward.1} parent=1 // pred_region
      _
    $region5: #{patchtst_forward.1} parent=1 // pred_fallthru
      _
    // Predicated region
    $region6: #{patchtst_forward.1} parent=1 // pred_check
      _
    $region7: #{patchtst_forward.1} parent=1 // pred_check_branch
      %21 = sbr.rel (0) target = $region9
    $region8: #{patchtst_forward.1} parent=1 // pred_region
      _
    $region9: #{patchtst_forward.1} parent=1 // pred_fallthru
      _
    // Predicated region
    $region10: #{patchtst_forward.1} parent=1 // pred_check
      _
    $region11: #{patchtst_forward.1} parent=1 // pred_check_branch
      %23 = sbr.rel (0) target = $region13
    $region12: #{patchtst_forward.1} parent=1 // pred_region
      _
    $region13: #{patchtst_forward.1} parent=1 // pred_fallthru
      _
    // Predicated region
    $region14: #{patchtst_forward.1} parent=1 // pred_check
      _
    $region15: #{patchtst_forward.1} parent=1 // pred_check_branch
      %25 = sbr.rel (0) target = $region17
    $region16: #{patchtst_forward.1} parent=1 // pred_region
      _
    $region17: #{patchtst_forward.1} parent=1 // pred_fallthru
      _
    // Predicated region
    $region18: #{patchtst_forward.1} parent=1 // pred_check
      _
    $region19: #{patchtst_forward.1} parent=1 // pred_check_branch
      %27 = sbr.rel (0) target = $region21
    $region20: #{patchtst_forward.1} parent=1 // pred_region
      _
    $region21: #{patchtst_forward.1} parent=1 // pred_fallthru
      _
    // Predicated region
    $region22: #{patchtst_forward.1} parent=1 // pred_check
      _
    $region23: #{patchtst_forward.1} parent=1 // pred_check_branch
      %29 = sbr.rel (0) target = $region25
    $region24: #{patchtst_forward.1} parent=1 // pred_region
      _
    $region25: #{patchtst_forward.1} parent=1 // pred_fallthru
      _
    // Predicated region
    $region26: #{patchtst_forward.1} parent=1 // pred_check
      _
    $region27: #{patchtst_forward.1} parent=1 // pred_check_branch
      %31 = sbr.rel (0) target = $region29
    $region28: #{patchtst_forward.1} parent=1 // pred_region
      _
    $region29: #{patchtst_forward.1} parent=1 // pred_fallthru
      _
    // Predicated region
    $region30: #{patchtst_forward.1} parent=1 // pred_check
      _
    $region31: #{patchtst_forward.1} parent=1 // pred_check_branch
      %33 = sbr.rel (0) target = $region33
    $region32: #{patchtst_forward.1} parent=1 // pred_region
      _
    $region33: #{patchtst_forward.1} parent=1 // pred_fallthru
      _
    // Predicated region
    $region34: #{patchtst_forward.1} parent=1 // pred_check
      _
    $region35: #{patchtst_forward.1} parent=1 // pred_check_branch
      %35 = sbr.rel (0) target = $region37
    $region36: #{patchtst_forward.1} parent=1 // pred_region
      _
    $region37: #{patchtst_forward.1} parent=1 // pred_fallthru
      _
    // Predicated region
    $region38: #{patchtst_forward.1} parent=1 // pred_check
      _
    $region39: #{patchtst_forward.1} parent=1 // pred_check_branch
      %37 = sbr.rel (0) target = $region41
    $region40: #{patchtst_forward.1} parent=1 // pred_region
      _
    $region41: #{patchtst_forward.1} parent=1 // pred_fallthru
      _
    // Predicated region
    $region42: #{patchtst_forward.1} parent=1 // pred_check
      _
    $region43: #{patchtst_forward.1} parent=1 // pred_check_branch
      %39 = sbr.rel (0) target = $region45
    $region44: #{patchtst_forward.1} parent=1 // pred_region
      _
    $region45: #{patchtst_forward.1} parent=1 // pred_fallthru
      _
    // Predicated region
    $region46: #{patchtst_forward.1} parent=1 // pred_check
      _
    $region47: #{patchtst_forward.1} parent=1 // pred_check_branch
      %41 = sbr.rel (0) target = $region49
    $region48: #{patchtst_forward.1} parent=1 // pred_region
      _
    $region49: #{patchtst_forward.1} parent=1 // pred_fallthru
      _
    %v43 = vld [vmem:[%s0] sm:$0xf]
    %v44 = vld [vmem:[%s1] sm:$0xf]
    %v45 = vld [vmem:[%s1 + $0x4] sm:$0xf]
    %v46 = vld [vmem:[%s1 + $0x8] sm:$0xf]
    %v47 = vld [vmem:[%s1 + $0xc] sm:$0xf]
    %v48 = vld [vmem:[%s1 + $0x10] sm:$0xf]
    %v49 = vpack.c.bf16 %v43, %v43
    %v50 = vld [vmem:[%s2] sm:$0x1]
    %v52 = vlaneseq
    %v53 = vshrl.u32 %v52, 7
    %v54 = vsub.s32 0, %v53
    %v55 = vrot.slane %v50, %v54
    %v62 = vunpack.c.l.b16 %v44
    %v63 = vunpack.c.l.b16 %v45
    %v64 = vunpack.c.l.b16 %v46
    %v65 = vunpack.c.l.b16 %v47
    %v66 = vunpack.c.l.b16 %v48
    %v67 = vpack.c.b16 %v63, %v62
    %v68 = vpack.c.b16 %v65, %v64
    %v69 = vpack.c.b16 %v66, %v66
    %vm72 = vcmask 326656
    %v74 = vsel %vm72, %v49, 0
    %vm76 = vcmask 1043456
    %v78 = vsel %vm76, %v69, 0
    %80 = vmatprep.subr.bf16.mxu0 0
    %81 = vmatpush1.bf16.msra.mxu0 %v67
    %82 = vmatprep.subr.bf16.mxu0 0
    %83 = vmatpush1.bf16.msra.mxu0 %v68
    %84 = vmatprep.subr.bf16.mxu0 0
    %85 = vmatpush1.bf16.msra.mxu0 %v78
    %86 = vmatprep.subr.bf16.mxu0 0
    %87 = vmatpush1.bf16.msra.mxu0 0
    %88 = vmatprep.subr.bf16.mxu0 0
    %89 = vmatpush1.bf16.msra.mxu0 0
    %90 = vmatprep.subr.bf16.mxu0 0
    %91 = vmatpush1.bf16.msra.mxu0 0
    %92 = vmatprep.subr.bf16.mxu0 0
    %93 = vmatpush1.bf16.msra.mxu0 0
    %94 = vmatprep.subr.bf16.mxu0 0
    %95 = vmatpush1.bf16.msra.mxu0 0
    %96 = vmatprep.subr.bf16.mxu0 0
    %97 = vmatpush1.bf16.msra.mxu0 0
    %98 = vmatprep.subr.bf16.mxu0 0
    %99 = vmatpush1.bf16.msra.mxu0 0
    %100 = vmatprep.subr.bf16.mxu0 0
    %101 = vmatpush1.bf16.msra.mxu0 0
    %102 = vmatprep.subr.bf16.mxu0 0
    %103 = vmatpush1.bf16.msra.mxu0 0
    %104 = vmatprep.subr.bf16.mxu0 0
    %105 = vmatpush1.bf16.msra.mxu0 0
    %106 = vmatprep.subr.bf16.mxu0 0
    %107 = vmatpush1.bf16.msra.mxu0 0
    %108 = vmatprep.subr.bf16.mxu0 0
    %109 = vmatpush1.bf16.msra.mxu0 0
    %110 = vmatprep.subr.bf16.mxu0 0
    %111 = vmatpush1.bf16.msra.mxu0 0
    %112 = vmatprep.mubr.bf16.mxu0 0
    %113 = vmatmul.mubr.bf16.gmra.mrb[0].mxu0 %v74
    %v114 = vpop.f32.mrb[0].mxu0
    %v115 = vadd.f32 %v55, %v114
    %v116 = vpop.f32.mrb[0].mxu0
    %v117 = vpop.f32.mrb[0].mxu0
    %v118 = vpop.f32.mrb[0].mxu0
    %119 = vdwg.mxu0
    %v120 = vld [vmem:[%s3] sm:$0x3]
    %v123 = vunpack.c.l.s4 1983009808
    %v124 = vunpack.c.0.s8 %v123
    %v125 = vlaneseq
    %v126 = vshrl.u32 %v125, 7
    %v127 = vsub.s32 %v124, %v126
    %v128 = vrot.slane %v115, %v127
    %v129 = vcombine.high %v128, %v128
    %v134 = vunpack.c.l.s4 1966171168
    %v135 = vunpack.c.0.s8 %v134
    %v136 = vlaneseq
    %v137 = vshrl.u32 %v136, 7
    %v138 = vsub.s32 %v135, %v137
    %v139 = vrot.slane %v120, %v138
    %v140 = vcombine.high %v139, %v139
    %v142 = vunpack.c.l.s4 1966171168
    %v143 = vunpack.c.0.s8 %v142
    %v144 = vlaneseq
    %v145 = vshrl.u32 %v144, 7
    %v146 = vsub.s32 %v143, %v145
    %v147 = vrot.slane %v139, %v146
    %v149 = vunpack.c.l.s4 1966171168
    %v150 = vunpack.c.0.s8 %v149
    %v151 = vlaneseq
    %v152 = vshrl.u32 %v151, 7
    %v153 = vsub.s32 %v150, %v152
    %v154 = vrot.slane %v140, %v153
    %v155 = vlaneseq
    %v156 = vshrl.u32 %v155, 7
    %v157 = vsub.s32 0, %v156
    %v158 = vrot.slane %v147, %v157
    %v159 = vlaneseq
    %v160 = vshrl.u32 %v159, 7
    %v161 = vsub.s32 0, %v160
    %v162 = vrot.slane %v154, %v161
    %v165 = vadd.f32 %v128, %v158
    %v166 = vadd.f32 %v129, %v162
    %v167 = vld [vmem:[%s9] sm:$0xff]
    %v168 = vld [vmem:[%s9 + $0x8] sm:$0x1]
    %v169 = vld [vmem:[%s4] sm:$0xff]
    %v170 = vld [vmem:[%s4 + $0x8] sm:$0xff]
    %v171 = vld [vmem:[%s4 + $0x10] sm:$0xff]
    %v172 = vld [vmem:[%s4 + $0x18] sm:$0xff]
    %v173 = vld [vmem:[%s4 + $0x20] sm:$0xff]
    %v174 = vld [vmem:[%s4 + $0x28] sm:$0xff]
    %v175 = vld [vmem:[%s4 + $0x30] sm:$0xff]
    %v176 = vld [vmem:[%s4 + $0x38] sm:$0xff]
    %v179 = vcombine.low %v165, %v166
    %v181 = vunpack.c.l.s4 1983009808
    %v182 = vunpack.c.0.s8 %v181
    %v183 = vlaneseq
    %v184 = vshrl.u32 %v183, 7
    %v185 = vsub.s32 %v182, %v184
    %v186 = vrot.slane %v179, %v185
    %v188 = vpack.c.bf16 %v186, %v186
    %v197 = vunpack.c.l.b16 %v169
    %v198 = vunpack.c.h.b16 %v169
    %v199 = vunpack.c.l.b16 %v170
    %v200 = vunpack.c.h.b16 %v170
    %v201 = vunpack.c.l.b16 %v171
    %v202 = vunpack.c.h.b16 %v171
    %v203 = vunpack.c.l.b16 %v172
    %v204 = vunpack.c.h.b16 %v172
    %v205 = vunpack.c.l.b16 %v173
    %v206 = vunpack.c.h.b16 %v173
    %v207 = vunpack.c.l.b16 %v174
    %v208 = vunpack.c.h.b16 %v174
    %v209 = vunpack.c.l.b16 %v175
    %v210 = vunpack.c.h.b16 %v175
    %v211 = vunpack.c.l.b16 %v176
    %v212 = vunpack.c.h.b16 %v176
    %v213 = vpack.c.b16 %v199, %v197
    %v214 = vpack.c.b16 %v200, %v198
    %v215 = vpack.c.b16 %v203, %v201
    %v216 = vpack.c.b16 %v204, %v202
    %v217 = vpack.c.b16 %v207, %v205
    %v218 = vpack.c.b16 %v208, %v206
    %v219 = vpack.c.b16 %v211, %v209
    %v220 = vpack.c.b16 %v212, %v210
    %vm229 = vcmask 523264
    %v231 = vsel %vm229, %v188, 0
    %233 = vmatprep.subr.bf16.mxu0 %v214
    %234 = vmatpush1.bf16.msra.mxu0 %v213
    %235 = vmatprep.subr.bf16.mxu0 %v216
    %236 = vmatpush1.bf16.msra.mxu0 %v215
    %237 = vmatprep.subr.bf16.mxu0 %v218
    %238 = vmatpush1.bf16.msra.mxu0 %v217
    %239 = vmatprep.subr.bf16.mxu0 %v220
    %240 = vmatpush1.bf16.msra.mxu0 %v219
    %241 = vmatprep.subr.bf16.mxu0 0
    %242 = vmatpush1.bf16.msra.mxu0 0
    %243 = vmatprep.subr.bf16.mxu0 0
    %244 = vmatpush1.bf16.msra.mxu0 0
    %245 = vmatprep.subr.bf16.mxu0 0
    %246 = vmatpush1.bf16.msra.mxu0 0
    %247 = vmatprep.subr.bf16.mxu0 0
    %248 = vmatpush1.bf16.msra.mxu0 0
    %249 = vmatprep.subr.bf16.mxu0 0
    %250 = vmatpush1.bf16.msra.mxu0 0
    %251 = vmatprep.subr.bf16.mxu0 0
    %252 = vmatpush1.bf16.msra.mxu0 0
    %253 = vmatprep.subr.bf16.mxu0 0
    %254 = vmatpush1.bf16.msra.mxu0 0
    %255 = vmatprep.subr.bf16.mxu0 0
    %256 = vmatpush1.bf16.msra.mxu0 0
    %257 = vmatprep.subr.bf16.mxu0 0
    %258 = vmatpush1.bf16.msra.mxu0 0
    %259 = vmatprep.subr.bf16.mxu0 0
    %260 = vmatpush1.bf16.msra.mxu0 0
    %261 = vmatprep.subr.bf16.mxu0 0
    %262 = vmatpush1.bf16.msra.mxu0 0
    %263 = vmatprep.subr.bf16.mxu0 0
    %264 = vmatpush1.bf16.msra.mxu0 0
    %265 = vmatprep.mubr.bf16.mxu0 0
    %266 = vmatmul.mubr.bf16.gmra.mrb[0].mxu0 %v231
    %v267 = vpop.f32.mrb[0].mxu0
    %v268 = vadd.f32 0.0, %v267
    %v269 = vpop.f32.mrb[0].mxu0
    %v270 = vadd.f32 0.0, %v269
    %v271 = vpop.f32.mrb[0].mxu0
    %v272 = vpop.f32.mrb[0].mxu0
    %273 = vdwg.mxu0
    %v274 = vlaneseq
    %v275 = vshrl.u32 %v274, 7
    %v276 = vsub.s32 0, %v275
    %v277 = vrot.slane %v167, %v276
    %v278 = vadd.f32 %v268, %v277
    %v279 = vlaneseq
    %v280 = vshrl.u32 %v279, 7
    %v281 = vsub.s32 1, %v280
    %v282 = vrot.slane %v167, %v281
    %284 = vrot.lane.b32.xlu0 %v282, 64
    %v285 = vpop.permute.xlu0 %284
    %v287 = vadd.f32 %v268, %v285
    %v288 = vlaneseq
    %v289 = vshrl.u32 %v288, 7
    %v290 = vsub.s32 2, %v289
    %v291 = vrot.slane %v167, %v290
    %v292 = vadd.f32 %v270, %v291
    %v295 = vunpack.c.l.s4 1983009808
    %v296 = vunpack.c.0.s8 %v295
    %v297 = vlaneseq
    %v298 = vshrl.u32 %v297, 7
    %v299 = vsub.s32 %v296, %v298
    %v300 = vrot.slane %v278, %v299
    %v301 = vcombine.high %v300, %v300
    %v304 = vunpack.c.l.s4 1983009808
    %v305 = vunpack.c.0.s8 %v304
    %v306 = vlaneseq
    %v307 = vshrl.u32 %v306, 7
    %v308 = vsub.s32 %v305, %v307
    %v309 = vrot.slane %v287, %v308
    %v310 = vcombine.high %v309, %v309
    %v313 = vunpack.c.l.s4 1983009808
    %v314 = vunpack.c.0.s8 %v313
    %v315 = vlaneseq
    %v316 = vshrl.u32 %v315, 7
    %v317 = vsub.s32 %v314, %v316
    %v318 = vrot.slane %v292, %v317
    %v319 = vcombine.high %v318, %v318
    %v321 = vunpack.c.l.s4 1983009808
    %v322 = vunpack.c.0.s8 %v321
    %v323 = vlaneseq
    %v324 = vshrl.u32 %v323, 7
    %v325 = vsub.s32 %v322, %v324
    %v326 = vrot.slane %v309, %v325
    %327 = vrot.lane.b32.xlu0 %v326, 64
    %v328 = vpop.permute.xlu0 %327
    %vm329 = vcmask 130048
    %v330 = vsel %vm329, %v300, 0
    %v332 = vsel %vm329, %v328, 0
    %334 = vmatprep.subr.mxu0 0.0
    %335 = vmatpush1.xpose.msra.mxu0 %v332
    %336 = vmatprep.subr.mxu0 0.0
    %337 = vmatpush1.xpose.msra.mxu0 0.0
    %338 = vmatprep.subr.mxu0 0.0
    %339 = vmatpush1.xpose.msra.mxu0 0.0
    %340 = vmatprep.subr.mxu0 0.0
    %341 = vmatpush1.xpose.msra.mxu0 0.0
    %342 = vmatprep.subr.mxu0 0.0
    %343 = vmatpush1.xpose.msra.mxu0 0.0
    %344 = vmatprep.subr.mxu0 0.0
    %345 = vmatpush1.xpose.msra.mxu0 0.0
    %346 = vmatprep.subr.mxu0 0.0
    %347 = vmatpush1.xpose.msra.mxu0 0.0
    %348 = vmatprep.subr.mxu0 0.0
    %349 = vmatpush1.xpose.msra.mxu0 0.0
    %350 = vmatprep.subr.mxu0 0.0
    %351 = vmatpush1.xpose.msra.mxu0 0.0
    %352 = vmatprep.subr.mxu0 0.0
    %353 = vmatpush1.xpose.msra.mxu0 0.0
    %354 = vmatprep.subr.mxu0 0.0
    %355 = vmatpush1.xpose.msra.mxu0 0.0
    %356 = vmatprep.subr.mxu0 0.0
    %357 = vmatpush1.xpose.msra.mxu0 0.0
    %358 = vmatprep.subr.mxu0 0.0
    %359 = vmatpush1.xpose.msra.mxu0 0.0
    %360 = vmatprep.subr.mxu0 0.0
    %361 = vmatpush1.xpose.msra.mxu0 0.0
    %362 = vmatprep.subr.mxu0 0.0
    %363 = vmatpush1.xpose.msra.mxu0 0.0
    %364 = vmatprep.subr.mxu0 0.0
    %365 = vmatpush1.xpose.msra.mxu0 0.0
    %366 = vmatprep.subr.mxu0 0.0
    %367 = vmatpush1.xpose.msra.mxu0 0.0
    %368 = vmatprep.subr.mxu0 0.0
    %369 = vmatpush1.xpose.msra.mxu0 0.0
    %370 = vmatprep.subr.mxu0 0.0
    %371 = vmatpush1.xpose.msra.mxu0 0.0
    %372 = vmatprep.subr.mxu0 0.0
    %373 = vmatpush1.xpose.msra.mxu0 0.0
    %374 = vmatprep.subr.mxu0 0.0
    %375 = vmatpush1.xpose.msra.mxu0 0.0
    %376 = vmatprep.subr.mxu0 0.0
    %377 = vmatpush1.xpose.msra.mxu0 0.0
    %378 = vmatprep.subr.mxu0 0.0
    %379 = vmatpush1.xpose.msra.mxu0 0.0
    %380 = vmatprep.subr.mxu0 0.0
    %381 = vmatpush1.xpose.msra.mxu0 0.0
    %382 = vmatprep.subr.mxu0 0.0
    %383 = vmatpush1.xpose.msra.mxu0 0.0
    %384 = vmatprep.subr.mxu0 0.0
    %385 = vmatpush1.xpose.msra.mxu0 0.0
    %386 = vmatprep.subr.mxu0 0.0
    %387 = vmatpush1.xpose.msra.mxu0 0.0
    %388 = vmatprep.subr.mxu0 0.0
    %389 = vmatpush1.xpose.msra.mxu0 0.0
    %390 = vmatprep.subr.mxu0 0.0
    %391 = vmatpush1.xpose.msra.mxu0 0.0
    %392 = vmatprep.subr.mxu0 0.0
    %393 = vmatpush1.xpose.msra.mxu0 0.0
    %394 = vmatprep.subr.mxu0 0.0
    %395 = vmatpush1.xpose.msra.mxu0 0.0
    %396 = vmatprep.subr.mxu0 0.0
    %397 = vmatpush1.xpose.msra.mxu0 0.0
    %398 = vmatprep.mubr.f32.mxu0 0.0
    %399 = vmatmul.mubr.f32.gmra.mrb[0].mxu0 %v330
    %v400 = vpop.f32.mrb[0].mxu0
    %v401 = vadd.f32 0.0, %v400
    %v402 = vpop.f32.mrb[0].mxu0
    %403 = vdwg.mxu0
    %v405 = vunpack.c.l.s4 1983009808
    %v406 = vunpack.c.0.s8 %v405
    %v407 = vlaneseq
    %v408 = vshrl.u32 %v407, 7
    %v409 = vsub.s32 %v406, %v408
    %v410 = vrot.slane %v310, %v409
    %411 = vrot.lane.b32.xlu0 %v410, 64
    %v412 = vpop.permute.xlu0 %411
    %v413 = vsel %vm329, %v301, 0
    %v415 = vsel %vm329, %v412, 0
    %417 = vmatprep.subr.mxu0 0.0
    %418 = vmatpush1.xpose.msra.mxu0 %v415
    %419 = vmatprep.subr.mxu0 0.0
    %420 = vmatpush1.xpose.msra.mxu0 0.0
    %421 = vmatprep.subr.mxu0 0.0
    %422 = vmatpush1.xpose.msra.mxu0 0.0
    %423 = vmatprep.subr.mxu0 0.0
    %424 = vmatpush1.xpose.msra.mxu0 0.0
    %425 = vmatprep.subr.mxu0 0.0
    %426 = vmatpush1.xpose.msra.mxu0 0.0
    %427 = vmatprep.subr.mxu0 0.0
    %428 = vmatpush1.xpose.msra.mxu0 0.0
    %429 = vmatprep.subr.mxu0 0.0
    %430 = vmatpush1.xpose.msra.mxu0 0.0
    %431 = vmatprep.subr.mxu0 0.0
    %432 = vmatpush1.xpose.msra.mxu0 0.0
    %433 = vmatprep.subr.mxu0 0.0
    %434 = vmatpush1.xpose.msra.mxu0 0.0
    %435 = vmatprep.subr.mxu0 0.0
    %436 = vmatpush1.xpose.msra.mxu0 0.0
    %437 = vmatprep.subr.mxu0 0.0
    %438 = vmatpush1.xpose.msra.mxu0 0.0
    %439 = vmatprep.subr.mxu0 0.0
    %440 = vmatpush1.xpose.msra.mxu0 0.0
    %441 = vmatprep.subr.mxu0 0.0
    %442 = vmatpush1.xpose.msra.mxu0 0.0
    %443 = vmatprep.subr.mxu0 0.0
    %444 = vmatpush1.xpose.msra.mxu0 0.0
    %445 = vmatprep.subr.mxu0 0.0
    %446 = vmatpush1.xpose.msra.mxu0 0.0
    %447 = vmatprep.subr.mxu0 0.0
    %448 = vmatpush1.xpose.msra.mxu0 0.0
    %449 = vmatprep.subr.mxu0 0.0
    %450 = vmatpush1.xpose.msra.mxu0 0.0
    %451 = vmatprep.subr.mxu0 0.0
    %452 = vmatpush1.xpose.msra.mxu0 0.0
    %453 = vmatprep.subr.mxu0 0.0
    %454 = vmatpush1.xpose.msra.mxu0 0.0
    %455 = vmatprep.subr.mxu0 0.0
    %456 = vmatpush1.xpose.msra.mxu0 0.0
    %457 = vmatprep.subr.mxu0 0.0
    %458 = vmatpush1.xpose.msra.mxu0 0.0
    %459 = vmatprep.subr.mxu0 0.0
    %460 = vmatpush1.xpose.msra.mxu0 0.0
    %461 = vmatprep.subr.mxu0 0.0
    %462 = vmatpush1.xpose.msra.mxu0 0.0
    %463 = vmatprep.subr.mxu0 0.0
    %464 = vmatpush1.xpose.msra.mxu0 0.0
    %465 = vmatprep.subr.mxu0 0.0
    %466 = vmatpush1.xpose.msra.mxu0 0.0
    %467 = vmatprep.subr.mxu0 0.0
    %468 = vmatpush1.xpose.msra.mxu0 0.0
    %469 = vmatprep.subr.mxu0 0.0
    %470 = vmatpush1.xpose.msra.mxu0 0.0
    %471 = vmatprep.subr.mxu0 0.0
    %472 = vmatpush1.xpose.msra.mxu0 0.0
    %473 = vmatprep.subr.mxu0 0.0
    %474 = vmatpush1.xpose.msra.mxu0 0.0
    %475 = vmatprep.subr.mxu0 0.0
    %476 = vmatpush1.xpose.msra.mxu0 0.0
    %477 = vmatprep.subr.mxu0 0.0
    %478 = vmatpush1.xpose.msra.mxu0 0.0
    %479 = vmatprep.subr.mxu0 0.0
    %480 = vmatpush1.xpose.msra.mxu0 0.0
    %481 = vmatprep.mubr.f32.mxu0 0.0
    %482 = vmatmul.mubr.f32.gmra.mrb[0].mxu0 %v413
    %v483 = vpop.f32.mrb[0].mxu0
    %v484 = vadd.f32 0.0, %v483
    %v485 = vpop.f32.mrb[0].mxu0
    %486 = vdwg.mxu0
    %v487 = vmul.f32 %v401, 0.25
    %v488 = vmul.f32 %v484, 0.25
    %vm489 = vcmask 9216
    %v490 = vsel %vm489, %v487, -inf
    %491 = vmax.xlane.f32.xlu0 %v490
    %v492 = vpop.xlane.xlu0 %491
    %v493 = vsel %vm489, %v488, -inf
    %494 = vmax.xlane.f32.xlu0 %v493
    %v495 = vpop.xlane.xlu0 %494
    %v496 = vsub.f32 %v487, %v492
    %v497 = vsub.f32 %v488, %v495
    %v498 = vmul.f32 %v496, 1.442695
    %v499 = vpow.pop %v498
    %v500 = vmul.f32 %v497, 1.442695
    %v501 = vpow.pop %v500
    %v502 = vsel %vm489, %v499, 0.0
    %503 = vadd.xlane.f32.xlu0 %v502
    %v504 = vpop.xlane.xlu0 %503
    %v505 = vsel %vm489, %v501, 0.0
    %506 = vadd.xlane.f32.xlu0 %v505
    %v507 = vpop.xlane.xlu0 %506
    %v508 = vrcp.pop %v504
    %v509 = vrcp.pop %v507
    %v510 = vmul.f32 %v499, %v508
    %v511 = vmul.f32 %v501, %v509
    %vm512 = vcmask 15360
    %v514 = vsel %vm512, %v510, 0
    %vm516 = vcmask 1041408
    %v517 = vsel %vm516, %v318, 0
    %519 = vmatprep.subr.mxu0 0.0
    %520 = vmatpush1.msra.mxu0 %v517
    %521 = vmatprep.subr.mxu0 0.0
    %522 = vmatpush1.msra.mxu0 0.0
    %523 = vmatprep.subr.mxu0 0.0
    %524 = vmatpush1.msra.mxu0 0.0
    %525 = vmatprep.subr.mxu0 0.0
    %526 = vmatpush1.msra.mxu0 0.0
    %527 = vmatprep.subr.mxu0 0.0
    %528 = vmatpush1.msra.mxu0 0.0
    %529 = vmatprep.subr.mxu0 0.0
    %530 = vmatpush1.msra.mxu0 0.0
    %531 = vmatprep.subr.mxu0 0.0
    %532 = vmatpush1.msra.mxu0 0.0
    %533 = vmatprep.subr.mxu0 0.0
    %534 = vmatpush1.msra.mxu0 0.0
    %535 = vmatprep.subr.mxu0 0.0
    %536 = vmatpush1.msra.mxu0 0.0
    %537 = vmatprep.subr.mxu0 0.0
    %538 = vmatpush1.msra.mxu0 0.0
    %539 = vmatprep.subr.mxu0 0.0
    %540 = vmatpush1.msra.mxu0 0.0
    %541 = vmatprep.subr.mxu0 0.0
    %542 = vmatpush1.msra.mxu0 0.0
    %543 = vmatprep.subr.mxu0 0.0
    %544 = vmatpush1.msra.mxu0 0.0
    %545 = vmatprep.subr.mxu0 0.0
    %546 = vmatpush1.msra.mxu0 0.0
    %547 = vmatprep.subr.mxu0 0.0
    %548 = vmatpush1.msra.mxu0 0.0
    %549 = vmatprep.subr.mxu0 0.0
    %550 = vmatpush1.msra.mxu0 0.0
    %551 = vmatprep.subr.mxu0 0.0
    %552 = vmatpush1.msra.mxu0 0.0
    %553 = vmatprep.subr.mxu0 0.0
    %554 = vmatpush1.msra.mxu0 0.0
    %555 = vmatprep.subr.mxu0 0.0
    %556 = vmatpush1.msra.mxu0 0.0
    %557 = vmatprep.subr.mxu0 0.0
    %558 = vmatpush1.msra.mxu0 0.0
    %559 = vmatprep.subr.mxu0 0.0
    %560 = vmatpush1.msra.mxu0 0.0
    %561 = vmatprep.subr.mxu0 0.0
    %562 = vmatpush1.msra.mxu0 0.0
    %563 = vmatprep.subr.mxu0 0.0
    %564 = vmatpush1.msra.mxu0 0.0
    %565 = vmatprep.subr.mxu0 0.0
    %566 = vmatpush1.msra.mxu0 0.0
    %567 = vmatprep.subr.mxu0 0.0
    %568 = vmatpush1.msra.mxu0 0.0
    %569 = vmatprep.subr.mxu0 0.0
    %570 = vmatpush1.msra.mxu0 0.0
    %571 = vmatprep.subr.mxu0 0.0
    %572 = vmatpush1.msra.mxu0 0.0
    %573 = vmatprep.subr.mxu0 0.0
    %574 = vmatpush1.msra.mxu0 0.0
    %575 = vmatprep.subr.mxu0 0.0
    %576 = vmatpush1.msra.mxu0 0.0
    %577 = vmatprep.subr.mxu0 0.0
    %578 = vmatpush1.msra.mxu0 0.0
    %579 = vmatprep.subr.mxu0 0.0
    %580 = vmatpush1.msra.mxu0 0.0
    %581 = vmatprep.subr.mxu0 0.0
    %582 = vmatpush1.msra.mxu0 0.0
    %583 = vmatprep.mubr.f32.mxu0 0.0
    %584 = vmatmul.mubr.f32.gmra.mrb[0].mxu0 %v514
    %v585 = vpop.f32.mrb[0].mxu0
    %v586 = vadd.f32 0.0, %v585
    %v587 = vpop.f32.mrb[0].mxu0
    %588 = vdwg.mxu0
    %v590 = vsel %vm512, %v511, 0
    %v592 = vsel %vm516, %v319, 0
    %594 = vmatprep.subr.mxu0 0.0
    %595 = vmatpush1.msra.mxu0 %v592
    %596 = vmatprep.subr.mxu0 0.0
    %597 = vmatpush1.msra.mxu0 0.0
    %598 = vmatprep.subr.mxu0 0.0
    %599 = vmatpush1.msra.mxu0 0.0
    %600 = vmatprep.subr.mxu0 0.0
    %601 = vmatpush1.msra.mxu0 0.0
    %602 = vmatprep.subr.mxu0 0.0
    %603 = vmatpush1.msra.mxu0 0.0
    %604 = vmatprep.subr.mxu0 0.0
    %605 = vmatpush1.msra.mxu0 0.0
    %606 = vmatprep.subr.mxu0 0.0
    %607 = vmatpush1.msra.mxu0 0.0
    %608 = vmatprep.subr.mxu0 0.0
    %609 = vmatpush1.msra.mxu0 0.0
    %610 = vmatprep.subr.mxu0 0.0
    %611 = vmatpush1.msra.mxu0 0.0
    %612 = vmatprep.subr.mxu0 0.0
    %613 = vmatpush1.msra.mxu0 0.0
    %614 = vmatprep.subr.mxu0 0.0
    %615 = vmatpush1.msra.mxu0 0.0
    %616 = vmatprep.subr.mxu0 0.0
    %617 = vmatpush1.msra.mxu0 0.0
    %618 = vmatprep.subr.mxu0 0.0
    %619 = vmatpush1.msra.mxu0 0.0
    %620 = vmatprep.subr.mxu0 0.0
    %621 = vmatpush1.msra.mxu0 0.0
    %622 = vmatprep.subr.mxu0 0.0
    %623 = vmatpush1.msra.mxu0 0.0
    %624 = vmatprep.subr.mxu0 0.0
    %625 = vmatpush1.msra.mxu0 0.0
    %626 = vmatprep.subr.mxu0 0.0
    %627 = vmatpush1.msra.mxu0 0.0
    %628 = vmatprep.subr.mxu0 0.0
    %629 = vmatpush1.msra.mxu0 0.0
    %630 = vmatprep.subr.mxu0 0.0
    %631 = vmatpush1.msra.mxu0 0.0
    %632 = vmatprep.subr.mxu0 0.0
    %633 = vmatpush1.msra.mxu0 0.0
    %634 = vmatprep.subr.mxu0 0.0
    %635 = vmatpush1.msra.mxu0 0.0
    %636 = vmatprep.subr.mxu0 0.0
    %637 = vmatpush1.msra.mxu0 0.0
    %638 = vmatprep.subr.mxu0 0.0
    %639 = vmatpush1.msra.mxu0 0.0
    %640 = vmatprep.subr.mxu0 0.0
    %641 = vmatpush1.msra.mxu0 0.0
    %642 = vmatprep.subr.mxu0 0.0
    %643 = vmatpush1.msra.mxu0 0.0
    %644 = vmatprep.subr.mxu0 0.0
    %645 = vmatpush1.msra.mxu0 0.0
    %646 = vmatprep.subr.mxu0 0.0
    %647 = vmatpush1.msra.mxu0 0.0
    %648 = vmatprep.subr.mxu0 0.0
    %649 = vmatpush1.msra.mxu0 0.0
    %650 = vmatprep.subr.mxu0 0.0
    %651 = vmatpush1.msra.mxu0 0.0
    %652 = vmatprep.subr.mxu0 0.0
    %653 = vmatpush1.msra.mxu0 0.0
    %654 = vmatprep.subr.mxu0 0.0
    %655 = vmatpush1.msra.mxu0 0.0
    %656 = vmatprep.subr.mxu0 0.0
    %657 = vmatpush1.msra.mxu0 0.0
    %658 = vmatprep.mubr.f32.mxu0 0.0
    %659 = vmatmul.mubr.f32.gmra.mrb[0].mxu0 %v590
    %v660 = vpop.f32.mrb[0].mxu0
    %v661 = vadd.f32 0.0, %v660
    %v662 = vpop.f32.mrb[0].mxu0
    %663 = vdwg.mxu0
    %v665 = vunpack.c.l.s4 1983009808
    %v666 = vunpack.c.0.s8 %v665
    %v667 = vlaneseq
    %v668 = vshrl.u32 %v667, 7
    %v669 = vsub.s32 %v666, %v668
    %v670 = vrot.slane %v300, %v669
    %671 = vrot.lane.b32.xlu0 %v670, 112
    %v672 = vpop.permute.xlu0 %671
    %673 = vrot.lane.b32.xlu0 %v326, 48
    %v674 = vpop.permute.xlu0 %673
    %v675 = vsel %vm329, %v672, 0
    %v677 = vsel %vm329, %v674, 0
    %679 = vmatprep.subr.mxu0 0.0
    %680 = vmatpush1.xpose.msra.mxu0 %v677
    %681 = vmatprep.subr.mxu0 0.0
    %682 = vmatpush1.xpose.msra.mxu0 0.0
    %683 = vmatprep.subr.mxu0 0.0
    %684 = vmatpush1.xpose.msra.mxu0 0.0
    %685 = vmatprep.subr.mxu0 0.0
    %686 = vmatpush1.xpose.msra.mxu0 0.0
    %687 = vmatprep.subr.mxu0 0.0
    %688 = vmatpush1.xpose.msra.mxu0 0.0
    %689 = vmatprep.subr.mxu0 0.0
    %690 = vmatpush1.xpose.msra.mxu0 0.0
    %691 = vmatprep.subr.mxu0 0.0
    %692 = vmatpush1.xpose.msra.mxu0 0.0
    %693 = vmatprep.subr.mxu0 0.0
    %694 = vmatpush1.xpose.msra.mxu0 0.0
    %695 = vmatprep.subr.mxu0 0.0
    %696 = vmatpush1.xpose.msra.mxu0 0.0
    %697 = vmatprep.subr.mxu0 0.0
    %698 = vmatpush1.xpose.msra.mxu0 0.0
    %699 = vmatprep.subr.mxu0 0.0
    %700 = vmatpush1.xpose.msra.mxu0 0.0
    %701 = vmatprep.subr.mxu0 0.0
    %702 = vmatpush1.xpose.msra.mxu0 0.0
    %703 = vmatprep.subr.mxu0 0.0
    %704 = vmatpush1.xpose.msra.mxu0 0.0
    %705 = vmatprep.subr.mxu0 0.0
    %706 = vmatpush1.xpose.msra.mxu0 0.0
    %707 = vmatprep.subr.mxu0 0.0
    %708 = vmatpush1.xpose.msra.mxu0 0.0
    %709 = vmatprep.subr.mxu0 0.0
    %710 = vmatpush1.xpose.msra.mxu0 0.0
    %711 = vmatprep.subr.mxu0 0.0
    %712 = vmatpush1.xpose.msra.mxu0 0.0
    %713 = vmatprep.subr.mxu0 0.0
    %714 = vmatpush1.xpose.msra.mxu0 0.0
    %715 = vmatprep.subr.mxu0 0.0
    %716 = vmatpush1.xpose.msra.mxu0 0.0
    %717 = vmatprep.subr.mxu0 0.0
    %718 = vmatpush1.xpose.msra.mxu0 0.0
    %719 = vmatprep.subr.mxu0 0.0
    %720 = vmatpush1.xpose.msra.mxu0 0.0
    %721 = vmatprep.subr.mxu0 0.0
    %722 = vmatpush1.xpose.msra.mxu0 0.0
    %723 = vmatprep.subr.mxu0 0.0
    %724 = vmatpush1.xpose.msra.mxu0 0.0
    %725 = vmatprep.subr.mxu0 0.0
    %726 = vmatpush1.xpose.msra.mxu0 0.0
    %727 = vmatprep.subr.mxu0 0.0
    %728 = vmatpush1.xpose.msra.mxu0 0.0
    %729 = vmatprep.subr.mxu0 0.0
    %730 = vmatpush1.xpose.msra.mxu0 0.0
    %731 = vmatprep.subr.mxu0 0.0
    %732 = vmatpush1.xpose.msra.mxu0 0.0
    %733 = vmatprep.subr.mxu0 0.0
    %734 = vmatpush1.xpose.msra.mxu0 0.0
    %735 = vmatprep.subr.mxu0 0.0
    %736 = vmatpush1.xpose.msra.mxu0 0.0
    %737 = vmatprep.subr.mxu0 0.0
    %738 = vmatpush1.xpose.msra.mxu0 0.0
    %739 = vmatprep.subr.mxu0 0.0
    %740 = vmatpush1.xpose.msra.mxu0 0.0
    %741 = vmatprep.subr.mxu0 0.0
    %742 = vmatpush1.xpose.msra.mxu0 0.0
    %743 = vmatprep.mubr.f32.mxu0 0.0
    %744 = vmatmul.mubr.f32.gmra.mrb[0].mxu0 %v675
    %v745 = vpop.f32.mrb[0].mxu0
    %v746 = vadd.f32 0.0, %v745
    %v747 = vpop.f32.mrb[0].mxu0
    %748 = vdwg.mxu0
    %v750 = vunpack.c.l.s4 1983009808
    %v751 = vunpack.c.0.s8 %v750
    %v752 = vlaneseq
    %v753 = vshrl.u32 %v752, 7
    %v754 = vsub.s32 %v751, %v753
    %v755 = vrot.slane %v301, %v754
    %756 = vrot.lane.b32.xlu0 %v755, 112
    %v757 = vpop.permute.xlu0 %756
    %758 = vrot.lane.b32.xlu0 %v410, 48
    %v759 = vpop.permute.xlu0 %758
    %v760 = vsel %vm329, %v757, 0
    %v762 = vsel %vm329, %v759, 0
    %764 = vmatprep.subr.mxu0 0.0
    %765 = vmatpush1.xpose.msra.mxu0 %v762
    %766 = vmatprep.subr.mxu0 0.0
    %767 = vmatpush1.xpose.msra.mxu0 0.0
    %768 = vmatprep.subr.mxu0 0.0
    %769 = vmatpush1.xpose.msra.mxu0 0.0
    %770 = vmatprep.subr.mxu0 0.0
    %771 = vmatpush1.xpose.msra.mxu0 0.0
    %772 = vmatprep.subr.mxu0 0.0
    %773 = vmatpush1.xpose.msra.mxu0 0.0
    %774 = vmatprep.subr.mxu0 0.0
    %775 = vmatpush1.xpose.msra.mxu0 0.0
    %776 = vmatprep.subr.mxu0 0.0
    %777 = vmatpush1.xpose.msra.mxu0 0.0
    %778 = vmatprep.subr.mxu0 0.0
    %779 = vmatpush1.xpose.msra.mxu0 0.0
    %780 = vmatprep.subr.mxu0 0.0
    %781 = vmatpush1.xpose.msra.mxu0 0.0
    %782 = vmatprep.subr.mxu0 0.0
    %783 = vmatpush1.xpose.msra.mxu0 0.0
    %784 = vmatprep.subr.mxu0 0.0
    %785 = vmatpush1.xpose.msra.mxu0 0.0
    %786 = vmatprep.subr.mxu0 0.0
    %787 = vmatpush1.xpose.msra.mxu0 0.0
    %788 = vmatprep.subr.mxu0 0.0
    %789 = vmatpush1.xpose.msra.mxu0 0.0
    %790 = vmatprep.subr.mxu0 0.0
    %791 = vmatpush1.xpose.msra.mxu0 0.0
    %792 = vmatprep.subr.mxu0 0.0
    %793 = vmatpush1.xpose.msra.mxu0 0.0
    %794 = vmatprep.subr.mxu0 0.0
    %795 = vmatpush1.xpose.msra.mxu0 0.0
    %796 = vmatprep.subr.mxu0 0.0
    %797 = vmatpush1.xpose.msra.mxu0 0.0
    %798 = vmatprep.subr.mxu0 0.0
    %799 = vmatpush1.xpose.msra.mxu0 0.0
    %800 = vmatprep.subr.mxu0 0.0
    %801 = vmatpush1.xpose.msra.mxu0 0.0
    %802 = vmatprep.subr.mxu0 0.0
    %803 = vmatpush1.xpose.msra.mxu0 0.0
    %804 = vmatprep.subr.mxu0 0.0
    %805 = vmatpush1.xpose.msra.mxu0 0.0
    %806 = vmatprep.subr.mxu0 0.0
    %807 = vmatpush1.xpose.msra.mxu0 0.0
    %808 = vmatprep.subr.mxu0 0.0
    %809 = vmatpush1.xpose.msra.mxu0 0.0
    %810 = vmatprep.subr.mxu0 0.0
    %811 = vmatpush1.xpose.msra.mxu0 0.0
    %812 = vmatprep.subr.mxu0 0.0
    %813 = vmatpush1.xpose.msra.mxu0 0.0
    %814 = vmatprep.subr.mxu0 0.0
    %815 = vmatpush1.xpose.msra.mxu0 0.0
    %816 = vmatprep.subr.mxu0 0.0
    %817 = vmatpush1.xpose.msra.mxu0 0.0
    %818 = vmatprep.subr.mxu0 0.0
    %819 = vmatpush1.xpose.msra.mxu0 0.0
    %820 = vmatprep.subr.mxu0 0.0
    %821 = vmatpush1.xpose.msra.mxu0 0.0
    %822 = vmatprep.subr.mxu0 0.0
    %823 = vmatpush1.xpose.msra.mxu0 0.0
    %824 = vmatprep.subr.mxu0 0.0
    %825 = vmatpush1.xpose.msra.mxu0 0.0
    %826 = vmatprep.subr.mxu0 0.0
    %827 = vmatpush1.xpose.msra.mxu0 0.0
    %828 = vmatprep.mubr.f32.mxu0 0.0
    %829 = vmatmul.mubr.f32.gmra.mrb[0].mxu0 %v760
    %v830 = vpop.f32.mrb[0].mxu0
    %v831 = vadd.f32 0.0, %v830
    %v832 = vpop.f32.mrb[0].mxu0
    %833 = vdwg.mxu0
    %v834 = vmul.f32 %v746, 0.25
    %v835 = vmul.f32 %v831, 0.25
    %v836 = vsel %vm489, %v834, -inf
    %837 = vmax.xlane.f32.xlu0 %v836
    %v838 = vpop.xlane.xlu0 %837
    %v839 = vsel %vm489, %v835, -inf
    %840 = vmax.xlane.f32.xlu0 %v839
    %v841 = vpop.xlane.xlu0 %840
    %v842 = vsub.f32 %v834, %v838
    %v843 = vsub.f32 %v835, %v841
    %v844 = vmul.f32 %v842, 1.442695
    %v845 = vpow.pop %v844
    %v846 = vmul.f32 %v843, 1.442695
    %v847 = vpow.pop %v846
    %v848 = vsel %vm489, %v845, 0.0
    %849 = vadd.xlane.f32.xlu0 %v848
    %v850 = vpop.xlane.xlu0 %849
    %v851 = vsel %vm489, %v847, 0.0
    %852 = vadd.xlane.f32.xlu0 %v851
    %v853 = vpop.xlane.xlu0 %852
    %v854 = vrcp.pop %v850
    %v855 = vrcp.pop %v853
    %v856 = vmul.f32 %v845, %v854
    %v857 = vmul.f32 %v847, %v855
    %v859 = vunpack.c.l.s4 1983009808
    %v860 = vunpack.c.0.s8 %v859
    %v861 = vlaneseq
    %v862 = vshrl.u32 %v861, 7
    %v863 = vsub.s32 %v860, %v862
    %v864 = vrot.slane %v318, %v863
    %865 = vrot.lane.b32.xlu0 %v864, 112
    %v866 = vpop.permute.xlu0 %865
    %v868 = vsel %vm512, %v856, 0
    %v870 = vsel %vm516, %v866, 0
    %872 = vmatprep.subr.mxu0 0.0
    %873 = vmatpush1.msra.mxu0 %v870
    %874 = vmatprep.subr.mxu0 0.0
    %875 = vmatpush1.msra.mxu0 0.0
    %876 = vmatprep.subr.mxu0 0.0
    %877 = vmatpush1.msra.mxu0 0.0
    %878 = vmatprep.subr.mxu0 0.0
    %879 = vmatpush1.msra.mxu0 0.0
    %880 = vmatprep.subr.mxu0 0.0
    %881 = vmatpush1.msra.mxu0 0.0
    %882 = vmatprep.subr.mxu0 0.0
    %883 = vmatpush1.msra.mxu0 0.0
    %884 = vmatprep.subr.mxu0 0.0
    %885 = vmatpush1.msra.mxu0 0.0
    %886 = vmatprep.subr.mxu0 0.0
    %887 = vmatpush1.msra.mxu0 0.0
    %888 = vmatprep.subr.mxu0 0.0
    %889 = vmatpush1.msra.mxu0 0.0
    %890 = vmatprep.subr.mxu0 0.0
    %891 = vmatpush1.msra.mxu0 0.0
    %892 = vmatprep.subr.mxu0 0.0
    %893 = vmatpush1.msra.mxu0 0.0
    %894 = vmatprep.subr.mxu0 0.0
    %895 = vmatpush1.msra.mxu0 0.0
    %896 = vmatprep.subr.mxu0 0.0
    %897 = vmatpush1.msra.mxu0 0.0
    %898 = vmatprep.subr.mxu0 0.0
    %899 = vmatpush1.msra.mxu0 0.0
    %900 = vmatprep.subr.mxu0 0.0
    %901 = vmatpush1.msra.mxu0 0.0
    %902 = vmatprep.subr.mxu0 0.0
    %903 = vmatpush1.msra.mxu0 0.0
    %904 = vmatprep.subr.mxu0 0.0
    %905 = vmatpush1.msra.mxu0 0.0
    %906 = vmatprep.subr.mxu0 0.0
    %907 = vmatpush1.msra.mxu0 0.0
    %908 = vmatprep.subr.mxu0 0.0
    %909 = vmatpush1.msra.mxu0 0.0
    %910 = vmatprep.subr.mxu0 0.0
    %911 = vmatpush1.msra.mxu0 0.0
    %912 = vmatprep.subr.mxu0 0.0
    %913 = vmatpush1.msra.mxu0 0.0
    %914 = vmatprep.subr.mxu0 0.0
    %915 = vmatpush1.msra.mxu0 0.0
    %916 = vmatprep.subr.mxu0 0.0
    %917 = vmatpush1.msra.mxu0 0.0
    %918 = vmatprep.subr.mxu0 0.0
    %919 = vmatpush1.msra.mxu0 0.0
    %920 = vmatprep.subr.mxu0 0.0
    %921 = vmatpush1.msra.mxu0 0.0
    %922 = vmatprep.subr.mxu0 0.0
    %923 = vmatpush1.msra.mxu0 0.0
    %924 = vmatprep.subr.mxu0 0.0
    %925 = vmatpush1.msra.mxu0 0.0
    %926 = vmatprep.subr.mxu0 0.0
    %927 = vmatpush1.msra.mxu0 0.0
    %928 = vmatprep.subr.mxu0 0.0
    %929 = vmatpush1.msra.mxu0 0.0
    %930 = vmatprep.subr.mxu0 0.0
    %931 = vmatpush1.msra.mxu0 0.0
    %932 = vmatprep.subr.mxu0 0.0
    %933 = vmatpush1.msra.mxu0 0.0
    %934 = vmatprep.subr.mxu0 0.0
    %935 = vmatpush1.msra.mxu0 0.0
    %936 = vmatprep.mubr.f32.mxu0 0.0
    %937 = vmatmul.mubr.f32.gmra.mrb[0].mxu0 %v868
    %v938 = vpop.f32.mrb[0].mxu0
    %v939 = vadd.f32 0.0, %v938
    %v940 = vpop.f32.mrb[0].mxu0
    %941 = vdwg.mxu0
    %v943 = vunpack.c.l.s4 1983009808
    %v944 = vunpack.c.0.s8 %v943
    %v945 = vlaneseq
    %v946 = vshrl.u32 %v945, 7
    %v947 = vsub.s32 %v944, %v946
    %v948 = vrot.slane %v319, %v947
    %949 = vrot.lane.b32.xlu0 %v948, 112
    %v950 = vpop.permute.xlu0 %949
    %v952 = vsel %vm512, %v857, 0
    %v954 = vsel %vm516, %v950, 0
    %956 = vmatprep.subr.mxu0 0.0
    %957 = vmatpush1.msra.mxu0 %v954
    %958 = vmatprep.subr.mxu0 0.0
    %959 = vmatpush1.msra.mxu0 0.0
    %960 = vmatprep.subr.mxu0 0.0
    %961 = vmatpush1.msra.mxu0 0.0
    %962 = vmatprep.subr.mxu0 0.0
    %963 = vmatpush1.msra.mxu0 0.0
    %964 = vmatprep.subr.mxu0 0.0
    %965 = vmatpush1.msra.mxu0 0.0
    %966 = vmatprep.subr.mxu0 0.0
    %967 = vmatpush1.msra.mxu0 0.0
    %968 = vmatprep.subr.mxu0 0.0
    %969 = vmatpush1.msra.mxu0 0.0
    %970 = vmatprep.subr.mxu0 0.0
    %971 = vmatpush1.msra.mxu0 0.0
    %972 = vmatprep.subr.mxu0 0.0
    %973 = vmatpush1.msra.mxu0 0.0
    %974 = vmatprep.subr.mxu0 0.0
    %975 = vmatpush1.msra.mxu0 0.0
    %976 = vmatprep.subr.mxu0 0.0
    %977 = vmatpush1.msra.mxu0 0.0
    %978 = vmatprep.subr.mxu0 0.0
    %979 = vmatpush1.msra.mxu0 0.0
    %980 = vmatprep.subr.mxu0 0.0
    %981 = vmatpush1.msra.mxu0 0.0
    %982 = vmatprep.subr.mxu0 0.0
    %983 = vmatpush1.msra.mxu0 0.0
    %984 = vmatprep.subr.mxu0 0.0
    %985 = vmatpush1.msra.mxu0 0.0
    %986 = vmatprep.subr.mxu0 0.0
    %987 = vmatpush1.msra.mxu0 0.0
    %988 = vmatprep.subr.mxu0 0.0
    %989 = vmatpush1.msra.mxu0 0.0
    %990 = vmatprep.subr.mxu0 0.0
    %991 = vmatpush1.msra.mxu0 0.0
    %992 = vmatprep.subr.mxu0 0.0
    %993 = vmatpush1.msra.mxu0 0.0
    %994 = vmatprep.subr.mxu0 0.0
    %995 = vmatpush1.msra.mxu0 0.0
    %996 = vmatprep.subr.mxu0 0.0
    %997 = vmatpush1.msra.mxu0 0.0
    %998 = vmatprep.subr.mxu0 0.0
    %999 = vmatpush1.msra.mxu0 0.0
    %1000 = vmatprep.subr.mxu0 0.0
    %1001 = vmatpush1.msra.mxu0 0.0
    %1002 = vmatprep.subr.mxu0 0.0
    %1003 = vmatpush1.msra.mxu0 0.0
    %1004 = vmatprep.subr.mxu0 0.0
    %1005 = vmatpush1.msra.mxu0 0.0
    %1006 = vmatprep.subr.mxu0 0.0
    %1007 = vmatpush1.msra.mxu0 0.0
    %1008 = vmatprep.subr.mxu0 0.0
    %1009 = vmatpush1.msra.mxu0 0.0
    %1010 = vmatprep.subr.mxu0 0.0
    %1011 = vmatpush1.msra.mxu0 0.0
    %1012 = vmatprep.subr.mxu0 0.0
    %1013 = vmatpush1.msra.mxu0 0.0
    %1014 = vmatprep.subr.mxu0 0.0
    %1015 = vmatpush1.msra.mxu0 0.0
    %1016 = vmatprep.subr.mxu0 0.0
    %1017 = vmatpush1.msra.mxu0 0.0
    %1018 = vmatprep.subr.mxu0 0.0
    %1019 = vmatpush1.msra.mxu0 0.0
    %1020 = vmatprep.mubr.f32.mxu0 0.0
    %1021 = vmatmul.mubr.f32.gmra.mrb[0].mxu0 %v952
    %v1022 = vpop.f32.mrb[0].mxu0
    %v1023 = vadd.f32 0.0, %v1022
    %v1024 = vpop.f32.mrb[0].mxu0
    %1025 = vdwg.mxu0
    %1026 = vrot.lane.b32.xlu0 %v670, 96
    %v1027 = vpop.permute.xlu0 %1026
    %1028 = vrot.lane.b32.xlu0 %v326, 32
    %v1029 = vpop.permute.xlu0 %1028
    %v1030 = vsel %vm329, %v1027, 0
    %v1032 = vsel %vm329, %v1029, 0
    %1034 = vmatprep.subr.mxu0 0.0
    %1035 = vmatpush1.xpose.msra.mxu0 %v1032
    %1036 = vmatprep.subr.mxu0 0.0
    %1037 = vmatpush1.xpose.msra.mxu0 0.0
    %1038 = vmatprep.subr.mxu0 0.0
    %1039 = vmatpush1.xpose.msra.mxu0 0.0
    %1040 = vmatprep.subr.mxu0 0.0
    %1041 = vmatpush1.xpose.msra.mxu0 0.0
    %1042 = vmatprep.subr.mxu0 0.0
    %1043 = vmatpush1.xpose.msra.mxu0 0.0
    %1044 = vmatprep.subr.mxu0 0.0
    %1045 = vmatpush1.xpose.msra.mxu0 0.0
    %1046 = vmatprep.subr.mxu0 0.0
    %1047 = vmatpush1.xpose.msra.mxu0 0.0
    %1048 = vmatprep.subr.mxu0 0.0
    %1049 = vmatpush1.xpose.msra.mxu0 0.0
    %1050 = vmatprep.subr.mxu0 0.0
    %1051 = vmatpush1.xpose.msra.mxu0 0.0
    %1052 = vmatprep.subr.mxu0 0.0
    %1053 = vmatpush1.xpose.msra.mxu0 0.0
    %1054 = vmatprep.subr.mxu0 0.0
    %1055 = vmatpush1.xpose.msra.mxu0 0.0
    %1056 = vmatprep.subr.mxu0 0.0
    %1057 = vmatpush1.xpose.msra.mxu0 0.0
    %1058 = vmatprep.subr.mxu0 0.0
    %1059 = vmatpush1.xpose.msra.mxu0 0.0
    %1060 = vmatprep.subr.mxu0 0.0
    %1061 = vmatpush1.xpose.msra.mxu0 0.0
    %1062 = vmatprep.subr.mxu0 0.0
    %1063 = vmatpush1.xpose.msra.mxu0 0.0
    %1064 = vmatprep.subr.mxu0 0.0
    %1065 = vmatpush1.xpose.msra.mxu0 0.0
    %1066 = vmatprep.subr.mxu0 0.0
    %1067 = vmatpush1.xpose.msra.mxu0 0.0
    %1068 = vmatprep.subr.mxu0 0.0
    %1069 = vmatpush1.xpose.msra.mxu0 0.0
    %1070 = vmatprep.subr.mxu0 0.0
    %1071 = vmatpush1.xpose.msra.mxu0 0.0
    %1072 = vmatprep.subr.mxu0 0.0
    %1073 = vmatpush1.xpose.msra.mxu0 0.0
    %1074 = vmatprep.subr.mxu0 0.0
    %1075 = vmatpush1.xpose.msra.mxu0 0.0
    %1076 = vmatprep.subr.mxu0 0.0
    %1077 = vmatpush1.xpose.msra.mxu0 0.0
    %1078 = vmatprep.subr.mxu0 0.0
    %1079 = vmatpush1.xpose.msra.mxu0 0.0
    %1080 = vmatprep.subr.mxu0 0.0
    %1081 = vmatpush1.xpose.msra.mxu0 0.0
    %1082 = vmatprep.subr.mxu0 0.0
    %1083 = vmatpush1.xpose.msra.mxu0 0.0
    %1084 = vmatprep.subr.mxu0 0.0
    %1085 = vmatpush1.xpose.msra.mxu0 0.0
    %1086 = vmatprep.subr.mxu0 0.0
    %1087 = vmatpush1.xpose.msra.mxu0 0.0
    %1088 = vmatprep.subr.mxu0 0.0
    %1089 = vmatpush1.xpose.msra.mxu0 0.0
    %1090 = vmatprep.subr.mxu0 0.0
    %1091 = vmatpush1.xpose.msra.mxu0 0.0
    %1092 = vmatprep.subr.mxu0 0.0
    %1093 = vmatpush1.xpose.msra.mxu0 0.0
    %1094 = vmatprep.subr.mxu0 0.0
    %1095 = vmatpush1.xpose.msra.mxu0 0.0
    %1096 = vmatprep.subr.mxu0 0.0
    %1097 = vmatpush1.xpose.msra.mxu0 0.0
    %1098 = vmatprep.mubr.f32.mxu0 0.0
    %1099 = vmatmul.mubr.f32.gmra.mrb[0].mxu0 %v1030
    %v1100 = vpop.f32.mrb[0].mxu0
    %v1101 = vadd.f32 0.0, %v1100
    %v1102 = vpop.f32.mrb[0].mxu0
    %1103 = vdwg.mxu0
    %1104 = vrot.lane.b32.xlu0 %v755, 96
    %v1105 = vpop.permute.xlu0 %1104
    %1106 = vrot.lane.b32.xlu0 %v410, 32
    %v1107 = vpop.permute.xlu0 %1106
    %v1108 = vsel %vm329, %v1105, 0
    %v1110 = vsel %vm329, %v1107, 0
    %1112 = vmatprep.subr.mxu0 0.0
    %1113 = vmatpush1.xpose.msra.mxu0 %v1110
    %1114 = vmatprep.subr.mxu0 0.0
    %1115 = vmatpush1.xpose.msra.mxu0 0.0
    %1116 = vmatprep.subr.mxu0 0.0
    %1117 = vmatpush1.xpose.msra.mxu0 0.0
    %1118 = vmatprep.subr.mxu0 0.0
    %1119 = vmatpush1.xpose.msra.mxu0 0.0
    %1120 = vmatprep.subr.mxu0 0.0
    %1121 = vmatpush1.xpose.msra.mxu0 0.0
    %1122 = vmatprep.subr.mxu0 0.0
    %1123 = vmatpush1.xpose.msra.mxu0 0.0
    %1124 = vmatprep.subr.mxu0 0.0
    %1125 = vmatpush1.xpose.msra.mxu0 0.0
    %1126 = vmatprep.subr.mxu0 0.0
    %1127 = vmatpush1.xpose.msra.mxu0 0.0
    %1128 = vmatprep.subr.mxu0 0.0
    %1129 = vmatpush1.xpose.msra.mxu0 0.0
    %1130 = vmatprep.subr.mxu0 0.0
    %1131 = vmatpush1.xpose.msra.mxu0 0.0
    %1132 = vmatprep.subr.mxu0 0.0
    %1133 = vmatpush1.xpose.msra.mxu0 0.0
    %1134 = vmatprep.subr.mxu0 0.0
    %1135 = vmatpush1.xpose.msra.mxu0 0.0
    %1136 = vmatprep.subr.mxu0 0.0
    %1137 = vmatpush1.xpose.msra.mxu0 0.0
    %1138 = vmatprep.subr.mxu0 0.0
    %1139 = vmatpush1.xpose.msra.mxu0 0.0
    %1140 = vmatprep.subr.mxu0 0.0
    %1141 = vmatpush1.xpose.msra.mxu0 0.0
    %1142 = vmatprep.subr.mxu0 0.0
    %1143 = vmatpush1.xpose.msra.mxu0 0.0
    %1144 = vmatprep.subr.mxu0 0.0
    %1145 = vmatpush1.xpose.msra.mxu0 0.0
    %1146 = vmatprep.subr.mxu0 0.0
    %1147 = vmatpush1.xpose.msra.mxu0 0.0
    %1148 = vmatprep.subr.mxu0 0.0
    %1149 = vmatpush1.xpose.msra.mxu0 0.0
    %1150 = vmatprep.subr.mxu0 0.0
    %1151 = vmatpush1.xpose.msra.mxu0 0.0
    %1152 = vmatprep.subr.mxu0 0.0
    %1153 = vmatpush1.xpose.msra.mxu0 0.0
    %1154 = vmatprep.subr.mxu0 0.0
    %1155 = vmatpush1.xpose.msra.mxu0 0.0
    %1156 = vmatprep.subr.mxu0 0.0
    %1157 = vmatpush1.xpose.msra.mxu0 0.0
    %1158 = vmatprep.subr.mxu0 0.0
    %1159 = vmatpush1.xpose.msra.mxu0 0.0
    %1160 = vmatprep.subr.mxu0 0.0
    %1161 = vmatpush1.xpose.msra.mxu0 0.0
    %1162 = vmatprep.subr.mxu0 0.0
    %1163 = vmatpush1.xpose.msra.mxu0 0.0
    %1164 = vmatprep.subr.mxu0 0.0
    %1165 = vmatpush1.xpose.msra.mxu0 0.0
    %1166 = vmatprep.subr.mxu0 0.0
    %1167 = vmatpush1.xpose.msra.mxu0 0.0
    %1168 = vmatprep.subr.mxu0 0.0
    %1169 = vmatpush1.xpose.msra.mxu0 0.0
    %1170 = vmatprep.subr.mxu0 0.0
    %1171 = vmatpush1.xpose.msra.mxu0 0.0
    %1172 = vmatprep.subr.mxu0 0.0
    %1173 = vmatpush1.xpose.msra.mxu0 0.0
    %1174 = vmatprep.subr.mxu0 0.0
    %1175 = vmatpush1.xpose.msra.mxu0 0.0
    %1176 = vmatprep.mubr.f32.mxu0 0.0
    %1177 = vmatmul.mubr.f32.gmra.mrb[0].mxu0 %v1108
    %v1178 = vpop.f32.mrb[0].mxu0
    %v1179 = vadd.f32 0.0, %v1178
    %v1180 = vpop.f32.mrb[0].mxu0
    %1181 = vdwg.mxu0
    %v1182 = vmul.f32 %v1101, 0.25
    %v1183 = vmul.f32 %v1179, 0.25
    %v1184 = vsel %vm489, %v1182, -inf
    %1185 = vmax.xlane.f32.xlu0 %v1184
    %v1186 = vpop.xlane.xlu0 %1185
    %v1187 = vsel %vm489, %v1183, -inf
    %1188 = vmax.xlane.f32.xlu0 %v1187
    %v1189 = vpop.xlane.xlu0 %1188
    %v1190 = vsub.f32 %v1182, %v1186
    %v1191 = vsub.f32 %v1183, %v1189
    %v1192 = vmul.f32 %v1190, 1.442695
    %v1193 = vpow.pop %v1192
    %v1194 = vmul.f32 %v1191, 1.442695
    %v1195 = vpow.pop %v1194
    %v1196 = vsel %vm489, %v1193, 0.0
    %1197 = vadd.xlane.f32.xlu0 %v1196
    %v1198 = vpop.xlane.xlu0 %1197
    %v1199 = vsel %vm489, %v1195, 0.0
    %1200 = vadd.xlane.f32.xlu0 %v1199
    %v1201 = vpop.xlane.xlu0 %1200
    %v1202 = vrcp.pop %v1198
    %v1203 = vrcp.pop %v1201
    %v1204 = vmul.f32 %v1193, %v1202
    %v1205 = vmul.f32 %v1195, %v1203
    %1206 = vrot.lane.b32.xlu0 %v864, 96
    %v1207 = vpop.permute.xlu0 %1206
    %v1209 = vsel %vm512, %v1204, 0
    %v1211 = vsel %vm516, %v1207, 0
    %1213 = vmatprep.subr.mxu0 0.0
    %1214 = vmatpush1.msra.mxu0 %v1211
    %1215 = vmatprep.subr.mxu0 0.0
    %1216 = vmatpush1.msra.mxu0 0.0
    %1217 = vmatprep.subr.mxu0 0.0
    %1218 = vmatpush1.msra.mxu0 0.0
    %1219 = vmatprep.subr.mxu0 0.0
    %1220 = vmatpush1.msra.mxu0 0.0
    %1221 = vmatprep.subr.mxu0 0.0
    %1222 = vmatpush1.msra.mxu0 0.0
    %1223 = vmatprep.subr.mxu0 0.0
    %1224 = vmatpush1.msra.mxu0 0.0
    %1225 = vmatprep.subr.mxu0 0.0
    %1226 = vmatpush1.msra.mxu0 0.0
    %1227 = vmatprep.subr.mxu0 0.0
    %1228 = vmatpush1.msra.mxu0 0.0
    %1229 = vmatprep.subr.mxu0 0.0
    %1230 = vmatpush1.msra.mxu0 0.0
    %1231 = vmatprep.subr.mxu0 0.0
    %1232 = vmatpush1.msra.mxu0 0.0
    %1233 = vmatprep.subr.mxu0 0.0
    %1234 = vmatpush1.msra.mxu0 0.0
    %1235 = vmatprep.subr.mxu0 0.0
    %1236 = vmatpush1.msra.mxu0 0.0
    %1237 = vmatprep.subr.mxu0 0.0
    %1238 = vmatpush1.msra.mxu0 0.0
    %1239 = vmatprep.subr.mxu0 0.0
    %1240 = vmatpush1.msra.mxu0 0.0
    %1241 = vmatprep.subr.mxu0 0.0
    %1242 = vmatpush1.msra.mxu0 0.0
    %1243 = vmatprep.subr.mxu0 0.0
    %1244 = vmatpush1.msra.mxu0 0.0
    %1245 = vmatprep.subr.mxu0 0.0
    %1246 = vmatpush1.msra.mxu0 0.0
    %1247 = vmatprep.subr.mxu0 0.0
    %1248 = vmatpush1.msra.mxu0 0.0
    %1249 = vmatprep.subr.mxu0 0.0
    %1250 = vmatpush1.msra.mxu0 0.0
    %1251 = vmatprep.subr.mxu0 0.0
    %1252 = vmatpush1.msra.mxu0 0.0
    %1253 = vmatprep.subr.mxu0 0.0
    %1254 = vmatpush1.msra.mxu0 0.0
    %1255 = vmatprep.subr.mxu0 0.0
    %1256 = vmatpush1.msra.mxu0 0.0
    %1257 = vmatprep.subr.mxu0 0.0
    %1258 = vmatpush1.msra.mxu0 0.0
    %1259 = vmatprep.subr.mxu0 0.0
    %1260 = vmatpush1.msra.mxu0 0.0
    %1261 = vmatprep.subr.mxu0 0.0
    %1262 = vmatpush1.msra.mxu0 0.0
    %1263 = vmatprep.subr.mxu0 0.0
    %1264 = vmatpush1.msra.mxu0 0.0
    %1265 = vmatprep.subr.mxu0 0.0
    %1266 = vmatpush1.msra.mxu0 0.0
    %1267 = vmatprep.subr.mxu0 0.0
    %1268 = vmatpush1.msra.mxu0 0.0
    %1269 = vmatprep.subr.mxu0 0.0
    %1270 = vmatpush1.msra.mxu0 0.0
    %1271 = vmatprep.subr.mxu0 0.0
    %1272 = vmatpush1.msra.mxu0 0.0
    %1273 = vmatprep.subr.mxu0 0.0
    %1274 = vmatpush1.msra.mxu0 0.0
    %1275 = vmatprep.subr.mxu0 0.0
    %1276 = vmatpush1.msra.mxu0 0.0
    %1277 = vmatprep.mubr.f32.mxu0 0.0
    %1278 = vmatmul.mubr.f32.gmra.mrb[0].mxu0 %v1209
    %v1279 = vpop.f32.mrb[0].mxu0
    %v1280 = vadd.f32 0.0, %v1279
    %v1281 = vpop.f32.mrb[0].mxu0
    %1282 = vdwg.mxu0
    %1283 = vrot.lane.b32.xlu0 %v948, 96
    %v1284 = vpop.permute.xlu0 %1283
    %v1286 = vsel %vm512, %v1205, 0
    %v1288 = vsel %vm516, %v1284, 0
    %1290 = vmatprep.subr.mxu0 0.0
    %1291 = vmatpush1.msra.mxu0 %v1288
    %1292 = vmatprep.subr.mxu0 0.0
    %1293 = vmatpush1.msra.mxu0 0.0
    %1294 = vmatprep.subr.mxu0 0.0
    %1295 = vmatpush1.msra.mxu0 0.0
    %1296 = vmatprep.subr.mxu0 0.0
    %1297 = vmatpush1.msra.mxu0 0.0
    %1298 = vmatprep.subr.mxu0 0.0
    %1299 = vmatpush1.msra.mxu0 0.0
    %1300 = vmatprep.subr.mxu0 0.0
    %1301 = vmatpush1.msra.mxu0 0.0
    %1302 = vmatprep.subr.mxu0 0.0
    %1303 = vmatpush1.msra.mxu0 0.0
    %1304 = vmatprep.subr.mxu0 0.0
    %1305 = vmatpush1.msra.mxu0 0.0
    %1306 = vmatprep.subr.mxu0 0.0
    %1307 = vmatpush1.msra.mxu0 0.0
    %1308 = vmatprep.subr.mxu0 0.0
    %1309 = vmatpush1.msra.mxu0 0.0
    %1310 = vmatprep.subr.mxu0 0.0
    %1311 = vmatpush1.msra.mxu0 0.0
    %1312 = vmatprep.subr.mxu0 0.0
    %1313 = vmatpush1.msra.mxu0 0.0
    %1314 = vmatprep.subr.mxu0 0.0
    %1315 = vmatpush1.msra.mxu0 0.0
    %1316 = vmatprep.subr.mxu0 0.0
    %1317 = vmatpush1.msra.mxu0 0.0
    %1318 = vmatprep.subr.mxu0 0.0
    %1319 = vmatpush1.msra.mxu0 0.0
    %1320 = vmatprep.subr.mxu0 0.0
    %1321 = vmatpush1.msra.mxu0 0.0
    %1322 = vmatprep.subr.mxu0 0.0
    %1323 = vmatpush1.msra.mxu0 0.0
    %1324 = vmatprep.subr.mxu0 0.0
    %1325 = vmatpush1.msra.mxu0 0.0
    %1326 = vmatprep.subr.mxu0 0.0
    %1327 = vmatpush1.msra.mxu0 0.0
    %1328 = vmatprep.subr.mxu0 0.0
    %1329 = vmatpush1.msra.mxu0 0.0
    %1330 = vmatprep.subr.mxu0 0.0
    %1331 = vmatpush1.msra.mxu0 0.0
    %1332 = vmatprep.subr.mxu0 0.0
    %1333 = vmatpush1.msra.mxu0 0.0
    %1334 = vmatprep.subr.mxu0 0.0
    %1335 = vmatpush1.msra.mxu0 0.0
    %1336 = vmatprep.subr.mxu0 0.0
    %1337 = vmatpush1.msra.mxu0 0.0
    %1338 = vmatprep.subr.mxu0 0.0
    %1339 = vmatpush1.msra.mxu0 0.0
    %1340 = vmatprep.subr.mxu0 0.0
    %1341 = vmatpush1.msra.mxu0 0.0
    %1342 = vmatprep.subr.mxu0 0.0
    %1343 = vmatpush1.msra.mxu0 0.0
    %1344 = vmatprep.subr.mxu0 0.0
    %1345 = vmatpush1.msra.mxu0 0.0
    %1346 = vmatprep.subr.mxu0 0.0
    %1347 = vmatpush1.msra.mxu0 0.0
    %1348 = vmatprep.subr.mxu0 0.0
    %1349 = vmatpush1.msra.mxu0 0.0
    %1350 = vmatprep.subr.mxu0 0.0
    %1351 = vmatpush1.msra.mxu0 0.0
    %1352 = vmatprep.subr.mxu0 0.0
    %1353 = vmatpush1.msra.mxu0 0.0
    %1354 = vmatprep.mubr.f32.mxu0 0.0
    %1355 = vmatmul.mubr.f32.gmra.mrb[0].mxu0 %v1286
    %v1356 = vpop.f32.mrb[0].mxu0
    %v1357 = vadd.f32 0.0, %v1356
    %v1358 = vpop.f32.mrb[0].mxu0
    %1359 = vdwg.mxu0
    %1360 = vrot.lane.b32.xlu0 %v670, 80
    %v1361 = vpop.permute.xlu0 %1360
    %1362 = vrot.lane.b32.xlu0 %v326, 16
    %v1363 = vpop.permute.xlu0 %1362
    %v1364 = vsel %vm329, %v1361, 0
    %v1366 = vsel %vm329, %v1363, 0
    %1368 = vmatprep.subr.mxu0 0.0
    %1369 = vmatpush1.xpose.msra.mxu0 %v1366
    %1370 = vmatprep.subr.mxu0 0.0
    %1371 = vmatpush1.xpose.msra.mxu0 0.0
    %1372 = vmatprep.subr.mxu0 0.0
    %1373 = vmatpush1.xpose.msra.mxu0 0.0
    %1374 = vmatprep.subr.mxu0 0.0
    %1375 = vmatpush1.xpose.msra.mxu0 0.0
    %1376 = vmatprep.subr.mxu0 0.0
    %1377 = vmatpush1.xpose.msra.mxu0 0.0
    %1378 = vmatprep.subr.mxu0 0.0
    %1379 = vmatpush1.xpose.msra.mxu0 0.0
    %1380 = vmatprep.subr.mxu0 0.0
    %1381 = vmatpush1.xpose.msra.mxu0 0.0
    %1382 = vmatprep.subr.mxu0 0.0
    %1383 = vmatpush1.xpose.msra.mxu0 0.0
    %1384 = vmatprep.subr.mxu0 0.0
    %1385 = vmatpush1.xpose.msra.mxu0 0.0
    %1386 = vmatprep.subr.mxu0 0.0
    %1387 = vmatpush1.xpose.msra.mxu0 0.0
    %1388 = vmatprep.subr.mxu0 0.0
    %1389 = vmatpush1.xpose.msra.mxu0 0.0
    %1390 = vmatprep.subr.mxu0 0.0
    %1391 = vmatpush1.xpose.msra.mxu0 0.0
    %1392 = vmatprep.subr.mxu0 0.0
    %1393 = vmatpush1.xpose.msra.mxu0 0.0
    %1394 = vmatprep.subr.mxu0 0.0
    %1395 = vmatpush1.xpose.msra.mxu0 0.0
    %1396 = vmatprep.subr.mxu0 0.0
    %1397 = vmatpush1.xpose.msra.mxu0 0.0
    %1398 = vmatprep.subr.mxu0 0.0
    %1399 = vmatpush1.xpose.msra.mxu0 0.0
    %1400 = vmatprep.subr.mxu0 0.0
    %1401 = vmatpush1.xpose.msra.mxu0 0.0
    %1402 = vmatprep.subr.mxu0 0.0
    %1403 = vmatpush1.xpose.msra.mxu0 0.0
    %1404 = vmatprep.subr.mxu0 0.0
    %1405 = vmatpush1.xpose.msra.mxu0 0.0
    %1406 = vmatprep.subr.mxu0 0.0
    %1407 = vmatpush1.xpose.msra.mxu0 0.0
    %1408 = vmatprep.subr.mxu0 0.0
    %1409 = vmatpush1.xpose.msra.mxu0 0.0
    %1410 = vmatprep.subr.mxu0 0.0
    %1411 = vmatpush1.xpose.msra.mxu0 0.0
    %1412 = vmatprep.subr.mxu0 0.0
    %1413 = vmatpush1.xpose.msra.mxu0 0.0
    %1414 = vmatprep.subr.mxu0 0.0
    %1415 = vmatpush1.xpose.msra.mxu0 0.0
    %1416 = vmatprep.subr.mxu0 0.0
    %1417 = vmatpush1.xpose.msra.mxu0 0.0
    %1418 = vmatprep.subr.mxu0 0.0
    %1419 = vmatpush1.xpose.msra.mxu0 0.0
    %1420 = vmatprep.subr.mxu0 0.0
    %1421 = vmatpush1.xpose.msra.mxu0 0.0
    %1422 = vmatprep.subr.mxu0 0.0
    %1423 = vmatpush1.xpose.msra.mxu0 0.0
    %1424 = vmatprep.subr.mxu0 0.0
    %1425 = vmatpush1.xpose.msra.mxu0 0.0
    %1426 = vmatprep.subr.mxu0 0.0
    %1427 = vmatpush1.xpose.msra.mxu0 0.0
    %1428 = vmatprep.subr.mxu0 0.0
    %1429 = vmatpush1.xpose.msra.mxu0 0.0
    %1430 = vmatprep.subr.mxu0 0.0
    %1431 = vmatpush1.xpose.msra.mxu0 0.0
    %1432 = vmatprep.mubr.f32.mxu0 0.0
    %1433 = vmatmul.mubr.f32.gmra.mrb[0].mxu0 %v1364
    %v1434 = vpop.f32.mrb[0].mxu0
    %v1435 = vadd.f32 0.0, %v1434
    %v1436 = vpop.f32.mrb[0].mxu0
    %1437 = vdwg.mxu0
    %1438 = vrot.lane.b32.xlu0 %v755, 80
    %v1439 = vpop.permute.xlu0 %1438
    %1440 = vrot.lane.b32.xlu0 %v410, 16
    %v1441 = vpop.permute.xlu0 %1440
    %v1442 = vsel %vm329, %v1439, 0
    %v1444 = vsel %vm329, %v1441, 0
    %1446 = vmatprep.subr.mxu0 0.0
    %1447 = vmatpush1.xpose.msra.mxu0 %v1444
    %1448 = vmatprep.subr.mxu0 0.0
    %1449 = vmatpush1.xpose.msra.mxu0 0.0
    %1450 = vmatprep.subr.mxu0 0.0
    %1451 = vmatpush1.xpose.msra.mxu0 0.0
    %1452 = vmatprep.subr.mxu0 0.0
    %1453 = vmatpush1.xpose.msra.mxu0 0.0
    %1454 = vmatprep.subr.mxu0 0.0
    %1455 = vmatpush1.xpose.msra.mxu0 0.0
    %1456 = vmatprep.subr.mxu0 0.0
    %1457 = vmatpush1.xpose.msra.mxu0 0.0
    %1458 = vmatprep.subr.mxu0 0.0
    %1459 = vmatpush1.xpose.msra.mxu0 0.0
    %1460 = vmatprep.subr.mxu0 0.0
    %1461 = vmatpush1.xpose.msra.mxu0 0.0
    %1462 = vmatprep.subr.mxu0 0.0
    %1463 = vmatpush1.xpose.msra.mxu0 0.0
    %1464 = vmatprep.subr.mxu0 0.0
    %1465 = vmatpush1.xpose.msra.mxu0 0.0
    %1466 = vmatprep.subr.mxu0 0.0
    %1467 = vmatpush1.xpose.msra.mxu0 0.0
    %1468 = vmatprep.subr.mxu0 0.0
    %1469 = vmatpush1.xpose.msra.mxu0 0.0
    %1470 = vmatprep.subr.mxu0 0.0
    %1471 = vmatpush1.xpose.msra.mxu0 0.0
    %1472 = vmatprep.subr.mxu0 0.0
    %1473 = vmatpush1.xpose.msra.mxu0 0.0
    %1474 = vmatprep.subr.mxu0 0.0
    %1475 = vmatpush1.xpose.msra.mxu0 0.0
    %1476 = vmatprep.subr.mxu0 0.0
    %1477 = vmatpush1.xpose.msra.mxu0 0.0
    %1478 = vmatprep.subr.mxu0 0.0
    %1479 = vmatpush1.xpose.msra.mxu0 0.0
    %1480 = vmatprep.subr.mxu0 0.0
    %1481 = vmatpush1.xpose.msra.mxu0 0.0
    %1482 = vmatprep.subr.mxu0 0.0
    %1483 = vmatpush1.xpose.msra.mxu0 0.0
    %1484 = vmatprep.subr.mxu0 0.0
    %1485 = vmatpush1.xpose.msra.mxu0 0.0
    %1486 = vmatprep.subr.mxu0 0.0
    %1487 = vmatpush1.xpose.msra.mxu0 0.0
    %1488 = vmatprep.subr.mxu0 0.0
    %1489 = vmatpush1.xpose.msra.mxu0 0.0
    %1490 = vmatprep.subr.mxu0 0.0
    %1491 = vmatpush1.xpose.msra.mxu0 0.0
    %1492 = vmatprep.subr.mxu0 0.0
    %1493 = vmatpush1.xpose.msra.mxu0 0.0
    %1494 = vmatprep.subr.mxu0 0.0
    %1495 = vmatpush1.xpose.msra.mxu0 0.0
    %1496 = vmatprep.subr.mxu0 0.0
    %1497 = vmatpush1.xpose.msra.mxu0 0.0
    %1498 = vmatprep.subr.mxu0 0.0
    %1499 = vmatpush1.xpose.msra.mxu0 0.0
    %1500 = vmatprep.subr.mxu0 0.0
    %1501 = vmatpush1.xpose.msra.mxu0 0.0
    %1502 = vmatprep.subr.mxu0 0.0
    %1503 = vmatpush1.xpose.msra.mxu0 0.0
    %1504 = vmatprep.subr.mxu0 0.0
    %1505 = vmatpush1.xpose.msra.mxu0 0.0
    %1506 = vmatprep.subr.mxu0 0.0
    %1507 = vmatpush1.xpose.msra.mxu0 0.0
    %1508 = vmatprep.subr.mxu0 0.0
    %1509 = vmatpush1.xpose.msra.mxu0 0.0
    %1510 = vmatprep.mubr.f32.mxu0 0.0
    %1511 = vmatmul.mubr.f32.gmra.mrb[0].mxu0 %v1442
    %v1512 = vpop.f32.mrb[0].mxu0
    %v1513 = vadd.f32 0.0, %v1512
    %v1514 = vpop.f32.mrb[0].mxu0
    %1515 = vdwg.mxu0
    %v1516 = vmul.f32 %v1435, 0.25
    %v1517 = vmul.f32 %v1513, 0.25
    %v1518 = vsel %vm489, %v1516, -inf
    %1519 = vmax.xlane.f32.xlu0 %v1518
    %v1520 = vpop.xlane.xlu0 %1519
    %v1521 = vsel %vm489, %v1517, -inf
    %1522 = vmax.xlane.f32.xlu0 %v1521
    %v1523 = vpop.xlane.xlu0 %1522
    %v1524 = vsub.f32 %v1516, %v1520
    %v1525 = vsub.f32 %v1517, %v1523
    %v1526 = vmul.f32 %v1524, 1.442695
    %v1527 = vpow.pop %v1526
    %v1528 = vmul.f32 %v1525, 1.442695
    %v1529 = vpow.pop %v1528
    %v1530 = vsel %vm489, %v1527, 0.0
    %1531 = vadd.xlane.f32.xlu0 %v1530
    %v1532 = vpop.xlane.xlu0 %1531
    %v1533 = vsel %vm489, %v1529, 0.0
    %1534 = vadd.xlane.f32.xlu0 %v1533
    %v1535 = vpop.xlane.xlu0 %1534
    %v1536 = vrcp.pop %v1532
    %v1537 = vrcp.pop %v1535
    %v1538 = vmul.f32 %v1527, %v1536
    %v1539 = vmul.f32 %v1529, %v1537
    %1540 = vrot.lane.b32.xlu0 %v864, 80
    %v1541 = vpop.permute.xlu0 %1540
    %v1543 = vsel %vm512, %v1538, 0
    %v1545 = vsel %vm516, %v1541, 0
    %1547 = vmatprep.subr.mxu0 0.0
    %1548 = vmatpush1.msra.mxu0 %v1545
    %1549 = vmatprep.subr.mxu0 0.0
    %1550 = vmatpush1.msra.mxu0 0.0
    %1551 = vmatprep.subr.mxu0 0.0
    %1552 = vmatpush1.msra.mxu0 0.0
    %1553 = vmatprep.subr.mxu0 0.0
    %1554 = vmatpush1.msra.mxu0 0.0
    %1555 = vmatprep.subr.mxu0 0.0
    %1556 = vmatpush1.msra.mxu0 0.0
    %1557 = vmatprep.subr.mxu0 0.0
    %1558 = vmatpush1.msra.mxu0 0.0
    %1559 = vmatprep.subr.mxu0 0.0
    %1560 = vmatpush1.msra.mxu0 0.0
    %1561 = vmatprep.subr.mxu0 0.0
    %1562 = vmatpush1.msra.mxu0 0.0
    %1563 = vmatprep.subr.mxu0 0.0
    %1564 = vmatpush1.msra.mxu0 0.0
    %1565 = vmatprep.subr.mxu0 0.0
    %1566 = vmatpush1.msra.mxu0 0.0
    %1567 = vmatprep.subr.mxu0 0.0
    %1568 = vmatpush1.msra.mxu0 0.0
    %1569 = vmatprep.subr.mxu0 0.0
    %1570 = vmatpush1.msra.mxu0 0.0
    %1571 = vmatprep.subr.mxu0 0.0
    %1572 = vmatpush1.msra.mxu0 0.0
    %1573 = vmatprep.subr.mxu0 0.0
    %1574 = vmatpush1.msra.mxu0 0.0
    %1575 = vmatprep.subr.mxu0 0.0
    %1576 = vmatpush1.msra.mxu0 0.0
    %1577 = vmatprep.subr.mxu0 0.0
    %1578 = vmatpush1.msra.mxu0 0.0
    %1579 = vmatprep.subr.mxu0 0.0
    %1580 = vmatpush1.msra.mxu0 0.0
    %1581 = vmatprep.subr.mxu0 0.0
    %1582 = vmatpush1.msra.mxu0 0.0
    %1583 = vmatprep.subr.mxu0 0.0
    %1584 = vmatpush1.msra.mxu0 0.0
    %1585 = vmatprep.subr.mxu0 0.0
    %1586 = vmatpush1.msra.mxu0 0.0
    %1587 = vmatprep.subr.mxu0 0.0
    %1588 = vmatpush1.msra.mxu0 0.0
    %1589 = vmatprep.subr.mxu0 0.0
    %1590 = vmatpush1.msra.mxu0 0.0
    %1591 = vmatprep.subr.mxu0 0.0
    %1592 = vmatpush1.msra.mxu0 0.0
    %1593 = vmatprep.subr.mxu0 0.0
    %1594 = vmatpush1.msra.mxu0 0.0
    %1595 = vmatprep.subr.mxu0 0.0
    %1596 = vmatpush1.msra.mxu0 0.0
    %1597 = vmatprep.subr.mxu0 0.0
    %1598 = vmatpush1.msra.mxu0 0.0
    %1599 = vmatprep.subr.mxu0 0.0
    %1600 = vmatpush1.msra.mxu0 0.0
    %1601 = vmatprep.subr.mxu0 0.0
    %1602 = vmatpush1.msra.mxu0 0.0
    %1603 = vmatprep.subr.mxu0 0.0
    %1604 = vmatpush1.msra.mxu0 0.0
    %1605 = vmatprep.subr.mxu0 0.0
    %1606 = vmatpush1.msra.mxu0 0.0
    %1607 = vmatprep.subr.mxu0 0.0
    %1608 = vmatpush1.msra.mxu0 0.0
    %1609 = vmatprep.subr.mxu0 0.0
    %1610 = vmatpush1.msra.mxu0 0.0
    %1611 = vmatprep.mubr.f32.mxu0 0.0
    %1612 = vmatmul.mubr.f32.gmra.mrb[0].mxu0 %v1543
    %v1613 = vpop.f32.mrb[0].mxu0
    %v1614 = vadd.f32 0.0, %v1613
    %v1615 = vpop.f32.mrb[0].mxu0
    %1616 = vdwg.mxu0
    %1617 = vrot.lane.b32.xlu0 %v948, 80
    %v1618 = vpop.permute.xlu0 %1617
    %v1620 = vsel %vm512, %v1539, 0
    %v1622 = vsel %vm516, %v1618, 0
    %1624 = vmatprep.subr.mxu0 0.0
    %1625 = vmatpush1.msra.mxu0 %v1622
    %1626 = vmatprep.subr.mxu0 0.0
    %1627 = vmatpush1.msra.mxu0 0.0
    %1628 = vmatprep.subr.mxu0 0.0
    %1629 = vmatpush1.msra.mxu0 0.0
    %1630 = vmatprep.subr.mxu0 0.0
    %1631 = vmatpush1.msra.mxu0 0.0
    %1632 = vmatprep.subr.mxu0 0.0
    %1633 = vmatpush1.msra.mxu0 0.0
    %1634 = vmatprep.subr.mxu0 0.0
    %1635 = vmatpush1.msra.mxu0 0.0
    %1636 = vmatprep.subr.mxu0 0.0
    %1637 = vmatpush1.msra.mxu0 0.0
    %1638 = vmatprep.subr.mxu0 0.0
    %1639 = vmatpush1.msra.mxu0 0.0
    %1640 = vmatprep.subr.mxu0 0.0
    %1641 = vmatpush1.msra.mxu0 0.0
    %1642 = vmatprep.subr.mxu0 0.0
    %1643 = vmatpush1.msra.mxu0 0.0
    %1644 = vmatprep.subr.mxu0 0.0
    %1645 = vmatpush1.msra.mxu0 0.0
    %1646 = vmatprep.subr.mxu0 0.0
    %1647 = vmatpush1.msra.mxu0 0.0
    %1648 = vmatprep.subr.mxu0 0.0
    %1649 = vmatpush1.msra.mxu0 0.0
    %1650 = vmatprep.subr.mxu0 0.0
    %1651 = vmatpush1.msra.mxu0 0.0
    %1652 = vmatprep.subr.mxu0 0.0
    %1653 = vmatpush1.msra.mxu0 0.0
    %1654 = vmatprep.subr.mxu0 0.0
    %1655 = vmatpush1.msra.mxu0 0.0
    %1656 = vmatprep.subr.mxu0 0.0
    %1657 = vmatpush1.msra.mxu0 0.0
    %1658 = vmatprep.subr.mxu0 0.0
    %1659 = vmatpush1.msra.mxu0 0.0
    %1660 = vmatprep.subr.mxu0 0.0
    %1661 = vmatpush1.msra.mxu0 0.0
    %1662 = vmatprep.subr.mxu0 0.0
    %1663 = vmatpush1.msra.mxu0 0.0
    %1664 = vmatprep.subr.mxu0 0.0
    %1665 = vmatpush1.msra.mxu0 0.0
    %1666 = vmatprep.subr.mxu0 0.0
    %1667 = vmatpush1.msra.mxu0 0.0
    %1668 = vmatprep.subr.mxu0 0.0
    %1669 = vmatpush1.msra.mxu0 0.0
    %1670 = vmatprep.subr.mxu0 0.0
    %1671 = vmatpush1.msra.mxu0 0.0
    %1672 = vmatprep.subr.mxu0 0.0
    %1673 = vmatpush1.msra.mxu0 0.0
    %1674 = vmatprep.subr.mxu0 0.0
    %1675 = vmatpush1.msra.mxu0 0.0
    %1676 = vmatprep.subr.mxu0 0.0
    %1677 = vmatpush1.msra.mxu0 0.0
    %1678 = vmatprep.subr.mxu0 0.0
    %1679 = vmatpush1.msra.mxu0 0.0
    %1680 = vmatprep.subr.mxu0 0.0
    %1681 = vmatpush1.msra.mxu0 0.0
    %1682 = vmatprep.subr.mxu0 0.0
    %1683 = vmatpush1.msra.mxu0 0.0
    %1684 = vmatprep.subr.mxu0 0.0
    %1685 = vmatpush1.msra.mxu0 0.0
    %1686 = vmatprep.subr.mxu0 0.0
    %1687 = vmatpush1.msra.mxu0 0.0
    %1688 = vmatprep.mubr.f32.mxu0 0.0
    %1689 = vmatmul.mubr.f32.gmra.mrb[0].mxu0 %v1620
    %v1690 = vpop.f32.mrb[0].mxu0
    %v1691 = vadd.f32 0.0, %v1690
    %v1692 = vpop.f32.mrb[0].mxu0
    %1693 = vdwg.mxu0
    %v1696 = vcombine.low %v586, %v661
    %v1698 = vunpack.c.l.s4 1983009808
    %v1699 = vunpack.c.0.s8 %v1698
    %v1700 = vlaneseq
    %v1701 = vshrl.u32 %v1700, 7
    %v1702 = vsub.s32 %v1699, %v1701
    %v1703 = vrot.slane %v1696, %v1702
    %v1707 = vcombine.low %v939, %v1023
    %v1709 = vunpack.c.l.s4 1983009808
    %v1710 = vunpack.c.0.s8 %v1709
    %v1711 = vlaneseq
    %v1712 = vshrl.u32 %v1711, 7
    %v1713 = vsub.s32 %v1710, %v1712
    %v1714 = vrot.slane %v1707, %v1713
    %1715 = vrot.lane.b32.xlu0 %v1714, 16
    %v1716 = vpop.permute.xlu0 %1715
    %v1720 = vcombine.low %v1280, %v1357
    %v1722 = vunpack.c.l.s4 1983009808
    %v1723 = vunpack.c.0.s8 %v1722
    %v1724 = vlaneseq
    %v1725 = vshrl.u32 %v1724, 7
    %v1726 = vsub.s32 %v1723, %v1725
    %v1727 = vrot.slane %v1720, %v1726
    %1728 = vrot.lane.b32.xlu0 %v1727, 32
    %v1729 = vpop.permute.xlu0 %1728
    %v1733 = vcombine.low %v1614, %v1691
    %v1735 = vunpack.c.l.s4 1983009808
    %v1736 = vunpack.c.0.s8 %v1735
    %v1737 = vlaneseq
    %v1738 = vshrl.u32 %v1737, 7
    %v1739 = vsub.s32 %v1736, %v1738
    %v1740 = vrot.slane %v1733, %v1739
    %1741 = vrot.lane.b32.xlu0 %v1740, 48
    %v1742 = vpop.permute.xlu0 %1741
    %v1744 = vsel %vm329, %v1703, %v1716
    %vm1745 = vcmask 261120
    %v1746 = vsel %vm1745, %v1744, %v1729
    %vm1747 = vcmask 392192
    %v1748 = vsel %vm1747, %v1746, %v1742
    %v1749 = vld [vmem:[%s5] sm:$0xf]
    %v1750 = vld [vmem:[%s5 + $0x4] sm:$0xf]
    %v1751 = vld [vmem:[%s5 + $0x8] sm:$0xf]
    %v1752 = vld [vmem:[%s5 + $0xc] sm:$0xf]
    %v1753 = vld [vmem:[%s5 + $0x10] sm:$0xf]
    %v1754 = vld [vmem:[%s5 + $0x14] sm:$0xf]
    %v1755 = vld [vmem:[%s5 + $0x18] sm:$0xf]
    %v1756 = vld [vmem:[%s5 + $0x1c] sm:$0xf]
    %v1757 = vpack.c.bf16 %v1748, %v1748
    %v1758 = vlaneseq
    %v1759 = vshrl.u32 %v1758, 7
    %v1760 = vsub.s32 3, %v1759
    %v1761 = vrot.slane %v167, %v1760
    %v1770 = vunpack.c.l.b16 %v1749
    %v1771 = vunpack.c.l.b16 %v1750
    %v1772 = vunpack.c.l.b16 %v1751
    %v1773 = vunpack.c.l.b16 %v1752
    %v1774 = vunpack.c.l.b16 %v1753
    %v1775 = vunpack.c.l.b16 %v1754
    %v1776 = vunpack.c.l.b16 %v1755
    %v1777 = vunpack.c.l.b16 %v1756
    %v1778 = vpack.c.b16 %v1771, %v1770
    %v1779 = vpack.c.b16 %v1773, %v1772
    %v1780 = vpack.c.b16 %v1775, %v1774
    %v1781 = vpack.c.b16 %v1777, %v1776
    %v1787 = vsel %vm229, %v1757, 0
    %1789 = vmatprep.subr.bf16.mxu0 0
    %1790 = vmatpush1.bf16.msra.mxu0 %v1778
    %1791 = vmatprep.subr.bf16.mxu0 0
    %1792 = vmatpush1.bf16.msra.mxu0 %v1779
    %1793 = vmatprep.subr.bf16.mxu0 0
    %1794 = vmatpush1.bf16.msra.mxu0 %v1780
    %1795 = vmatprep.subr.bf16.mxu0 0
    %1796 = vmatpush1.bf16.msra.mxu0 %v1781
    %1797 = vmatprep.subr.bf16.mxu0 0
    %1798 = vmatpush1.bf16.msra.mxu0 0
    %1799 = vmatprep.subr.bf16.mxu0 0
    %1800 = vmatpush1.bf16.msra.mxu0 0
    %1801 = vmatprep.subr.bf16.mxu0 0
    %1802 = vmatpush1.bf16.msra.mxu0 0
    %1803 = vmatprep.subr.bf16.mxu0 0
    %1804 = vmatpush1.bf16.msra.mxu0 0
    %1805 = vmatprep.subr.bf16.mxu0 0
    %1806 = vmatpush1.bf16.msra.mxu0 0
    %1807 = vmatprep.subr.bf16.mxu0 0
    %1808 = vmatpush1.bf16.msra.mxu0 0
    %1809 = vmatprep.subr.bf16.mxu0 0
    %1810 = vmatpush1.bf16.msra.mxu0 0
    %1811 = vmatprep.subr.bf16.mxu0 0
    %1812 = vmatpush1.bf16.msra.mxu0 0
    %1813 = vmatprep.subr.bf16.mxu0 0
    %1814 = vmatpush1.bf16.msra.mxu0 0
    %1815 = vmatprep.subr.bf16.mxu0 0
    %1816 = vmatpush1.bf16.msra.mxu0 0
    %1817 = vmatprep.subr.bf16.mxu0 0
    %1818 = vmatpush1.bf16.msra.mxu0 0
    %1819 = vmatprep.subr.bf16.mxu0 0
    %1820 = vmatpush1.bf16.msra.mxu0 0
    %1821 = vmatprep.mubr.bf16.mxu0 0
    %1822 = vmatmul.mubr.bf16.gmra.mrb[0].mxu0 %v1787
    %v1823 = vpop.f32.mrb[0].mxu0
    %v1824 = vadd.f32 %v1761, %v1823
    %v1825 = vpop.f32.mrb[0].mxu0
    %v1826 = vpop.f32.mrb[0].mxu0
    %v1827 = vpop.f32.mrb[0].mxu0
    %1828 = vdwg.mxu0
    %v1831 = vunpack.c.l.s4 1983009808
    %v1832 = vunpack.c.0.s8 %v1831
    %v1833 = vlaneseq
    %v1834 = vshrl.u32 %v1833, 7
    %v1835 = vsub.s32 %v1832, %v1834
    %v1836 = vrot.slane %v1824, %v1835
    %v1837 = vcombine.high %v1836, %v1836
    %v1840 = vadd.f32 %v165, %v1836
    %v1841 = vadd.f32 %v166, %v1837
    %v1844 = vcombine.low %v1840, %v1841
    %v1846 = vunpack.c.l.s4 1983009808
    %v1847 = vunpack.c.0.s8 %v1846
    %v1848 = vlaneseq
    %v1849 = vshrl.u32 %v1848, 7
    %v1850 = vsub.s32 %v1847, %v1849
    %v1851 = vrot.slane %v1844, %v1850
    %vm1853 = vcmask 519168
    %v1854 = vsel %vm1853, %v1851, 0.0
    %1855 = vadd.xlane.f32.xlu0 %v1854
    %v1856 = vpop.xlane.xlu0 %1855
    %v1857 = vrcp.pop 64.0
    %v1858 = vmul.f32 %v1856, %v1857
    %v1861 = vunpack.c.l.s4 269488144
    %v1862 = vunpack.c.0.s8 %v1861
    %v1863 = vlaneseq
    %v1864 = vshrl.u32 %v1863, 7
    %v1865 = vsub.s32 %v1862, %v1864
    %v1866 = vrot.slane %v1858, %v1865
    %v1868 = vunpack.c.l.s4 842150450
    %v1869 = vunpack.c.0.s8 %v1868
    %v1870 = vlaneseq
    %v1871 = vshrl.u32 %v1870, 7
    %v1872 = vsub.s32 %v1869, %v1871
    %v1873 = vrot.slane %v1858, %v1872
    %v1876 = vsub.f32 %v1840, %v1866
    %v1877 = vsub.f32 %v1841, %v1873
    %v1878 = vmul.f32 %v1876, %v1876
    %v1879 = vmul.f32 %v1877, %v1877
    %v1882 = vcombine.low %v1878, %v1879
    %v1884 = vunpack.c.l.s4 1983009808
    %v1885 = vunpack.c.0.s8 %v1884
    %v1886 = vlaneseq
    %v1887 = vshrl.u32 %v1886, 7
    %v1888 = vsub.s32 %v1885, %v1887
    %v1889 = vrot.slane %v1882, %v1888
    %v1891 = vsel %vm1853, %v1889, 0.0
    %1892 = vadd.xlane.f32.xlu0 %v1891
    %v1893 = vpop.xlane.xlu0 %1892
    %v1894 = vmul.f32 %v1893, %v1857
    %v1895 = vadd.f32 %v1894, 1e-05
    %v1896 = vrsqrt.pop %v1895
    %v1899 = vunpack.c.l.s4 269488144
    %v1900 = vunpack.c.0.s8 %v1899
    %v1901 = vlaneseq
    %v1902 = vshrl.u32 %v1901, 7
    %v1903 = vsub.s32 %v1900, %v1902
    %v1904 = vrot.slane %v1896, %v1903
    %v1906 = vunpack.c.l.s4 842150450
    %v1907 = vunpack.c.0.s8 %v1906
    %v1908 = vlaneseq
    %v1909 = vshrl.u32 %v1908, 7
    %v1910 = vsub.s32 %v1907, %v1909
    %v1911 = vrot.slane %v1896, %v1910
    %v1914 = vmul.f32 %v1876, %v1904
    %v1915 = vmul.f32 %v1877, %v1911
    %v1916 = vlaneseq
    %v1917 = vshrl.u32 %v1916, 7
    %v1918 = vsub.s32 4, %v1917
    %v1919 = vrot.slane %v167, %v1918
    %v1922 = vunpack.c.l.s4 1983009808
    %v1923 = vunpack.c.0.s8 %v1922
    %v1924 = vlaneseq
    %v1925 = vshrl.u32 %v1924, 7
    %v1926 = vsub.s32 %v1923, %v1925
    %v1927 = vrot.slane %v1919, %v1926
    %v1928 = vcombine.high %v1927, %v1927
    %v1931 = vmul.f32 %v1914, %v1927
    %v1932 = vmul.f32 %v1915, %v1928
    %v1933 = vlaneseq
    %v1934 = vshrl.u32 %v1933, 7
    %v1935 = vsub.s32 5, %v1934
    %v1936 = vrot.slane %v167, %v1935
    %v1939 = vunpack.c.l.s4 1983009808
    %v1940 = vunpack.c.0.s8 %v1939
    %v1941 = vlaneseq
    %v1942 = vshrl.u32 %v1941, 7
    %v1943 = vsub.s32 %v1940, %v1942
    %v1944 = vrot.slane %v1936, %v1943
    %v1945 = vcombine.high %v1944, %v1944
    %v1948 = vadd.f32 %v1931, %v1944
    %v1949 = vadd.f32 %v1932, %v1945
    %v1950 = vld [vmem:[%s6] sm:$0xff]
    %v1951 = vld [vmem:[%s6 + $0x8] sm:$0xff]
    %v1952 = vld [vmem:[%s6 + $0x10] sm:$0xff]
    %v1953 = vld [vmem:[%s6 + $0x18] sm:$0xff]
    %v1954 = vld [vmem:[%s6 + $0x20] sm:$0xff]
    %v1955 = vld [vmem:[%s6 + $0x28] sm:$0xff]
    %v1956 = vld [vmem:[%s6 + $0x30] sm:$0xff]
    %v1957 = vld [vmem:[%s6 + $0x38] sm:$0xff]
    %v1958 = vld [vmem:[%s6 + $0x40] sm:$0xff]
    %v1959 = vld [vmem:[%s6 + $0x48] sm:$0xff]
    %v1960 = vld [vmem:[%s6 + $0x50] sm:$0xff]
    %v1961 = vld [vmem:[%s6 + $0x58] sm:$0xff]
    %v1962 = vld [vmem:[%s6 + $0x60] sm:$0xff]
    %v1963 = vld [vmem:[%s6 + $0x68] sm:$0xff]
    %v1964 = vld [vmem:[%s6 + $0x70] sm:$0xff]
    %v1965 = vld [vmem:[%s6 + $0x78] sm:$0xff]
    %v1966 = vld [vmem:[%s6 + $0x80] sm:$0xff]
    %v1967 = vld [vmem:[%s6 + $0x88] sm:$0xff]
    %v1968 = vld [vmem:[%s6 + $0x90] sm:$0xff]
    %v1969 = vld [vmem:[%s6 + $0x98] sm:$0xff]
    %v1970 = vld [vmem:[%s6 + $0xa0] sm:$0xff]
    %v1971 = vld [vmem:[%s6 + $0xa8] sm:$0xff]
    %v1972 = vld [vmem:[%s6 + $0xb0] sm:$0xff]
    %v1973 = vld [vmem:[%s6 + $0xb8] sm:$0xff]
    %v1974 = vld [vmem:[%s6 + $0xc0] sm:$0xff]
    %v1975 = vld [vmem:[%s6 + $0xc8] sm:$0xff]
    %v1976 = vld [vmem:[%s6 + $0xd0] sm:$0xff]
    %v1977 = vld [vmem:[%s6 + $0xd8] sm:$0xff]
    %v1978 = vld [vmem:[%s6 + $0xe0] sm:$0xff]
    %v1979 = vld [vmem:[%s6 + $0xe8] sm:$0xff]
    %v1980 = vld [vmem:[%s6 + $0xf0] sm:$0xff]
    %v1981 = vld [vmem:[%s6 + $0xf8] sm:$0xff]
    %v1982 = vld [vmem:[%s6 + $0x100] sm:$0xff]
    %v1983 = vld [vmem:[%s6 + $0x108] sm:$0xff]
    %v1984 = vld [vmem:[%s6 + $0x110] sm:$0xff]
    %v1985 = vld [vmem:[%s6 + $0x118] sm:$0xff]
    %v1986 = vld [vmem:[%s6 + $0x120] sm:$0xff]
    %v1987 = vld [vmem:[%s6 + $0x128] sm:$0xff]
    %v1988 = vld [vmem:[%s6 + $0x130] sm:$0xff]
    %v1989 = vld [vmem:[%s6 + $0x138] sm:$0xff]
    %v1990 = vld [vmem:[%s6 + $0x140] sm:$0xff]
    %v1991 = vld [vmem:[%s6 + $0x148] sm:$0xff]
    %v1992 = vld [vmem:[%s6 + $0x150] sm:$0xff]
    %v1993 = vld [vmem:[%s6 + $0x158] sm:$0xff]
    %v1994 = vld [vmem:[%s6 + $0x160] sm:$0xff]
    %v1995 = vld [vmem:[%s6 + $0x168] sm:$0xff]
    %v1996 = vld [vmem:[%s6 + $0x170] sm:$0xff]
    %v1997 = vld [vmem:[%s6 + $0x178] sm:$0xff]
    %v1998 = vld [vmem:[%s6 + $0x180] sm:$0xff]
    %v1999 = vld [vmem:[%s6 + $0x188] sm:$0xff]
    %v2000 = vld [vmem:[%s6 + $0x190] sm:$0xff]
    %v2001 = vld [vmem:[%s6 + $0x198] sm:$0xff]
    %v2002 = vld [vmem:[%s6 + $0x1a0] sm:$0xff]
    %v2003 = vld [vmem:[%s6 + $0x1a8] sm:$0xff]
    %v2004 = vld [vmem:[%s6 + $0x1b0] sm:$0xff]
    %v2005 = vld [vmem:[%s6 + $0x1b8] sm:$0xff]
    %v2006 = vld [vmem:[%s6 + $0x1c0] sm:$0xff]
    %v2007 = vld [vmem:[%s6 + $0x1c8] sm:$0xff]
    %v2008 = vld [vmem:[%s6 + $0x1d0] sm:$0xff]
    %v2009 = vld [vmem:[%s6 + $0x1d8] sm:$0xff]
    %v2010 = vld [vmem:[%s6 + $0x1e0] sm:$0xff]
    %v2011 = vld [vmem:[%s6 + $0x1e8] sm:$0xff]
    %v2012 = vld [vmem:[%s6 + $0x1f0] sm:$0xff]
    %v2013 = vld [vmem:[%s6 + $0x1f8] sm:$0xff]
    %v2016 = vcombine.low %v1948, %v1949
    %v2018 = vunpack.c.l.s4 1983009808
    %v2019 = vunpack.c.0.s8 %v2018
    %v2020 = vlaneseq
    %v2021 = vshrl.u32 %v2020, 7
    %v2022 = vsub.s32 %v2019, %v2021
    %v2023 = vrot.slane %v2016, %v2022
    %v2025 = vpack.c.bf16 %v2023, %v2023
    %v2026 = vld [vmem:[%s7] sm:$0xff]
    %v2027 = vld [vmem:[%s7 + $0x8] sm:$0xff]
    %v2030 = vlaneseq
    %v2031 = vshrl.u32 %v2030, 7
    %v2032 = vsub.s32 0, %v2031
    %v2033 = vrot.slane %v2026, %v2032
    %v2034 = vlaneseq
    %v2035 = vshrl.u32 %v2034, 7
    %v2036 = vsub.s32 1, %v2035
    %v2037 = vrot.slane %v2026, %v2036
    %v2038 = vlaneseq
    %v2039 = vshrl.u32 %v2038, 7
    %v2040 = vsub.s32 2, %v2039
    %v2041 = vrot.slane %v2026, %v2040
    %v2042 = vlaneseq
    %v2043 = vshrl.u32 %v2042, 7
    %v2044 = vsub.s32 3, %v2043
    %v2045 = vrot.slane %v2026, %v2044
    %v2046 = vlaneseq
    %v2047 = vshrl.u32 %v2046, 7
    %v2048 = vsub.s32 4, %v2047
    %v2049 = vrot.slane %v2026, %v2048
    %v2050 = vlaneseq
    %v2051 = vshrl.u32 %v2050, 7
    %v2052 = vsub.s32 5, %v2051
    %v2053 = vrot.slane %v2026, %v2052
    %v2054 = vlaneseq
    %v2055 = vshrl.u32 %v2054, 7
    %v2056 = vsub.s32 6, %v2055
    %v2057 = vrot.slane %v2026, %v2056
    %v2058 = vlaneseq
    %v2059 = vshrl.u32 %v2058, 7
    %v2060 = vsub.s32 7, %v2059
    %v2061 = vrot.slane %v2026, %v2060
    %v2062 = vlaneseq
    %v2063 = vshrl.u32 %v2062, 7
    %v2064 = vsub.s32 0, %v2063
    %v2065 = vrot.slane %v2027, %v2064
    %v2066 = vlaneseq
    %v2067 = vshrl.u32 %v2066, 7
    %v2068 = vsub.s32 1, %v2067
    %v2069 = vrot.slane %v2027, %v2068
    %v2070 = vlaneseq
    %v2071 = vshrl.u32 %v2070, 7
    %v2072 = vsub.s32 2, %v2071
    %v2073 = vrot.slane %v2027, %v2072
    %v2074 = vlaneseq
    %v2075 = vshrl.u32 %v2074, 7
    %v2076 = vsub.s32 3, %v2075
    %v2077 = vrot.slane %v2027, %v2076
    %v2078 = vlaneseq
    %v2079 = vshrl.u32 %v2078, 7
    %v2080 = vsub.s32 4, %v2079
    %v2081 = vrot.slane %v2027, %v2080
    %v2082 = vlaneseq
    %v2083 = vshrl.u32 %v2082, 7
    %v2084 = vsub.s32 5, %v2083
    %v2085 = vrot.slane %v2027, %v2084
    %v2086 = vlaneseq
    %v2087 = vshrl.u32 %v2086, 7
    %v2088 = vsub.s32 6, %v2087
    %v2089 = vrot.slane %v2027, %v2088
    %v2090 = vlaneseq
    %v2091 = vshrl.u32 %v2090, 7
    %v2092 = vsub.s32 7, %v2091
    %v2093 = vrot.slane %v2027, %v2092
    %v2174 = vunpack.c.l.b16 %v1950
    %v2175 = vunpack.c.h.b16 %v1950
    %v2176 = vunpack.c.l.b16 %v1951
    %v2177 = vunpack.c.h.b16 %v1951
    %v2178 = vunpack.c.l.b16 %v1952
    %v2179 = vunpack.c.h.b16 %v1952
    %v2180 = vunpack.c.l.b16 %v1953
    %v2181 = vunpack.c.h.b16 %v1953
    %v2182 = vunpack.c.l.b16 %v1954
    %v2183 = vunpack.c.h.b16 %v1954
    %v2184 = vunpack.c.l.b16 %v1955
    %v2185 = vunpack.c.h.b16 %v1955
    %v2186 = vunpack.c.l.b16 %v1956
    %v2187 = vunpack.c.h.b16 %v1956
    %v2188 = vunpack.c.l.b16 %v1957
    %v2189 = vunpack.c.h.b16 %v1957
    %v2190 = vunpack.c.l.b16 %v1958
    %v2191 = vunpack.c.h.b16 %v1958
    %v2192 = vunpack.c.l.b16 %v1959
    %v2193 = vunpack.c.h.b16 %v1959
    %v2194 = vunpack.c.l.b16 %v1960
    %v2195 = vunpack.c.h.b16 %v1960
    %v2196 = vunpack.c.l.b16 %v1961
    %v2197 = vunpack.c.h.b16 %v1961
    %v2198 = vunpack.c.l.b16 %v1962
    %v2199 = vunpack.c.h.b16 %v1962
    %v2200 = vunpack.c.l.b16 %v1963
    %v2201 = vunpack.c.h.b16 %v1963
    %v2202 = vunpack.c.l.b16 %v1964
    %v2203 = vunpack.c.h.b16 %v1964
    %v2204 = vunpack.c.l.b16 %v1965
    %v2205 = vunpack.c.h.b16 %v1965
    %v2206 = vunpack.c.l.b16 %v1966
    %v2207 = vunpack.c.h.b16 %v1966
    %v2208 = vunpack.c.l.b16 %v1967
    %v2209 = vunpack.c.h.b16 %v1967
    %v2210 = vunpack.c.l.b16 %v1968
    %v2211 = vunpack.c.h.b16 %v1968
    %v2212 = vunpack.c.l.b16 %v1969
    %v2213 = vunpack.c.h.b16 %v1969
    %v2214 = vunpack.c.l.b16 %v1970
    %v2215 = vunpack.c.h.b16 %v1970
    %v2216 = vunpack.c.l.b16 %v1971
    %v2217 = vunpack.c.h.b16 %v1971
    %v2218 = vunpack.c.l.b16 %v1972
    %v2219 = vunpack.c.h.b16 %v1972
    %v2220 = vunpack.c.l.b16 %v1973
    %v2221 = vunpack.c.h.b16 %v1973
    %v2222 = vunpack.c.l.b16 %v1974
    %v2223 = vunpack.c.h.b16 %v1974
    %v2224 = vunpack.c.l.b16 %v1975
    %v2225 = vunpack.c.h.b16 %v1975
    %v2226 = vunpack.c.l.b16 %v1976
    %v2227 = vunpack.c.h.b16 %v1976
    %v2228 = vunpack.c.l.b16 %v1977
    %v2229 = vunpack.c.h.b16 %v1977
    %v2230 = vunpack.c.l.b16 %v1978
    %v2231 = vunpack.c.h.b16 %v1978
    %v2232 = vunpack.c.l.b16 %v1979
    %v2233 = vunpack.c.h.b16 %v1979
    %v2234 = vunpack.c.l.b16 %v1980
    %v2235 = vunpack.c.h.b16 %v1980
    %v2236 = vunpack.c.l.b16 %v1981
    %v2237 = vunpack.c.h.b16 %v1981
    %v2238 = vunpack.c.l.b16 %v1982
    %v2239 = vunpack.c.h.b16 %v1982
    %v2240 = vunpack.c.l.b16 %v1983
    %v2241 = vunpack.c.h.b16 %v1983
    %v2242 = vunpack.c.l.b16 %v1984
    %v2243 = vunpack.c.h.b16 %v1984
    %v2244 = vunpack.c.l.b16 %v1985
    %v2245 = vunpack.c.h.b16 %v1985
    %v2246 = vunpack.c.l.b16 %v1986
    %v2247 = vunpack.c.h.b16 %v1986
    %v2248 = vunpack.c.l.b16 %v1987
    %v2249 = vunpack.c.h.b16 %v1987
    %v2250 = vunpack.c.l.b16 %v1988
    %v2251 = vunpack.c.h.b16 %v1988
    %v2252 = vunpack.c.l.b16 %v1989
    %v2253 = vunpack.c.h.b16 %v1989
    %v2254 = vunpack.c.l.b16 %v1990
    %v2255 = vunpack.c.h.b16 %v1990
    %v2256 = vunpack.c.l.b16 %v1991
    %v2257 = vunpack.c.h.b16 %v1991
    %v2258 = vunpack.c.l.b16 %v1992
    %v2259 = vunpack.c.h.b16 %v1992
    %v2260 = vunpack.c.l.b16 %v1993
    %v2261 = vunpack.c.h.b16 %v1993
    %v2262 = vunpack.c.l.b16 %v1994
    %v2263 = vunpack.c.h.b16 %v1994
    %v2264 = vunpack.c.l.b16 %v1995
    %v2265 = vunpack.c.h.b16 %v1995
    %v2266 = vunpack.c.l.b16 %v1996
    %v2267 = vunpack.c.h.b16 %v1996
    %v2268 = vunpack.c.l.b16 %v1997
    %v2269 = vunpack.c.h.b16 %v1997
    %v2270 = vunpack.c.l.b16 %v1998
    %v2271 = vunpack.c.h.b16 %v1998
    %v2272 = vunpack.c.l.b16 %v1999
    %v2273 = vunpack.c.h.b16 %v1999
    %v2274 = vunpack.c.l.b16 %v2000
    %v2275 = vunpack.c.h.b16 %v2000
    %v2276 = vunpack.c.l.b16 %v2001
    %v2277 = vunpack.c.h.b16 %v2001
    %v2278 = vunpack.c.l.b16 %v2002
    %v2279 = vunpack.c.h.b16 %v2002
    %v2280 = vunpack.c.l.b16 %v2003
    %v2281 = vunpack.c.h.b16 %v2003
    %v2282 = vunpack.c.l.b16 %v2004
    %v2283 = vunpack.c.h.b16 %v2004
    %v2284 = vunpack.c.l.b16 %v2005
    %v2285 = vunpack.c.h.b16 %v2005
    %v2286 = vunpack.c.l.b16 %v2006
    %v2287 = vunpack.c.h.b16 %v2006
    %v2288 = vunpack.c.l.b16 %v2007
    %v2289 = vunpack.c.h.b16 %v2007
    %v2290 = vunpack.c.l.b16 %v2008
    %v2291 = vunpack.c.h.b16 %v2008
    %v2292 = vunpack.c.l.b16 %v2009
    %v2293 = vunpack.c.h.b16 %v2009
    %v2294 = vunpack.c.l.b16 %v2010
    %v2295 = vunpack.c.h.b16 %v2010
    %v2296 = vunpack.c.l.b16 %v2011
    %v2297 = vunpack.c.h.b16 %v2011
    %v2298 = vunpack.c.l.b16 %v2012
    %v2299 = vunpack.c.h.b16 %v2012
    %v2300 = vunpack.c.l.b16 %v2013
    %v2301 = vunpack.c.h.b16 %v2013
    %v2302 = vpack.c.b16 %v2190, %v2174
    %v2303 = vpack.c.b16 %v2191, %v2175
    %v2304 = vpack.c.b16 %v2192, %v2176
    %v2305 = vpack.c.b16 %v2193, %v2177
    %v2306 = vpack.c.b16 %v2194, %v2178
    %v2307 = vpack.c.b16 %v2195, %v2179
    %v2308 = vpack.c.b16 %v2196, %v2180
    %v2309 = vpack.c.b16 %v2197, %v2181
    %v2310 = vpack.c.b16 %v2198, %v2182
    %v2311 = vpack.c.b16 %v2199, %v2183
    %v2312 = vpack.c.b16 %v2200, %v2184
    %v2313 = vpack.c.b16 %v2201, %v2185
    %v2314 = vpack.c.b16 %v2202, %v2186
    %v2315 = vpack.c.b16 %v2203, %v2187
    %v2316 = vpack.c.b16 %v2204, %v2188
    %v2317 = vpack.c.b16 %v2205, %v2189
    %v2318 = vpack.c.b16 %v2222, %v2206
    %v2319 = vpack.c.b16 %v2223, %v2207
    %v2320 = vpack.c.b16 %v2224, %v2208
    %v2321 = vpack.c.b16 %v2225, %v2209
    %v2322 = vpack.c.b16 %v2226, %v2210
    %v2323 = vpack.c.b16 %v2227, %v2211
    %v2324 = vpack.c.b16 %v2228, %v2212
    %v2325 = vpack.c.b16 %v2229, %v2213
    %v2326 = vpack.c.b16 %v2230, %v2214
    %v2327 = vpack.c.b16 %v2231, %v2215
    %v2328 = vpack.c.b16 %v2232, %v2216
    %v2329 = vpack.c.b16 %v2233, %v2217
    %v2330 = vpack.c.b16 %v2234, %v2218
    %v2331 = vpack.c.b16 %v2235, %v2219
    %v2332 = vpack.c.b16 %v2236, %v2220
    %v2333 = vpack.c.b16 %v2237, %v2221
    %v2334 = vpack.c.b16 %v2254, %v2238
    %v2335 = vpack.c.b16 %v2255, %v2239
    %v2336 = vpack.c.b16 %v2256, %v2240
    %v2337 = vpack.c.b16 %v2257, %v2241
    %v2338 = vpack.c.b16 %v2258, %v2242
    %v2339 = vpack.c.b16 %v2259, %v2243
    %v2340 = vpack.c.b16 %v2260, %v2244
    %v2341 = vpack.c.b16 %v2261, %v2245
    %v2342 = vpack.c.b16 %v2262, %v2246
    %v2343 = vpack.c.b16 %v2263, %v2247
    %v2344 = vpack.c.b16 %v2264, %v2248
    %v2345 = vpack.c.b16 %v2265, %v2249
    %v2346 = vpack.c.b16 %v2266, %v2250
    %v2347 = vpack.c.b16 %v2267, %v2251
    %v2348 = vpack.c.b16 %v2268, %v2252
    %v2349 = vpack.c.b16 %v2269, %v2253
    %v2350 = vpack.c.b16 %v2286, %v2270
    %v2351 = vpack.c.b16 %v2287, %v2271
    %v2352 = vpack.c.b16 %v2288, %v2272
    %v2353 = vpack.c.b16 %v2289, %v2273
    %v2354 = vpack.c.b16 %v2290, %v2274
    %v2355 = vpack.c.b16 %v2291, %v2275
    %v2356 = vpack.c.b16 %v2292, %v2276
    %v2357 = vpack.c.b16 %v2293, %v2277
    %v2358 = vpack.c.b16 %v2294, %v2278
    %v2359 = vpack.c.b16 %v2295, %v2279
    %v2360 = vpack.c.b16 %v2296, %v2280
    %v2361 = vpack.c.b16 %v2297, %v2281
    %v2362 = vpack.c.b16 %v2298, %v2282
    %v2363 = vpack.c.b16 %v2299, %v2283
    %v2364 = vpack.c.b16 %v2300, %v2284
    %v2365 = vpack.c.b16 %v2301, %v2285
    %v2431 = vsel %vm229, %v2025, 0
    %2433 = vmatprep.subr.bf16.mxu0 %v2303
    %2434 = vmatpush1.bf16.msra.mxu0 %v2302
    %2435 = vmatprep.subr.bf16.mxu0 %v2319
    %2436 = vmatpush1.bf16.msra.mxu0 %v2318
    %2437 = vmatprep.subr.bf16.mxu0 %v2335
    %2438 = vmatpush1.bf16.msra.mxu0 %v2334
    %2439 = vmatprep.subr.bf16.mxu0 %v2351
    %2440 = vmatpush1.bf16.msra.mxu0 %v2350
    %2441 = vmatprep.subr.bf16.mxu0 0
    %2442 = vmatpush1.bf16.msra.mxu0 0
    %2443 = vmatprep.subr.bf16.mxu0 0
    %2444 = vmatpush1.bf16.msra.mxu0 0
    %2445 = vmatprep.subr.bf16.mxu0 0
    %2446 = vmatpush1.bf16.msra.mxu0 0
    %2447 = vmatprep.subr.bf16.mxu0 0
    %2448 = vmatpush1.bf16.msra.mxu0 0
    %2449 = vmatprep.subr.bf16.mxu0 0
    %2450 = vmatpush1.bf16.msra.mxu0 0
    %2451 = vmatprep.subr.bf16.mxu0 0
    %2452 = vmatpush1.bf16.msra.mxu0 0
    %2453 = vmatprep.subr.bf16.mxu0 0
    %2454 = vmatpush1.bf16.msra.mxu0 0
    %2455 = vmatprep.subr.bf16.mxu0 0
    %2456 = vmatpush1.bf16.msra.mxu0 0
    %2457 = vmatprep.subr.bf16.mxu0 0
    %2458 = vmatpush1.bf16.msra.mxu0 0
    %2459 = vmatprep.subr.bf16.mxu0 0
    %2460 = vmatpush1.bf16.msra.mxu0 0
    %2461 = vmatprep.subr.bf16.mxu0 0
    %2462 = vmatpush1.bf16.msra.mxu0 0
    %2463 = vmatprep.subr.bf16.mxu0 0
    %2464 = vmatpush1.bf16.msra.mxu0 0
    %2465 = vmatprep.mubr.bf16.mxu0 0
    %2466 = vmatmul.mubr.bf16.gmra.mrb[0].mxu0 %v2431
    %v2467 = vpop.f32.mrb[0].mxu0
    %v2468 = vadd.f32 %v2033, %v2467
    %v2469 = vpop.f32.mrb[0].mxu0
    %v2470 = vadd.f32 %v2037, %v2469
    %v2471 = vpop.f32.mrb[0].mxu0
    %v2472 = vpop.f32.mrb[0].mxu0
    %2473 = vdwg.mxu0
    %2474 = vmatprep.subr.bf16.mxu0 %v2305
    %2475 = vmatpush1.bf16.msra.mxu0 %v2304
    %2476 = vmatprep.subr.bf16.mxu0 %v2321
    %2477 = vmatpush1.bf16.msra.mxu0 %v2320
    %2478 = vmatprep.subr.bf16.mxu0 %v2337
    %2479 = vmatpush1.bf16.msra.mxu0 %v2336
    %2480 = vmatprep.subr.bf16.mxu0 %v2353
    %2481 = vmatpush1.bf16.msra.mxu0 %v2352
    %2482 = vmatprep.subr.bf16.mxu0 0
    %2483 = vmatpush1.bf16.msra.mxu0 0
    %2484 = vmatprep.subr.bf16.mxu0 0
    %2485 = vmatpush1.bf16.msra.mxu0 0
    %2486 = vmatprep.subr.bf16.mxu0 0
    %2487 = vmatpush1.bf16.msra.mxu0 0
    %2488 = vmatprep.subr.bf16.mxu0 0
    %2489 = vmatpush1.bf16.msra.mxu0 0
    %2490 = vmatprep.subr.bf16.mxu0 0
    %2491 = vmatpush1.bf16.msra.mxu0 0
    %2492 = vmatprep.subr.bf16.mxu0 0
    %2493 = vmatpush1.bf16.msra.mxu0 0
    %2494 = vmatprep.subr.bf16.mxu0 0
    %2495 = vmatpush1.bf16.msra.mxu0 0
    %2496 = vmatprep.subr.bf16.mxu0 0
    %2497 = vmatpush1.bf16.msra.mxu0 0
    %2498 = vmatprep.subr.bf16.mxu0 0
    %2499 = vmatpush1.bf16.msra.mxu0 0
    %2500 = vmatprep.subr.bf16.mxu0 0
    %2501 = vmatpush1.bf16.msra.mxu0 0
    %2502 = vmatprep.subr.bf16.mxu0 0
    %2503 = vmatpush1.bf16.msra.mxu0 0
    %2504 = vmatprep.subr.bf16.mxu0 0
    %2505 = vmatpush1.bf16.msra.mxu0 0
    %2506 = vmatprep.mubr.bf16.mxu0 0
    %2507 = vmatmul.mubr.bf16.gmra.mrb[0].mxu0 %v2431
    %v2508 = vpop.f32.mrb[0].mxu0
    %v2509 = vadd.f32 %v2041, %v2508
    %v2510 = vpop.f32.mrb[0].mxu0
    %v2511 = vadd.f32 %v2045, %v2510
    %v2512 = vpop.f32.mrb[0].mxu0
    %v2513 = vpop.f32.mrb[0].mxu0
    %2514 = vdwg.mxu0
    %2515 = vmatprep.subr.bf16.mxu0 %v2307
    %2516 = vmatpush1.bf16.msra.mxu0 %v2306
    %2517 = vmatprep.subr.bf16.mxu0 %v2323
    %2518 = vmatpush1.bf16.msra.mxu0 %v2322
    %2519 = vmatprep.subr.bf16.mxu0 %v2339
    %2520 = vmatpush1.bf16.msra.mxu0 %v2338
    %2521 = vmatprep.subr.bf16.mxu0 %v2355
    %2522 = vmatpush1.bf16.msra.mxu0 %v2354
    %2523 = vmatprep.subr.bf16.mxu0 0
    %2524 = vmatpush1.bf16.msra.mxu0 0
    %2525 = vmatprep.subr.bf16.mxu0 0
    %2526 = vmatpush1.bf16.msra.mxu0 0
    %2527 = vmatprep.subr.bf16.mxu0 0
    %2528 = vmatpush1.bf16.msra.mxu0 0
    %2529 = vmatprep.subr.bf16.mxu0 0
    %2530 = vmatpush1.bf16.msra.mxu0 0
    %2531 = vmatprep.subr.bf16.mxu0 0
    %2532 = vmatpush1.bf16.msra.mxu0 0
    %2533 = vmatprep.subr.bf16.mxu0 0
    %2534 = vmatpush1.bf16.msra.mxu0 0
    %2535 = vmatprep.subr.bf16.mxu0 0
    %2536 = vmatpush1.bf16.msra.mxu0 0
    %2537 = vmatprep.subr.bf16.mxu0 0
    %2538 = vmatpush1.bf16.msra.mxu0 0
    %2539 = vmatprep.subr.bf16.mxu0 0
    %2540 = vmatpush1.bf16.msra.mxu0 0
    %2541 = vmatprep.subr.bf16.mxu0 0
    %2542 = vmatpush1.bf16.msra.mxu0 0
    %2543 = vmatprep.subr.bf16.mxu0 0
    %2544 = vmatpush1.bf16.msra.mxu0 0
    %2545 = vmatprep.subr.bf16.mxu0 0
    %2546 = vmatpush1.bf16.msra.mxu0 0
    %2547 = vmatprep.mubr.bf16.mxu0 0
    %2548 = vmatmul.mubr.bf16.gmra.mrb[0].mxu0 %v2431
    %v2549 = vpop.f32.mrb[0].mxu0
    %v2550 = vadd.f32 %v2049, %v2549
    %v2551 = vpop.f32.mrb[0].mxu0
    %v2552 = vadd.f32 %v2053, %v2551
    %v2553 = vpop.f32.mrb[0].mxu0
    %v2554 = vpop.f32.mrb[0].mxu0
    %2555 = vdwg.mxu0
    %2556 = vmatprep.subr.bf16.mxu0 %v2309
    %2557 = vmatpush1.bf16.msra.mxu0 %v2308
    %2558 = vmatprep.subr.bf16.mxu0 %v2325
    %2559 = vmatpush1.bf16.msra.mxu0 %v2324
    %2560 = vmatprep.subr.bf16.mxu0 %v2341
    %2561 = vmatpush1.bf16.msra.mxu0 %v2340
    %2562 = vmatprep.subr.bf16.mxu0 %v2357
    %2563 = vmatpush1.bf16.msra.mxu0 %v2356
    %2564 = vmatprep.subr.bf16.mxu0 0
    %2565 = vmatpush1.bf16.msra.mxu0 0
    %2566 = vmatprep.subr.bf16.mxu0 0
    %2567 = vmatpush1.bf16.msra.mxu0 0
    %2568 = vmatprep.subr.bf16.mxu0 0
    %2569 = vmatpush1.bf16.msra.mxu0 0
    %2570 = vmatprep.subr.bf16.mxu0 0
    %2571 = vmatpush1.bf16.msra.mxu0 0
    %2572 = vmatprep.subr.bf16.mxu0 0
    %2573 = vmatpush1.bf16.msra.mxu0 0
    %2574 = vmatprep.subr.bf16.mxu0 0
    %2575 = vmatpush1.bf16.msra.mxu0 0
    %2576 = vmatprep.subr.bf16.mxu0 0
    %2577 = vmatpush1.bf16.msra.mxu0 0
    %2578 = vmatprep.subr.bf16.mxu0 0
    %2579 = vmatpush1.bf16.msra.mxu0 0
    %2580 = vmatprep.subr.bf16.mxu0 0
    %2581 = vmatpush1.bf16.msra.mxu0 0
    %2582 = vmatprep.subr.bf16.mxu0 0
    %2583 = vmatpush1.bf16.msra.mxu0 0
    %2584 = vmatprep.subr.bf16.mxu0 0
    %2585 = vmatpush1.bf16.msra.mxu0 0
    %2586 = vmatprep.subr.bf16.mxu0 0
    %2587 = vmatpush1.bf16.msra.mxu0 0
    %2588 = vmatprep.mubr.bf16.mxu0 0
    %2589 = vmatmul.mubr.bf16.gmra.mrb[0].mxu0 %v2431
    %v2590 = vpop.f32.mrb[0].mxu0
    %v2591 = vadd.f32 %v2057, %v2590
    %v2592 = vpop.f32.mrb[0].mxu0
    %v2593 = vadd.f32 %v2061, %v2592
    %v2594 = vpop.f32.mrb[0].mxu0
    %v2595 = vpop.f32.mrb[0].mxu0
    %2596 = vdwg.mxu0
    %2597 = vmatprep.subr.bf16.mxu0 %v2311
    %2598 = vmatpush1.bf16.msra.mxu0 %v2310
    %2599 = vmatprep.subr.bf16.mxu0 %v2327
    %2600 = vmatpush1.bf16.msra.mxu0 %v2326
    %2601 = vmatprep.subr.bf16.mxu0 %v2343
    %2602 = vmatpush1.bf16.msra.mxu0 %v2342
    %2603 = vmatprep.subr.bf16.mxu0 %v2359
    %2604 = vmatpush1.bf16.msra.mxu0 %v2358
    %2605 = vmatprep.subr.bf16.mxu0 0
    %2606 = vmatpush1.bf16.msra.mxu0 0
    %2607 = vmatprep.subr.bf16.mxu0 0
    %2608 = vmatpush1.bf16.msra.mxu0 0
    %2609 = vmatprep.subr.bf16.mxu0 0
    %2610 = vmatpush1.bf16.msra.mxu0 0
    %2611 = vmatprep.subr.bf16.mxu0 0
    %2612 = vmatpush1.bf16.msra.mxu0 0
    %2613 = vmatprep.subr.bf16.mxu0 0
    %2614 = vmatpush1.bf16.msra.mxu0 0
    %2615 = vmatprep.subr.bf16.mxu0 0
    %2616 = vmatpush1.bf16.msra.mxu0 0
    %2617 = vmatprep.subr.bf16.mxu0 0
    %2618 = vmatpush1.bf16.msra.mxu0 0
    %2619 = vmatprep.subr.bf16.mxu0 0
    %2620 = vmatpush1.bf16.msra.mxu0 0
    %2621 = vmatprep.subr.bf16.mxu0 0
    %2622 = vmatpush1.bf16.msra.mxu0 0
    %2623 = vmatprep.subr.bf16.mxu0 0
    %2624 = vmatpush1.bf16.msra.mxu0 0
    %2625 = vmatprep.subr.bf16.mxu0 0
    %2626 = vmatpush1.bf16.msra.mxu0 0
    %2627 = vmatprep.subr.bf16.mxu0 0
    %2628 = vmatpush1.bf16.msra.mxu0 0
    %2629 = vmatprep.mubr.bf16.mxu0 0
    %2630 = vmatmul.mubr.bf16.gmra.mrb[0].mxu0 %v2431
    %v2631 = vpop.f32.mrb[0].mxu0
    %v2632 = vadd.f32 %v2065, %v2631
    %v2633 = vpop.f32.mrb[0].mxu0
    %v2634 = vadd.f32 %v2069, %v2633
    %v2635 = vpop.f32.mrb[0].mxu0
    %v2636 = vpop.f32.mrb[0].mxu0
    %2637 = vdwg.mxu0
    %2638 = vmatprep.subr.bf16.mxu0 %v2313
    %2639 = vmatpush1.bf16.msra.mxu0 %v2312
    %2640 = vmatprep.subr.bf16.mxu0 %v2329
    %2641 = vmatpush1.bf16.msra.mxu0 %v2328
    %2642 = vmatprep.subr.bf16.mxu0 %v2345
    %2643 = vmatpush1.bf16.msra.mxu0 %v2344
    %2644 = vmatprep.subr.bf16.mxu0 %v2361
    %2645 = vmatpush1.bf16.msra.mxu0 %v2360
    %2646 = vmatprep.subr.bf16.mxu0 0
    %2647 = vmatpush1.bf16.msra.mxu0 0
    %2648 = vmatprep.subr.bf16.mxu0 0
    %2649 = vmatpush1.bf16.msra.mxu0 0
    %2650 = vmatprep.subr.bf16.mxu0 0
    %2651 = vmatpush1.bf16.msra.mxu0 0
    %2652 = vmatprep.subr.bf16.mxu0 0
    %2653 = vmatpush1.bf16.msra.mxu0 0
    %2654 = vmatprep.subr.bf16.mxu0 0
    %2655 = vmatpush1.bf16.msra.mxu0 0
    %2656 = vmatprep.subr.bf16.mxu0 0
    %2657 = vmatpush1.bf16.msra.mxu0 0
    %2658 = vmatprep.subr.bf16.mxu0 0
    %2659 = vmatpush1.bf16.msra.mxu0 0
    %2660 = vmatprep.subr.bf16.mxu0 0
    %2661 = vmatpush1.bf16.msra.mxu0 0
    %2662 = vmatprep.subr.bf16.mxu0 0
    %2663 = vmatpush1.bf16.msra.mxu0 0
    %2664 = vmatprep.subr.bf16.mxu0 0
    %2665 = vmatpush1.bf16.msra.mxu0 0
    %2666 = vmatprep.subr.bf16.mxu0 0
    %2667 = vmatpush1.bf16.msra.mxu0 0
    %2668 = vmatprep.subr.bf16.mxu0 0
    %2669 = vmatpush1.bf16.msra.mxu0 0
    %2670 = vmatprep.mubr.bf16.mxu0 0
    %2671 = vmatmul.mubr.bf16.gmra.mrb[0].mxu0 %v2431
    %v2672 = vpop.f32.mrb[0].mxu0
    %v2673 = vadd.f32 %v2073, %v2672
    %v2674 = vpop.f32.mrb[0].mxu0
    %v2675 = vadd.f32 %v2077, %v2674
    %v2676 = vpop.f32.mrb[0].mxu0
    %v2677 = vpop.f32.mrb[0].mxu0
    %2678 = vdwg.mxu0
    %2679 = vmatprep.subr.bf16.mxu0 %v2315
    %2680 = vmatpush1.bf16.msra.mxu0 %v2314
    %2681 = vmatprep.subr.bf16.mxu0 %v2331
    %2682 = vmatpush1.bf16.msra.mxu0 %v2330
    %2683 = vmatprep.subr.bf16.mxu0 %v2347
    %2684 = vmatpush1.bf16.msra.mxu0 %v2346
    %2685 = vmatprep.subr.bf16.mxu0 %v2363
    %2686 = vmatpush1.bf16.msra.mxu0 %v2362
    %2687 = vmatprep.subr.bf16.mxu0 0
    %2688 = vmatpush1.bf16.msra.mxu0 0
    %2689 = vmatprep.subr.bf16.mxu0 0
    %2690 = vmatpush1.bf16.msra.mxu0 0
    %2691 = vmatprep.subr.bf16.mxu0 0
    %2692 = vmatpush1.bf16.msra.mxu0 0
    %2693 = vmatprep.subr.bf16.mxu0 0
    %2694 = vmatpush1.bf16.msra.mxu0 0
    %2695 = vmatprep.subr.bf16.mxu0 0
    %2696 = vmatpush1.bf16.msra.mxu0 0
    %2697 = vmatprep.subr.bf16.mxu0 0
    %2698 = vmatpush1.bf16.msra.mxu0 0
    %2699 = vmatprep.subr.bf16.mxu0 0
    %2700 = vmatpush1.bf16.msra.mxu0 0
    %2701 = vmatprep.subr.bf16.mxu0 0
    %2702 = vmatpush1.bf16.msra.mxu0 0
    %2703 = vmatprep.subr.bf16.mxu0 0
    %2704 = vmatpush1.bf16.msra.mxu0 0
    %2705 = vmatprep.subr.bf16.mxu0 0
    %2706 = vmatpush1.bf16.msra.mxu0 0
    %2707 = vmatprep.subr.bf16.mxu0 0
    %2708 = vmatpush1.bf16.msra.mxu0 0
    %2709 = vmatprep.subr.bf16.mxu0 0
    %2710 = vmatpush1.bf16.msra.mxu0 0
    %2711 = vmatprep.mubr.bf16.mxu0 0
    %2712 = vmatmul.mubr.bf16.gmra.mrb[0].mxu0 %v2431
    %v2713 = vpop.f32.mrb[0].mxu0
    %v2714 = vadd.f32 %v2081, %v2713
    %v2715 = vpop.f32.mrb[0].mxu0
    %v2716 = vadd.f32 %v2085, %v2715
    %v2717 = vpop.f32.mrb[0].mxu0
    %v2718 = vpop.f32.mrb[0].mxu0
    %2719 = vdwg.mxu0
    %2720 = vmatprep.subr.bf16.mxu0 %v2317
    %2721 = vmatpush1.bf16.msra.mxu0 %v2316
    %2722 = vmatprep.subr.bf16.mxu0 %v2333
    %2723 = vmatpush1.bf16.msra.mxu0 %v2332
    %2724 = vmatprep.subr.bf16.mxu0 %v2349
    %2725 = vmatpush1.bf16.msra.mxu0 %v2348
    %2726 = vmatprep.subr.bf16.mxu0 %v2365
    %2727 = vmatpush1.bf16.msra.mxu0 %v2364
    %2728 = vmatprep.subr.bf16.mxu0 0
    %2729 = vmatpush1.bf16.msra.mxu0 0
    %2730 = vmatprep.subr.bf16.mxu0 0
    %2731 = vmatpush1.bf16.msra.mxu0 0
    %2732 = vmatprep.subr.bf16.mxu0 0
    %2733 = vmatpush1.bf16.msra.mxu0 0
    %2734 = vmatprep.subr.bf16.mxu0 0
    %2735 = vmatpush1.bf16.msra.mxu0 0
    %2736 = vmatprep.subr.bf16.mxu0 0
    %2737 = vmatpush1.bf16.msra.mxu0 0
    %2738 = vmatprep.subr.bf16.mxu0 0
    %2739 = vmatpush1.bf16.msra.mxu0 0
    %2740 = vmatprep.subr.bf16.mxu0 0
    %2741 = vmatpush1.bf16.msra.mxu0 0
    %2742 = vmatprep.subr.bf16.mxu0 0
    %2743 = vmatpush1.bf16.msra.mxu0 0
    %2744 = vmatprep.subr.bf16.mxu0 0
    %2745 = vmatpush1.bf16.msra.mxu0 0
    %2746 = vmatprep.subr.bf16.mxu0 0
    %2747 = vmatpush1.bf16.msra.mxu0 0
    %2748 = vmatprep.subr.bf16.mxu0 0
    %2749 = vmatpush1.bf16.msra.mxu0 0
    %2750 = vmatprep.subr.bf16.mxu0 0
    %2751 = vmatpush1.bf16.msra.mxu0 0
    %2752 = vmatprep.mubr.bf16.mxu0 0
    %2753 = vmatmul.mubr.bf16.gmra.mrb[0].mxu0 %v2431
    %v2754 = vpop.f32.mrb[0].mxu0
    %v2755 = vadd.f32 %v2089, %v2754
    %v2756 = vpop.f32.mrb[0].mxu0
    %v2757 = vadd.f32 %v2093, %v2756
    %v2758 = vpop.f32.mrb[0].mxu0
    %v2759 = vpop.f32.mrb[0].mxu0
    %2760 = vdwg.mxu0
    %v2761 = vmax.f32 %v2468, 0.0
    %v2762 = vmax.f32 %v2470, 0.0
    %v2763 = vmax.f32 %v2509, 0.0
    %v2764 = vmax.f32 %v2511, 0.0
    %v2765 = vmax.f32 %v2550, 0.0
    %v2766 = vmax.f32 %v2552, 0.0
    %v2767 = vmax.f32 %v2591, 0.0
    %v2768 = vmax.f32 %v2593, 0.0
    %v2769 = vmax.f32 %v2632, 0.0
    %v2770 = vmax.f32 %v2634, 0.0
    %v2771 = vmax.f32 %v2673, 0.0
    %v2772 = vmax.f32 %v2675, 0.0
    %v2773 = vmax.f32 %v2714, 0.0
    %v2774 = vmax.f32 %v2716, 0.0
    %v2775 = vmax.f32 %v2755, 0.0
    %v2776 = vmax.f32 %v2757, 0.0
    %v2777 = vld [vmem:[%s8] sm:$0xf]
    %v2778 = vld [vmem:[%s8 + $0x4] sm:$0xf]
    %v2779 = vld [vmem:[%s8 + $0x8] sm:$0xf]
    %v2780 = vld [vmem:[%s8 + $0xc] sm:$0xf]
    %v2781 = vld [vmem:[%s8 + $0x10] sm:$0xf]
    %v2782 = vld [vmem:[%s8 + $0x14] sm:$0xf]
    %v2783 = vld [vmem:[%s8 + $0x18] sm:$0xf]
    %v2784 = vld [vmem:[%s8 + $0x1c] sm:$0xf]
    %v2785 = vld [vmem:[%s8 + $0x20] sm:$0xf]
    %v2786 = vld [vmem:[%s8 + $0x24] sm:$0xf]
    %v2787 = vld [vmem:[%s8 + $0x28] sm:$0xf]
    %v2788 = vld [vmem:[%s8 + $0x2c] sm:$0xf]
    %v2789 = vld [vmem:[%s8 + $0x30] sm:$0xf]
    %v2790 = vld [vmem:[%s8 + $0x34] sm:$0xf]
    %v2791 = vld [vmem:[%s8 + $0x38] sm:$0xf]
    %v2792 = vld [vmem:[%s8 + $0x3c] sm:$0xf]
    %v2793 = vld [vmem:[%s8 + $0x40] sm:$0xf]
    %v2794 = vld [vmem:[%s8 + $0x44] sm:$0xf]
    %v2795 = vld [vmem:[%s8 + $0x48] sm:$0xf]
    %v2796 = vld [vmem:[%s8 + $0x4c] sm:$0xf]
    %v2797 = vld [vmem:[%s8 + $0x50] sm:$0xf]
    %v2798 = vld [vmem:[%s8 + $0x54] sm:$0xf]
    %v2799 = vld [vmem:[%s8 + $0x58] sm:$0xf]
    %v2800 = vld [vmem:[%s8 + $0x5c] sm:$0xf]
    %v2801 = vld [vmem:[%s8 + $0x60] sm:$0xf]
    %v2802 = vld [vmem:[%s8 + $0x64] sm:$0xf]
    %v2803 = vld [vmem:[%s8 + $0x68] sm:$0xf]
    %v2804 = vld [vmem:[%s8 + $0x6c] sm:$0xf]
    %v2805 = vld [vmem:[%s8 + $0x70] sm:$0xf]
    %v2806 = vld [vmem:[%s8 + $0x74] sm:$0xf]
    %v2807 = vld [vmem:[%s8 + $0x78] sm:$0xf]
    %v2808 = vld [vmem:[%s8 + $0x7c] sm:$0xf]
    %v2809 = vld [vmem:[%s8 + $0x80] sm:$0xf]
    %v2810 = vld [vmem:[%s8 + $0x84] sm:$0xf]
    %v2811 = vld [vmem:[%s8 + $0x88] sm:$0xf]
    %v2812 = vld [vmem:[%s8 + $0x8c] sm:$0xf]
    %v2813 = vld [vmem:[%s8 + $0x90] sm:$0xf]
    %v2814 = vld [vmem:[%s8 + $0x94] sm:$0xf]
    %v2815 = vld [vmem:[%s8 + $0x98] sm:$0xf]
    %v2816 = vld [vmem:[%s8 + $0x9c] sm:$0xf]
    %v2817 = vld [vmem:[%s8 + $0xa0] sm:$0xf]
    %v2818 = vld [vmem:[%s8 + $0xa4] sm:$0xf]
    %v2819 = vld [vmem:[%s8 + $0xa8] sm:$0xf]
    %v2820 = vld [vmem:[%s8 + $0xac] sm:$0xf]
    %v2821 = vld [vmem:[%s8 + $0xb0] sm:$0xf]
    %v2822 = vld [vmem:[%s8 + $0xb4] sm:$0xf]
    %v2823 = vld [vmem:[%s8 + $0xb8] sm:$0xf]
    %v2824 = vld [vmem:[%s8 + $0xbc] sm:$0xf]
    %v2825 = vld [vmem:[%s8 + $0xc0] sm:$0xf]
    %v2826 = vld [vmem:[%s8 + $0xc4] sm:$0xf]
    %v2827 = vld [vmem:[%s8 + $0xc8] sm:$0xf]
    %v2828 = vld [vmem:[%s8 + $0xcc] sm:$0xf]
    %v2829 = vld [vmem:[%s8 + $0xd0] sm:$0xf]
    %v2830 = vld [vmem:[%s8 + $0xd4] sm:$0xf]
    %v2831 = vld [vmem:[%s8 + $0xd8] sm:$0xf]
    %v2832 = vld [vmem:[%s8 + $0xdc] sm:$0xf]
    %v2833 = vld [vmem:[%s8 + $0xe0] sm:$0xf]
    %v2834 = vld [vmem:[%s8 + $0xe4] sm:$0xf]
    %v2835 = vld [vmem:[%s8 + $0xe8] sm:$0xf]
    %v2836 = vld [vmem:[%s8 + $0xec] sm:$0xf]
    %v2837 = vld [vmem:[%s8 + $0xf0] sm:$0xf]
    %v2838 = vld [vmem:[%s8 + $0xf4] sm:$0xf]
    %v2839 = vld [vmem:[%s8 + $0xf8] sm:$0xf]
    %v2840 = vld [vmem:[%s8 + $0xfc] sm:$0xf]
    %v2841 = vld [vmem:[%s8 + $0x100] sm:$0xf]
    %v2842 = vld [vmem:[%s8 + $0x104] sm:$0xf]
    %v2843 = vld [vmem:[%s8 + $0x108] sm:$0xf]
    %v2844 = vld [vmem:[%s8 + $0x10c] sm:$0xf]
    %v2845 = vld [vmem:[%s8 + $0x110] sm:$0xf]
    %v2846 = vld [vmem:[%s8 + $0x114] sm:$0xf]
    %v2847 = vld [vmem:[%s8 + $0x118] sm:$0xf]
    %v2848 = vld [vmem:[%s8 + $0x11c] sm:$0xf]
    %v2849 = vld [vmem:[%s8 + $0x120] sm:$0xf]
    %v2850 = vld [vmem:[%s8 + $0x124] sm:$0xf]
    %v2851 = vld [vmem:[%s8 + $0x128] sm:$0xf]
    %v2852 = vld [vmem:[%s8 + $0x12c] sm:$0xf]
    %v2853 = vld [vmem:[%s8 + $0x130] sm:$0xf]
    %v2854 = vld [vmem:[%s8 + $0x134] sm:$0xf]
    %v2855 = vld [vmem:[%s8 + $0x138] sm:$0xf]
    %v2856 = vld [vmem:[%s8 + $0x13c] sm:$0xf]
    %v2857 = vld [vmem:[%s8 + $0x140] sm:$0xf]
    %v2858 = vld [vmem:[%s8 + $0x144] sm:$0xf]
    %v2859 = vld [vmem:[%s8 + $0x148] sm:$0xf]
    %v2860 = vld [vmem:[%s8 + $0x14c] sm:$0xf]
    %v2861 = vld [vmem:[%s8 + $0x150] sm:$0xf]
    %v2862 = vld [vmem:[%s8 + $0x154] sm:$0xf]
    %v2863 = vld [vmem:[%s8 + $0x158] sm:$0xf]
    %v2864 = vld [vmem:[%s8 + $0x15c] sm:$0xf]
    %v2865 = vld [vmem:[%s8 + $0x160] sm:$0xf]
    %v2866 = vld [vmem:[%s8 + $0x164] sm:$0xf]
    %v2867 = vld [vmem:[%s8 + $0x168] sm:$0xf]
    %v2868 = vld [vmem:[%s8 + $0x16c] sm:$0xf]
    %v2869 = vld [vmem:[%s8 + $0x170] sm:$0xf]
    %v2870 = vld [vmem:[%s8 + $0x174] sm:$0xf]
    %v2871 = vld [vmem:[%s8 + $0x178] sm:$0xf]
    %v2872 = vld [vmem:[%s8 + $0x17c] sm:$0xf]
    %v2873 = vld [vmem:[%s8 + $0x180] sm:$0xf]
    %v2874 = vld [vmem:[%s8 + $0x184] sm:$0xf]
    %v2875 = vld [vmem:[%s8 + $0x188] sm:$0xf]
    %v2876 = vld [vmem:[%s8 + $0x18c] sm:$0xf]
    %v2877 = vld [vmem:[%s8 + $0x190] sm:$0xf]
    %v2878 = vld [vmem:[%s8 + $0x194] sm:$0xf]
    %v2879 = vld [vmem:[%s8 + $0x198] sm:$0xf]
    %v2880 = vld [vmem:[%s8 + $0x19c] sm:$0xf]
    %v2881 = vld [vmem:[%s8 + $0x1a0] sm:$0xf]
    %v2882 = vld [vmem:[%s8 + $0x1a4] sm:$0xf]
    %v2883 = vld [vmem:[%s8 + $0x1a8] sm:$0xf]
    %v2884 = vld [vmem:[%s8 + $0x1ac] sm:$0xf]
    %v2885 = vld [vmem:[%s8 + $0x1b0] sm:$0xf]
    %v2886 = vld [vmem:[%s8 + $0x1b4] sm:$0xf]
    %v2887 = vld [vmem:[%s8 + $0x1b8] sm:$0xf]
    %v2888 = vld [vmem:[%s8 + $0x1bc] sm:$0xf]
    %v2889 = vld [vmem:[%s8 + $0x1c0] sm:$0xf]
    %v2890 = vld [vmem:[%s8 + $0x1c4] sm:$0xf]
    %v2891 = vld [vmem:[%s8 + $0x1c8] sm:$0xf]
    %v2892 = vld [vmem:[%s8 + $0x1cc] sm:$0xf]
    %v2893 = vld [vmem:[%s8 + $0x1d0] sm:$0xf]
    %v2894 = vld [vmem:[%s8 + $0x1d4] sm:$0xf]
    %v2895 = vld [vmem:[%s8 + $0x1d8] sm:$0xf]
    %v2896 = vld [vmem:[%s8 + $0x1dc] sm:$0xf]
    %v2897 = vld [vmem:[%s8 + $0x1e0] sm:$0xf]
    %v2898 = vld [vmem:[%s8 + $0x1e4] sm:$0xf]
    %v2899 = vld [vmem:[%s8 + $0x1e8] sm:$0xf]
    %v2900 = vld [vmem:[%s8 + $0x1ec] sm:$0xf]
    %v2901 = vld [vmem:[%s8 + $0x1f0] sm:$0xf]
    %v2902 = vld [vmem:[%s8 + $0x1f4] sm:$0xf]
    %v2903 = vld [vmem:[%s8 + $0x1f8] sm:$0xf]
    %v2904 = vld [vmem:[%s8 + $0x1fc] sm:$0xf]
    %v2905 = vld [vmem:[%s8 + $0x200] sm:$0xf]
    %v2906 = vld [vmem:[%s8 + $0x204] sm:$0xf]
    %v2907 = vld [vmem:[%s8 + $0x208] sm:$0xf]
    %v2908 = vld [vmem:[%s8 + $0x20c] sm:$0xf]
    %v2909 = vld [vmem:[%s8 + $0x210] sm:$0xf]
    %v2910 = vld [vmem:[%s8 + $0x214] sm:$0xf]
    %v2911 = vld [vmem:[%s8 + $0x218] sm:$0xf]
    %v2912 = vld [vmem:[%s8 + $0x21c] sm:$0xf]
    %v2913 = vld [vmem:[%s8 + $0x220] sm:$0xf]
    %v2914 = vld [vmem:[%s8 + $0x224] sm:$0xf]
    %v2915 = vld [vmem:[%s8 + $0x228] sm:$0xf]
    %v2916 = vld [vmem:[%s8 + $0x22c] sm:$0xf]
    %v2917 = vld [vmem:[%s8 + $0x230] sm:$0xf]
    %v2918 = vld [vmem:[%s8 + $0x234] sm:$0xf]
    %v2919 = vld [vmem:[%s8 + $0x238] sm:$0xf]
    %v2920 = vld [vmem:[%s8 + $0x23c] sm:$0xf]
    %v2921 = vld [vmem:[%s8 + $0x240] sm:$0xf]
    %v2922 = vld [vmem:[%s8 + $0x244] sm:$0xf]
    %v2923 = vld [vmem:[%s8 + $0x248] sm:$0xf]
    %v2924 = vld [vmem:[%s8 + $0x24c] sm:$0xf]
    %v2925 = vld [vmem:[%s8 + $0x250] sm:$0xf]
    %v2926 = vld [vmem:[%s8 + $0x254] sm:$0xf]
    %v2927 = vld [vmem:[%s8 + $0x258] sm:$0xf]
    %v2928 = vld [vmem:[%s8 + $0x25c] sm:$0xf]
    %v2929 = vld [vmem:[%s8 + $0x260] sm:$0xf]
    %v2930 = vld [vmem:[%s8 + $0x264] sm:$0xf]
    %v2931 = vld [vmem:[%s8 + $0x268] sm:$0xf]
    %v2932 = vld [vmem:[%s8 + $0x26c] sm:$0xf]
    %v2933 = vld [vmem:[%s8 + $0x270] sm:$0xf]
    %v2934 = vld [vmem:[%s8 + $0x274] sm:$0xf]
    %v2935 = vld [vmem:[%s8 + $0x278] sm:$0xf]
    %v2936 = vld [vmem:[%s8 + $0x27c] sm:$0xf]
    %v2937 = vld [vmem:[%s8 + $0x280] sm:$0xf]
    %v2938 = vld [vmem:[%s8 + $0x284] sm:$0xf]
    %v2939 = vld [vmem:[%s8 + $0x288] sm:$0xf]
    %v2940 = vld [vmem:[%s8 + $0x28c] sm:$0xf]
    %v2941 = vld [vmem:[%s8 + $0x290] sm:$0xf]
    %v2942 = vld [vmem:[%s8 + $0x294] sm:$0xf]
    %v2943 = vld [vmem:[%s8 + $0x298] sm:$0xf]
    %v2944 = vld [vmem:[%s8 + $0x29c] sm:$0xf]
    %v2945 = vld [vmem:[%s8 + $0x2a0] sm:$0xf]
    %v2946 = vld [vmem:[%s8 + $0x2a4] sm:$0xf]
    %v2947 = vld [vmem:[%s8 + $0x2a8] sm:$0xf]
    %v2948 = vld [vmem:[%s8 + $0x2ac] sm:$0xf]
    %v2949 = vld [vmem:[%s8 + $0x2b0] sm:$0xf]
    %v2950 = vld [vmem:[%s8 + $0x2b4] sm:$0xf]
    %v2951 = vld [vmem:[%s8 + $0x2b8] sm:$0xf]
    %v2952 = vld [vmem:[%s8 + $0x2bc] sm:$0xf]
    %v2953 = vld [vmem:[%s8 + $0x2c0] sm:$0xf]
    %v2954 = vld [vmem:[%s8 + $0x2c4] sm:$0xf]
    %v2955 = vld [vmem:[%s8 + $0x2c8] sm:$0xf]
    %v2956 = vld [vmem:[%s8 + $0x2cc] sm:$0xf]
    %v2957 = vld [vmem:[%s8 + $0x2d0] sm:$0xf]
    %v2958 = vld [vmem:[%s8 + $0x2d4] sm:$0xf]
    %v2959 = vld [vmem:[%s8 + $0x2d8] sm:$0xf]
    %v2960 = vld [vmem:[%s8 + $0x2dc] sm:$0xf]
    %v2961 = vld [vmem:[%s8 + $0x2e0] sm:$0xf]
    %v2962 = vld [vmem:[%s8 + $0x2e4] sm:$0xf]
    %v2963 = vld [vmem:[%s8 + $0x2e8] sm:$0xf]
    %v2964 = vld [vmem:[%s8 + $0x2ec] sm:$0xf]
    %v2965 = vld [vmem:[%s8 + $0x2f0] sm:$0xf]
    %v2966 = vld [vmem:[%s8 + $0x2f4] sm:$0xf]
    %v2967 = vld [vmem:[%s8 + $0x2f8] sm:$0xf]
    %v2968 = vld [vmem:[%s8 + $0x2fc] sm:$0xf]
    %v2969 = vld [vmem:[%s8 + $0x300] sm:$0xf]
    %v2970 = vld [vmem:[%s8 + $0x304] sm:$0xf]
    %v2971 = vld [vmem:[%s8 + $0x308] sm:$0xf]
    %v2972 = vld [vmem:[%s8 + $0x30c] sm:$0xf]
    %v2973 = vld [vmem:[%s8 + $0x310] sm:$0xf]
    %v2974 = vld [vmem:[%s8 + $0x314] sm:$0xf]
    %v2975 = vld [vmem:[%s8 + $0x318] sm:$0xf]
    %v2976 = vld [vmem:[%s8 + $0x31c] sm:$0xf]
    %v2977 = vld [vmem:[%s8 + $0x320] sm:$0xf]
    %v2978 = vld [vmem:[%s8 + $0x324] sm:$0xf]
    %v2979 = vld [vmem:[%s8 + $0x328] sm:$0xf]
    %v2980 = vld [vmem:[%s8 + $0x32c] sm:$0xf]
    %v2981 = vld [vmem:[%s8 + $0x330] sm:$0xf]
    %v2982 = vld [vmem:[%s8 + $0x334] sm:$0xf]
    %v2983 = vld [vmem:[%s8 + $0x338] sm:$0xf]
    %v2984 = vld [vmem:[%s8 + $0x33c] sm:$0xf]
    %v2985 = vld [vmem:[%s8 + $0x340] sm:$0xf]
    %v2986 = vld [vmem:[%s8 + $0x344] sm:$0xf]
    %v2987 = vld [vmem:[%s8 + $0x348] sm:$0xf]
    %v2988 = vld [vmem:[%s8 + $0x34c] sm:$0xf]
    %v2989 = vld [vmem:[%s8 + $0x350] sm:$0xf]
    %v2990 = vld [vmem:[%s8 + $0x354] sm:$0xf]
    %v2991 = vld [vmem:[%s8 + $0x358] sm:$0xf]
    %v2992 = vld [vmem:[%s8 + $0x35c] sm:$0xf]
    %v2993 = vld [vmem:[%s8 + $0x360] sm:$0xf]
    %v2994 = vld [vmem:[%s8 + $0x364] sm:$0xf]
    %v2995 = vld [vmem:[%s8 + $0x368] sm:$0xf]
    %v2996 = vld [vmem:[%s8 + $0x36c] sm:$0xf]
    %v2997 = vld [vmem:[%s8 + $0x370] sm:$0xf]
    %v2998 = vld [vmem:[%s8 + $0x374] sm:$0xf]
    %v2999 = vld [vmem:[%s8 + $0x378] sm:$0xf]
    %v3000 = vld [vmem:[%s8 + $0x37c] sm:$0xf]
    %v3001 = vld [vmem:[%s8 + $0x380] sm:$0xf]
    %v3002 = vld [vmem:[%s8 + $0x384] sm:$0xf]
    %v3003 = vld [vmem:[%s8 + $0x388] sm:$0xf]
    %v3004 = vld [vmem:[%s8 + $0x38c] sm:$0xf]
    %v3005 = vld [vmem:[%s8 + $0x390] sm:$0xf]
    %v3006 = vld [vmem:[%s8 + $0x394] sm:$0xf]
    %v3007 = vld [vmem:[%s8 + $0x398] sm:$0xf]
    %v3008 = vld [vmem:[%s8 + $0x39c] sm:$0xf]
    %v3009 = vld [vmem:[%s8 + $0x3a0] sm:$0xf]
    %v3010 = vld [vmem:[%s8 + $0x3a4] sm:$0xf]
    %v3011 = vld [vmem:[%s8 + $0x3a8] sm:$0xf]
    %v3012 = vld [vmem:[%s8 + $0x3ac] sm:$0xf]
    %v3013 = vld [vmem:[%s8 + $0x3b0] sm:$0xf]
    %v3014 = vld [vmem:[%s8 + $0x3b4] sm:$0xf]
    %v3015 = vld [vmem:[%s8 + $0x3b8] sm:$0xf]
    %v3016 = vld [vmem:[%s8 + $0x3bc] sm:$0xf]
    %v3017 = vld [vmem:[%s8 + $0x3c0] sm:$0xf]
    %v3018 = vld [vmem:[%s8 + $0x3c4] sm:$0xf]
    %v3019 = vld [vmem:[%s8 + $0x3c8] sm:$0xf]
    %v3020 = vld [vmem:[%s8 + $0x3cc] sm:$0xf]
    %v3021 = vld [vmem:[%s8 + $0x3d0] sm:$0xf]
    %v3022 = vld [vmem:[%s8 + $0x3d4] sm:$0xf]
    %v3023 = vld [vmem:[%s8 + $0x3d8] sm:$0xf]
    %v3024 = vld [vmem:[%s8 + $0x3dc] sm:$0xf]
    %v3025 = vld [vmem:[%s8 + $0x3e0] sm:$0xf]
    %v3026 = vld [vmem:[%s8 + $0x3e4] sm:$0xf]
    %v3027 = vld [vmem:[%s8 + $0x3e8] sm:$0xf]
    %v3028 = vld [vmem:[%s8 + $0x3ec] sm:$0xf]
    %v3029 = vld [vmem:[%s8 + $0x3f0] sm:$0xf]
    %v3030 = vld [vmem:[%s8 + $0x3f4] sm:$0xf]
    %v3031 = vld [vmem:[%s8 + $0x3f8] sm:$0xf]
    %v3032 = vld [vmem:[%s8 + $0x3fc] sm:$0xf]
    %v3033 = vpack.c.bf16 %v2761, %v2761
    %v3034 = vpack.c.bf16 %v2762, %v2762
    %v3035 = vpack.c.bf16 %v2763, %v2763
    %v3036 = vpack.c.bf16 %v2764, %v2764
    %v3037 = vpack.c.bf16 %v2765, %v2765
    %v3038 = vpack.c.bf16 %v2766, %v2766
    %v3039 = vpack.c.bf16 %v2767, %v2767
    %v3040 = vpack.c.bf16 %v2768, %v2768
    %v3041 = vpack.c.bf16 %v2769, %v2769
    %v3042 = vpack.c.bf16 %v2770, %v2770
    %v3043 = vpack.c.bf16 %v2771, %v2771
    %v3044 = vpack.c.bf16 %v2772, %v2772
    %v3045 = vpack.c.bf16 %v2773, %v2773
    %v3046 = vpack.c.bf16 %v2774, %v2774
    %v3047 = vpack.c.bf16 %v2775, %v2775
    %v3048 = vpack.c.bf16 %v2776, %v2776
    %v3049 = vlaneseq
    %v3050 = vshrl.u32 %v3049, 7
    %v3051 = vsub.s32 6, %v3050
    %v3052 = vrot.slane %v167, %v3051
    %v3309 = vunpack.c.l.b16 %v2777
    %v3310 = vunpack.c.l.b16 %v2778
    %v3311 = vunpack.c.l.b16 %v2779
    %v3312 = vunpack.c.l.b16 %v2780
    %v3313 = vunpack.c.l.b16 %v2781
    %v3314 = vunpack.c.l.b16 %v2782
    %v3315 = vunpack.c.l.b16 %v2783
    %v3316 = vunpack.c.l.b16 %v2784
    %v3317 = vunpack.c.l.b16 %v2785
    %v3318 = vunpack.c.l.b16 %v2786
    %v3319 = vunpack.c.l.b16 %v2787
    %v3320 = vunpack.c.l.b16 %v2788
    %v3321 = vunpack.c.l.b16 %v2789
    %v3322 = vunpack.c.l.b16 %v2790
    %v3323 = vunpack.c.l.b16 %v2791
    %v3324 = vunpack.c.l.b16 %v2792
    %v3325 = vunpack.c.l.b16 %v2793
    %v3326 = vunpack.c.l.b16 %v2794
    %v3327 = vunpack.c.l.b16 %v2795
    %v3328 = vunpack.c.l.b16 %v2796
    %v3329 = vunpack.c.l.b16 %v2797
    %v3330 = vunpack.c.l.b16 %v2798
    %v3331 = vunpack.c.l.b16 %v2799
    %v3332 = vunpack.c.l.b16 %v2800
    %v3333 = vunpack.c.l.b16 %v2801
    %v3334 = vunpack.c.l.b16 %v2802
    %v3335 = vunpack.c.l.b16 %v2803
    %v3336 = vunpack.c.l.b16 %v2804
    %v3337 = vunpack.c.l.b16 %v2805
    %v3338 = vunpack.c.l.b16 %v2806
    %v3339 = vunpack.c.l.b16 %v2807
    %v3340 = vunpack.c.l.b16 %v2808
    %v3341 = vunpack.c.l.b16 %v2809
    %v3342 = vunpack.c.l.b16 %v2810
    %v3343 = vunpack.c.l.b16 %v2811
    %v3344 = vunpack.c.l.b16 %v2812
    %v3345 = vunpack.c.l.b16 %v2813
    %v3346 = vunpack.c.l.b16 %v2814
    %v3347 = vunpack.c.l.b16 %v2815
    %v3348 = vunpack.c.l.b16 %v2816
    %v3349 = vunpack.c.l.b16 %v2817
    %v3350 = vunpack.c.l.b16 %v2818
    %v3351 = vunpack.c.l.b16 %v2819
    %v3352 = vunpack.c.l.b16 %v2820
    %v3353 = vunpack.c.l.b16 %v2821
    %v3354 = vunpack.c.l.b16 %v2822
    %v3355 = vunpack.c.l.b16 %v2823
    %v3356 = vunpack.c.l.b16 %v2824
    %v3357 = vunpack.c.l.b16 %v2825
    %v3358 = vunpack.c.l.b16 %v2826
    %v3359 = vunpack.c.l.b16 %v2827
    %v3360 = vunpack.c.l.b16 %v2828
    %v3361 = vunpack.c.l.b16 %v2829
    %v3362 = vunpack.c.l.b16 %v2830
    %v3363 = vunpack.c.l.b16 %v2831
    %v3364 = vunpack.c.l.b16 %v2832
    %v3365 = vunpack.c.l.b16 %v2833
    %v3366 = vunpack.c.l.b16 %v2834
    %v3367 = vunpack.c.l.b16 %v2835
    %v3368 = vunpack.c.l.b16 %v2836
    %v3369 = vunpack.c.l.b16 %v2837
    %v3370 = vunpack.c.l.b16 %v2838
    %v3371 = vunpack.c.l.b16 %v2839
    %v3372 = vunpack.c.l.b16 %v2840
    %v3373 = vunpack.c.l.b16 %v2841
    %v3374 = vunpack.c.l.b16 %v2842
    %v3375 = vunpack.c.l.b16 %v2843
    %v3376 = vunpack.c.l.b16 %v2844
    %v3377 = vunpack.c.l.b16 %v2845
    %v3378 = vunpack.c.l.b16 %v2846
    %v3379 = vunpack.c.l.b16 %v2847
    %v3380 = vunpack.c.l.b16 %v2848
    %v3381 = vunpack.c.l.b16 %v2849
    %v3382 = vunpack.c.l.b16 %v2850
    %v3383 = vunpack.c.l.b16 %v2851
    %v3384 = vunpack.c.l.b16 %v2852
    %v3385 = vunpack.c.l.b16 %v2853
    %v3386 = vunpack.c.l.b16 %v2854
    %v3387 = vunpack.c.l.b16 %v2855
    %v3388 = vunpack.c.l.b16 %v2856
    %v3389 = vunpack.c.l.b16 %v2857
    %v3390 = vunpack.c.l.b16 %v2858
    %v3391 = vunpack.c.l.b16 %v2859
    %v3392 = vunpack.c.l.b16 %v2860
    %v3393 = vunpack.c.l.b16 %v2861
    %v3394 = vunpack.c.l.b16 %v2862
    %v3395 = vunpack.c.l.b16 %v2863
    %v3396 = vunpack.c.l.b16 %v2864
    %v3397 = vunpack.c.l.b16 %v2865
    %v3398 = vunpack.c.l.b16 %v2866
    %v3399 = vunpack.c.l.b16 %v2867
    %v3400 = vunpack.c.l.b16 %v2868
    %v3401 = vunpack.c.l.b16 %v2869
    %v3402 = vunpack.c.l.b16 %v2870
    %v3403 = vunpack.c.l.b16 %v2871
    %v3404 = vunpack.c.l.b16 %v2872
    %v3405 = vunpack.c.l.b16 %v2873
    %v3406 = vunpack.c.l.b16 %v2874
    %v3407 = vunpack.c.l.b16 %v2875
    %v3408 = vunpack.c.l.b16 %v2876
    %v3409 = vunpack.c.l.b16 %v2877
    %v3410 = vunpack.c.l.b16 %v2878
    %v3411 = vunpack.c.l.b16 %v2879
    %v3412 = vunpack.c.l.b16 %v2880
    %v3413 = vunpack.c.l.b16 %v2881
    %v3414 = vunpack.c.l.b16 %v2882
    %v3415 = vunpack.c.l.b16 %v2883
    %v3416 = vunpack.c.l.b16 %v2884
    %v3417 = vunpack.c.l.b16 %v2885
    %v3418 = vunpack.c.l.b16 %v2886
    %v3419 = vunpack.c.l.b16 %v2887
    %v3420 = vunpack.c.l.b16 %v2888
    %v3421 = vunpack.c.l.b16 %v2889
    %v3422 = vunpack.c.l.b16 %v2890
    %v3423 = vunpack.c.l.b16 %v2891
    %v3424 = vunpack.c.l.b16 %v2892
    %v3425 = vunpack.c.l.b16 %v2893
    %v3426 = vunpack.c.l.b16 %v2894
    %v3427 = vunpack.c.l.b16 %v2895
    %v3428 = vunpack.c.l.b16 %v2896
    %v3429 = vunpack.c.l.b16 %v2897
    %v3430 = vunpack.c.l.b16 %v2898
    %v3431 = vunpack.c.l.b16 %v2899
    %v3432 = vunpack.c.l.b16 %v2900
    %v3433 = vunpack.c.l.b16 %v2901
    %v3434 = vunpack.c.l.b16 %v2902
    %v3435 = vunpack.c.l.b16 %v2903
    %v3436 = vunpack.c.l.b16 %v2904
    %v3437 = vunpack.c.l.b16 %v2905
    %v3438 = vunpack.c.l.b16 %v2906
    %v3439 = vunpack.c.l.b16 %v2907
    %v3440 = vunpack.c.l.b16 %v2908
    %v3441 = vunpack.c.l.b16 %v2909
    %v3442 = vunpack.c.l.b16 %v2910
    %v3443 = vunpack.c.l.b16 %v2911
    %v3444 = vunpack.c.l.b16 %v2912
    %v3445 = vunpack.c.l.b16 %v2913
    %v3446 = vunpack.c.l.b16 %v2914
    %v3447 = vunpack.c.l.b16 %v2915
    %v3448 = vunpack.c.l.b16 %v2916
    %v3449 = vunpack.c.l.b16 %v2917
    %v3450 = vunpack.c.l.b16 %v2918
    %v3451 = vunpack.c.l.b16 %v2919
    %v3452 = vunpack.c.l.b16 %v2920
    %v3453 = vunpack.c.l.b16 %v2921
    %v3454 = vunpack.c.l.b16 %v2922
    %v3455 = vunpack.c.l.b16 %v2923
    %v3456 = vunpack.c.l.b16 %v2924
    %v3457 = vunpack.c.l.b16 %v2925
    %v3458 = vunpack.c.l.b16 %v2926
    %v3459 = vunpack.c.l.b16 %v2927
    %v3460 = vunpack.c.l.b16 %v2928
    %v3461 = vunpack.c.l.b16 %v2929
    %v3462 = vunpack.c.l.b16 %v2930
    %v3463 = vunpack.c.l.b16 %v2931
    %v3464 = vunpack.c.l.b16 %v2932
    %v3465 = vunpack.c.l.b16 %v2933
    %v3466 = vunpack.c.l.b16 %v2934
    %v3467 = vunpack.c.l.b16 %v2935
    %v3468 = vunpack.c.l.b16 %v2936
    %v3469 = vunpack.c.l.b16 %v2937
    %v3470 = vunpack.c.l.b16 %v2938
    %v3471 = vunpack.c.l.b16 %v2939
    %v3472 = vunpack.c.l.b16 %v2940
    %v3473 = vunpack.c.l.b16 %v2941
    %v3474 = vunpack.c.l.b16 %v2942
    %v3475 = vunpack.c.l.b16 %v2943
    %v3476 = vunpack.c.l.b16 %v2944
    %v3477 = vunpack.c.l.b16 %v2945
    %v3478 = vunpack.c.l.b16 %v2946
    %v3479 = vunpack.c.l.b16 %v2947
    %v3480 = vunpack.c.l.b16 %v2948
    %v3481 = vunpack.c.l.b16 %v2949
    %v3482 = vunpack.c.l.b16 %v2950
    %v3483 = vunpack.c.l.b16 %v2951
    %v3484 = vunpack.c.l.b16 %v2952
    %v3485 = vunpack.c.l.b16 %v2953
    %v3486 = vunpack.c.l.b16 %v2954
    %v3487 = vunpack.c.l.b16 %v2955
    %v3488 = vunpack.c.l.b16 %v2956
    %v3489 = vunpack.c.l.b16 %v2957
    %v3490 = vunpack.c.l.b16 %v2958
    %v3491 = vunpack.c.l.b16 %v2959
    %v3492 = vunpack.c.l.b16 %v2960
    %v3493 = vunpack.c.l.b16 %v2961
    %v3494 = vunpack.c.l.b16 %v2962
    %v3495 = vunpack.c.l.b16 %v2963
    %v3496 = vunpack.c.l.b16 %v2964
    %v3497 = vunpack.c.l.b16 %v2965
    %v3498 = vunpack.c.l.b16 %v2966
    %v3499 = vunpack.c.l.b16 %v2967
    %v3500 = vunpack.c.l.b16 %v2968
    %v3501 = vunpack.c.l.b16 %v2969
    %v3502 = vunpack.c.l.b16 %v2970
    %v3503 = vunpack.c.l.b16 %v2971
    %v3504 = vunpack.c.l.b16 %v2972
    %v3505 = vunpack.c.l.b16 %v2973
    %v3506 = vunpack.c.l.b16 %v2974
    %v3507 = vunpack.c.l.b16 %v2975
    %v3508 = vunpack.c.l.b16 %v2976
    %v3509 = vunpack.c.l.b16 %v2977
    %v3510 = vunpack.c.l.b16 %v2978
    %v3511 = vunpack.c.l.b16 %v2979
    %v3512 = vunpack.c.l.b16 %v2980
    %v3513 = vunpack.c.l.b16 %v2981
    %v3514 = vunpack.c.l.b16 %v2982
    %v3515 = vunpack.c.l.b16 %v2983
    %v3516 = vunpack.c.l.b16 %v2984
    %v3517 = vunpack.c.l.b16 %v2985
    %v3518 = vunpack.c.l.b16 %v2986
    %v3519 = vunpack.c.l.b16 %v2987
    %v3520 = vunpack.c.l.b16 %v2988
    %v3521 = vunpack.c.l.b16 %v2989
    %v3522 = vunpack.c.l.b16 %v2990
    %v3523 = vunpack.c.l.b16 %v2991
    %v3524 = vunpack.c.l.b16 %v2992
    %v3525 = vunpack.c.l.b16 %v2993
    %v3526 = vunpack.c.l.b16 %v2994
    %v3527 = vunpack.c.l.b16 %v2995
    %v3528 = vunpack.c.l.b16 %v2996
    %v3529 = vunpack.c.l.b16 %v2997
    %v3530 = vunpack.c.l.b16 %v2998
    %v3531 = vunpack.c.l.b16 %v2999
    %v3532 = vunpack.c.l.b16 %v3000
    %v3533 = vunpack.c.l.b16 %v3001
    %v3534 = vunpack.c.l.b16 %v3002
    %v3535 = vunpack.c.l.b16 %v3003
    %v3536 = vunpack.c.l.b16 %v3004
    %v3537 = vunpack.c.l.b16 %v3005
    %v3538 = vunpack.c.l.b16 %v3006
    %v3539 = vunpack.c.l.b16 %v3007
    %v3540 = vunpack.c.l.b16 %v3008
    %v3541 = vunpack.c.l.b16 %v3009
    %v3542 = vunpack.c.l.b16 %v3010
    %v3543 = vunpack.c.l.b16 %v3011
    %v3544 = vunpack.c.l.b16 %v3012
    %v3545 = vunpack.c.l.b16 %v3013
    %v3546 = vunpack.c.l.b16 %v3014
    %v3547 = vunpack.c.l.b16 %v3015
    %v3548 = vunpack.c.l.b16 %v3016
    %v3549 = vunpack.c.l.b16 %v3017
    %v3550 = vunpack.c.l.b16 %v3018
    %v3551 = vunpack.c.l.b16 %v3019
    %v3552 = vunpack.c.l.b16 %v3020
    %v3553 = vunpack.c.l.b16 %v3021
    %v3554 = vunpack.c.l.b16 %v3022
    %v3555 = vunpack.c.l.b16 %v3023
    %v3556 = vunpack.c.l.b16 %v3024
    %v3557 = vunpack.c.l.b16 %v3025
    %v3558 = vunpack.c.l.b16 %v3026
    %v3559 = vunpack.c.l.b16 %v3027
    %v3560 = vunpack.c.l.b16 %v3028
    %v3561 = vunpack.c.l.b16 %v3029
    %v3562 = vunpack.c.l.b16 %v3030
    %v3563 = vunpack.c.l.b16 %v3031
    %v3564 = vunpack.c.l.b16 %v3032
    %v3565 = vpack.c.b16 %v3310, %v3309
    %v3566 = vpack.c.b16 %v3312, %v3311
    %v3567 = vpack.c.b16 %v3314, %v3313
    %v3568 = vpack.c.b16 %v3316, %v3315
    %v3569 = vpack.c.b16 %v3318, %v3317
    %v3570 = vpack.c.b16 %v3320, %v3319
    %v3571 = vpack.c.b16 %v3322, %v3321
    %v3572 = vpack.c.b16 %v3324, %v3323
    %v3573 = vpack.c.b16 %v3326, %v3325
    %v3574 = vpack.c.b16 %v3328, %v3327
    %v3575 = vpack.c.b16 %v3330, %v3329
    %v3576 = vpack.c.b16 %v3332, %v3331
    %v3577 = vpack.c.b16 %v3334, %v3333
    %v3578 = vpack.c.b16 %v3336, %v3335
    %v3579 = vpack.c.b16 %v3338, %v3337
    %v3580 = vpack.c.b16 %v3340, %v3339
    %v3581 = vpack.c.b16 %v3342, %v3341
    %v3582 = vpack.c.b16 %v3344, %v3343
    %v3583 = vpack.c.b16 %v3346, %v3345
    %v3584 = vpack.c.b16 %v3348, %v3347
    %v3585 = vpack.c.b16 %v3350, %v3349
    %v3586 = vpack.c.b16 %v3352, %v3351
    %v3587 = vpack.c.b16 %v3354, %v3353
    %v3588 = vpack.c.b16 %v3356, %v3355
    %v3589 = vpack.c.b16 %v3358, %v3357
    %v3590 = vpack.c.b16 %v3360, %v3359
    %v3591 = vpack.c.b16 %v3362, %v3361
    %v3592 = vpack.c.b16 %v3364, %v3363
    %v3593 = vpack.c.b16 %v3366, %v3365
    %v3594 = vpack.c.b16 %v3368, %v3367
    %v3595 = vpack.c.b16 %v3370, %v3369
    %v3596 = vpack.c.b16 %v3372, %v3371
    %v3597 = vpack.c.b16 %v3374, %v3373
    %v3598 = vpack.c.b16 %v3376, %v3375
    %v3599 = vpack.c.b16 %v3378, %v3377
    %v3600 = vpack.c.b16 %v3380, %v3379
    %v3601 = vpack.c.b16 %v3382, %v3381
    %v3602 = vpack.c.b16 %v3384, %v3383
    %v3603 = vpack.c.b16 %v3386, %v3385
    %v3604 = vpack.c.b16 %v3388, %v3387
    %v3605 = vpack.c.b16 %v3390, %v3389
    %v3606 = vpack.c.b16 %v3392, %v3391
    %v3607 = vpack.c.b16 %v3394, %v3393
    %v3608 = vpack.c.b16 %v3396, %v3395
    %v3609 = vpack.c.b16 %v3398, %v3397
    %v3610 = vpack.c.b16 %v3400, %v3399
    %v3611 = vpack.c.b16 %v3402, %v3401
    %v3612 = vpack.c.b16 %v3404, %v3403
    %v3613 = vpack.c.b16 %v3406, %v3405
    %v3614 = vpack.c.b16 %v3408, %v3407
    %v3615 = vpack.c.b16 %v3410, %v3409
    %v3616 = vpack.c.b16 %v3412, %v3411
    %v3617 = vpack.c.b16 %v3414, %v3413
    %v3618 = vpack.c.b16 %v3416, %v3415
    %v3619 = vpack.c.b16 %v3418, %v3417
    %v3620 = vpack.c.b16 %v3420, %v3419
    %v3621 = vpack.c.b16 %v3422, %v3421
    %v3622 = vpack.c.b16 %v3424, %v3423
    %v3623 = vpack.c.b16 %v3426, %v3425
    %v3624 = vpack.c.b16 %v3428, %v3427
    %v3625 = vpack.c.b16 %v3430, %v3429
    %v3626 = vpack.c.b16 %v3432, %v3431
    %v3627 = vpack.c.b16 %v3434, %v3433
    %v3628 = vpack.c.b16 %v3436, %v3435
    %v3629 = vpack.c.b16 %v3438, %v3437
    %v3630 = vpack.c.b16 %v3440, %v3439
    %v3631 = vpack.c.b16 %v3442, %v3441
    %v3632 = vpack.c.b16 %v3444, %v3443
    %v3633 = vpack.c.b16 %v3446, %v3445
    %v3634 = vpack.c.b16 %v3448, %v3447
    %v3635 = vpack.c.b16 %v3450, %v3449
    %v3636 = vpack.c.b16 %v3452, %v3451
    %v3637 = vpack.c.b16 %v3454, %v3453
    %v3638 = vpack.c.b16 %v3456, %v3455
    %v3639 = vpack.c.b16 %v3458, %v3457
    %v3640 = vpack.c.b16 %v3460, %v3459
    %v3641 = vpack.c.b16 %v3462, %v3461
    %v3642 = vpack.c.b16 %v3464, %v3463
    %v3643 = vpack.c.b16 %v3466, %v3465
    %v3644 = vpack.c.b16 %v3468, %v3467
    %v3645 = vpack.c.b16 %v3470, %v3469
    %v3646 = vpack.c.b16 %v3472, %v3471
    %v3647 = vpack.c.b16 %v3474, %v3473
    %v3648 = vpack.c.b16 %v3476, %v3475
    %v3649 = vpack.c.b16 %v3478, %v3477
    %v3650 = vpack.c.b16 %v3480, %v3479
    %v3651 = vpack.c.b16 %v3482, %v3481
    %v3652 = vpack.c.b16 %v3484, %v3483
    %v3653 = vpack.c.b16 %v3486, %v3485
    %v3654 = vpack.c.b16 %v3488, %v3487
    %v3655 = vpack.c.b16 %v3490, %v3489
    %v3656 = vpack.c.b16 %v3492, %v3491
    %v3657 = vpack.c.b16 %v3494, %v3493
    %v3658 = vpack.c.b16 %v3496, %v3495
    %v3659 = vpack.c.b16 %v3498, %v3497
    %v3660 = vpack.c.b16 %v3500, %v3499
    %v3661 = vpack.c.b16 %v3502, %v3501
    %v3662 = vpack.c.b16 %v3504, %v3503
    %v3663 = vpack.c.b16 %v3506, %v3505
    %v3664 = vpack.c.b16 %v3508, %v3507
    %v3665 = vpack.c.b16 %v3510, %v3509
    %v3666 = vpack.c.b16 %v3512, %v3511
    %v3667 = vpack.c.b16 %v3514, %v3513
    %v3668 = vpack.c.b16 %v3516, %v3515
    %v3669 = vpack.c.b16 %v3518, %v3517
    %v3670 = vpack.c.b16 %v3520, %v3519
    %v3671 = vpack.c.b16 %v3522, %v3521
    %v3672 = vpack.c.b16 %v3524, %v3523
    %v3673 = vpack.c.b16 %v3526, %v3525
    %v3674 = vpack.c.b16 %v3528, %v3527
    %v3675 = vpack.c.b16 %v3530, %v3529
    %v3676 = vpack.c.b16 %v3532, %v3531
    %v3677 = vpack.c.b16 %v3534, %v3533
    %v3678 = vpack.c.b16 %v3536, %v3535
    %v3679 = vpack.c.b16 %v3538, %v3537
    %v3680 = vpack.c.b16 %v3540, %v3539
    %v3681 = vpack.c.b16 %v3542, %v3541
    %v3682 = vpack.c.b16 %v3544, %v3543
    %v3683 = vpack.c.b16 %v3546, %v3545
    %v3684 = vpack.c.b16 %v3548, %v3547
    %v3685 = vpack.c.b16 %v3550, %v3549
    %v3686 = vpack.c.b16 %v3552, %v3551
    %v3687 = vpack.c.b16 %v3554, %v3553
    %v3688 = vpack.c.b16 %v3556, %v3555
    %v3689 = vpack.c.b16 %v3558, %v3557
    %v3690 = vpack.c.b16 %v3560, %v3559
    %v3691 = vpack.c.b16 %v3562, %v3561
    %v3692 = vpack.c.b16 %v3564, %v3563
    %3821 = vmatprep.subr.bf16.mxu0 0
    %3822 = vmatpush1.bf16.msra.mxu0 %v3565
    %3823 = vmatprep.subr.bf16.mxu0 0
    %3824 = vmatpush1.bf16.msra.mxu0 %v3566
    %3825 = vmatprep.subr.bf16.mxu0 0
    %3826 = vmatpush1.bf16.msra.mxu0 %v3567
    %3827 = vmatprep.subr.bf16.mxu0 0
    %3828 = vmatpush1.bf16.msra.mxu0 %v3568
    %3829 = vmatprep.subr.bf16.mxu0 0
    %3830 = vmatpush1.bf16.msra.mxu0 %v3569
    %3831 = vmatprep.subr.bf16.mxu0 0
    %3832 = vmatpush1.bf16.msra.mxu0 %v3570
    %3833 = vmatprep.subr.bf16.mxu0 0
    %3834 = vmatpush1.bf16.msra.mxu0 %v3571
    %3835 = vmatprep.subr.bf16.mxu0 0
    %3836 = vmatpush1.bf16.msra.mxu0 %v3572
    %3837 = vmatprep.subr.bf16.mxu0 0
    %3838 = vmatpush1.bf16.msra.mxu0 %v3573
    %3839 = vmatprep.subr.bf16.mxu0 0
    %3840 = vmatpush1.bf16.msra.mxu0 %v3574
    %3841 = vmatprep.subr.bf16.mxu0 0
    %3842 = vmatpush1.bf16.msra.mxu0 %v3575
    %3843 = vmatprep.subr.bf16.mxu0 0
    %3844 = vmatpush1.bf16.msra.mxu0 %v3576
    %3845 = vmatprep.subr.bf16.mxu0 0
    %3846 = vmatpush1.bf16.msra.mxu0 %v3577
    %3847 = vmatprep.subr.bf16.mxu0 0
    %3848 = vmatpush1.bf16.msra.mxu0 %v3578
    %3849 = vmatprep.subr.bf16.mxu0 0
    %3850 = vmatpush1.bf16.msra.mxu0 %v3579
    %3851 = vmatprep.subr.bf16.mxu0 0
    %3852 = vmatpush1.bf16.msra.mxu0 %v3580
    %3853 = vmatprep.mubr.bf16.mxu0 %v3034
    %3854 = vmatmul.mubr.bf16.gmra.mrb[0].mxu0 %v3033
    %v3855 = vpop.f32.mrb[0].mxu0
    %v3856 = vadd.f32 %v3052, %v3855
    %v3857 = vpop.f32.mrb[0].mxu0
    %v3858 = vpop.f32.mrb[0].mxu0
    %v3859 = vpop.f32.mrb[0].mxu0
    %3860 = vdwg.mxu0
    %3861 = vmatprep.subr.bf16.mxu0 0
    %3862 = vmatpush1.bf16.msra.mxu0 %v3581
    %3863 = vmatprep.subr.bf16.mxu0 0
    %3864 = vmatpush1.bf16.msra.mxu0 %v3582
    %3865 = vmatprep.subr.bf16.mxu0 0
    %3866 = vmatpush1.bf16.msra.mxu0 %v3583
    %3867 = vmatprep.subr.bf16.mxu0 0
    %3868 = vmatpush1.bf16.msra.mxu0 %v3584
    %3869 = vmatprep.subr.bf16.mxu0 0
    %3870 = vmatpush1.bf16.msra.mxu0 %v3585
    %3871 = vmatprep.subr.bf16.mxu0 0
    %3872 = vmatpush1.bf16.msra.mxu0 %v3586
    %3873 = vmatprep.subr.bf16.mxu0 0
    %3874 = vmatpush1.bf16.msra.mxu0 %v3587
    %3875 = vmatprep.subr.bf16.mxu0 0
    %3876 = vmatpush1.bf16.msra.mxu0 %v3588
    %3877 = vmatprep.subr.bf16.mxu0 0
    %3878 = vmatpush1.bf16.msra.mxu0 %v3589
    %3879 = vmatprep.subr.bf16.mxu0 0
    %3880 = vmatpush1.bf16.msra.mxu0 %v3590
    %3881 = vmatprep.subr.bf16.mxu0 0
    %3882 = vmatpush1.bf16.msra.mxu0 %v3591
    %3883 = vmatprep.subr.bf16.mxu0 0
    %3884 = vmatpush1.bf16.msra.mxu0 %v3592
    %3885 = vmatprep.subr.bf16.mxu0 0
    %3886 = vmatpush1.bf16.msra.mxu0 %v3593
    %3887 = vmatprep.subr.bf16.mxu0 0
    %3888 = vmatpush1.bf16.msra.mxu0 %v3594
    %3889 = vmatprep.subr.bf16.mxu0 0
    %3890 = vmatpush1.bf16.msra.mxu0 %v3595
    %3891 = vmatprep.subr.bf16.mxu0 0
    %3892 = vmatpush1.bf16.msra.mxu0 %v3596
    %3893 = vmatprep.mubr.bf16.mxu0 %v3036
    %3894 = vmatmul.mubr.bf16.gmra.mrb[0].mxu0 %v3035
    %v3895 = vpop.f32.mrb[0].mxu0
    %v3896 = vadd.f32 %v3856, %v3895
    %v3897 = vpop.f32.mrb[0].mxu0
    %v3898 = vpop.f32.mrb[0].mxu0
    %v3899 = vpop.f32.mrb[0].mxu0
    %3900 = vdwg.mxu0
    %3901 = vmatprep.subr.bf16.mxu0 0
    %3902 = vmatpush1.bf16.msra.mxu0 %v3597
    %3903 = vmatprep.subr.bf16.mxu0 0
    %3904 = vmatpush1.bf16.msra.mxu0 %v3598
    %3905 = vmatprep.subr.bf16.mxu0 0
    %3906 = vmatpush1.bf16.msra.mxu0 %v3599
    %3907 = vmatprep.subr.bf16.mxu0 0
    %3908 = vmatpush1.bf16.msra.mxu0 %v3600
    %3909 = vmatprep.subr.bf16.mxu0 0
    %3910 = vmatpush1.bf16.msra.mxu0 %v3601
    %3911 = vmatprep.subr.bf16.mxu0 0
    %3912 = vmatpush1.bf16.msra.mxu0 %v3602
    %3913 = vmatprep.subr.bf16.mxu0 0
    %3914 = vmatpush1.bf16.msra.mxu0 %v3603
    %3915 = vmatprep.subr.bf16.mxu0 0
    %3916 = vmatpush1.bf16.msra.mxu0 %v3604
    %3917 = vmatprep.subr.bf16.mxu0 0
    %3918 = vmatpush1.bf16.msra.mxu0 %v3605
    %3919 = vmatprep.subr.bf16.mxu0 0
    %3920 = vmatpush1.bf16.msra.mxu0 %v3606
    %3921 = vmatprep.subr.bf16.mxu0 0
    %3922 = vmatpush1.bf16.msra.mxu0 %v3607
    %3923 = vmatprep.subr.bf16.mxu0 0
    %3924 = vmatpush1.bf16.msra.mxu0 %v3608
    %3925 = vmatprep.subr.bf16.mxu0 0
    %3926 = vmatpush1.bf16.msra.mxu0 %v3609
    %3927 = vmatprep.subr.bf16.mxu0 0
    %3928 = vmatpush1.bf16.msra.mxu0 %v3610
    %3929 = vmatprep.subr.bf16.mxu0 0
    %3930 = vmatpush1.bf16.msra.mxu0 %v3611
    %3931 = vmatprep.subr.bf16.mxu0 0
    %3932 = vmatpush1.bf16.msra.mxu0 %v3612
    %3933 = vmatprep.mubr.bf16.mxu0 %v3038
    %3934 = vmatmul.mubr.bf16.gmra.mrb[0].mxu0 %v3037
    %v3935 = vpop.f32.mrb[0].mxu0
    %v3936 = vadd.f32 %v3896, %v3935
    %v3937 = vpop.f32.mrb[0].mxu0
    %v3938 = vpop.f32.mrb[0].mxu0
    %v3939 = vpop.f32.mrb[0].mxu0
    %3940 = vdwg.mxu0
    %3941 = vmatprep.subr.bf16.mxu0 0
    %3942 = vmatpush1.bf16.msra.mxu0 %v3613
    %3943 = vmatprep.subr.bf16.mxu0 0
    %3944 = vmatpush1.bf16.msra.mxu0 %v3614
    %3945 = vmatprep.subr.bf16.mxu0 0
    %3946 = vmatpush1.bf16.msra.mxu0 %v3615
    %3947 = vmatprep.subr.bf16.mxu0 0
    %3948 = vmatpush1.bf16.msra.mxu0 %v3616
    %3949 = vmatprep.subr.bf16.mxu0 0
    %3950 = vmatpush1.bf16.msra.mxu0 %v3617
    %3951 = vmatprep.subr.bf16.mxu0 0
    %3952 = vmatpush1.bf16.msra.mxu0 %v3618
    %3953 = vmatprep.subr.bf16.mxu0 0
    %3954 = vmatpush1.bf16.msra.mxu0 %v3619
    %3955 = vmatprep.subr.bf16.mxu0 0
    %3956 = vmatpush1.bf16.msra.mxu0 %v3620
    %3957 = vmatprep.subr.bf16.mxu0 0
    %3958 = vmatpush1.bf16.msra.mxu0 %v3621
    %3959 = vmatprep.subr.bf16.mxu0 0
    %3960 = vmatpush1.bf16.msra.mxu0 %v3622
    %3961 = vmatprep.subr.bf16.mxu0 0
    %3962 = vmatpush1.bf16.msra.mxu0 %v3623
    %3963 = vmatprep.subr.bf16.mxu0 0
    %3964 = vmatpush1.bf16.msra.mxu0 %v3624
    %3965 = vmatprep.subr.bf16.mxu0 0
    %3966 = vmatpush1.bf16.msra.mxu0 %v3625
    %3967 = vmatprep.subr.bf16.mxu0 0
    %3968 = vmatpush1.bf16.msra.mxu0 %v3626
    %3969 = vmatprep.subr.bf16.mxu0 0
    %3970 = vmatpush1.bf16.msra.mxu0 %v3627
    %3971 = vmatprep.subr.bf16.mxu0 0
    %3972 = vmatpush1.bf16.msra.mxu0 %v3628
    %3973 = vmatprep.mubr.bf16.mxu0 %v3040
    %3974 = vmatmul.mubr.bf16.gmra.mrb[0].mxu0 %v3039
    %v3975 = vpop.f32.mrb[0].mxu0
    %v3976 = vadd.f32 %v3936, %v3975
    %v3977 = vpop.f32.mrb[0].mxu0
    %v3978 = vpop.f32.mrb[0].mxu0
    %v3979 = vpop.f32.mrb[0].mxu0
    %3980 = vdwg.mxu0
    %3981 = vmatprep.subr.bf16.mxu0 0
    %3982 = vmatpush1.bf16.msra.mxu0 %v3629
    %3983 = vmatprep.subr.bf16.mxu0 0
    %3984 = vmatpush1.bf16.msra.mxu0 %v3630
    %3985 = vmatprep.subr.bf16.mxu0 0
    %3986 = vmatpush1.bf16.msra.mxu0 %v3631
    %3987 = vmatprep.subr.bf16.mxu0 0
    %3988 = vmatpush1.bf16.msra.mxu0 %v3632
    %3989 = vmatprep.subr.bf16.mxu0 0
    %3990 = vmatpush1.bf16.msra.mxu0 %v3633
    %3991 = vmatprep.subr.bf16.mxu0 0
    %3992 = vmatpush1.bf16.msra.mxu0 %v3634
    %3993 = vmatprep.subr.bf16.mxu0 0
    %3994 = vmatpush1.bf16.msra.mxu0 %v3635
    %3995 = vmatprep.subr.bf16.mxu0 0
    %3996 = vmatpush1.bf16.msra.mxu0 %v3636
    %3997 = vmatprep.subr.bf16.mxu0 0
    %3998 = vmatpush1.bf16.msra.mxu0 %v3637
    %3999 = vmatprep.subr.bf16.mxu0 0
    %4000 = vmatpush1.bf16.msra.mxu0 %v3638
    %4001 = vmatprep.subr.bf16.mxu0 0
    %4002 = vmatpush1.bf16.msra.mxu0 %v3639
    %4003 = vmatprep.subr.bf16.mxu0 0
    %4004 = vmatpush1.bf16.msra.mxu0 %v3640
    %4005 = vmatprep.subr.bf16.mxu0 0
    %4006 = vmatpush1.bf16.msra.mxu0 %v3641
    %4007 = vmatprep.subr.bf16.mxu0 0
    %4008 = vmatpush1.bf16.msra.mxu0 %v3642
    %4009 = vmatprep.subr.bf16.mxu0 0
    %4010 = vmatpush1.bf16.msra.mxu0 %v3643
    %4011 = vmatprep.subr.bf16.mxu0 0
    %4012 = vmatpush1.bf16.msra.mxu0 %v3644
    %4013 = vmatprep.mubr.bf16.mxu0 %v3042
    %4014 = vmatmul.mubr.bf16.gmra.mrb[0].mxu0 %v3041
    %v4015 = vpop.f32.mrb[0].mxu0
    %v4016 = vadd.f32 %v3976, %v4015
    %v4017 = vpop.f32.mrb[0].mxu0
    %v4018 = vpop.f32.mrb[0].mxu0
    %v4019 = vpop.f32.mrb[0].mxu0
    %4020 = vdwg.mxu0
    %4021 = vmatprep.subr.bf16.mxu0 0
    %4022 = vmatpush1.bf16.msra.mxu0 %v3645
    %4023 = vmatprep.subr.bf16.mxu0 0
    %4024 = vmatpush1.bf16.msra.mxu0 %v3646
    %4025 = vmatprep.subr.bf16.mxu0 0
    %4026 = vmatpush1.bf16.msra.mxu0 %v3647
    %4027 = vmatprep.subr.bf16.mxu0 0
    %4028 = vmatpush1.bf16.msra.mxu0 %v3648
    %4029 = vmatprep.subr.bf16.mxu0 0
    %4030 = vmatpush1.bf16.msra.mxu0 %v3649
    %4031 = vmatprep.subr.bf16.mxu0 0
    %4032 = vmatpush1.bf16.msra.mxu0 %v3650
    %4033 = vmatprep.subr.bf16.mxu0 0
    %4034 = vmatpush1.bf16.msra.mxu0 %v3651
    %4035 = vmatprep.subr.bf16.mxu0 0
    %4036 = vmatpush1.bf16.msra.mxu0 %v3652
    %4037 = vmatprep.subr.bf16.mxu0 0
    %4038 = vmatpush1.bf16.msra.mxu0 %v3653
    %4039 = vmatprep.subr.bf16.mxu0 0
    %4040 = vmatpush1.bf16.msra.mxu0 %v3654
    %4041 = vmatprep.subr.bf16.mxu0 0
    %4042 = vmatpush1.bf16.msra.mxu0 %v3655
    %4043 = vmatprep.subr.bf16.mxu0 0
    %4044 = vmatpush1.bf16.msra.mxu0 %v3656
    %4045 = vmatprep.subr.bf16.mxu0 0
    %4046 = vmatpush1.bf16.msra.mxu0 %v3657
    %4047 = vmatprep.subr.bf16.mxu0 0
    %4048 = vmatpush1.bf16.msra.mxu0 %v3658
    %4049 = vmatprep.subr.bf16.mxu0 0
    %4050 = vmatpush1.bf16.msra.mxu0 %v3659
    %4051 = vmatprep.subr.bf16.mxu0 0
    %4052 = vmatpush1.bf16.msra.mxu0 %v3660
    %4053 = vmatprep.mubr.bf16.mxu0 %v3044
    %4054 = vmatmul.mubr.bf16.gmra.mrb[0].mxu0 %v3043
    %v4055 = vpop.f32.mrb[0].mxu0
    %v4056 = vadd.f32 %v4016, %v4055
    %v4057 = vpop.f32.mrb[0].mxu0
    %v4058 = vpop.f32.mrb[0].mxu0
    %v4059 = vpop.f32.mrb[0].mxu0
    %4060 = vdwg.mxu0
    %4061 = vmatprep.subr.bf16.mxu0 0
    %4062 = vmatpush1.bf16.msra.mxu0 %v3661
    %4063 = vmatprep.subr.bf16.mxu0 0
    %4064 = vmatpush1.bf16.msra.mxu0 %v3662
    %4065 = vmatprep.subr.bf16.mxu0 0
    %4066 = vmatpush1.bf16.msra.mxu0 %v3663
    %4067 = vmatprep.subr.bf16.mxu0 0
    %4068 = vmatpush1.bf16.msra.mxu0 %v3664
    %4069 = vmatprep.subr.bf16.mxu0 0
    %4070 = vmatpush1.bf16.msra.mxu0 %v3665
    %4071 = vmatprep.subr.bf16.mxu0 0
    %4072 = vmatpush1.bf16.msra.mxu0 %v3666
    %4073 = vmatprep.subr.bf16.mxu0 0
    %4074 = vmatpush1.bf16.msra.mxu0 %v3667
    %4075 = vmatprep.subr.bf16.mxu0 0
    %4076 = vmatpush1.bf16.msra.mxu0 %v3668
    %4077 = vmatprep.subr.bf16.mxu0 0
    %4078 = vmatpush1.bf16.msra.mxu0 %v3669
    %4079 = vmatprep.subr.bf16.mxu0 0
    %4080 = vmatpush1.bf16.msra.mxu0 %v3670
    %4081 = vmatprep.subr.bf16.mxu0 0
    %4082 = vmatpush1.bf16.msra.mxu0 %v3671
    %4083 = vmatprep.subr.bf16.mxu0 0
    %4084 = vmatpush1.bf16.msra.mxu0 %v3672
    %4085 = vmatprep.subr.bf16.mxu0 0
    %4086 = vmatpush1.bf16.msra.mxu0 %v3673
    %4087 = vmatprep.subr.bf16.mxu0 0
    %4088 = vmatpush1.bf16.msra.mxu0 %v3674
    %4089 = vmatprep.subr.bf16.mxu0 0
    %4090 = vmatpush1.bf16.msra.mxu0 %v3675
    %4091 = vmatprep.subr.bf16.mxu0 0
    %4092 = vmatpush1.bf16.msra.mxu0 %v3676
    %4093 = vmatprep.mubr.bf16.mxu0 %v3046
    %4094 = vmatmul.mubr.bf16.gmra.mrb[0].mxu0 %v3045
    %v4095 = vpop.f32.mrb[0].mxu0
    %v4096 = vadd.f32 %v4056, %v4095
    %v4097 = vpop.f32.mrb[0].mxu0
    %v4098 = vpop.f32.mrb[0].mxu0
    %v4099 = vpop.f32.mrb[0].mxu0
    %4100 = vdwg.mxu0
    %4101 = vmatprep.subr.bf16.mxu0 0
    %4102 = vmatpush1.bf16.msra.mxu0 %v3677
    %4103 = vmatprep.subr.bf16.mxu0 0
    %4104 = vmatpush1.bf16.msra.mxu0 %v3678
    %4105 = vmatprep.subr.bf16.mxu0 0
    %4106 = vmatpush1.bf16.msra.mxu0 %v3679
    %4107 = vmatprep.subr.bf16.mxu0 0
    %4108 = vmatpush1.bf16.msra.mxu0 %v3680
    %4109 = vmatprep.subr.bf16.mxu0 0
    %4110 = vmatpush1.bf16.msra.mxu0 %v3681
    %4111 = vmatprep.subr.bf16.mxu0 0
    %4112 = vmatpush1.bf16.msra.mxu0 %v3682
    %4113 = vmatprep.subr.bf16.mxu0 0
    %4114 = vmatpush1.bf16.msra.mxu0 %v3683
    %4115 = vmatprep.subr.bf16.mxu0 0
    %4116 = vmatpush1.bf16.msra.mxu0 %v3684
    %4117 = vmatprep.subr.bf16.mxu0 0
    %4118 = vmatpush1.bf16.msra.mxu0 %v3685
    %4119 = vmatprep.subr.bf16.mxu0 0
    %4120 = vmatpush1.bf16.msra.mxu0 %v3686
    %4121 = vmatprep.subr.bf16.mxu0 0
    %4122 = vmatpush1.bf16.msra.mxu0 %v3687
    %4123 = vmatprep.subr.bf16.mxu0 0
    %4124 = vmatpush1.bf16.msra.mxu0 %v3688
    %4125 = vmatprep.subr.bf16.mxu0 0
    %4126 = vmatpush1.bf16.msra.mxu0 %v3689
    %4127 = vmatprep.subr.bf16.mxu0 0
    %4128 = vmatpush1.bf16.msra.mxu0 %v3690
    %4129 = vmatprep.subr.bf16.mxu0 0
    %4130 = vmatpush1.bf16.msra.mxu0 %v3691
    %4131 = vmatprep.subr.bf16.mxu0 0
    %4132 = vmatpush1.bf16.msra.mxu0 %v3692
    %4133 = vmatprep.mubr.bf16.mxu0 %v3048
    %4134 = vmatmul.mubr.bf16.gmra.mrb[0].mxu0 %v3047
    %v4135 = vpop.f32.mrb[0].mxu0
    %v4136 = vadd.f32 %v4096, %v4135
    %v4137 = vpop.f32.mrb[0].mxu0
    %v4138 = vpop.f32.mrb[0].mxu0
    %v4139 = vpop.f32.mrb[0].mxu0
    %4140 = vdwg.mxu0
    %v4143 = vunpack.c.l.s4 1983009808
    %v4144 = vunpack.c.0.s8 %v4143
    %v4145 = vlaneseq
    %v4146 = vshrl.u32 %v4145, 7
    %v4147 = vsub.s32 %v4144, %v4146
    %v4148 = vrot.slane %v4136, %v4147
    %v4149 = vcombine.high %v4148, %v4148
    %v4152 = vadd.f32 %v1948, %v4148
    %v4153 = vadd.f32 %v1949, %v4149
    %v4156 = vcombine.low %v4152, %v4153
    %v4158 = vunpack.c.l.s4 1983009808
    %v4159 = vunpack.c.0.s8 %v4158
    %v4160 = vlaneseq
    %v4161 = vshrl.u32 %v4160, 7
    %v4162 = vsub.s32 %v4159, %v4161
    %v4163 = vrot.slane %v4156, %v4162
    %v4165 = vsel %vm1853, %v4163, 0.0
    %4166 = vadd.xlane.f32.xlu0 %v4165
    %v4167 = vpop.xlane.xlu0 %4166
    %v4168 = vmul.f32 %v4167, %v1857
    %v4171 = vunpack.c.l.s4 269488144
    %v4172 = vunpack.c.0.s8 %v4171
    %v4173 = vlaneseq
    %v4174 = vshrl.u32 %v4173, 7
    %v4175 = vsub.s32 %v4172, %v4174
    %v4176 = vrot.slane %v4168, %v4175
    %v4178 = vunpack.c.l.s4 842150450
    %v4179 = vunpack.c.0.s8 %v4178
    %v4180 = vlaneseq
    %v4181 = vshrl.u32 %v4180, 7
    %v4182 = vsub.s32 %v4179, %v4181
    %v4183 = vrot.slane %v4168, %v4182
    %v4186 = vsub.f32 %v4152, %v4176
    %v4187 = vsub.f32 %v4153, %v4183
    %v4188 = vmul.f32 %v4186, %v4186
    %v4189 = vmul.f32 %v4187, %v4187
    %v4192 = vcombine.low %v4188, %v4189
    %v4194 = vunpack.c.l.s4 1983009808
    %v4195 = vunpack.c.0.s8 %v4194
    %v4196 = vlaneseq
    %v4197 = vshrl.u32 %v4196, 7
    %v4198 = vsub.s32 %v4195, %v4197
    %v4199 = vrot.slane %v4192, %v4198
    %v4201 = vsel %vm1853, %v4199, 0.0
    %4202 = vadd.xlane.f32.xlu0 %v4201
    %v4203 = vpop.xlane.xlu0 %4202
    %v4204 = vmul.f32 %v4203, %v1857
    %v4205 = vadd.f32 %v4204, 1e-05
    %v4206 = vrsqrt.pop %v4205
    %v4209 = vunpack.c.l.s4 269488144
    %v4210 = vunpack.c.0.s8 %v4209
    %v4211 = vlaneseq
    %v4212 = vshrl.u32 %v4211, 7
    %v4213 = vsub.s32 %v4210, %v4212
    %v4214 = vrot.slane %v4206, %v4213
    %v4216 = vunpack.c.l.s4 842150450
    %v4217 = vunpack.c.0.s8 %v4216
    %v4218 = vlaneseq
    %v4219 = vshrl.u32 %v4218, 7
    %v4220 = vsub.s32 %v4217, %v4219
    %v4221 = vrot.slane %v4206, %v4220
    %v4224 = vmul.f32 %v4186, %v4214
    %v4225 = vmul.f32 %v4187, %v4221
    %v4226 = vlaneseq
    %v4227 = vshrl.u32 %v4226, 7
    %v4228 = vsub.s32 7, %v4227
    %v4229 = vrot.slane %v167, %v4228
    %v4232 = vunpack.c.l.s4 1983009808
    %v4233 = vunpack.c.0.s8 %v4232
    %v4234 = vlaneseq
    %v4235 = vshrl.u32 %v4234, 7
    %v4236 = vsub.s32 %v4233, %v4235
    %v4237 = vrot.slane %v4229, %v4236
    %v4238 = vcombine.high %v4237, %v4237
    %v4241 = vmul.f32 %v4224, %v4237
    %v4242 = vmul.f32 %v4225, %v4238
    %v4243 = vlaneseq
    %v4244 = vshrl.u32 %v4243, 7
    %v4245 = vsub.s32 0, %v4244
    %v4246 = vrot.slane %v168, %v4245
    %v4249 = vunpack.c.l.s4 1983009808
    %v4250 = vunpack.c.0.s8 %v4249
    %v4251 = vlaneseq
    %v4252 = vshrl.u32 %v4251, 7
    %v4253 = vsub.s32 %v4250, %v4252
    %v4254 = vrot.slane %v4246, %v4253
    %v4255 = vcombine.high %v4254, %v4254
    %v4258 = vadd.f32 %v4241, %v4254
    %v4259 = vadd.f32 %v4242, %v4255
    %s4260 = scalar_lea.vmem %s9, 16
    %v4261 = vld [vmem:[%s4260] sm:$0xff]
    %v4262 = vld [vmem:[%s4260 + $0x8] sm:$0x1]
    %s4263 = scalar_lea.vmem %s4, 64
    %v4264 = vld [vmem:[%s4263] sm:$0xff]
    %v4265 = vld [vmem:[%s4263 + $0x8] sm:$0xff]
    %v4266 = vld [vmem:[%s4263 + $0x10] sm:$0xff]
    %v4267 = vld [vmem:[%s4263 + $0x18] sm:$0xff]
    %v4268 = vld [vmem:[%s4263 + $0x20] sm:$0xff]
    %v4269 = vld [vmem:[%s4263 + $0x28] sm:$0xff]
    %v4270 = vld [vmem:[%s4263 + $0x30] sm:$0xff]
    %v4271 = vld [vmem:[%s4263 + $0x38] sm:$0xff]
    %v4274 = vcombine.low %v4258, %v4259
    %v4276 = vunpack.c.l.s4 1983009808
    %v4277 = vunpack.c.0.s8 %v4276
    %v4278 = vlaneseq
    %v4279 = vshrl.u32 %v4278, 7
    %v4280 = vsub.s32 %v4277, %v4279
    %v4281 = vrot.slane %v4274, %v4280
    %v4283 = vpack.c.bf16 %v4281, %v4281
    %v4292 = vunpack.c.l.b16 %v4264
    %v4293 = vunpack.c.h.b16 %v4264
    %v4294 = vunpack.c.l.b16 %v4265
    %v4295 = vunpack.c.h.b16 %v4265
    %v4296 = vunpack.c.l.b16 %v4266
    %v4297 = vunpack.c.h.b16 %v4266
    %v4298 = vunpack.c.l.b16 %v4267
    %v4299 = vunpack.c.h.b16 %v4267
    %v4300 = vunpack.c.l.b16 %v4268
    %v4301 = vunpack.c.h.b16 %v4268
    %v4302 = vunpack.c.l.b16 %v4269
    %v4303 = vunpack.c.h.b16 %v4269
    %v4304 = vunpack.c.l.b16 %v4270
    %v4305 = vunpack.c.h.b16 %v4270
    %v4306 = vunpack.c.l.b16 %v4271
    %v4307 = vunpack.c.h.b16 %v4271
    %v4308 = vpack.c.b16 %v4294, %v4292
    %v4309 = vpack.c.b16 %v4295, %v4293
    %v4310 = vpack.c.b16 %v4298, %v4296
    %v4311 = vpack.c.b16 %v4299, %v4297
    %v4312 = vpack.c.b16 %v4302, %v4300
    %v4313 = vpack.c.b16 %v4303, %v4301
    %v4314 = vpack.c.b16 %v4306, %v4304
    %v4315 = vpack.c.b16 %v4307, %v4305
    %v4325 = vsel %vm229, %v4283, 0
    %4327 = vmatprep.subr.bf16.mxu0 %v4309
    %4328 = vmatpush1.bf16.msra.mxu0 %v4308
    %4329 = vmatprep.subr.bf16.mxu0 %v4311
    %4330 = vmatpush1.bf16.msra.mxu0 %v4310
    %4331 = vmatprep.subr.bf16.mxu0 %v4313
    %4332 = vmatpush1.bf16.msra.mxu0 %v4312
    %4333 = vmatprep.subr.bf16.mxu0 %v4315
    %4334 = vmatpush1.bf16.msra.mxu0 %v4314
    %4335 = vmatprep.subr.bf16.mxu0 0
    %4336 = vmatpush1.bf16.msra.mxu0 0
    %4337 = vmatprep.subr.bf16.mxu0 0
    %4338 = vmatpush1.bf16.msra.mxu0 0
    %4339 = vmatprep.subr.bf16.mxu0 0
    %4340 = vmatpush1.bf16.msra.mxu0 0
    %4341 = vmatprep.subr.bf16.mxu0 0
    %4342 = vmatpush1.bf16.msra.mxu0 0
    %4343 = vmatprep.subr.bf16.mxu0 0
    %4344 = vmatpush1.bf16.msra.mxu0 0
    %4345 = vmatprep.subr.bf16.mxu0 0
    %4346 = vmatpush1.bf16.msra.mxu0 0
    %4347 = vmatprep.subr.bf16.mxu0 0
    %4348 = vmatpush1.bf16.msra.mxu0 0
    %4349 = vmatprep.subr.bf16.mxu0 0
    %4350 = vmatpush1.bf16.msra.mxu0 0
    %4351 = vmatprep.subr.bf16.mxu0 0
    %4352 = vmatpush1.bf16.msra.mxu0 0
    %4353 = vmatprep.subr.bf16.mxu0 0
    %4354 = vmatpush1.bf16.msra.mxu0 0
    %4355 = vmatprep.subr.bf16.mxu0 0
    %4356 = vmatpush1.bf16.msra.mxu0 0
    %4357 = vmatprep.subr.bf16.mxu0 0
    %4358 = vmatpush1.bf16.msra.mxu0 0
    %4359 = vmatprep.mubr.bf16.mxu0 0
    %4360 = vmatmul.mubr.bf16.gmra.mrb[0].mxu0 %v4325
    %v4361 = vpop.f32.mrb[0].mxu0
    %v4362 = vadd.f32 0.0, %v4361
    %v4363 = vpop.f32.mrb[0].mxu0
    %v4364 = vadd.f32 0.0, %v4363
    %v4365 = vpop.f32.mrb[0].mxu0
    %v4366 = vpop.f32.mrb[0].mxu0
    %4367 = vdwg.mxu0
    %v4368 = vlaneseq
    %v4369 = vshrl.u32 %v4368, 7
    %v4370 = vsub.s32 0, %v4369
    %v4371 = vrot.slane %v4261, %v4370
    %v4372 = vadd.f32 %v4362, %v4371
    %v4373 = vlaneseq
    %v4374 = vshrl.u32 %v4373, 7
    %v4375 = vsub.s32 1, %v4374
    %v4376 = vrot.slane %v4261, %v4375
    %4378 = vrot.lane.b32.xlu0 %v4376, 64
    %v4379 = vpop.permute.xlu0 %4378
    %v4381 = vadd.f32 %v4362, %v4379
    %v4382 = vlaneseq
    %v4383 = vshrl.u32 %v4382, 7
    %v4384 = vsub.s32 2, %v4383
    %v4385 = vrot.slane %v4261, %v4384
    %v4386 = vadd.f32 %v4364, %v4385
    %v4389 = vunpack.c.l.s4 1983009808
    %v4390 = vunpack.c.0.s8 %v4389
    %v4391 = vlaneseq
    %v4392 = vshrl.u32 %v4391, 7
    %v4393 = vsub.s32 %v4390, %v4392
    %v4394 = vrot.slane %v4372, %v4393
    %v4395 = vcombine.high %v4394, %v4394
    %v4398 = vunpack.c.l.s4 1983009808
    %v4399 = vunpack.c.0.s8 %v4398
    %v4400 = vlaneseq
    %v4401 = vshrl.u32 %v4400, 7
    %v4402 = vsub.s32 %v4399, %v4401
    %v4403 = vrot.slane %v4381, %v4402
    %v4404 = vcombine.high %v4403, %v4403
    %v4407 = vunpack.c.l.s4 1983009808
    %v4408 = vunpack.c.0.s8 %v4407
    %v4409 = vlaneseq
    %v4410 = vshrl.u32 %v4409, 7
    %v4411 = vsub.s32 %v4408, %v4410
    %v4412 = vrot.slane %v4386, %v4411
    %v4413 = vcombine.high %v4412, %v4412
    %v4415 = vunpack.c.l.s4 1983009808
    %v4416 = vunpack.c.0.s8 %v4415
    %v4417 = vlaneseq
    %v4418 = vshrl.u32 %v4417, 7
    %v4419 = vsub.s32 %v4416, %v4418
    %v4420 = vrot.slane %v4403, %v4419
    %4421 = vrot.lane.b32.xlu0 %v4420, 64
    %v4422 = vpop.permute.xlu0 %4421
    %v4423 = vsel %vm329, %v4394, 0
    %v4425 = vsel %vm329, %v4422, 0
    %4427 = vmatprep.subr.mxu0 0.0
    %4428 = vmatpush1.xpose.msra.mxu0 %v4425
    %4429 = vmatprep.subr.mxu0 0.0
    %4430 = vmatpush1.xpose.msra.mxu0 0.0
    %4431 = vmatprep.subr.mxu0 0.0
    %4432 = vmatpush1.xpose.msra.mxu0 0.0
    %4433 = vmatprep.subr.mxu0 0.0
    %4434 = vmatpush1.xpose.msra.mxu0 0.0
    %4435 = vmatprep.subr.mxu0 0.0
    %4436 = vmatpush1.xpose.msra.mxu0 0.0
    %4437 = vmatprep.subr.mxu0 0.0
    %4438 = vmatpush1.xpose.msra.mxu0 0.0
    %4439 = vmatprep.subr.mxu0 0.0
    %4440 = vmatpush1.xpose.msra.mxu0 0.0
    %4441 = vmatprep.subr.mxu0 0.0
    %4442 = vmatpush1.xpose.msra.mxu0 0.0
    %4443 = vmatprep.subr.mxu0 0.0
    %4444 = vmatpush1.xpose.msra.mxu0 0.0
    %4445 = vmatprep.subr.mxu0 0.0
    %4446 = vmatpush1.xpose.msra.mxu0 0.0
    %4447 = vmatprep.subr.mxu0 0.0
    %4448 = vmatpush1.xpose.msra.mxu0 0.0
    %4449 = vmatprep.subr.mxu0 0.0
    %4450 = vmatpush1.xpose.msra.mxu0 0.0
    %4451 = vmatprep.subr.mxu0 0.0
    %4452 = vmatpush1.xpose.msra.mxu0 0.0
    %4453 = vmatprep.subr.mxu0 0.0
    %4454 = vmatpush1.xpose.msra.mxu0 0.0
    %4455 = vmatprep.subr.mxu0 0.0
    %4456 = vmatpush1.xpose.msra.mxu0 0.0
    %4457 = vmatprep.subr.mxu0 0.0
    %4458 = vmatpush1.xpose.msra.mxu0 0.0
    %4459 = vmatprep.subr.mxu0 0.0
    %4460 = vmatpush1.xpose.msra.mxu0 0.0
    %4461 = vmatprep.subr.mxu0 0.0
    %4462 = vmatpush1.xpose.msra.mxu0 0.0
    %4463 = vmatprep.subr.mxu0 0.0
    %4464 = vmatpush1.xpose.msra.mxu0 0.0
    %4465 = vmatprep.subr.mxu0 0.0
    %4466 = vmatpush1.xpose.msra.mxu0 0.0
    %4467 = vmatprep.subr.mxu0 0.0
    %4468 = vmatpush1.xpose.msra.mxu0 0.0
    %4469 = vmatprep.subr.mxu0 0.0
    %4470 = vmatpush1.xpose.msra.mxu0 0.0
    %4471 = vmatprep.subr.mxu0 0.0
    %4472 = vmatpush1.xpose.msra.mxu0 0.0
    %4473 = vmatprep.subr.mxu0 0.0
    %4474 = vmatpush1.xpose.msra.mxu0 0.0
    %4475 = vmatprep.subr.mxu0 0.0
    %4476 = vmatpush1.xpose.msra.mxu0 0.0
    %4477 = vmatprep.subr.mxu0 0.0
    %4478 = vmatpush1.xpose.msra.mxu0 0.0
    %4479 = vmatprep.subr.mxu0 0.0
    %4480 = vmatpush1.xpose.msra.mxu0 0.0
    %4481 = vmatprep.subr.mxu0 0.0
    %4482 = vmatpush1.xpose.msra.mxu0 0.0
    %4483 = vmatprep.subr.mxu0 0.0
    %4484 = vmatpush1.xpose.msra.mxu0 0.0
    %4485 = vmatprep.subr.mxu0 0.0
    %4486 = vmatpush1.xpose.msra.mxu0 0.0
    %4487 = vmatprep.subr.mxu0 0.0
    %4488 = vmatpush1.xpose.msra.mxu0 0.0
    %4489 = vmatprep.subr.mxu0 0.0
    %4490 = vmatpush1.xpose.msra.mxu0 0.0
    %4491 = vmatprep.mubr.f32.mxu0 0.0
    %4492 = vmatmul.mubr.f32.gmra.mrb[0].mxu0 %v4423
    %v4493 = vpop.f32.mrb[0].mxu0
    %v4494 = vadd.f32 0.0, %v4493
    %v4495 = vpop.f32.mrb[0].mxu0
    %4496 = vdwg.mxu0
    %v4498 = vunpack.c.l.s4 1983009808
    %v4499 = vunpack.c.0.s8 %v4498
    %v4500 = vlaneseq
    %v4501 = vshrl.u32 %v4500, 7
    %v4502 = vsub.s32 %v4499, %v4501
    %v4503 = vrot.slane %v4404, %v4502
    %4504 = vrot.lane.b32.xlu0 %v4503, 64
    %v4505 = vpop.permute.xlu0 %4504
    %v4506 = vsel %vm329, %v4395, 0
    %v4508 = vsel %vm329, %v4505, 0
    %4510 = vmatprep.subr.mxu0 0.0
    %4511 = vmatpush1.xpose.msra.mxu0 %v4508
    %4512 = vmatprep.subr.mxu0 0.0
    %4513 = vmatpush1.xpose.msra.mxu0 0.0
    %4514 = vmatprep.subr.mxu0 0.0
    %4515 = vmatpush1.xpose.msra.mxu0 0.0
    %4516 = vmatprep.subr.mxu0 0.0
    %4517 = vmatpush1.xpose.msra.mxu0 0.0
    %4518 = vmatprep.subr.mxu0 0.0
    %4519 = vmatpush1.xpose.msra.mxu0 0.0
    %4520 = vmatprep.subr.mxu0 0.0
    %4521 = vmatpush1.xpose.msra.mxu0 0.0
    %4522 = vmatprep.subr.mxu0 0.0
    %4523 = vmatpush1.xpose.msra.mxu0 0.0
    %4524 = vmatprep.subr.mxu0 0.0
    %4525 = vmatpush1.xpose.msra.mxu0 0.0
    %4526 = vmatprep.subr.mxu0 0.0
    %4527 = vmatpush1.xpose.msra.mxu0 0.0
    %4528 = vmatprep.subr.mxu0 0.0
    %4529 = vmatpush1.xpose.msra.mxu0 0.0
    %4530 = vmatprep.subr.mxu0 0.0
    %4531 = vmatpush1.xpose.msra.mxu0 0.0
    %4532 = vmatprep.subr.mxu0 0.0
    %4533 = vmatpush1.xpose.msra.mxu0 0.0
    %4534 = vmatprep.subr.mxu0 0.0
    %4535 = vmatpush1.xpose.msra.mxu0 0.0
    %4536 = vmatprep.subr.mxu0 0.0
    %4537 = vmatpush1.xpose.msra.mxu0 0.0
    %4538 = vmatprep.subr.mxu0 0.0
    %4539 = vmatpush1.xpose.msra.mxu0 0.0
    %4540 = vmatprep.subr.mxu0 0.0
    %4541 = vmatpush1.xpose.msra.mxu0 0.0
    %4542 = vmatprep.subr.mxu0 0.0
    %4543 = vmatpush1.xpose.msra.mxu0 0.0
    %4544 = vmatprep.subr.mxu0 0.0
    %4545 = vmatpush1.xpose.msra.mxu0 0.0
    %4546 = vmatprep.subr.mxu0 0.0
    %4547 = vmatpush1.xpose.msra.mxu0 0.0
    %4548 = vmatprep.subr.mxu0 0.0
    %4549 = vmatpush1.xpose.msra.mxu0 0.0
    %4550 = vmatprep.subr.mxu0 0.0
    %4551 = vmatpush1.xpose.msra.mxu0 0.0
    %4552 = vmatprep.subr.mxu0 0.0
    %4553 = vmatpush1.xpose.msra.mxu0 0.0
    %4554 = vmatprep.subr.mxu0 0.0
    %4555 = vmatpush1.xpose.msra.mxu0 0.0
    %4556 = vmatprep.subr.mxu0 0.0
    %4557 = vmatpush1.xpose.msra.mxu0 0.0
    %4558 = vmatprep.subr.mxu0 0.0
    %4559 = vmatpush1.xpose.msra.mxu0 0.0
    %4560 = vmatprep.subr.mxu0 0.0
    %4561 = vmatpush1.xpose.msra.mxu0 0.0
    %4562 = vmatprep.subr.mxu0 0.0
    %4563 = vmatpush1.xpose.msra.mxu0 0.0
    %4564 = vmatprep.subr.mxu0 0.0
    %4565 = vmatpush1.xpose.msra.mxu0 0.0
    %4566 = vmatprep.subr.mxu0 0.0
    %4567 = vmatpush1.xpose.msra.mxu0 0.0
    %4568 = vmatprep.subr.mxu0 0.0
    %4569 = vmatpush1.xpose.msra.mxu0 0.0
    %4570 = vmatprep.subr.mxu0 0.0
    %4571 = vmatpush1.xpose.msra.mxu0 0.0
    %4572 = vmatprep.subr.mxu0 0.0
    %4573 = vmatpush1.xpose.msra.mxu0 0.0
    %4574 = vmatprep.mubr.f32.mxu0 0.0
    %4575 = vmatmul.mubr.f32.gmra.mrb[0].mxu0 %v4506
    %v4576 = vpop.f32.mrb[0].mxu0
    %v4577 = vadd.f32 0.0, %v4576
    %v4578 = vpop.f32.mrb[0].mxu0
    %4579 = vdwg.mxu0
    %v4580 = vmul.f32 %v4494, 0.25
    %v4581 = vmul.f32 %v4577, 0.25
    %v4582 = vsel %vm489, %v4580, -inf
    %4583 = vmax.xlane.f32.xlu0 %v4582
    %v4584 = vpop.xlane.xlu0 %4583
    %v4585 = vsel %vm489, %v4581, -inf
    %4586 = vmax.xlane.f32.xlu0 %v4585
    %v4587 = vpop.xlane.xlu0 %4586
    %v4588 = vsub.f32 %v4580, %v4584
    %v4589 = vsub.f32 %v4581, %v4587
    %v4590 = vmul.f32 %v4588, 1.442695
    %v4591 = vpow.pop %v4590
    %v4592 = vmul.f32 %v4589, 1.442695
    %v4593 = vpow.pop %v4592
    %v4594 = vsel %vm489, %v4591, 0.0
    %4595 = vadd.xlane.f32.xlu0 %v4594
    %v4596 = vpop.xlane.xlu0 %4595
    %v4597 = vsel %vm489, %v4593, 0.0
    %4598 = vadd.xlane.f32.xlu0 %v4597
    %v4599 = vpop.xlane.xlu0 %4598
    %v4600 = vrcp.pop %v4596
    %v4601 = vrcp.pop %v4599
    %v4602 = vmul.f32 %v4591, %v4600
    %v4603 = vmul.f32 %v4593, %v4601
    %v4605 = vsel %vm512, %v4602, 0
    %v4607 = vsel %vm516, %v4412, 0
    %4609 = vmatprep.subr.mxu0 0.0
    %4610 = vmatpush1.msra.mxu0 %v4607
    %4611 = vmatprep.subr.mxu0 0.0
    %4612 = vmatpush1.msra.mxu0 0.0
    %4613 = vmatprep.subr.mxu0 0.0
    %4614 = vmatpush1.msra.mxu0 0.0
    %4615 = vmatprep.subr.mxu0 0.0
    %4616 = vmatpush1.msra.mxu0 0.0
    %4617 = vmatprep.subr.mxu0 0.0
    %4618 = vmatpush1.msra.mxu0 0.0
    %4619 = vmatprep.subr.mxu0 0.0
    %4620 = vmatpush1.msra.mxu0 0.0
    %4621 = vmatprep.subr.mxu0 0.0
    %4622 = vmatpush1.msra.mxu0 0.0
    %4623 = vmatprep.subr.mxu0 0.0
    %4624 = vmatpush1.msra.mxu0 0.0
    %4625 = vmatprep.subr.mxu0 0.0
    %4626 = vmatpush1.msra.mxu0 0.0
    %4627 = vmatprep.subr.mxu0 0.0
    %4628 = vmatpush1.msra.mxu0 0.0
    %4629 = vmatprep.subr.mxu0 0.0
    %4630 = vmatpush1.msra.mxu0 0.0
    %4631 = vmatprep.subr.mxu0 0.0
    %4632 = vmatpush1.msra.mxu0 0.0
    %4633 = vmatprep.subr.mxu0 0.0
    %4634 = vmatpush1.msra.mxu0 0.0
    %4635 = vmatprep.subr.mxu0 0.0
    %4636 = vmatpush1.msra.mxu0 0.0
    %4637 = vmatprep.subr.mxu0 0.0
    %4638 = vmatpush1.msra.mxu0 0.0
    %4639 = vmatprep.subr.mxu0 0.0
    %4640 = vmatpush1.msra.mxu0 0.0
    %4641 = vmatprep.subr.mxu0 0.0
    %4642 = vmatpush1.msra.mxu0 0.0
    %4643 = vmatprep.subr.mxu0 0.0
    %4644 = vmatpush1.msra.mxu0 0.0
    %4645 = vmatprep.subr.mxu0 0.0
    %4646 = vmatpush1.msra.mxu0 0.0
    %4647 = vmatprep.subr.mxu0 0.0
    %4648 = vmatpush1.msra.mxu0 0.0
    %4649 = vmatprep.subr.mxu0 0.0
    %4650 = vmatpush1.msra.mxu0 0.0
    %4651 = vmatprep.subr.mxu0 0.0
    %4652 = vmatpush1.msra.mxu0 0.0
    %4653 = vmatprep.subr.mxu0 0.0
    %4654 = vmatpush1.msra.mxu0 0.0
    %4655 = vmatprep.subr.mxu0 0.0
    %4656 = vmatpush1.msra.mxu0 0.0
    %4657 = vmatprep.subr.mxu0 0.0
    %4658 = vmatpush1.msra.mxu0 0.0
    %4659 = vmatprep.subr.mxu0 0.0
    %4660 = vmatpush1.msra.mxu0 0.0
    %4661 = vmatprep.subr.mxu0 0.0
    %4662 = vmatpush1.msra.mxu0 0.0
    %4663 = vmatprep.subr.mxu0 0.0
    %4664 = vmatpush1.msra.mxu0 0.0
    %4665 = vmatprep.subr.mxu0 0.0
    %4666 = vmatpush1.msra.mxu0 0.0
    %4667 = vmatprep.subr.mxu0 0.0
    %4668 = vmatpush1.msra.mxu0 0.0
    %4669 = vmatprep.subr.mxu0 0.0
    %4670 = vmatpush1.msra.mxu0 0.0
    %4671 = vmatprep.subr.mxu0 0.0
    %4672 = vmatpush1.msra.mxu0 0.0
    %4673 = vmatprep.mubr.f32.mxu0 0.0
    %4674 = vmatmul.mubr.f32.gmra.mrb[0].mxu0 %v4605
    %v4675 = vpop.f32.mrb[0].mxu0
    %v4676 = vadd.f32 0.0, %v4675
    %v4677 = vpop.f32.mrb[0].mxu0
    %4678 = vdwg.mxu0
    %v4680 = vsel %vm512, %v4603, 0
    %v4682 = vsel %vm516, %v4413, 0
    %4684 = vmatprep.subr.mxu0 0.0
    %4685 = vmatpush1.msra.mxu0 %v4682
    %4686 = vmatprep.subr.mxu0 0.0
    %4687 = vmatpush1.msra.mxu0 0.0
    %4688 = vmatprep.subr.mxu0 0.0
    %4689 = vmatpush1.msra.mxu0 0.0
    %4690 = vmatprep.subr.mxu0 0.0
    %4691 = vmatpush1.msra.mxu0 0.0
    %4692 = vmatprep.subr.mxu0 0.0
    %4693 = vmatpush1.msra.mxu0 0.0
    %4694 = vmatprep.subr.mxu0 0.0
    %4695 = vmatpush1.msra.mxu0 0.0
    %4696 = vmatprep.subr.mxu0 0.0
    %4697 = vmatpush1.msra.mxu0 0.0
    %4698 = vmatprep.subr.mxu0 0.0
    %4699 = vmatpush1.msra.mxu0 0.0
    %4700 = vmatprep.subr.mxu0 0.0
    %4701 = vmatpush1.msra.mxu0 0.0
    %4702 = vmatprep.subr.mxu0 0.0
    %4703 = vmatpush1.msra.mxu0 0.0
    %4704 = vmatprep.subr.mxu0 0.0
    %4705 = vmatpush1.msra.mxu0 0.0
    %4706 = vmatprep.subr.mxu0 0.0
    %4707 = vmatpush1.msra.mxu0 0.0
    %4708 = vmatprep.subr.mxu0 0.0
    %4709 = vmatpush1.msra.mxu0 0.0
    %4710 = vmatprep.subr.mxu0 0.0
    %4711 = vmatpush1.msra.mxu0 0.0
    %4712 = vmatprep.subr.mxu0 0.0
    %4713 = vmatpush1.msra.mxu0 0.0
    %4714 = vmatprep.subr.mxu0 0.0
    %4715 = vmatpush1.msra.mxu0 0.0
    %4716 = vmatprep.subr.mxu0 0.0
    %4717 = vmatpush1.msra.mxu0 0.0
    %4718 = vmatprep.subr.mxu0 0.0
    %4719 = vmatpush1.msra.mxu0 0.0
    %4720 = vmatprep.subr.mxu0 0.0
    %4721 = vmatpush1.msra.mxu0 0.0
    %4722 = vmatprep.subr.mxu0 0.0
    %4723 = vmatpush1.msra.mxu0 0.0
    %4724 = vmatprep.subr.mxu0 0.0
    %4725 = vmatpush1.msra.mxu0 0.0
    %4726 = vmatprep.subr.mxu0 0.0
    %4727 = vmatpush1.msra.mxu0 0.0
    %4728 = vmatprep.subr.mxu0 0.0
    %4729 = vmatpush1.msra.mxu0 0.0
    %4730 = vmatprep.subr.mxu0 0.0
    %4731 = vmatpush1.msra.mxu0 0.0
    %4732 = vmatprep.subr.mxu0 0.0
    %4733 = vmatpush1.msra.mxu0 0.0
    %4734 = vmatprep.subr.mxu0 0.0
    %4735 = vmatpush1.msra.mxu0 0.0
    %4736 = vmatprep.subr.mxu0 0.0
    %4737 = vmatpush1.msra.mxu0 0.0
    %4738 = vmatprep.subr.mxu0 0.0
    %4739 = vmatpush1.msra.mxu0 0.0
    %4740 = vmatprep.subr.mxu0 0.0
    %4741 = vmatpush1.msra.mxu0 0.0
    %4742 = vmatprep.subr.mxu0 0.0
    %4743 = vmatpush1.msra.mxu0 0.0
    %4744 = vmatprep.subr.mxu0 0.0
    %4745 = vmatpush1.msra.mxu0 0.0
    %4746 = vmatprep.subr.mxu0 0.0
    %4747 = vmatpush1.msra.mxu0 0.0
    %4748 = vmatprep.mubr.f32.mxu0 0.0
    %4749 = vmatmul.mubr.f32.gmra.mrb[0].mxu0 %v4680
    %v4750 = vpop.f32.mrb[0].mxu0
    %v4751 = vadd.f32 0.0, %v4750
    %v4752 = vpop.f32.mrb[0].mxu0
    %4753 = vdwg.mxu0
    %v4755 = vunpack.c.l.s4 1983009808
    %v4756 = vunpack.c.0.s8 %v4755
    %v4757 = vlaneseq
    %v4758 = vshrl.u32 %v4757, 7
    %v4759 = vsub.s32 %v4756, %v4758
    %v4760 = vrot.slane %v4394, %v4759
    %4761 = vrot.lane.b32.xlu0 %v4760, 112
    %v4762 = vpop.permute.xlu0 %4761
    %4763 = vrot.lane.b32.xlu0 %v4420, 48
    %v4764 = vpop.permute.xlu0 %4763
    %v4765 = vsel %vm329, %v4762, 0
    %v4767 = vsel %vm329, %v4764, 0
    %4769 = vmatprep.subr.mxu0 0.0
    %4770 = vmatpush1.xpose.msra.mxu0 %v4767
    %4771 = vmatprep.subr.mxu0 0.0
    %4772 = vmatpush1.xpose.msra.mxu0 0.0
    %4773 = vmatprep.subr.mxu0 0.0
    %4774 = vmatpush1.xpose.msra.mxu0 0.0
    %4775 = vmatprep.subr.mxu0 0.0
    %4776 = vmatpush1.xpose.msra.mxu0 0.0
    %4777 = vmatprep.subr.mxu0 0.0
    %4778 = vmatpush1.xpose.msra.mxu0 0.0
    %4779 = vmatprep.subr.mxu0 0.0
    %4780 = vmatpush1.xpose.msra.mxu0 0.0
    %4781 = vmatprep.subr.mxu0 0.0
    %4782 = vmatpush1.xpose.msra.mxu0 0.0
    %4783 = vmatprep.subr.mxu0 0.0
    %4784 = vmatpush1.xpose.msra.mxu0 0.0
    %4785 = vmatprep.subr.mxu0 0.0
    %4786 = vmatpush1.xpose.msra.mxu0 0.0
    %4787 = vmatprep.subr.mxu0 0.0
    %4788 = vmatpush1.xpose.msra.mxu0 0.0
    %4789 = vmatprep.subr.mxu0 0.0
    %4790 = vmatpush1.xpose.msra.mxu0 0.0
    %4791 = vmatprep.subr.mxu0 0.0
    %4792 = vmatpush1.xpose.msra.mxu0 0.0
    %4793 = vmatprep.subr.mxu0 0.0
    %4794 = vmatpush1.xpose.msra.mxu0 0.0
    %4795 = vmatprep.subr.mxu0 0.0
    %4796 = vmatpush1.xpose.msra.mxu0 0.0
    %4797 = vmatprep.subr.mxu0 0.0
    %4798 = vmatpush1.xpose.msra.mxu0 0.0
    %4799 = vmatprep.subr.mxu0 0.0
    %4800 = vmatpush1.xpose.msra.mxu0 0.0
    %4801 = vmatprep.subr.mxu0 0.0
    %4802 = vmatpush1.xpose.msra.mxu0 0.0
    %4803 = vmatprep.subr.mxu0 0.0
    %4804 = vmatpush1.xpose.msra.mxu0 0.0
    %4805 = vmatprep.subr.mxu0 0.0
    %4806 = vmatpush1.xpose.msra.mxu0 0.0
    %4807 = vmatprep.subr.mxu0 0.0
    %4808 = vmatpush1.xpose.msra.mxu0 0.0
    %4809 = vmatprep.subr.mxu0 0.0
    %4810 = vmatpush1.xpose.msra.mxu0 0.0
    %4811 = vmatprep.subr.mxu0 0.0
    %4812 = vmatpush1.xpose.msra.mxu0 0.0
    %4813 = vmatprep.subr.mxu0 0.0
    %4814 = vmatpush1.xpose.msra.mxu0 0.0
    %4815 = vmatprep.subr.mxu0 0.0
    %4816 = vmatpush1.xpose.msra.mxu0 0.0
    %4817 = vmatprep.subr.mxu0 0.0
    %4818 = vmatpush1.xpose.msra.mxu0 0.0
    %4819 = vmatprep.subr.mxu0 0.0
    %4820 = vmatpush1.xpose.msra.mxu0 0.0
    %4821 = vmatprep.subr.mxu0 0.0
    %4822 = vmatpush1.xpose.msra.mxu0 0.0
    %4823 = vmatprep.subr.mxu0 0.0
    %4824 = vmatpush1.xpose.msra.mxu0 0.0
    %4825 = vmatprep.subr.mxu0 0.0
    %4826 = vmatpush1.xpose.msra.mxu0 0.0
    %4827 = vmatprep.subr.mxu0 0.0
    %4828 = vmatpush1.xpose.msra.mxu0 0.0
    %4829 = vmatprep.subr.mxu0 0.0
    %4830 = vmatpush1.xpose.msra.mxu0 0.0
    %4831 = vmatprep.subr.mxu0 0.0
    %4832 = vmatpush1.xpose.msra.mxu0 0.0
    %4833 = vmatprep.mubr.f32.mxu0 0.0
    %4834 = vmatmul.mubr.f32.gmra.mrb[0].mxu0 %v4765
    %v4835 = vpop.f32.mrb[0].mxu0
    %v4836 = vadd.f32 0.0, %v4835
    %v4837 = vpop.f32.mrb[0].mxu0
    %4838 = vdwg.mxu0
    %v4840 = vunpack.c.l.s4 1983009808
    %v4841 = vunpack.c.0.s8 %v4840
    %v4842 = vlaneseq
    %v4843 = vshrl.u32 %v4842, 7
    %v4844 = vsub.s32 %v4841, %v4843
    %v4845 = vrot.slane %v4395, %v4844
    %4846 = vrot.lane.b32.xlu0 %v4845, 112
    %v4847 = vpop.permute.xlu0 %4846
    %4848 = vrot.lane.b32.xlu0 %v4503, 48
    %v4849 = vpop.permute.xlu0 %4848
    %v4850 = vsel %vm329, %v4847, 0
    %v4852 = vsel %vm329, %v4849, 0
    %4854 = vmatprep.subr.mxu0 0.0
    %4855 = vmatpush1.xpose.msra.mxu0 %v4852
    %4856 = vmatprep.subr.mxu0 0.0
    %4857 = vmatpush1.xpose.msra.mxu0 0.0
    %4858 = vmatprep.subr.mxu0 0.0
    %4859 = vmatpush1.xpose.msra.mxu0 0.0
    %4860 = vmatprep.subr.mxu0 0.0
    %4861 = vmatpush1.xpose.msra.mxu0 0.0
    %4862 = vmatprep.subr.mxu0 0.0
    %4863 = vmatpush1.xpose.msra.mxu0 0.0
    %4864 = vmatprep.subr.mxu0 0.0
    %4865 = vmatpush1.xpose.msra.mxu0 0.0
    %4866 = vmatprep.subr.mxu0 0.0
    %4867 = vmatpush1.xpose.msra.mxu0 0.0
    %4868 = vmatprep.subr.mxu0 0.0
    %4869 = vmatpush1.xpose.msra.mxu0 0.0
    %4870 = vmatprep.subr.mxu0 0.0
    %4871 = vmatpush1.xpose.msra.mxu0 0.0
    %4872 = vmatprep.subr.mxu0 0.0
    %4873 = vmatpush1.xpose.msra.mxu0 0.0
    %4874 = vmatprep.subr.mxu0 0.0
    %4875 = vmatpush1.xpose.msra.mxu0 0.0
    %4876 = vmatprep.subr.mxu0 0.0
    %4877 = vmatpush1.xpose.msra.mxu0 0.0
    %4878 = vmatprep.subr.mxu0 0.0
    %4879 = vmatpush1.xpose.msra.mxu0 0.0
    %4880 = vmatprep.subr.mxu0 0.0
    %4881 = vmatpush1.xpose.msra.mxu0 0.0
    %4882 = vmatprep.subr.mxu0 0.0
    %4883 = vmatpush1.xpose.msra.mxu0 0.0
    %4884 = vmatprep.subr.mxu0 0.0
    %4885 = vmatpush1.xpose.msra.mxu0 0.0
    %4886 = vmatprep.subr.mxu0 0.0
    %4887 = vmatpush1.xpose.msra.mxu0 0.0
    %4888 = vmatprep.subr.mxu0 0.0
    %4889 = vmatpush1.xpose.msra.mxu0 0.0
    %4890 = vmatprep.subr.mxu0 0.0
    %4891 = vmatpush1.xpose.msra.mxu0 0.0
    %4892 = vmatprep.subr.mxu0 0.0
    %4893 = vmatpush1.xpose.msra.mxu0 0.0
    %4894 = vmatprep.subr.mxu0 0.0
    %4895 = vmatpush1.xpose.msra.mxu0 0.0
    %4896 = vmatprep.subr.mxu0 0.0
    %4897 = vmatpush1.xpose.msra.mxu0 0.0
    %4898 = vmatprep.subr.mxu0 0.0
    %4899 = vmatpush1.xpose.msra.mxu0 0.0
    %4900 = vmatprep.subr.mxu0 0.0
    %4901 = vmatpush1.xpose.msra.mxu0 0.0
    %4902 = vmatprep.subr.mxu0 0.0
    %4903 = vmatpush1.xpose.msra.mxu0 0.0
    %4904 = vmatprep.subr.mxu0 0.0
    %4905 = vmatpush1.xpose.msra.mxu0 0.0
    %4906 = vmatprep.subr.mxu0 0.0
    %4907 = vmatpush1.xpose.msra.mxu0 0.0
    %4908 = vmatprep.subr.mxu0 0.0
    %4909 = vmatpush1.xpose.msra.mxu0 0.0
    %4910 = vmatprep.subr.mxu0 0.0
    %4911 = vmatpush1.xpose.msra.mxu0 0.0
    %4912 = vmatprep.subr.mxu0 0.0
    %4913 = vmatpush1.xpose.msra.mxu0 0.0
    %4914 = vmatprep.subr.mxu0 0.0
    %4915 = vmatpush1.xpose.msra.mxu0 0.0
    %4916 = vmatprep.subr.mxu0 0.0
    %4917 = vmatpush1.xpose.msra.mxu0 0.0
    %4918 = vmatprep.mubr.f32.mxu0 0.0
    %4919 = vmatmul.mubr.f32.gmra.mrb[0].mxu0 %v4850
    %v4920 = vpop.f32.mrb[0].mxu0
    %v4921 = vadd.f32 0.0, %v4920
    %v4922 = vpop.f32.mrb[0].mxu0
    %4923 = vdwg.mxu0
    %v4924 = vmul.f32 %v4836, 0.25
    %v4925 = vmul.f32 %v4921, 0.25
    %v4926 = vsel %vm489, %v4924, -inf
    %4927 = vmax.xlane.f32.xlu0 %v4926
    %v4928 = vpop.xlane.xlu0 %4927
    %v4929 = vsel %vm489, %v4925, -inf
    %4930 = vmax.xlane.f32.xlu0 %v4929
    %v4931 = vpop.xlane.xlu0 %4930
    %v4932 = vsub.f32 %v4924, %v4928
    %v4933 = vsub.f32 %v4925, %v4931
    %v4934 = vmul.f32 %v4932, 1.442695
    %v4935 = vpow.pop %v4934
    %v4936 = vmul.f32 %v4933, 1.442695
    %v4937 = vpow.pop %v4936
    %v4938 = vsel %vm489, %v4935, 0.0
    %4939 = vadd.xlane.f32.xlu0 %v4938
    %v4940 = vpop.xlane.xlu0 %4939
    %v4941 = vsel %vm489, %v4937, 0.0
    %4942 = vadd.xlane.f32.xlu0 %v4941
    %v4943 = vpop.xlane.xlu0 %4942
    %v4944 = vrcp.pop %v4940
    %v4945 = vrcp.pop %v4943
    %v4946 = vmul.f32 %v4935, %v4944
    %v4947 = vmul.f32 %v4937, %v4945
    %v4949 = vunpack.c.l.s4 1983009808
    %v4950 = vunpack.c.0.s8 %v4949
    %v4951 = vlaneseq
    %v4952 = vshrl.u32 %v4951, 7
    %v4953 = vsub.s32 %v4950, %v4952
    %v4954 = vrot.slane %v4412, %v4953
    %4955 = vrot.lane.b32.xlu0 %v4954, 112
    %v4956 = vpop.permute.xlu0 %4955
    %v4958 = vsel %vm512, %v4946, 0
    %v4960 = vsel %vm516, %v4956, 0
    %4962 = vmatprep.subr.mxu0 0.0
    %4963 = vmatpush1.msra.mxu0 %v4960
    %4964 = vmatprep.subr.mxu0 0.0
    %4965 = vmatpush1.msra.mxu0 0.0
    %4966 = vmatprep.subr.mxu0 0.0
    %4967 = vmatpush1.msra.mxu0 0.0
    %4968 = vmatprep.subr.mxu0 0.0
    %4969 = vmatpush1.msra.mxu0 0.0
    %4970 = vmatprep.subr.mxu0 0.0
    %4971 = vmatpush1.msra.mxu0 0.0
    %4972 = vmatprep.subr.mxu0 0.0
    %4973 = vmatpush1.msra.mxu0 0.0
    %4974 = vmatprep.subr.mxu0 0.0
    %4975 = vmatpush1.msra.mxu0 0.0
    %4976 = vmatprep.subr.mxu0 0.0
    %4977 = vmatpush1.msra.mxu0 0.0
    %4978 = vmatprep.subr.mxu0 0.0
    %4979 = vmatpush1.msra.mxu0 0.0
    %4980 = vmatprep.subr.mxu0 0.0
    %4981 = vmatpush1.msra.mxu0 0.0
    %4982 = vmatprep.subr.mxu0 0.0
    %4983 = vmatpush1.msra.mxu0 0.0
    %4984 = vmatprep.subr.mxu0 0.0
    %4985 = vmatpush1.msra.mxu0 0.0
    %4986 = vmatprep.subr.mxu0 0.0
    %4987 = vmatpush1.msra.mxu0 0.0
    %4988 = vmatprep.subr.mxu0 0.0
    %4989 = vmatpush1.msra.mxu0 0.0
    %4990 = vmatprep.subr.mxu0 0.0
    %4991 = vmatpush1.msra.mxu0 0.0
    %4992 = vmatprep.subr.mxu0 0.0
    %4993 = vmatpush1.msra.mxu0 0.0
    %4994 = vmatprep.subr.mxu0 0.0
    %4995 = vmatpush1.msra.mxu0 0.0
    %4996 = vmatprep.subr.mxu0 0.0
    %4997 = vmatpush1.msra.mxu0 0.0
    %4998 = vmatprep.subr.mxu0 0.0
    %4999 = vmatpush1.msra.mxu0 0.0
    %5000 = vmatprep.subr.mxu0 0.0
    %5001 = vmatpush1.msra.mxu0 0.0
    %5002 = vmatprep.subr.mxu0 0.0
    %5003 = vmatpush1.msra.mxu0 0.0
    %5004 = vmatprep.subr.mxu0 0.0
    %5005 = vmatpush1.msra.mxu0 0.0
    %5006 = vmatprep.subr.mxu0 0.0
    %5007 = vmatpush1.msra.mxu0 0.0
    %5008 = vmatprep.subr.mxu0 0.0
    %5009 = vmatpush1.msra.mxu0 0.0
    %5010 = vmatprep.subr.mxu0 0.0
    %5011 = vmatpush1.msra.mxu0 0.0
    %5012 = vmatprep.subr.mxu0 0.0
    %5013 = vmatpush1.msra.mxu0 0.0
    %5014 = vmatprep.subr.mxu0 0.0
    %5015 = vmatpush1.msra.mxu0 0.0
    %5016 = vmatprep.subr.mxu0 0.0
    %5017 = vmatpush1.msra.mxu0 0.0
    %5018 = vmatprep.subr.mxu0 0.0
    %5019 = vmatpush1.msra.mxu0 0.0
    %5020 = vmatprep.subr.mxu0 0.0
    %5021 = vmatpush1.msra.mxu0 0.0
    %5022 = vmatprep.subr.mxu0 0.0
    %5023 = vmatpush1.msra.mxu0 0.0
    %5024 = vmatprep.subr.mxu0 0.0
    %5025 = vmatpush1.msra.mxu0 0.0
    %5026 = vmatprep.mubr.f32.mxu0 0.0
    %5027 = vmatmul.mubr.f32.gmra.mrb[0].mxu0 %v4958
    %v5028 = vpop.f32.mrb[0].mxu0
    %v5029 = vadd.f32 0.0, %v5028
    %v5030 = vpop.f32.mrb[0].mxu0
    %5031 = vdwg.mxu0
    %v5033 = vunpack.c.l.s4 1983009808
    %v5034 = vunpack.c.0.s8 %v5033
    %v5035 = vlaneseq
    %v5036 = vshrl.u32 %v5035, 7
    %v5037 = vsub.s32 %v5034, %v5036
    %v5038 = vrot.slane %v4413, %v5037
    %5039 = vrot.lane.b32.xlu0 %v5038, 112
    %v5040 = vpop.permute.xlu0 %5039
    %v5042 = vsel %vm512, %v4947, 0
    %v5044 = vsel %vm516, %v5040, 0
    %5046 = vmatprep.subr.mxu0 0.0
    %5047 = vmatpush1.msra.mxu0 %v5044
    %5048 = vmatprep.subr.mxu0 0.0
    %5049 = vmatpush1.msra.mxu0 0.0
    %5050 = vmatprep.subr.mxu0 0.0
    %5051 = vmatpush1.msra.mxu0 0.0
    %5052 = vmatprep.subr.mxu0 0.0
    %5053 = vmatpush1.msra.mxu0 0.0
    %5054 = vmatprep.subr.mxu0 0.0
    %5055 = vmatpush1.msra.mxu0 0.0
    %5056 = vmatprep.subr.mxu0 0.0
    %5057 = vmatpush1.msra.mxu0 0.0
    %5058 = vmatprep.subr.mxu0 0.0
    %5059 = vmatpush1.msra.mxu0 0.0
    %5060 = vmatprep.subr.mxu0 0.0
    %5061 = vmatpush1.msra.mxu0 0.0
    %5062 = vmatprep.subr.mxu0 0.0
    %5063 = vmatpush1.msra.mxu0 0.0
    %5064 = vmatprep.subr.mxu0 0.0
    %5065 = vmatpush1.msra.mxu0 0.0
    %5066 = vmatprep.subr.mxu0 0.0
    %5067 = vmatpush1.msra.mxu0 0.0
    %5068 = vmatprep.subr.mxu0 0.0
    %5069 = vmatpush1.msra.mxu0 0.0
    %5070 = vmatprep.subr.mxu0 0.0
    %5071 = vmatpush1.msra.mxu0 0.0
    %5072 = vmatprep.subr.mxu0 0.0
    %5073 = vmatpush1.msra.mxu0 0.0
    %5074 = vmatprep.subr.mxu0 0.0
    %5075 = vmatpush1.msra.mxu0 0.0
    %5076 = vmatprep.subr.mxu0 0.0
    %5077 = vmatpush1.msra.mxu0 0.0
    %5078 = vmatprep.subr.mxu0 0.0
    %5079 = vmatpush1.msra.mxu0 0.0
    %5080 = vmatprep.subr.mxu0 0.0
    %5081 = vmatpush1.msra.mxu0 0.0
    %5082 = vmatprep.subr.mxu0 0.0
    %5083 = vmatpush1.msra.mxu0 0.0
    %5084 = vmatprep.subr.mxu0 0.0
    %5085 = vmatpush1.msra.mxu0 0.0
    %5086 = vmatprep.subr.mxu0 0.0
    %5087 = vmatpush1.msra.mxu0 0.0
    %5088 = vmatprep.subr.mxu0 0.0
    %5089 = vmatpush1.msra.mxu0 0.0
    %5090 = vmatprep.subr.mxu0 0.0
    %5091 = vmatpush1.msra.mxu0 0.0
    %5092 = vmatprep.subr.mxu0 0.0
    %5093 = vmatpush1.msra.mxu0 0.0
    %5094 = vmatprep.subr.mxu0 0.0
    %5095 = vmatpush1.msra.mxu0 0.0
    %5096 = vmatprep.subr.mxu0 0.0
    %5097 = vmatpush1.msra.mxu0 0.0
    %5098 = vmatprep.subr.mxu0 0.0
    %5099 = vmatpush1.msra.mxu0 0.0
    %5100 = vmatprep.subr.mxu0 0.0
    %5101 = vmatpush1.msra.mxu0 0.0
    %5102 = vmatprep.subr.mxu0 0.0
    %5103 = vmatpush1.msra.mxu0 0.0
    %5104 = vmatprep.subr.mxu0 0.0
    %5105 = vmatpush1.msra.mxu0 0.0
    %5106 = vmatprep.subr.mxu0 0.0
    %5107 = vmatpush1.msra.mxu0 0.0
    %5108 = vmatprep.subr.mxu0 0.0
    %5109 = vmatpush1.msra.mxu0 0.0
    %5110 = vmatprep.mubr.f32.mxu0 0.0
    %5111 = vmatmul.mubr.f32.gmra.mrb[0].mxu0 %v5042
    %v5112 = vpop.f32.mrb[0].mxu0
    %v5113 = vadd.f32 0.0, %v5112
    %v5114 = vpop.f32.mrb[0].mxu0
    %5115 = vdwg.mxu0
    %5116 = vrot.lane.b32.xlu0 %v4760, 96
    %v5117 = vpop.permute.xlu0 %5116
    %5118 = vrot.lane.b32.xlu0 %v4420, 32
    %v5119 = vpop.permute.xlu0 %5118
    %v5120 = vsel %vm329, %v5117, 0
    %v5122 = vsel %vm329, %v5119, 0
    %5124 = vmatprep.subr.mxu0 0.0
    %5125 = vmatpush1.xpose.msra.mxu0 %v5122
    %5126 = vmatprep.subr.mxu0 0.0
    %5127 = vmatpush1.xpose.msra.mxu0 0.0
    %5128 = vmatprep.subr.mxu0 0.0
    %5129 = vmatpush1.xpose.msra.mxu0 0.0
    %5130 = vmatprep.subr.mxu0 0.0
    %5131 = vmatpush1.xpose.msra.mxu0 0.0
    %5132 = vmatprep.subr.mxu0 0.0
    %5133 = vmatpush1.xpose.msra.mxu0 0.0
    %5134 = vmatprep.subr.mxu0 0.0
    %5135 = vmatpush1.xpose.msra.mxu0 0.0
    %5136 = vmatprep.subr.mxu0 0.0
    %5137 = vmatpush1.xpose.msra.mxu0 0.0
    %5138 = vmatprep.subr.mxu0 0.0
    %5139 = vmatpush1.xpose.msra.mxu0 0.0
    %5140 = vmatprep.subr.mxu0 0.0
    %5141 = vmatpush1.xpose.msra.mxu0 0.0
    %5142 = vmatprep.subr.mxu0 0.0
    %5143 = vmatpush1.xpose.msra.mxu0 0.0
    %5144 = vmatprep.subr.mxu0 0.0
    %5145 = vmatpush1.xpose.msra.mxu0 0.0
    %5146 = vmatprep.subr.mxu0 0.0
    %5147 = vmatpush1.xpose.msra.mxu0 0.0
    %5148 = vmatprep.subr.mxu0 0.0
    %5149 = vmatpush1.xpose.msra.mxu0 0.0
    %5150 = vmatprep.subr.mxu0 0.0
    %5151 = vmatpush1.xpose.msra.mxu0 0.0
    %5152 = vmatprep.subr.mxu0 0.0
    %5153 = vmatpush1.xpose.msra.mxu0 0.0
    %5154 = vmatprep.subr.mxu0 0.0
    %5155 = vmatpush1.xpose.msra.mxu0 0.0
    %5156 = vmatprep.subr.mxu0 0.0
    %5157 = vmatpush1.xpose.msra.mxu0 0.0
    %5158 = vmatprep.subr.mxu0 0.0
    %5159 = vmatpush1.xpose.msra.mxu0 0.0
    %5160 = vmatprep.subr.mxu0 0.0
    %5161 = vmatpush1.xpose.msra.mxu0 0.0
    %5162 = vmatprep.subr.mxu0 0.0
    %5163 = vmatpush1.xpose.msra.mxu0 0.0
    %5164 = vmatprep.subr.mxu0 0.0
    %5165 = vmatpush1.xpose.msra.mxu0 0.0
    %5166 = vmatprep.subr.mxu0 0.0
    %5167 = vmatpush1.xpose.msra.mxu0 0.0
    %5168 = vmatprep.subr.mxu0 0.0
    %5169 = vmatpush1.xpose.msra.mxu0 0.0
    %5170 = vmatprep.subr.mxu0 0.0
    %5171 = vmatpush1.xpose.msra.mxu0 0.0
    %5172 = vmatprep.subr.mxu0 0.0
    %5173 = vmatpush1.xpose.msra.mxu0 0.0
    %5174 = vmatprep.subr.mxu0 0.0
    %5175 = vmatpush1.xpose.msra.mxu0 0.0
    %5176 = vmatprep.subr.mxu0 0.0
    %5177 = vmatpush1.xpose.msra.mxu0 0.0
    %5178 = vmatprep.subr.mxu0 0.0
    %5179 = vmatpush1.xpose.msra.mxu0 0.0
    %5180 = vmatprep.subr.mxu0 0.0
    %5181 = vmatpush1.xpose.msra.mxu0 0.0
    %5182 = vmatprep.subr.mxu0 0.0
    %5183 = vmatpush1.xpose.msra.mxu0 0.0
    %5184 = vmatprep.subr.mxu0 0.0
    %5185 = vmatpush1.xpose.msra.mxu0 0.0
    %5186 = vmatprep.subr.mxu0 0.0
    %5187 = vmatpush1.xpose.msra.mxu0 0.0
    %5188 = vmatprep.mubr.f32.mxu0 0.0
    %5189 = vmatmul.mubr.f32.gmra.mrb[0].mxu0 %v5120
    %v5190 = vpop.f32.mrb[0].mxu0
    %v5191 = vadd.f32 0.0, %v5190
    %v5192 = vpop.f32.mrb[0].mxu0
    %5193 = vdwg.mxu0
    %5194 = vrot.lane.b32.xlu0 %v4845, 96
    %v5195 = vpop.permute.xlu0 %5194
    %5196 = vrot.lane.b32.xlu0 %v4503, 32
    %v5197 = vpop.permute.xlu0 %5196
    %v5198 = vsel %vm329, %v5195, 0
    %v5200 = vsel %vm329, %v5197, 0
    %5202 = vmatprep.subr.mxu0 0.0
    %5203 = vmatpush1.xpose.msra.mxu0 %v5200
    %5204 = vmatprep.subr.mxu0 0.0
    %5205 = vmatpush1.xpose.msra.mxu0 0.0
    %5206 = vmatprep.subr.mxu0 0.0
    %5207 = vmatpush1.xpose.msra.mxu0 0.0
    %5208 = vmatprep.subr.mxu0 0.0
    %5209 = vmatpush1.xpose.msra.mxu0 0.0
    %5210 = vmatprep.subr.mxu0 0.0
    %5211 = vmatpush1.xpose.msra.mxu0 0.0
    %5212 = vmatprep.subr.mxu0 0.0
    %5213 = vmatpush1.xpose.msra.mxu0 0.0
    %5214 = vmatprep.subr.mxu0 0.0
    %5215 = vmatpush1.xpose.msra.mxu0 0.0
    %5216 = vmatprep.subr.mxu0 0.0
    %5217 = vmatpush1.xpose.msra.mxu0 0.0
    %5218 = vmatprep.subr.mxu0 0.0
    %5219 = vmatpush1.xpose.msra.mxu0 0.0
    %5220 = vmatprep.subr.mxu0 0.0
    %5221 = vmatpush1.xpose.msra.mxu0 0.0
    %5222 = vmatprep.subr.mxu0 0.0
    %5223 = vmatpush1.xpose.msra.mxu0 0.0
    %5224 = vmatprep.subr.mxu0 0.0
    %5225 = vmatpush1.xpose.msra.mxu0 0.0
    %5226 = vmatprep.subr.mxu0 0.0
    %5227 = vmatpush1.xpose.msra.mxu0 0.0
    %5228 = vmatprep.subr.mxu0 0.0
    %5229 = vmatpush1.xpose.msra.mxu0 0.0
    %5230 = vmatprep.subr.mxu0 0.0
    %5231 = vmatpush1.xpose.msra.mxu0 0.0
    %5232 = vmatprep.subr.mxu0 0.0
    %5233 = vmatpush1.xpose.msra.mxu0 0.0
    %5234 = vmatprep.subr.mxu0 0.0
    %5235 = vmatpush1.xpose.msra.mxu0 0.0
    %5236 = vmatprep.subr.mxu0 0.0
    %5237 = vmatpush1.xpose.msra.mxu0 0.0
    %5238 = vmatprep.subr.mxu0 0.0
    %5239 = vmatpush1.xpose.msra.mxu0 0.0
    %5240 = vmatprep.subr.mxu0 0.0
    %5241 = vmatpush1.xpose.msra.mxu0 0.0
    %5242 = vmatprep.subr.mxu0 0.0
    %5243 = vmatpush1.xpose.msra.mxu0 0.0
    %5244 = vmatprep.subr.mxu0 0.0
    %5245 = vmatpush1.xpose.msra.mxu0 0.0
    %5246 = vmatprep.subr.mxu0 0.0
    %5247 = vmatpush1.xpose.msra.mxu0 0.0
    %5248 = vmatprep.subr.mxu0 0.0
    %5249 = vmatpush1.xpose.msra.mxu0 0.0
    %5250 = vmatprep.subr.mxu0 0.0
    %5251 = vmatpush1.xpose.msra.mxu0 0.0
    %5252 = vmatprep.subr.mxu0 0.0
    %5253 = vmatpush1.xpose.msra.mxu0 0.0
    %5254 = vmatprep.subr.mxu0 0.0
    %5255 = vmatpush1.xpose.msra.mxu0 0.0
    %5256 = vmatprep.subr.mxu0 0.0
    %5257 = vmatpush1.xpose.msra.mxu0 0.0
    %5258 = vmatprep.subr.mxu0 0.0
    %5259 = vmatpush1.xpose.msra.mxu0 0.0
    %5260 = vmatprep.subr.mxu0 0.0
    %5261 = vmatpush1.xpose.msra.mxu0 0.0
    %5262 = vmatprep.subr.mxu0 0.0
    %5263 = vmatpush1.xpose.msra.mxu0 0.0
    %5264 = vmatprep.subr.mxu0 0.0
    %5265 = vmatpush1.xpose.msra.mxu0 0.0
    %5266 = vmatprep.mubr.f32.mxu0 0.0
    %5267 = vmatmul.mubr.f32.gmra.mrb[0].mxu0 %v5198
    %v5268 = vpop.f32.mrb[0].mxu0
    %v5269 = vadd.f32 0.0, %v5268
    %v5270 = vpop.f32.mrb[0].mxu0
    %5271 = vdwg.mxu0
    %v5272 = vmul.f32 %v5191, 0.25
    %v5273 = vmul.f32 %v5269, 0.25
    %v5274 = vsel %vm489, %v5272, -inf
    %5275 = vmax.xlane.f32.xlu0 %v5274
    %v5276 = vpop.xlane.xlu0 %5275
    %v5277 = vsel %vm489, %v5273, -inf
    %5278 = vmax.xlane.f32.xlu0 %v5277
    %v5279 = vpop.xlane.xlu0 %5278
    %v5280 = vsub.f32 %v5272, %v5276
    %v5281 = vsub.f32 %v5273, %v5279
    %v5282 = vmul.f32 %v5280, 1.442695
    %v5283 = vpow.pop %v5282
    %v5284 = vmul.f32 %v5281, 1.442695
    %v5285 = vpow.pop %v5284
    %v5286 = vsel %vm489, %v5283, 0.0
    %5287 = vadd.xlane.f32.xlu0 %v5286
    %v5288 = vpop.xlane.xlu0 %5287
    %v5289 = vsel %vm489, %v5285, 0.0
    %5290 = vadd.xlane.f32.xlu0 %v5289
    %v5291 = vpop.xlane.xlu0 %5290
    %v5292 = vrcp.pop %v5288
    %v5293 = vrcp.pop %v5291
    %v5294 = vmul.f32 %v5283, %v5292
    %v5295 = vmul.f32 %v5285, %v5293
    %5296 = vrot.lane.b32.xlu0 %v4954, 96
    %v5297 = vpop.permute.xlu0 %5296
    %v5299 = vsel %vm512, %v5294, 0
    %v5301 = vsel %vm516, %v5297, 0
    %5303 = vmatprep.subr.mxu0 0.0
    %5304 = vmatpush1.msra.mxu0 %v5301
    %5305 = vmatprep.subr.mxu0 0.0
    %5306 = vmatpush1.msra.mxu0 0.0
    %5307 = vmatprep.subr.mxu0 0.0
    %5308 = vmatpush1.msra.mxu0 0.0
    %5309 = vmatprep.subr.mxu0 0.0
    %5310 = vmatpush1.msra.mxu0 0.0
    %5311 = vmatprep.subr.mxu0 0.0
    %5312 = vmatpush1.msra.mxu0 0.0
    %5313 = vmatprep.subr.mxu0 0.0
    %5314 = vmatpush1.msra.mxu0 0.0
    %5315 = vmatprep.subr.mxu0 0.0
    %5316 = vmatpush1.msra.mxu0 0.0
    %5317 = vmatprep.subr.mxu0 0.0
    %5318 = vmatpush1.msra.mxu0 0.0
    %5319 = vmatprep.subr.mxu0 0.0
    %5320 = vmatpush1.msra.mxu0 0.0
    %5321 = vmatprep.subr.mxu0 0.0
    %5322 = vmatpush1.msra.mxu0 0.0
    %5323 = vmatprep.subr.mxu0 0.0
    %5324 = vmatpush1.msra.mxu0 0.0
    %5325 = vmatprep.subr.mxu0 0.0
    %5326 = vmatpush1.msra.mxu0 0.0
    %5327 = vmatprep.subr.mxu0 0.0
    %5328 = vmatpush1.msra.mxu0 0.0
    %5329 = vmatprep.subr.mxu0 0.0
    %5330 = vmatpush1.msra.mxu0 0.0
    %5331 = vmatprep.subr.mxu0 0.0
    %5332 = vmatpush1.msra.mxu0 0.0
    %5333 = vmatprep.subr.mxu0 0.0
    %5334 = vmatpush1.msra.mxu0 0.0
    %5335 = vmatprep.subr.mxu0 0.0
    %5336 = vmatpush1.msra.mxu0 0.0
    %5337 = vmatprep.subr.mxu0 0.0
    %5338 = vmatpush1.msra.mxu0 0.0
    %5339 = vmatprep.subr.mxu0 0.0
    %5340 = vmatpush1.msra.mxu0 0.0
    %5341 = vmatprep.subr.mxu0 0.0
    %5342 = vmatpush1.msra.mxu0 0.0
    %5343 = vmatprep.subr.mxu0 0.0
    %5344 = vmatpush1.msra.mxu0 0.0
    %5345 = vmatprep.subr.mxu0 0.0
    %5346 = vmatpush1.msra.mxu0 0.0
    %5347 = vmatprep.subr.mxu0 0.0
    %5348 = vmatpush1.msra.mxu0 0.0
    %5349 = vmatprep.subr.mxu0 0.0
    %5350 = vmatpush1.msra.mxu0 0.0
    %5351 = vmatprep.subr.mxu0 0.0
    %5352 = vmatpush1.msra.mxu0 0.0
    %5353 = vmatprep.subr.mxu0 0.0
    %5354 = vmatpush1.msra.mxu0 0.0
    %5355 = vmatprep.subr.mxu0 0.0
    %5356 = vmatpush1.msra.mxu0 0.0
    %5357 = vmatprep.subr.mxu0 0.0
    %5358 = vmatpush1.msra.mxu0 0.0
    %5359 = vmatprep.subr.mxu0 0.0
    %5360 = vmatpush1.msra.mxu0 0.0
    %5361 = vmatprep.subr.mxu0 0.0
    %5362 = vmatpush1.msra.mxu0 0.0
    %5363 = vmatprep.subr.mxu0 0.0
    %5364 = vmatpush1.msra.mxu0 0.0
    %5365 = vmatprep.subr.mxu0 0.0
    %5366 = vmatpush1.msra.mxu0 0.0
    %5367 = vmatprep.mubr.f32.mxu0 0.0
    %5368 = vmatmul.mubr.f32.gmra.mrb[0].mxu0 %v5299
    %v5369 = vpop.f32.mrb[0].mxu0
    %v5370 = vadd.f32 0.0, %v5369
    %v5371 = vpop.f32.mrb[0].mxu0
    %5372 = vdwg.mxu0
    %5373 = vrot.lane.b32.xlu0 %v5038, 96
    %v5374 = vpop.permute.xlu0 %5373
    %v5376 = vsel %vm512, %v5295, 0
    %v5378 = vsel %vm516, %v5374, 0
    %5380 = vmatprep.subr.mxu0 0.0
    %5381 = vmatpush1.msra.mxu0 %v5378
    %5382 = vmatprep.subr.mxu0 0.0
    %5383 = vmatpush1.msra.mxu0 0.0
    %5384 = vmatprep.subr.mxu0 0.0
    %5385 = vmatpush1.msra.mxu0 0.0
    %5386 = vmatprep.subr.mxu0 0.0
    %5387 = vmatpush1.msra.mxu0 0.0
    %5388 = vmatprep.subr.mxu0 0.0
    %5389 = vmatpush1.msra.mxu0 0.0
    %5390 = vmatprep.subr.mxu0 0.0
    %5391 = vmatpush1.msra.mxu0 0.0
    %5392 = vmatprep.subr.mxu0 0.0
    %5393 = vmatpush1.msra.mxu0 0.0
    %5394 = vmatprep.subr.mxu0 0.0
    %5395 = vmatpush1.msra.mxu0 0.0
    %5396 = vmatprep.subr.mxu0 0.0
    %5397 = vmatpush1.msra.mxu0 0.0
    %5398 = vmatprep.subr.mxu0 0.0
    %5399 = vmatpush1.msra.mxu0 0.0
    %5400 = vmatprep.subr.mxu0 0.0
    %5401 = vmatpush1.msra.mxu0 0.0
    %5402 = vmatprep.subr.mxu0 0.0
    %5403 = vmatpush1.msra.mxu0 0.0
    %5404 = vmatprep.subr.mxu0 0.0
    %5405 = vmatpush1.msra.mxu0 0.0
    %5406 = vmatprep.subr.mxu0 0.0
    %5407 = vmatpush1.msra.mxu0 0.0
    %5408 = vmatprep.subr.mxu0 0.0
    %5409 = vmatpush1.msra.mxu0 0.0
    %5410 = vmatprep.subr.mxu0 0.0
    %5411 = vmatpush1.msra.mxu0 0.0
    %5412 = vmatprep.subr.mxu0 0.0
    %5413 = vmatpush1.msra.mxu0 0.0
    %5414 = vmatprep.subr.mxu0 0.0
    %5415 = vmatpush1.msra.mxu0 0.0
    %5416 = vmatprep.subr.mxu0 0.0
    %5417 = vmatpush1.msra.mxu0 0.0
    %5418 = vmatprep.subr.mxu0 0.0
    %5419 = vmatpush1.msra.mxu0 0.0
    %5420 = vmatprep.subr.mxu0 0.0
    %5421 = vmatpush1.msra.mxu0 0.0
    %5422 = vmatprep.subr.mxu0 0.0
    %5423 = vmatpush1.msra.mxu0 0.0
    %5424 = vmatprep.subr.mxu0 0.0
    %5425 = vmatpush1.msra.mxu0 0.0
    %5426 = vmatprep.subr.mxu0 0.0
    %5427 = vmatpush1.msra.mxu0 0.0
    %5428 = vmatprep.subr.mxu0 0.0
    %5429 = vmatpush1.msra.mxu0 0.0
    %5430 = vmatprep.subr.mxu0 0.0
    %5431 = vmatpush1.msra.mxu0 0.0
    %5432 = vmatprep.subr.mxu0 0.0
    %5433 = vmatpush1.msra.mxu0 0.0
    %5434 = vmatprep.subr.mxu0 0.0
    %5435 = vmatpush1.msra.mxu0 0.0
    %5436 = vmatprep.subr.mxu0 0.0
    %5437 = vmatpush1.msra.mxu0 0.0
    %5438 = vmatprep.subr.mxu0 0.0
    %5439 = vmatpush1.msra.mxu0 0.0
    %5440 = vmatprep.subr.mxu0 0.0
    %5441 = vmatpush1.msra.mxu0 0.0
    %5442 = vmatprep.subr.mxu0 0.0
    %5443 = vmatpush1.msra.mxu0 0.0
    %5444 = vmatprep.mubr.f32.mxu0 0.0
    %5445 = vmatmul.mubr.f32.gmra.mrb[0].mxu0 %v5376
    %v5446 = vpop.f32.mrb[0].mxu0
    %v5447 = vadd.f32 0.0, %v5446
    %v5448 = vpop.f32.mrb[0].mxu0
    %5449 = vdwg.mxu0
    %5450 = vrot.lane.b32.xlu0 %v4760, 80
    %v5451 = vpop.permute.xlu0 %5450
    %5452 = vrot.lane.b32.xlu0 %v4420, 16
    %v5453 = vpop.permute.xlu0 %5452
    %v5454 = vsel %vm329, %v5451, 0
    %v5456 = vsel %vm329, %v5453, 0
    %5458 = vmatprep.subr.mxu0 0.0
    %5459 = vmatpush1.xpose.msra.mxu0 %v5456
    %5460 = vmatprep.subr.mxu0 0.0
    %5461 = vmatpush1.xpose.msra.mxu0 0.0
    %5462 = vmatprep.subr.mxu0 0.0
    %5463 = vmatpush1.xpose.msra.mxu0 0.0
    %5464 = vmatprep.subr.mxu0 0.0
    %5465 = vmatpush1.xpose.msra.mxu0 0.0
    %5466 = vmatprep.subr.mxu0 0.0
    %5467 = vmatpush1.xpose.msra.mxu0 0.0
    %5468 = vmatprep.subr.mxu0 0.0
    %5469 = vmatpush1.xpose.msra.mxu0 0.0
    %5470 = vmatprep.subr.mxu0 0.0
    %5471 = vmatpush1.xpose.msra.mxu0 0.0
    %5472 = vmatprep.subr.mxu0 0.0
    %5473 = vmatpush1.xpose.msra.mxu0 0.0
    %5474 = vmatprep.subr.mxu0 0.0
    %5475 = vmatpush1.xpose.msra.mxu0 0.0
    %5476 = vmatprep.subr.mxu0 0.0
    %5477 = vmatpush1.xpose.msra.mxu0 0.0
    %5478 = vmatprep.subr.mxu0 0.0
    %5479 = vmatpush1.xpose.msra.mxu0 0.0
    %5480 = vmatprep.subr.mxu0 0.0
    %5481 = vmatpush1.xpose.msra.mxu0 0.0
    %5482 = vmatprep.subr.mxu0 0.0
    %5483 = vmatpush1.xpose.msra.mxu0 0.0
    %5484 = vmatprep.subr.mxu0 0.0
    %5485 = vmatpush1.xpose.msra.mxu0 0.0
    %5486 = vmatprep.subr.mxu0 0.0
    %5487 = vmatpush1.xpose.msra.mxu0 0.0
    %5488 = vmatprep.subr.mxu0 0.0
    %5489 = vmatpush1.xpose.msra.mxu0 0.0
    %5490 = vmatprep.subr.mxu0 0.0
    %5491 = vmatpush1.xpose.msra.mxu0 0.0
    %5492 = vmatprep.subr.mxu0 0.0
    %5493 = vmatpush1.xpose.msra.mxu0 0.0
    %5494 = vmatprep.subr.mxu0 0.0
    %5495 = vmatpush1.xpose.msra.mxu0 0.0
    %5496 = vmatprep.subr.mxu0 0.0
    %5497 = vmatpush1.xpose.msra.mxu0 0.0
    %5498 = vmatprep.subr.mxu0 0.0
    %5499 = vmatpush1.xpose.msra.mxu0 0.0
    %5500 = vmatprep.subr.mxu0 0.0
    %5501 = vmatpush1.xpose.msra.mxu0 0.0
    %5502 = vmatprep.subr.mxu0 0.0
    %5503 = vmatpush1.xpose.msra.mxu0 0.0
    %5504 = vmatprep.subr.mxu0 0.0
    %5505 = vmatpush1.xpose.msra.mxu0 0.0
    %5506 = vmatprep.subr.mxu0 0.0
    %5507 = vmatpush1.xpose.msra.mxu0 0.0
    %5508 = vmatprep.subr.mxu0 0.0
    %5509 = vmatpush1.xpose.msra.mxu0 0.0
    %5510 = vmatprep.subr.mxu0 0.0
    %5511 = vmatpush1.xpose.msra.mxu0 0.0
    %5512 = vmatprep.subr.mxu0 0.0
    %5513 = vmatpush1.xpose.msra.mxu0 0.0
    %5514 = vmatprep.subr.mxu0 0.0
    %5515 = vmatpush1.xpose.msra.mxu0 0.0
    %5516 = vmatprep.subr.mxu0 0.0
    %5517 = vmatpush1.xpose.msra.mxu0 0.0
    %5518 = vmatprep.subr.mxu0 0.0
    %5519 = vmatpush1.xpose.msra.mxu0 0.0
    %5520 = vmatprep.subr.mxu0 0.0
    %5521 = vmatpush1.xpose.msra.mxu0 0.0
    %5522 = vmatprep.mubr.f32.mxu0 0.0
    %5523 = vmatmul.mubr.f32.gmra.mrb[0].mxu0 %v5454
    %v5524 = vpop.f32.mrb[0].mxu0
    %v5525 = vadd.f32 0.0, %v5524
    %v5526 = vpop.f32.mrb[0].mxu0
    %5527 = vdwg.mxu0
    %5528 = vrot.lane.b32.xlu0 %v4845, 80
    %v5529 = vpop.permute.xlu0 %5528
    %5530 = vrot.lane.b32.xlu0 %v4503, 16
    %v5531 = vpop.permute.xlu0 %5530
    %v5532 = vsel %vm329, %v5529, 0
    %v5534 = vsel %vm329, %v5531, 0
    %5536 = vmatprep.subr.mxu0 0.0
    %5537 = vmatpush1.xpose.msra.mxu0 %v5534
    %5538 = vmatprep.subr.mxu0 0.0
    %5539 = vmatpush1.xpose.msra.mxu0 0.0
    %5540 = vmatprep.subr.mxu0 0.0
    %5541 = vmatpush1.xpose.msra.mxu0 0.0
    %5542 = vmatprep.subr.mxu0 0.0
    %5543 = vmatpush1.xpose.msra.mxu0 0.0
    %5544 = vmatprep.subr.mxu0 0.0
    %5545 = vmatpush1.xpose.msra.mxu0 0.0
    %5546 = vmatprep.subr.mxu0 0.0
    %5547 = vmatpush1.xpose.msra.mxu0 0.0
    %5548 = vmatprep.subr.mxu0 0.0
    %5549 = vmatpush1.xpose.msra.mxu0 0.0
    %5550 = vmatprep.subr.mxu0 0.0
    %5551 = vmatpush1.xpose.msra.mxu0 0.0
    %5552 = vmatprep.subr.mxu0 0.0
    %5553 = vmatpush1.xpose.msra.mxu0 0.0
    %5554 = vmatprep.subr.mxu0 0.0
    %5555 = vmatpush1.xpose.msra.mxu0 0.0
    %5556 = vmatprep.subr.mxu0 0.0
    %5557 = vmatpush1.xpose.msra.mxu0 0.0
    %5558 = vmatprep.subr.mxu0 0.0
    %5559 = vmatpush1.xpose.msra.mxu0 0.0
    %5560 = vmatprep.subr.mxu0 0.0
    %5561 = vmatpush1.xpose.msra.mxu0 0.0
    %5562 = vmatprep.subr.mxu0 0.0
    %5563 = vmatpush1.xpose.msra.mxu0 0.0
    %5564 = vmatprep.subr.mxu0 0.0
    %5565 = vmatpush1.xpose.msra.mxu0 0.0
    %5566 = vmatprep.subr.mxu0 0.0
    %5567 = vmatpush1.xpose.msra.mxu0 0.0
    %5568 = vmatprep.subr.mxu0 0.0
    %5569 = vmatpush1.xpose.msra.mxu0 0.0
    %5570 = vmatprep.subr.mxu0 0.0
    %5571 = vmatpush1.xpose.msra.mxu0 0.0
    %5572 = vmatprep.subr.mxu0 0.0
    %5573 = vmatpush1.xpose.msra.mxu0 0.0
    %5574 = vmatprep.subr.mxu0 0.0
    %5575 = vmatpush1.xpose.msra.mxu0 0.0
    %5576 = vmatprep.subr.mxu0 0.0
    %5577 = vmatpush1.xpose.msra.mxu0 0.0
    %5578 = vmatprep.subr.mxu0 0.0
    %5579 = vmatpush1.xpose.msra.mxu0 0.0
    %5580 = vmatprep.subr.mxu0 0.0
    %5581 = vmatpush1.xpose.msra.mxu0 0.0
    %5582 = vmatprep.subr.mxu0 0.0
    %5583 = vmatpush1.xpose.msra.mxu0 0.0
    %5584 = vmatprep.subr.mxu0 0.0
    %5585 = vmatpush1.xpose.msra.mxu0 0.0
    %5586 = vmatprep.subr.mxu0 0.0
    %5587 = vmatpush1.xpose.msra.mxu0 0.0
    %5588 = vmatprep.subr.mxu0 0.0
    %5589 = vmatpush1.xpose.msra.mxu0 0.0
    %5590 = vmatprep.subr.mxu0 0.0
    %5591 = vmatpush1.xpose.msra.mxu0 0.0
    %5592 = vmatprep.subr.mxu0 0.0
    %5593 = vmatpush1.xpose.msra.mxu0 0.0
    %5594 = vmatprep.subr.mxu0 0.0
    %5595 = vmatpush1.xpose.msra.mxu0 0.0
    %5596 = vmatprep.subr.mxu0 0.0
    %5597 = vmatpush1.xpose.msra.mxu0 0.0
    %5598 = vmatprep.subr.mxu0 0.0
    %5599 = vmatpush1.xpose.msra.mxu0 0.0
    %5600 = vmatprep.mubr.f32.mxu0 0.0
    %5601 = vmatmul.mubr.f32.gmra.mrb[0].mxu0 %v5532
    %v5602 = vpop.f32.mrb[0].mxu0
    %v5603 = vadd.f32 0.0, %v5602
    %v5604 = vpop.f32.mrb[0].mxu0
    %5605 = vdwg.mxu0
    %v5606 = vmul.f32 %v5525, 0.25
    %v5607 = vmul.f32 %v5603, 0.25
    %v5608 = vsel %vm489, %v5606, -inf
    %5609 = vmax.xlane.f32.xlu0 %v5608
    %v5610 = vpop.xlane.xlu0 %5609
    %v5611 = vsel %vm489, %v5607, -inf
    %5612 = vmax.xlane.f32.xlu0 %v5611
    %v5613 = vpop.xlane.xlu0 %5612
    %v5614 = vsub.f32 %v5606, %v5610
    %v5615 = vsub.f32 %v5607, %v5613
    %v5616 = vmul.f32 %v5614, 1.442695
    %v5617 = vpow.pop %v5616
    %v5618 = vmul.f32 %v5615, 1.442695
    %v5619 = vpow.pop %v5618
    %v5620 = vsel %vm489, %v5617, 0.0
    %5621 = vadd.xlane.f32.xlu0 %v5620
    %v5622 = vpop.xlane.xlu0 %5621
    %v5623 = vsel %vm489, %v5619, 0.0
    %5624 = vadd.xlane.f32.xlu0 %v5623
    %v5625 = vpop.xlane.xlu0 %5624
    %v5626 = vrcp.pop %v5622
    %v5627 = vrcp.pop %v5625
    %v5628 = vmul.f32 %v5617, %v5626
    %v5629 = vmul.f32 %v5619, %v5627
    %5630 = vrot.lane.b32.xlu0 %v4954, 80
    %v5631 = vpop.permute.xlu0 %5630
    %v5633 = vsel %vm512, %v5628, 0
    %v5635 = vsel %vm516, %v5631, 0
    %5637 = vmatprep.subr.mxu0 0.0
    %5638 = vmatpush1.msra.mxu0 %v5635
    %5639 = vmatprep.subr.mxu0 0.0
    %5640 = vmatpush1.msra.mxu0 0.0
    %5641 = vmatprep.subr.mxu0 0.0
    %5642 = vmatpush1.msra.mxu0 0.0
    %5643 = vmatprep.subr.mxu0 0.0
    %5644 = vmatpush1.msra.mxu0 0.0
    %5645 = vmatprep.subr.mxu0 0.0
    %5646 = vmatpush1.msra.mxu0 0.0
    %5647 = vmatprep.subr.mxu0 0.0
    %5648 = vmatpush1.msra.mxu0 0.0
    %5649 = vmatprep.subr.mxu0 0.0
    %5650 = vmatpush1.msra.mxu0 0.0
    %5651 = vmatprep.subr.mxu0 0.0
    %5652 = vmatpush1.msra.mxu0 0.0
    %5653 = vmatprep.subr.mxu0 0.0
    %5654 = vmatpush1.msra.mxu0 0.0
    %5655 = vmatprep.subr.mxu0 0.0
    %5656 = vmatpush1.msra.mxu0 0.0
    %5657 = vmatprep.subr.mxu0 0.0
    %5658 = vmatpush1.msra.mxu0 0.0
    %5659 = vmatprep.subr.mxu0 0.0
    %5660 = vmatpush1.msra.mxu0 0.0
    %5661 = vmatprep.subr.mxu0 0.0
    %5662 = vmatpush1.msra.mxu0 0.0
    %5663 = vmatprep.subr.mxu0 0.0
    %5664 = vmatpush1.msra.mxu0 0.0
    %5665 = vmatprep.subr.mxu0 0.0
    %5666 = vmatpush1.msra.mxu0 0.0
    %5667 = vmatprep.subr.mxu0 0.0
    %5668 = vmatpush1.msra.mxu0 0.0
    %5669 = vmatprep.subr.mxu0 0.0
    %5670 = vmatpush1.msra.mxu0 0.0
    %5671 = vmatprep.subr.mxu0 0.0
    %5672 = vmatpush1.msra.mxu0 0.0
    %5673 = vmatprep.subr.mxu0 0.0
    %5674 = vmatpush1.msra.mxu0 0.0
    %5675 = vmatprep.subr.mxu0 0.0
    %5676 = vmatpush1.msra.mxu0 0.0
    %5677 = vmatprep.subr.mxu0 0.0
    %5678 = vmatpush1.msra.mxu0 0.0
    %5679 = vmatprep.subr.mxu0 0.0
    %5680 = vmatpush1.msra.mxu0 0.0
    %5681 = vmatprep.subr.mxu0 0.0
    %5682 = vmatpush1.msra.mxu0 0.0
    %5683 = vmatprep.subr.mxu0 0.0
    %5684 = vmatpush1.msra.mxu0 0.0
    %5685 = vmatprep.subr.mxu0 0.0
    %5686 = vmatpush1.msra.mxu0 0.0
    %5687 = vmatprep.subr.mxu0 0.0
    %5688 = vmatpush1.msra.mxu0 0.0
    %5689 = vmatprep.subr.mxu0 0.0
    %5690 = vmatpush1.msra.mxu0 0.0
    %5691 = vmatprep.subr.mxu0 0.0
    %5692 = vmatpush1.msra.mxu0 0.0
    %5693 = vmatprep.subr.mxu0 0.0
    %5694 = vmatpush1.msra.mxu0 0.0
    %5695 = vmatprep.subr.mxu0 0.0
    %5696 = vmatpush1.msra.mxu0 0.0
    %5697 = vmatprep.subr.mxu0 0.0
    %5698 = vmatpush1.msra.mxu0 0.0
    %5699 = vmatprep.subr.mxu0 0.0
    %5700 = vmatpush1.msra.mxu0 0.0
    %5701 = vmatprep.mubr.f32.mxu0 0.0
    %5702 = vmatmul.mubr.f32.gmra.mrb[0].mxu0 %v5633
    %v5703 = vpop.f32.mrb[0].mxu0
    %v5704 = vadd.f32 0.0, %v5703
    %v5705 = vpop.f32.mrb[0].mxu0
    %5706 = vdwg.mxu0
    %5707 = vrot.lane.b32.xlu0 %v5038, 80
    %v5708 = vpop.permute.xlu0 %5707
    %v5710 = vsel %vm512, %v5629, 0
    %v5712 = vsel %vm516, %v5708, 0
    %5714 = vmatprep.subr.mxu0 0.0
    %5715 = vmatpush1.msra.mxu0 %v5712
    %5716 = vmatprep.subr.mxu0 0.0
    %5717 = vmatpush1.msra.mxu0 0.0
    %5718 = vmatprep.subr.mxu0 0.0
    %5719 = vmatpush1.msra.mxu0 0.0
    %5720 = vmatprep.subr.mxu0 0.0
    %5721 = vmatpush1.msra.mxu0 0.0
    %5722 = vmatprep.subr.mxu0 0.0
    %5723 = vmatpush1.msra.mxu0 0.0
    %5724 = vmatprep.subr.mxu0 0.0
    %5725 = vmatpush1.msra.mxu0 0.0
    %5726 = vmatprep.subr.mxu0 0.0
    %5727 = vmatpush1.msra.mxu0 0.0
    %5728 = vmatprep.subr.mxu0 0.0
    %5729 = vmatpush1.msra.mxu0 0.0
    %5730 = vmatprep.subr.mxu0 0.0
    %5731 = vmatpush1.msra.mxu0 0.0
    %5732 = vmatprep.subr.mxu0 0.0
    %5733 = vmatpush1.msra.mxu0 0.0
    %5734 = vmatprep.subr.mxu0 0.0
    %5735 = vmatpush1.msra.mxu0 0.0
    %5736 = vmatprep.subr.mxu0 0.0
    %5737 = vmatpush1.msra.mxu0 0.0
    %5738 = vmatprep.subr.mxu0 0.0
    %5739 = vmatpush1.msra.mxu0 0.0
    %5740 = vmatprep.subr.mxu0 0.0
    %5741 = vmatpush1.msra.mxu0 0.0
    %5742 = vmatprep.subr.mxu0 0.0
    %5743 = vmatpush1.msra.mxu0 0.0
    %5744 = vmatprep.subr.mxu0 0.0
    %5745 = vmatpush1.msra.mxu0 0.0
    %5746 = vmatprep.subr.mxu0 0.0
    %5747 = vmatpush1.msra.mxu0 0.0
    %5748 = vmatprep.subr.mxu0 0.0
    %5749 = vmatpush1.msra.mxu0 0.0
    %5750 = vmatprep.subr.mxu0 0.0
    %5751 = vmatpush1.msra.mxu0 0.0
    %5752 = vmatprep.subr.mxu0 0.0
    %5753 = vmatpush1.msra.mxu0 0.0
    %5754 = vmatprep.subr.mxu0 0.0
    %5755 = vmatpush1.msra.mxu0 0.0
    %5756 = vmatprep.subr.mxu0 0.0
    %5757 = vmatpush1.msra.mxu0 0.0
    %5758 = vmatprep.subr.mxu0 0.0
    %5759 = vmatpush1.msra.mxu0 0.0
    %5760 = vmatprep.subr.mxu0 0.0
    %5761 = vmatpush1.msra.mxu0 0.0
    %5762 = vmatprep.subr.mxu0 0.0
    %5763 = vmatpush1.msra.mxu0 0.0
    %5764 = vmatprep.subr.mxu0 0.0
    %5765 = vmatpush1.msra.mxu0 0.0
    %5766 = vmatprep.subr.mxu0 0.0
    %5767 = vmatpush1.msra.mxu0 0.0
    %5768 = vmatprep.subr.mxu0 0.0
    %5769 = vmatpush1.msra.mxu0 0.0
    %5770 = vmatprep.subr.mxu0 0.0
    %5771 = vmatpush1.msra.mxu0 0.0
    %5772 = vmatprep.subr.mxu0 0.0
    %5773 = vmatpush1.msra.mxu0 0.0
    %5774 = vmatprep.subr.mxu0 0.0
    %5775 = vmatpush1.msra.mxu0 0.0
    %5776 = vmatprep.subr.mxu0 0.0
    %5777 = vmatpush1.msra.mxu0 0.0
    %5778 = vmatprep.mubr.f32.mxu0 0.0
    %5779 = vmatmul.mubr.f32.gmra.mrb[0].mxu0 %v5710
    %v5780 = vpop.f32.mrb[0].mxu0
    %v5781 = vadd.f32 0.0, %v5780
    %v5782 = vpop.f32.mrb[0].mxu0
    %5783 = vdwg.mxu0
    %v5786 = vcombine.low %v4676, %v4751
    %v5788 = vunpack.c.l.s4 1983009808
    %v5789 = vunpack.c.0.s8 %v5788
    %v5790 = vlaneseq
    %v5791 = vshrl.u32 %v5790, 7
    %v5792 = vsub.s32 %v5789, %v5791
    %v5793 = vrot.slane %v5786, %v5792
    %v5797 = vcombine.low %v5029, %v5113
    %v5799 = vunpack.c.l.s4 1983009808
    %v5800 = vunpack.c.0.s8 %v5799
    %v5801 = vlaneseq
    %v5802 = vshrl.u32 %v5801, 7
    %v5803 = vsub.s32 %v5800, %v5802
    %v5804 = vrot.slane %v5797, %v5803
    %5805 = vrot.lane.b32.xlu0 %v5804, 16
    %v5806 = vpop.permute.xlu0 %5805
    %v5810 = vcombine.low %v5370, %v5447
    %v5812 = vunpack.c.l.s4 1983009808
    %v5813 = vunpack.c.0.s8 %v5812
    %v5814 = vlaneseq
    %v5815 = vshrl.u32 %v5814, 7
    %v5816 = vsub.s32 %v5813, %v5815
    %v5817 = vrot.slane %v5810, %v5816
    %5818 = vrot.lane.b32.xlu0 %v5817, 32
    %v5819 = vpop.permute.xlu0 %5818
    %v5823 = vcombine.low %v5704, %v5781
    %v5825 = vunpack.c.l.s4 1983009808
    %v5826 = vunpack.c.0.s8 %v5825
    %v5827 = vlaneseq
    %v5828 = vshrl.u32 %v5827, 7
    %v5829 = vsub.s32 %v5826, %v5828
    %v5830 = vrot.slane %v5823, %v5829
    %5831 = vrot.lane.b32.xlu0 %v5830, 48
    %v5832 = vpop.permute.xlu0 %5831
    %v5834 = vsel %vm329, %v5793, %v5806
    %v5835 = vsel %vm1745, %v5834, %v5819
    %v5836 = vsel %vm1747, %v5835, %v5832
    %s5837 = scalar_lea.vmem %s5, 32
    %v5838 = vld [vmem:[%s5837] sm:$0xf]
    %v5839 = vld [vmem:[%s5837 + $0x4] sm:$0xf]
    %v5840 = vld [vmem:[%s5837 + $0x8] sm:$0xf]
    %v5841 = vld [vmem:[%s5837 + $0xc] sm:$0xf]
    %v5842 = vld [vmem:[%s5837 + $0x10] sm:$0xf]
    %v5843 = vld [vmem:[%s5837 + $0x14] sm:$0xf]
    %v5844 = vld [vmem:[%s5837 + $0x18] sm:$0xf]
    %v5845 = vld [vmem:[%s5837 + $0x1c] sm:$0xf]
    %v5846 = vpack.c.bf16 %v5836, %v5836
    %v5847 = vlaneseq
    %v5848 = vshrl.u32 %v5847, 7
    %v5849 = vsub.s32 3, %v5848
    %v5850 = vrot.slane %v4261, %v5849
    %v5859 = vunpack.c.l.b16 %v5838
    %v5860 = vunpack.c.l.b16 %v5839
    %v5861 = vunpack.c.l.b16 %v5840
    %v5862 = vunpack.c.l.b16 %v5841
    %v5863 = vunpack.c.l.b16 %v5842
    %v5864 = vunpack.c.l.b16 %v5843
    %v5865 = vunpack.c.l.b16 %v5844
    %v5866 = vunpack.c.l.b16 %v5845
    %v5867 = vpack.c.b16 %v5860, %v5859
    %v5868 = vpack.c.b16 %v5862, %v5861
    %v5869 = vpack.c.b16 %v5864, %v5863
    %v5870 = vpack.c.b16 %v5866, %v5865
    %v5876 = vsel %vm229, %v5846, 0
    %5878 = vmatprep.subr.bf16.mxu0 0
    %5879 = vmatpush1.bf16.msra.mxu0 %v5867
    %5880 = vmatprep.subr.bf16.mxu0 0
    %5881 = vmatpush1.bf16.msra.mxu0 %v5868
    %5882 = vmatprep.subr.bf16.mxu0 0
    %5883 = vmatpush1.bf16.msra.mxu0 %v5869
    %5884 = vmatprep.subr.bf16.mxu0 0
    %5885 = vmatpush1.bf16.msra.mxu0 %v5870
    %5886 = vmatprep.subr.bf16.mxu0 0
    %5887 = vmatpush1.bf16.msra.mxu0 0
    %5888 = vmatprep.subr.bf16.mxu0 0
    %5889 = vmatpush1.bf16.msra.mxu0 0
    %5890 = vmatprep.subr.bf16.mxu0 0
    %5891 = vmatpush1.bf16.msra.mxu0 0
    %5892 = vmatprep.subr.bf16.mxu0 0
    %5893 = vmatpush1.bf16.msra.mxu0 0
    %5894 = vmatprep.subr.bf16.mxu0 0
    %5895 = vmatpush1.bf16.msra.mxu0 0
    %5896 = vmatprep.subr.bf16.mxu0 0
    %5897 = vmatpush1.bf16.msra.mxu0 0
    %5898 = vmatprep.subr.bf16.mxu0 0
    %5899 = vmatpush1.bf16.msra.mxu0 0
    %5900 = vmatprep.subr.bf16.mxu0 0
    %5901 = vmatpush1.bf16.msra.mxu0 0
    %5902 = vmatprep.subr.bf16.mxu0 0
    %5903 = vmatpush1.bf16.msra.mxu0 0
    %5904 = vmatprep.subr.bf16.mxu0 0
    %5905 = vmatpush1.bf16.msra.mxu0 0
    %5906 = vmatprep.subr.bf16.mxu0 0
    %5907 = vmatpush1.bf16.msra.mxu0 0
    %5908 = vmatprep.subr.bf16.mxu0 0
    %5909 = vmatpush1.bf16.msra.mxu0 0
    %5910 = vmatprep.mubr.bf16.mxu0 0
    %5911 = vmatmul.mubr.bf16.gmra.mrb[0].mxu0 %v5876
    %v5912 = vpop.f32.mrb[0].mxu0
    %v5913 = vadd.f32 %v5850, %v5912
    %v5914 = vpop.f32.mrb[0].mxu0
    %v5915 = vpop.f32.mrb[0].mxu0
    %v5916 = vpop.f32.mrb[0].mxu0
    %5917 = vdwg.mxu0
    %v5920 = vunpack.c.l.s4 1983009808
    %v5921 = vunpack.c.0.s8 %v5920
    %v5922 = vlaneseq
    %v5923 = vshrl.u32 %v5922, 7
    %v5924 = vsub.s32 %v5921, %v5923
    %v5925 = vrot.slane %v5913, %v5924
    %v5926 = vcombine.high %v5925, %v5925
    %v5929 = vadd.f32 %v4258, %v5925
    %v5930 = vadd.f32 %v4259, %v5926
    %v5933 = vcombine.low %v5929, %v5930
    %v5935 = vunpack.c.l.s4 1983009808
    %v5936 = vunpack.c.0.s8 %v5935
    %v5937 = vlaneseq
    %v5938 = vshrl.u32 %v5937, 7
    %v5939 = vsub.s32 %v5936, %v5938
    %v5940 = vrot.slane %v5933, %v5939
    %v5942 = vsel %vm1853, %v5940, 0.0
    %5943 = vadd.xlane.f32.xlu0 %v5942
    %v5944 = vpop.xlane.xlu0 %5943
    %v5945 = vmul.f32 %v5944, %v1857
    %v5948 = vunpack.c.l.s4 269488144
    %v5949 = vunpack.c.0.s8 %v5948
    %v5950 = vlaneseq
    %v5951 = vshrl.u32 %v5950, 7
    %v5952 = vsub.s32 %v5949, %v5951
    %v5953 = vrot.slane %v5945, %v5952
    %v5955 = vunpack.c.l.s4 842150450
    %v5956 = vunpack.c.0.s8 %v5955
    %v5957 = vlaneseq
    %v5958 = vshrl.u32 %v5957, 7
    %v5959 = vsub.s32 %v5956, %v5958
    %v5960 = vrot.slane %v5945, %v5959
    %v5963 = vsub.f32 %v5929, %v5953
    %v5964 = vsub.f32 %v5930, %v5960
    %v5965 = vmul.f32 %v5963, %v5963
    %v5966 = vmul.f32 %v5964, %v5964
    %v5969 = vcombine.low %v5965, %v5966
    %v5971 = vunpack.c.l.s4 1983009808
    %v5972 = vunpack.c.0.s8 %v5971
    %v5973 = vlaneseq
    %v5974 = vshrl.u32 %v5973, 7
    %v5975 = vsub.s32 %v5972, %v5974
    %v5976 = vrot.slane %v5969, %v5975
    %v5978 = vsel %vm1853, %v5976, 0.0
    %5979 = vadd.xlane.f32.xlu0 %v5978
    %v5980 = vpop.xlane.xlu0 %5979
    %v5981 = vmul.f32 %v5980, %v1857
    %v5982 = vadd.f32 %v5981, 1e-05
    %v5983 = vrsqrt.pop %v5982
    %v5986 = vunpack.c.l.s4 269488144
    %v5987 = vunpack.c.0.s8 %v5986
    %v5988 = vlaneseq
    %v5989 = vshrl.u32 %v5988, 7
    %v5990 = vsub.s32 %v5987, %v5989
    %v5991 = vrot.slane %v5983, %v5990
    %v5993 = vunpack.c.l.s4 842150450
    %v5994 = vunpack.c.0.s8 %v5993
    %v5995 = vlaneseq
    %v5996 = vshrl.u32 %v5995, 7
    %v5997 = vsub.s32 %v5994, %v5996
    %v5998 = vrot.slane %v5983, %v5997
    %v6001 = vmul.f32 %v5963, %v5991
    %v6002 = vmul.f32 %v5964, %v5998
    %v6003 = vlaneseq
    %v6004 = vshrl.u32 %v6003, 7
    %v6005 = vsub.s32 4, %v6004
    %v6006 = vrot.slane %v4261, %v6005
    %v6009 = vunpack.c.l.s4 1983009808
    %v6010 = vunpack.c.0.s8 %v6009
    %v6011 = vlaneseq
    %v6012 = vshrl.u32 %v6011, 7
    %v6013 = vsub.s32 %v6010, %v6012
    %v6014 = vrot.slane %v6006, %v6013
    %v6015 = vcombine.high %v6014, %v6014
    %v6018 = vmul.f32 %v6001, %v6014
    %v6019 = vmul.f32 %v6002, %v6015
    %v6020 = vlaneseq
    %v6021 = vshrl.u32 %v6020, 7
    %v6022 = vsub.s32 5, %v6021
    %v6023 = vrot.slane %v4261, %v6022
    %v6026 = vunpack.c.l.s4 1983009808
    %v6027 = vunpack.c.0.s8 %v6026
    %v6028 = vlaneseq
    %v6029 = vshrl.u32 %v6028, 7
    %v6030 = vsub.s32 %v6027, %v6029
    %v6031 = vrot.slane %v6023, %v6030
    %v6032 = vcombine.high %v6031, %v6031
    %v6035 = vadd.f32 %v6018, %v6031
    %v6036 = vadd.f32 %v6019, %v6032
    %s6037 = scalar_lea.vmem %s6, 512
    %v6038 = vld [vmem:[%s6037] sm:$0xff]
    %v6039 = vld [vmem:[%s6037 + $0x8] sm:$0xff]
    %v6040 = vld [vmem:[%s6037 + $0x10] sm:$0xff]
    %v6041 = vld [vmem:[%s6037 + $0x18] sm:$0xff]
    %v6042 = vld [vmem:[%s6037 + $0x20] sm:$0xff]
    %v6043 = vld [vmem:[%s6037 + $0x28] sm:$0xff]
    %v6044 = vld [vmem:[%s6037 + $0x30] sm:$0xff]
    %v6045 = vld [vmem:[%s6037 + $0x38] sm:$0xff]
    %v6046 = vld [vmem:[%s6037 + $0x40] sm:$0xff]
    %v6047 = vld [vmem:[%s6037 + $0x48] sm:$0xff]
    %v6048 = vld [vmem:[%s6037 + $0x50] sm:$0xff]
    %v6049 = vld [vmem:[%s6037 + $0x58] sm:$0xff]
    %v6050 = vld [vmem:[%s6037 + $0x60] sm:$0xff]
    %v6051 = vld [vmem:[%s6037 + $0x68] sm:$0xff]
    %v6052 = vld [vmem:[%s6037 + $0x70] sm:$0xff]
    %v6053 = vld [vmem:[%s6037 + $0x78] sm:$0xff]
    %v6054 = vld [vmem:[%s6037 + $0x80] sm:$0xff]
    %v6055 = vld [vmem:[%s6037 + $0x88] sm:$0xff]
    %v6056 = vld [vmem:[%s6037 + $0x90] sm:$0xff]
    %v6057 = vld [vmem:[%s6037 + $0x98] sm:$0xff]
    %v6058 = vld [vmem:[%s6037 + $0xa0] sm:$0xff]
    %v6059 = vld [vmem:[%s6037 + $0xa8] sm:$0xff]
    %v6060 = vld [vmem:[%s6037 + $0xb0] sm:$0xff]
    %v6061 = vld [vmem:[%s6037 + $0xb8] sm:$0xff]
    %v6062 = vld [vmem:[%s6037 + $0xc0] sm:$0xff]
    %v6063 = vld [vmem:[%s6037 + $0xc8] sm:$0xff]
    %v6064 = vld [vmem:[%s6037 + $0xd0] sm:$0xff]
    %v6065 = vld [vmem:[%s6037 + $0xd8] sm:$0xff]
    %v6066 = vld [vmem:[%s6037 + $0xe0] sm:$0xff]
    %v6067 = vld [vmem:[%s6037 + $0xe8] sm:$0xff]
    %v6068 = vld [vmem:[%s6037 + $0xf0] sm:$0xff]
    %v6069 = vld [vmem:[%s6037 + $0xf8] sm:$0xff]
    %v6070 = vld [vmem:[%s6037 + $0x100] sm:$0xff]
    %v6071 = vld [vmem:[%s6037 + $0x108] sm:$0xff]
    %v6072 = vld [vmem:[%s6037 + $0x110] sm:$0xff]
    %v6073 = vld [vmem:[%s6037 + $0x118] sm:$0xff]
    %v6074 = vld [vmem:[%s6037 + $0x120] sm:$0xff]
    %v6075 = vld [vmem:[%s6037 + $0x128] sm:$0xff]
    %v6076 = vld [vmem:[%s6037 + $0x130] sm:$0xff]
    %v6077 = vld [vmem:[%s6037 + $0x138] sm:$0xff]
    %v6078 = vld [vmem:[%s6037 + $0x140] sm:$0xff]
    %v6079 = vld [vmem:[%s6037 + $0x148] sm:$0xff]
    %v6080 = vld [vmem:[%s6037 + $0x150] sm:$0xff]
    %v6081 = vld [vmem:[%s6037 + $0x158] sm:$0xff]
    %v6082 = vld [vmem:[%s6037 + $0x160] sm:$0xff]
    %v6083 = vld [vmem:[%s6037 + $0x168] sm:$0xff]
    %v6084 = vld [vmem:[%s6037 + $0x170] sm:$0xff]
    %v6085 = vld [vmem:[%s6037 + $0x178] sm:$0xff]
    %v6086 = vld [vmem:[%s6037 + $0x180] sm:$0xff]
    %v6087 = vld [vmem:[%s6037 + $0x188] sm:$0xff]
    %v6088 = vld [vmem:[%s6037 + $0x190] sm:$0xff]
    %v6089 = vld [vmem:[%s6037 + $0x198] sm:$0xff]
    %v6090 = vld [vmem:[%s6037 + $0x1a0] sm:$0xff]
    %v6091 = vld [vmem:[%s6037 + $0x1a8] sm:$0xff]
    %v6092 = vld [vmem:[%s6037 + $0x1b0] sm:$0xff]
    %v6093 = vld [vmem:[%s6037 + $0x1b8] sm:$0xff]
    %v6094 = vld [vmem:[%s6037 + $0x1c0] sm:$0xff]
    %v6095 = vld [vmem:[%s6037 + $0x1c8] sm:$0xff]
    %v6096 = vld [vmem:[%s6037 + $0x1d0] sm:$0xff]
    %v6097 = vld [vmem:[%s6037 + $0x1d8] sm:$0xff]
    %v6098 = vld [vmem:[%s6037 + $0x1e0] sm:$0xff]
    %v6099 = vld [vmem:[%s6037 + $0x1e8] sm:$0xff]
    %v6100 = vld [vmem:[%s6037 + $0x1f0] sm:$0xff]
    %v6101 = vld [vmem:[%s6037 + $0x1f8] sm:$0xff]
    %v6104 = vcombine.low %v6035, %v6036
    %v6106 = vunpack.c.l.s4 1983009808
    %v6107 = vunpack.c.0.s8 %v6106
    %v6108 = vlaneseq
    %v6109 = vshrl.u32 %v6108, 7
    %v6110 = vsub.s32 %v6107, %v6109
    %v6111 = vrot.slane %v6104, %v6110
    %v6113 = vpack.c.bf16 %v6111, %v6111
    %s6114 = scalar_lea.vmem %s7, 16
    %v6115 = vld [vmem:[%s6114] sm:$0xff]
    %v6116 = vld [vmem:[%s6114 + $0x8] sm:$0xff]
    %v6119 = vlaneseq
    %v6120 = vshrl.u32 %v6119, 7
    %v6121 = vsub.s32 0, %v6120
    %v6122 = vrot.slane %v6115, %v6121
    %v6123 = vlaneseq
    %v6124 = vshrl.u32 %v6123, 7
    %v6125 = vsub.s32 1, %v6124
    %v6126 = vrot.slane %v6115, %v6125
    %v6127 = vlaneseq
    %v6128 = vshrl.u32 %v6127, 7
    %v6129 = vsub.s32 2, %v6128
    %v6130 = vrot.slane %v6115, %v6129
    %v6131 = vlaneseq
    %v6132 = vshrl.u32 %v6131, 7
    %v6133 = vsub.s32 3, %v6132
    %v6134 = vrot.slane %v6115, %v6133
    %v6135 = vlaneseq
    %v6136 = vshrl.u32 %v6135, 7
    %v6137 = vsub.s32 4, %v6136
    %v6138 = vrot.slane %v6115, %v6137
    %v6139 = vlaneseq
    %v6140 = vshrl.u32 %v6139, 7
    %v6141 = vsub.s32 5, %v6140
    %v6142 = vrot.slane %v6115, %v6141
    %v6143 = vlaneseq
    %v6144 = vshrl.u32 %v6143, 7
    %v6145 = vsub.s32 6, %v6144
    %v6146 = vrot.slane %v6115, %v6145
    %v6147 = vlaneseq
    %v6148 = vshrl.u32 %v6147, 7
    %v6149 = vsub.s32 7, %v6148
    %v6150 = vrot.slane %v6115, %v6149
    %v6151 = vlaneseq
    %v6152 = vshrl.u32 %v6151, 7
    %v6153 = vsub.s32 0, %v6152
    %v6154 = vrot.slane %v6116, %v6153
    %v6155 = vlaneseq
    %v6156 = vshrl.u32 %v6155, 7
    %v6157 = vsub.s32 1, %v6156
    %v6158 = vrot.slane %v6116, %v6157
    %v6159 = vlaneseq
    %v6160 = vshrl.u32 %v6159, 7
    %v6161 = vsub.s32 2, %v6160
    %v6162 = vrot.slane %v6116, %v6161
    %v6163 = vlaneseq
    %v6164 = vshrl.u32 %v6163, 7
    %v6165 = vsub.s32 3, %v6164
    %v6166 = vrot.slane %v6116, %v6165
    %v6167 = vlaneseq
    %v6168 = vshrl.u32 %v6167, 7
    %v6169 = vsub.s32 4, %v6168
    %v6170 = vrot.slane %v6116, %v6169
    %v6171 = vlaneseq
    %v6172 = vshrl.u32 %v6171, 7
    %v6173 = vsub.s32 5, %v6172
    %v6174 = vrot.slane %v6116, %v6173
    %v6175 = vlaneseq
    %v6176 = vshrl.u32 %v6175, 7
    %v6177 = vsub.s32 6, %v6176
    %v6178 = vrot.slane %v6116, %v6177
    %v6179 = vlaneseq
    %v6180 = vshrl.u32 %v6179, 7
    %v6181 = vsub.s32 7, %v6180
    %v6182 = vrot.slane %v6116, %v6181
    %v6263 = vunpack.c.l.b16 %v6038
    %v6264 = vunpack.c.h.b16 %v6038
    %v6265 = vunpack.c.l.b16 %v6039
    %v6266 = vunpack.c.h.b16 %v6039
    %v6267 = vunpack.c.l.b16 %v6040
    %v6268 = vunpack.c.h.b16 %v6040
    %v6269 = vunpack.c.l.b16 %v6041
    %v6270 = vunpack.c.h.b16 %v6041
    %v6271 = vunpack.c.l.b16 %v6042
    %v6272 = vunpack.c.h.b16 %v6042
    %v6273 = vunpack.c.l.b16 %v6043
    %v6274 = vunpack.c.h.b16 %v6043
    %v6275 = vunpack.c.l.b16 %v6044
    %v6276 = vunpack.c.h.b16 %v6044
    %v6277 = vunpack.c.l.b16 %v6045
    %v6278 = vunpack.c.h.b16 %v6045
    %v6279 = vunpack.c.l.b16 %v6046
    %v6280 = vunpack.c.h.b16 %v6046
    %v6281 = vunpack.c.l.b16 %v6047
    %v6282 = vunpack.c.h.b16 %v6047
    %v6283 = vunpack.c.l.b16 %v6048
    %v6284 = vunpack.c.h.b16 %v6048
    %v6285 = vunpack.c.l.b16 %v6049
    %v6286 = vunpack.c.h.b16 %v6049
    %v6287 = vunpack.c.l.b16 %v6050
    %v6288 = vunpack.c.h.b16 %v6050
    %v6289 = vunpack.c.l.b16 %v6051
    %v6290 = vunpack.c.h.b16 %v6051
    %v6291 = vunpack.c.l.b16 %v6052
    %v6292 = vunpack.c.h.b16 %v6052
    %v6293 = vunpack.c.l.b16 %v6053
    %v6294 = vunpack.c.h.b16 %v6053
    %v6295 = vunpack.c.l.b16 %v6054
    %v6296 = vunpack.c.h.b16 %v6054
    %v6297 = vunpack.c.l.b16 %v6055
    %v6298 = vunpack.c.h.b16 %v6055
    %v6299 = vunpack.c.l.b16 %v6056
    %v6300 = vunpack.c.h.b16 %v6056
    %v6301 = vunpack.c.l.b16 %v6057
    %v6302 = vunpack.c.h.b16 %v6057
    %v6303 = vunpack.c.l.b16 %v6058
    %v6304 = vunpack.c.h.b16 %v6058
    %v6305 = vunpack.c.l.b16 %v6059
    %v6306 = vunpack.c.h.b16 %v6059
    %v6307 = vunpack.c.l.b16 %v6060
    %v6308 = vunpack.c.h.b16 %v6060
    %v6309 = vunpack.c.l.b16 %v6061
    %v6310 = vunpack.c.h.b16 %v6061
    %v6311 = vunpack.c.l.b16 %v6062
    %v6312 = vunpack.c.h.b16 %v6062
    %v6313 = vunpack.c.l.b16 %v6063
    %v6314 = vunpack.c.h.b16 %v6063
    %v6315 = vunpack.c.l.b16 %v6064
    %v6316 = vunpack.c.h.b16 %v6064
    %v6317 = vunpack.c.l.b16 %v6065
    %v6318 = vunpack.c.h.b16 %v6065
    %v6319 = vunpack.c.l.b16 %v6066
    %v6320 = vunpack.c.h.b16 %v6066
    %v6321 = vunpack.c.l.b16 %v6067
    %v6322 = vunpack.c.h.b16 %v6067
    %v6323 = vunpack.c.l.b16 %v6068
    %v6324 = vunpack.c.h.b16 %v6068
    %v6325 = vunpack.c.l.b16 %v6069
    %v6326 = vunpack.c.h.b16 %v6069
    %v6327 = vunpack.c.l.b16 %v6070
    %v6328 = vunpack.c.h.b16 %v6070
    %v6329 = vunpack.c.l.b16 %v6071
    %v6330 = vunpack.c.h.b16 %v6071
    %v6331 = vunpack.c.l.b16 %v6072
    %v6332 = vunpack.c.h.b16 %v6072
    %v6333 = vunpack.c.l.b16 %v6073
    %v6334 = vunpack.c.h.b16 %v6073
    %v6335 = vunpack.c.l.b16 %v6074
    %v6336 = vunpack.c.h.b16 %v6074
    %v6337 = vunpack.c.l.b16 %v6075
    %v6338 = vunpack.c.h.b16 %v6075
    %v6339 = vunpack.c.l.b16 %v6076
    %v6340 = vunpack.c.h.b16 %v6076
    %v6341 = vunpack.c.l.b16 %v6077
    %v6342 = vunpack.c.h.b16 %v6077
    %v6343 = vunpack.c.l.b16 %v6078
    %v6344 = vunpack.c.h.b16 %v6078
    %v6345 = vunpack.c.l.b16 %v6079
    %v6346 = vunpack.c.h.b16 %v6079
    %v6347 = vunpack.c.l.b16 %v6080
    %v6348 = vunpack.c.h.b16 %v6080
    %v6349 = vunpack.c.l.b16 %v6081
    %v6350 = vunpack.c.h.b16 %v6081
    %v6351 = vunpack.c.l.b16 %v6082
    %v6352 = vunpack.c.h.b16 %v6082
    %v6353 = vunpack.c.l.b16 %v6083
    %v6354 = vunpack.c.h.b16 %v6083
    %v6355 = vunpack.c.l.b16 %v6084
    %v6356 = vunpack.c.h.b16 %v6084
    %v6357 = vunpack.c.l.b16 %v6085
    %v6358 = vunpack.c.h.b16 %v6085
    %v6359 = vunpack.c.l.b16 %v6086
    %v6360 = vunpack.c.h.b16 %v6086
    %v6361 = vunpack.c.l.b16 %v6087
    %v6362 = vunpack.c.h.b16 %v6087
    %v6363 = vunpack.c.l.b16 %v6088
    %v6364 = vunpack.c.h.b16 %v6088
    %v6365 = vunpack.c.l.b16 %v6089
    %v6366 = vunpack.c.h.b16 %v6089
    %v6367 = vunpack.c.l.b16 %v6090
    %v6368 = vunpack.c.h.b16 %v6090
    %v6369 = vunpack.c.l.b16 %v6091
    %v6370 = vunpack.c.h.b16 %v6091
    %v6371 = vunpack.c.l.b16 %v6092
    %v6372 = vunpack.c.h.b16 %v6092
    %v6373 = vunpack.c.l.b16 %v6093
    %v6374 = vunpack.c.h.b16 %v6093
    %v6375 = vunpack.c.l.b16 %v6094
    %v6376 = vunpack.c.h.b16 %v6094
    %v6377 = vunpack.c.l.b16 %v6095
    %v6378 = vunpack.c.h.b16 %v6095
    %v6379 = vunpack.c.l.b16 %v6096
    %v6380 = vunpack.c.h.b16 %v6096
    %v6381 = vunpack.c.l.b16 %v6097
    %v6382 = vunpack.c.h.b16 %v6097
    %v6383 = vunpack.c.l.b16 %v6098
    %v6384 = vunpack.c.h.b16 %v6098
    %v6385 = vunpack.c.l.b16 %v6099
    %v6386 = vunpack.c.h.b16 %v6099
    %v6387 = vunpack.c.l.b16 %v6100
    %v6388 = vunpack.c.h.b16 %v6100
    %v6389 = vunpack.c.l.b16 %v6101
    %v6390 = vunpack.c.h.b16 %v6101
    %v6391 = vpack.c.b16 %v6279, %v6263
    %v6392 = vpack.c.b16 %v6280, %v6264
    %v6393 = vpack.c.b16 %v6281, %v6265
    %v6394 = vpack.c.b16 %v6282, %v6266
    %v6395 = vpack.c.b16 %v6283, %v6267
    %v6396 = vpack.c.b16 %v6284, %v6268
    %v6397 = vpack.c.b16 %v6285, %v6269
    %v6398 = vpack.c.b16 %v6286, %v6270
    %v6399 = vpack.c.b16 %v6287, %v6271
    %v6400 = vpack.c.b16 %v6288, %v6272
    %v6401 = vpack.c.b16 %v6289, %v6273
    %v6402 = vpack.c.b16 %v6290, %v6274
    %v6403 = vpack.c.b16 %v6291, %v6275
    %v6404 = vpack.c.b16 %v6292, %v6276
    %v6405 = vpack.c.b16 %v6293, %v6277
    %v6406 = vpack.c.b16 %v6294, %v6278
    %v6407 = vpack.c.b16 %v6311, %v6295
    %v6408 = vpack.c.b16 %v6312, %v6296
    %v6409 = vpack.c.b16 %v6313, %v6297
    %v6410 = vpack.c.b16 %v6314, %v6298
    %v6411 = vpack.c.b16 %v6315, %v6299
    %v6412 = vpack.c.b16 %v6316, %v6300
    %v6413 = vpack.c.b16 %v6317, %v6301
    %v6414 = vpack.c.b16 %v6318, %v6302
    %v6415 = vpack.c.b16 %v6319, %v6303
    %v6416 = vpack.c.b16 %v6320, %v6304
    %v6417 = vpack.c.b16 %v6321, %v6305
    %v6418 = vpack.c.b16 %v6322, %v6306
    %v6419 = vpack.c.b16 %v6323, %v6307
    %v6420 = vpack.c.b16 %v6324, %v6308
    %v6421 = vpack.c.b16 %v6325, %v6309
    %v6422 = vpack.c.b16 %v6326, %v6310
    %v6423 = vpack.c.b16 %v6343, %v6327
    %v6424 = vpack.c.b16 %v6344, %v6328
    %v6425 = vpack.c.b16 %v6345, %v6329
    %v6426 = vpack.c.b16 %v6346, %v6330
    %v6427 = vpack.c.b16 %v6347, %v6331
    %v6428 = vpack.c.b16 %v6348, %v6332
    %v6429 = vpack.c.b16 %v6349, %v6333
    %v6430 = vpack.c.b16 %v6350, %v6334
    %v6431 = vpack.c.b16 %v6351, %v6335
    %v6432 = vpack.c.b16 %v6352, %v6336
    %v6433 = vpack.c.b16 %v6353, %v6337
    %v6434 = vpack.c.b16 %v6354, %v6338
    %v6435 = vpack.c.b16 %v6355, %v6339
    %v6436 = vpack.c.b16 %v6356, %v6340
    %v6437 = vpack.c.b16 %v6357, %v6341
    %v6438 = vpack.c.b16 %v6358, %v6342
    %v6439 = vpack.c.b16 %v6375, %v6359
    %v6440 = vpack.c.b16 %v6376, %v6360
    %v6441 = vpack.c.b16 %v6377, %v6361
    %v6442 = vpack.c.b16 %v6378, %v6362
    %v6443 = vpack.c.b16 %v6379, %v6363
    %v6444 = vpack.c.b16 %v6380, %v6364
    %v6445 = vpack.c.b16 %v6381, %v6365
    %v6446 = vpack.c.b16 %v6382, %v6366
    %v6447 = vpack.c.b16 %v6383, %v6367
    %v6448 = vpack.c.b16 %v6384, %v6368
    %v6449 = vpack.c.b16 %v6385, %v6369
    %v6450 = vpack.c.b16 %v6386, %v6370
    %v6451 = vpack.c.b16 %v6387, %v6371
    %v6452 = vpack.c.b16 %v6388, %v6372
    %v6453 = vpack.c.b16 %v6389, %v6373
    %v6454 = vpack.c.b16 %v6390, %v6374
    %v6520 = vsel %vm229, %v6113, 0
    %6522 = vmatprep.subr.bf16.mxu0 %v6392
    %6523 = vmatpush1.bf16.msra.mxu0 %v6391
    %6524 = vmatprep.subr.bf16.mxu0 %v6408
    %6525 = vmatpush1.bf16.msra.mxu0 %v6407
    %6526 = vmatprep.subr.bf16.mxu0 %v6424
    %6527 = vmatpush1.bf16.msra.mxu0 %v6423
    %6528 = vmatprep.subr.bf16.mxu0 %v6440
    %6529 = vmatpush1.bf16.msra.mxu0 %v6439
    %6530 = vmatprep.subr.bf16.mxu0 0
    %6531 = vmatpush1.bf16.msra.mxu0 0
    %6532 = vmatprep.subr.bf16.mxu0 0
    %6533 = vmatpush1.bf16.msra.mxu0 0
    %6534 = vmatprep.subr.bf16.mxu0 0
    %6535 = vmatpush1.bf16.msra.mxu0 0
    %6536 = vmatprep.subr.bf16.mxu0 0
    %6537 = vmatpush1.bf16.msra.mxu0 0
    %6538 = vmatprep.subr.bf16.mxu0 0
    %6539 = vmatpush1.bf16.msra.mxu0 0
    %6540 = vmatprep.subr.bf16.mxu0 0
    %6541 = vmatpush1.bf16.msra.mxu0 0
    %6542 = vmatprep.subr.bf16.mxu0 0
    %6543 = vmatpush1.bf16.msra.mxu0 0
    %6544 = vmatprep.subr.bf16.mxu0 0
    %6545 = vmatpush1.bf16.msra.mxu0 0
    %6546 = vmatprep.subr.bf16.mxu0 0
    %6547 = vmatpush1.bf16.msra.mxu0 0
    %6548 = vmatprep.subr.bf16.mxu0 0
    %6549 = vmatpush1.bf16.msra.mxu0 0
    %6550 = vmatprep.subr.bf16.mxu0 0
    %6551 = vmatpush1.bf16.msra.mxu0 0
    %6552 = vmatprep.subr.bf16.mxu0 0
    %6553 = vmatpush1.bf16.msra.mxu0 0
    %6554 = vmatprep.mubr.bf16.mxu0 0
    %6555 = vmatmul.mubr.bf16.gmra.mrb[0].mxu0 %v6520
    %v6556 = vpop.f32.mrb[0].mxu0
    %v6557 = vadd.f32 %v6122, %v6556
    %v6558 = vpop.f32.mrb[0].mxu0
    %v6559 = vadd.f32 %v6126, %v6558
    %v6560 = vpop.f32.mrb[0].mxu0
    %v6561 = vpop.f32.mrb[0].mxu0
    %6562 = vdwg.mxu0
    %6563 = vmatprep.subr.bf16.mxu0 %v6394
    %6564 = vmatpush1.bf16.msra.mxu0 %v6393
    %6565 = vmatprep.subr.bf16.mxu0 %v6410
    %6566 = vmatpush1.bf16.msra.mxu0 %v6409
    %6567 = vmatprep.subr.bf16.mxu0 %v6426
    %6568 = vmatpush1.bf16.msra.mxu0 %v6425
    %6569 = vmatprep.subr.bf16.mxu0 %v6442
    %6570 = vmatpush1.bf16.msra.mxu0 %v6441
    %6571 = vmatprep.subr.bf16.mxu0 0
    %6572 = vmatpush1.bf16.msra.mxu0 0
    %6573 = vmatprep.subr.bf16.mxu0 0
    %6574 = vmatpush1.bf16.msra.mxu0 0
    %6575 = vmatprep.subr.bf16.mxu0 0
    %6576 = vmatpush1.bf16.msra.mxu0 0
    %6577 = vmatprep.subr.bf16.mxu0 0
    %6578 = vmatpush1.bf16.msra.mxu0 0
    %6579 = vmatprep.subr.bf16.mxu0 0
    %6580 = vmatpush1.bf16.msra.mxu0 0
    %6581 = vmatprep.subr.bf16.mxu0 0
    %6582 = vmatpush1.bf16.msra.mxu0 0
    %6583 = vmatprep.subr.bf16.mxu0 0
    %6584 = vmatpush1.bf16.msra.mxu0 0
    %6585 = vmatprep.subr.bf16.mxu0 0
    %6586 = vmatpush1.bf16.msra.mxu0 0
    %6587 = vmatprep.subr.bf16.mxu0 0
    %6588 = vmatpush1.bf16.msra.mxu0 0
    %6589 = vmatprep.subr.bf16.mxu0 0
    %6590 = vmatpush1.bf16.msra.mxu0 0
    %6591 = vmatprep.subr.bf16.mxu0 0
    %6592 = vmatpush1.bf16.msra.mxu0 0
    %6593 = vmatprep.subr.bf16.mxu0 0
    %6594 = vmatpush1.bf16.msra.mxu0 0
    %6595 = vmatprep.mubr.bf16.mxu0 0
    %6596 = vmatmul.mubr.bf16.gmra.mrb[0].mxu0 %v6520
    %v6597 = vpop.f32.mrb[0].mxu0
    %v6598 = vadd.f32 %v6130, %v6597
    %v6599 = vpop.f32.mrb[0].mxu0
    %v6600 = vadd.f32 %v6134, %v6599
    %v6601 = vpop.f32.mrb[0].mxu0
    %v6602 = vpop.f32.mrb[0].mxu0
    %6603 = vdwg.mxu0
    %6604 = vmatprep.subr.bf16.mxu0 %v6396
    %6605 = vmatpush1.bf16.msra.mxu0 %v6395
    %6606 = vmatprep.subr.bf16.mxu0 %v6412
    %6607 = vmatpush1.bf16.msra.mxu0 %v6411
    %6608 = vmatprep.subr.bf16.mxu0 %v6428
    %6609 = vmatpush1.bf16.msra.mxu0 %v6427
    %6610 = vmatprep.subr.bf16.mxu0 %v6444
    %6611 = vmatpush1.bf16.msra.mxu0 %v6443
    %6612 = vmatprep.subr.bf16.mxu0 0
    %6613 = vmatpush1.bf16.msra.mxu0 0
    %6614 = vmatprep.subr.bf16.mxu0 0
    %6615 = vmatpush1.bf16.msra.mxu0 0
    %6616 = vmatprep.subr.bf16.mxu0 0
    %6617 = vmatpush1.bf16.msra.mxu0 0
    %6618 = vmatprep.subr.bf16.mxu0 0
    %6619 = vmatpush1.bf16.msra.mxu0 0
    %6620 = vmatprep.subr.bf16.mxu0 0
    %6621 = vmatpush1.bf16.msra.mxu0 0
    %6622 = vmatprep.subr.bf16.mxu0 0
    %6623 = vmatpush1.bf16.msra.mxu0 0
    %6624 = vmatprep.subr.bf16.mxu0 0
    %6625 = vmatpush1.bf16.msra.mxu0 0
    %6626 = vmatprep.subr.bf16.mxu0 0
    %6627 = vmatpush1.bf16.msra.mxu0 0
    %6628 = vmatprep.subr.bf16.mxu0 0
    %6629 = vmatpush1.bf16.msra.mxu0 0
    %6630 = vmatprep.subr.bf16.mxu0 0
    %6631 = vmatpush1.bf16.msra.mxu0 0
    %6632 = vmatprep.subr.bf16.mxu0 0
    %6633 = vmatpush1.bf16.msra.mxu0 0
    %6634 = vmatprep.subr.bf16.mxu0 0
    %6635 = vmatpush1.bf16.msra.mxu0 0
    %6636 = vmatprep.mubr.bf16.mxu0 0
    %6637 = vmatmul.mubr.bf16.gmra.mrb[0].mxu0 %v6520
    %v6638 = vpop.f32.mrb[0].mxu0
    %v6639 = vadd.f32 %v6138, %v6638
    %v6640 = vpop.f32.mrb[0].mxu0
    %v6641 = vadd.f32 %v6142, %v6640
    %v6642 = vpop.f32.mrb[0].mxu0
    %v6643 = vpop.f32.mrb[0].mxu0
    %6644 = vdwg.mxu0
    %6645 = vmatprep.subr.bf16.mxu0 %v6398
    %6646 = vmatpush1.bf16.msra.mxu0 %v6397
    %6647 = vmatprep.subr.bf16.mxu0 %v6414
    %6648 = vmatpush1.bf16.msra.mxu0 %v6413
    %6649 = vmatprep.subr.bf16.mxu0 %v6430
    %6650 = vmatpush1.bf16.msra.mxu0 %v6429
    %6651 = vmatprep.subr.bf16.mxu0 %v6446
    %6652 = vmatpush1.bf16.msra.mxu0 %v6445
    %6653 = vmatprep.subr.bf16.mxu0 0
    %6654 = vmatpush1.bf16.msra.mxu0 0
    %6655 = vmatprep.subr.bf16.mxu0 0
    %6656 = vmatpush1.bf16.msra.mxu0 0
    %6657 = vmatprep.subr.bf16.mxu0 0
    %6658 = vmatpush1.bf16.msra.mxu0 0
    %6659 = vmatprep.subr.bf16.mxu0 0
    %6660 = vmatpush1.bf16.msra.mxu0 0
    %6661 = vmatprep.subr.bf16.mxu0 0
    %6662 = vmatpush1.bf16.msra.mxu0 0
    %6663 = vmatprep.subr.bf16.mxu0 0
    %6664 = vmatpush1.bf16.msra.mxu0 0
    %6665 = vmatprep.subr.bf16.mxu0 0
    %6666 = vmatpush1.bf16.msra.mxu0 0
    %6667 = vmatprep.subr.bf16.mxu0 0
    %6668 = vmatpush1.bf16.msra.mxu0 0
    %6669 = vmatprep.subr.bf16.mxu0 0
    %6670 = vmatpush1.bf16.msra.mxu0 0
    %6671 = vmatprep.subr.bf16.mxu0 0
    %6672 = vmatpush1.bf16.msra.mxu0 0
    %6673 = vmatprep.subr.bf16.mxu0 0
    %6674 = vmatpush1.bf16.msra.mxu0 0
    %6675 = vmatprep.subr.bf16.mxu0 0
    %6676 = vmatpush1.bf16.msra.mxu0 0
    %6677 = vmatprep.mubr.bf16.mxu0 0
    %6678 = vmatmul.mubr.bf16.gmra.mrb[0].mxu0 %v6520
    %v6679 = vpop.f32.mrb[0].mxu0
    %v6680 = vadd.f32 %v6146, %v6679
    %v6681 = vpop.f32.mrb[0].mxu0
    %v6682 = vadd.f32 %v6150, %v6681
    %v6683 = vpop.f32.mrb[0].mxu0
    %v6684 = vpop.f32.mrb[0].mxu0
    %6685 = vdwg.mxu0
    %6686 = vmatprep.subr.bf16.mxu0 %v6400
    %6687 = vmatpush1.bf16.msra.mxu0 %v6399
    %6688 = vmatprep.subr.bf16.mxu0 %v6416
    %6689 = vmatpush1.bf16.msra.mxu0 %v6415
    %6690 = vmatprep.subr.bf16.mxu0 %v6432
    %6691 = vmatpush1.bf16.msra.mxu0 %v6431
    %6692 = vmatprep.subr.bf16.mxu0 %v6448
    %6693 = vmatpush1.bf16.msra.mxu0 %v6447
    %6694 = vmatprep.subr.bf16.mxu0 0
    %6695 = vmatpush1.bf16.msra.mxu0 0
    %6696 = vmatprep.subr.bf16.mxu0 0
    %6697 = vmatpush1.bf16.msra.mxu0 0
    %6698 = vmatprep.subr.bf16.mxu0 0
    %6699 = vmatpush1.bf16.msra.mxu0 0
    %6700 = vmatprep.subr.bf16.mxu0 0
    %6701 = vmatpush1.bf16.msra.mxu0 0
    %6702 = vmatprep.subr.bf16.mxu0 0
    %6703 = vmatpush1.bf16.msra.mxu0 0
    %6704 = vmatprep.subr.bf16.mxu0 0
    %6705 = vmatpush1.bf16.msra.mxu0 0
    %6706 = vmatprep.subr.bf16.mxu0 0
    %6707 = vmatpush1.bf16.msra.mxu0 0
    %6708 = vmatprep.subr.bf16.mxu0 0
    %6709 = vmatpush1.bf16.msra.mxu0 0
    %6710 = vmatprep.subr.bf16.mxu0 0
    %6711 = vmatpush1.bf16.msra.mxu0 0
    %6712 = vmatprep.subr.bf16.mxu0 0
    %6713 = vmatpush1.bf16.msra.mxu0 0
    %6714 = vmatprep.subr.bf16.mxu0 0
    %6715 = vmatpush1.bf16.msra.mxu0 0
    %6716 = vmatprep.subr.bf16.mxu0 0
    %6717 = vmatpush1.bf16.msra.mxu0 0
    %6718 = vmatprep.mubr.bf16.mxu0 0
    %6719 = vmatmul.mubr.bf16.gmra.mrb[0].mxu0 %v6520
    %v6720 = vpop.f32.mrb[0].mxu0
    %v6721 = vadd.f32 %v6154, %v6720
    %v6722 = vpop.f32.mrb[0].mxu0
    %v6723 = vadd.f32 %v6158, %v6722
    %v6724 = vpop.f32.mrb[0].mxu0
    %v6725 = vpop.f32.mrb[0].mxu0
    %6726 = vdwg.mxu0
    %6727 = vmatprep.subr.bf16.mxu0 %v6402
    %6728 = vmatpush1.bf16.msra.mxu0 %v6401
    %6729 = vmatprep.subr.bf16.mxu0 %v6418
    %6730 = vmatpush1.bf16.msra.mxu0 %v6417
    %6731 = vmatprep.subr.bf16.mxu0 %v6434
    %6732 = vmatpush1.bf16.msra.mxu0 %v6433
    %6733 = vmatprep.subr.bf16.mxu0 %v6450
    %6734 = vmatpush1.bf16.msra.mxu0 %v6449
    %6735 = vmatprep.subr.bf16.mxu0 0
    %6736 = vmatpush1.bf16.msra.mxu0 0
    %6737 = vmatprep.subr.bf16.mxu0 0
    %6738 = vmatpush1.bf16.msra.mxu0 0
    %6739 = vmatprep.subr.bf16.mxu0 0
    %6740 = vmatpush1.bf16.msra.mxu0 0
    %6741 = vmatprep.subr.bf16.mxu0 0
    %6742 = vmatpush1.bf16.msra.mxu0 0
    %6743 = vmatprep.subr.bf16.mxu0 0
    %6744 = vmatpush1.bf16.msra.mxu0 0
    %6745 = vmatprep.subr.bf16.mxu0 0
    %6746 = vmatpush1.bf16.msra.mxu0 0
    %6747 = vmatprep.subr.bf16.mxu0 0
    %6748 = vmatpush1.bf16.msra.mxu0 0
    %6749 = vmatprep.subr.bf16.mxu0 0
    %6750 = vmatpush1.bf16.msra.mxu0 0
    %6751 = vmatprep.subr.bf16.mxu0 0
    %6752 = vmatpush1.bf16.msra.mxu0 0
    %6753 = vmatprep.subr.bf16.mxu0 0
    %6754 = vmatpush1.bf16.msra.mxu0 0
    %6755 = vmatprep.subr.bf16.mxu0 0
    %6756 = vmatpush1.bf16.msra.mxu0 0
    %6757 = vmatprep.subr.bf16.mxu0 0
    %6758 = vmatpush1.bf16.msra.mxu0 0
    %6759 = vmatprep.mubr.bf16.mxu0 0
    %6760 = vmatmul.mubr.bf16.gmra.mrb[0].mxu0 %v6520
    %v6761 = vpop.f32.mrb[0].mxu0
    %v6762 = vadd.f32 %v6162, %v6761
    %v6763 = vpop.f32.mrb[0].mxu0
    %v6764 = vadd.f32 %v6166, %v6763
    %v6765 = vpop.f32.mrb[0].mxu0
    %v6766 = vpop.f32.mrb[0].mxu0
    %6767 = vdwg.mxu0
    %6768 = vmatprep.subr.bf16.mxu0 %v6404
    %6769 = vmatpush1.bf16.msra.mxu0 %v6403
    %6770 = vmatprep.subr.bf16.mxu0 %v6420
    %6771 = vmatpush1.bf16.msra.mxu0 %v6419
    %6772 = vmatprep.subr.bf16.mxu0 %v6436
    %6773 = vmatpush1.bf16.msra.mxu0 %v6435
    %6774 = vmatprep.subr.bf16.mxu0 %v6452
    %6775 = vmatpush1.bf16.msra.mxu0 %v6451
    %6776 = vmatprep.subr.bf16.mxu0 0
    %6777 = vmatpush1.bf16.msra.mxu0 0
    %6778 = vmatprep.subr.bf16.mxu0 0
    %6779 = vmatpush1.bf16.msra.mxu0 0
    %6780 = vmatprep.subr.bf16.mxu0 0
    %6781 = vmatpush1.bf16.msra.mxu0 0
    %6782 = vmatprep.subr.bf16.mxu0 0
    %6783 = vmatpush1.bf16.msra.mxu0 0
    %6784 = vmatprep.subr.bf16.mxu0 0
    %6785 = vmatpush1.bf16.msra.mxu0 0
    %6786 = vmatprep.subr.bf16.mxu0 0
    %6787 = vmatpush1.bf16.msra.mxu0 0
    %6788 = vmatprep.subr.bf16.mxu0 0
    %6789 = vmatpush1.bf16.msra.mxu0 0
    %6790 = vmatprep.subr.bf16.mxu0 0
    %6791 = vmatpush1.bf16.msra.mxu0 0
    %6792 = vmatprep.subr.bf16.mxu0 0
    %6793 = vmatpush1.bf16.msra.mxu0 0
    %6794 = vmatprep.subr.bf16.mxu0 0
    %6795 = vmatpush1.bf16.msra.mxu0 0
    %6796 = vmatprep.subr.bf16.mxu0 0
    %6797 = vmatpush1.bf16.msra.mxu0 0
    %6798 = vmatprep.subr.bf16.mxu0 0
    %6799 = vmatpush1.bf16.msra.mxu0 0
    %6800 = vmatprep.mubr.bf16.mxu0 0
    %6801 = vmatmul.mubr.bf16.gmra.mrb[0].mxu0 %v6520
    %v6802 = vpop.f32.mrb[0].mxu0
    %v6803 = vadd.f32 %v6170, %v6802
    %v6804 = vpop.f32.mrb[0].mxu0
    %v6805 = vadd.f32 %v6174, %v6804
    %v6806 = vpop.f32.mrb[0].mxu0
    %v6807 = vpop.f32.mrb[0].mxu0
    %6808 = vdwg.mxu0
    %6809 = vmatprep.subr.bf16.mxu0 %v6406
    %6810 = vmatpush1.bf16.msra.mxu0 %v6405
    %6811 = vmatprep.subr.bf16.mxu0 %v6422
    %6812 = vmatpush1.bf16.msra.mxu0 %v6421
    %6813 = vmatprep.subr.bf16.mxu0 %v6438
    %6814 = vmatpush1.bf16.msra.mxu0 %v6437
    %6815 = vmatprep.subr.bf16.mxu0 %v6454
    %6816 = vmatpush1.bf16.msra.mxu0 %v6453
    %6817 = vmatprep.subr.bf16.mxu0 0
    %6818 = vmatpush1.bf16.msra.mxu0 0
    %6819 = vmatprep.subr.bf16.mxu0 0
    %6820 = vmatpush1.bf16.msra.mxu0 0
    %6821 = vmatprep.subr.bf16.mxu0 0
    %6822 = vmatpush1.bf16.msra.mxu0 0
    %6823 = vmatprep.subr.bf16.mxu0 0
    %6824 = vmatpush1.bf16.msra.mxu0 0
    %6825 = vmatprep.subr.bf16.mxu0 0
    %6826 = vmatpush1.bf16.msra.mxu0 0
    %6827 = vmatprep.subr.bf16.mxu0 0
    %6828 = vmatpush1.bf16.msra.mxu0 0
    %6829 = vmatprep.subr.bf16.mxu0 0
    %6830 = vmatpush1.bf16.msra.mxu0 0
    %6831 = vmatprep.subr.bf16.mxu0 0
    %6832 = vmatpush1.bf16.msra.mxu0 0
    %6833 = vmatprep.subr.bf16.mxu0 0
    %6834 = vmatpush1.bf16.msra.mxu0 0
    %6835 = vmatprep.subr.bf16.mxu0 0
    %6836 = vmatpush1.bf16.msra.mxu0 0
    %6837 = vmatprep.subr.bf16.mxu0 0
    %6838 = vmatpush1.bf16.msra.mxu0 0
    %6839 = vmatprep.subr.bf16.mxu0 0
    %6840 = vmatpush1.bf16.msra.mxu0 0
    %6841 = vmatprep.mubr.bf16.mxu0 0
    %6842 = vmatmul.mubr.bf16.gmra.mrb[0].mxu0 %v6520
    %v6843 = vpop.f32.mrb[0].mxu0
    %v6844 = vadd.f32 %v6178, %v6843
    %v6845 = vpop.f32.mrb[0].mxu0
    %v6846 = vadd.f32 %v6182, %v6845
    %v6847 = vpop.f32.mrb[0].mxu0
    %v6848 = vpop.f32.mrb[0].mxu0
    %6849 = vdwg.mxu0
    %v6850 = vmax.f32 %v6557, 0.0
    %v6851 = vmax.f32 %v6559, 0.0
    %v6852 = vmax.f32 %v6598, 0.0
    %v6853 = vmax.f32 %v6600, 0.0
    %v6854 = vmax.f32 %v6639, 0.0
    %v6855 = vmax.f32 %v6641, 0.0
    %v6856 = vmax.f32 %v6680, 0.0
    %v6857 = vmax.f32 %v6682, 0.0
    %v6858 = vmax.f32 %v6721, 0.0
    %v6859 = vmax.f32 %v6723, 0.0
    %v6860 = vmax.f32 %v6762, 0.0
    %v6861 = vmax.f32 %v6764, 0.0
    %v6862 = vmax.f32 %v6803, 0.0
    %v6863 = vmax.f32 %v6805, 0.0
    %v6864 = vmax.f32 %v6844, 0.0
    %v6865 = vmax.f32 %v6846, 0.0
    %s6866 = scalar_lea.vmem %s8, 1024
    %v6867 = vld [vmem:[%s6866] sm:$0xf]
    %v6868 = vld [vmem:[%s6866 + $0x4] sm:$0xf]
    %v6869 = vld [vmem:[%s6866 + $0x8] sm:$0xf]
    %v6870 = vld [vmem:[%s6866 + $0xc] sm:$0xf]
    %v6871 = vld [vmem:[%s6866 + $0x10] sm:$0xf]
    %v6872 = vld [vmem:[%s6866 + $0x14] sm:$0xf]
    %v6873 = vld [vmem:[%s6866 + $0x18] sm:$0xf]
    %v6874 = vld [vmem:[%s6866 + $0x1c] sm:$0xf]
    %v6875 = vld [vmem:[%s6866 + $0x20] sm:$0xf]
    %v6876 = vld [vmem:[%s6866 + $0x24] sm:$0xf]
    %v6877 = vld [vmem:[%s6866 + $0x28] sm:$0xf]
    %v6878 = vld [vmem:[%s6866 + $0x2c] sm:$0xf]
    %v6879 = vld [vmem:[%s6866 + $0x30] sm:$0xf]
    %v6880 = vld [vmem:[%s6866 + $0x34] sm:$0xf]
    %v6881 = vld [vmem:[%s6866 + $0x38] sm:$0xf]
    %v6882 = vld [vmem:[%s6866 + $0x3c] sm:$0xf]
    %v6883 = vld [vmem:[%s6866 + $0x40] sm:$0xf]
    %v6884 = vld [vmem:[%s6866 + $0x44] sm:$0xf]
    %v6885 = vld [vmem:[%s6866 + $0x48] sm:$0xf]
    %v6886 = vld [vmem:[%s6866 + $0x4c] sm:$0xf]
    %v6887 = vld [vmem:[%s6866 + $0x50] sm:$0xf]
    %v6888 = vld [vmem:[%s6866 + $0x54] sm:$0xf]
    %v6889 = vld [vmem:[%s6866 + $0x58] sm:$0xf]
    %v6890 = vld [vmem:[%s6866 + $0x5c] sm:$0xf]
    %v6891 = vld [vmem:[%s6866 + $0x60] sm:$0xf]
    %v6892 = vld [vmem:[%s6866 + $0x64] sm:$0xf]
    %v6893 = vld [vmem:[%s6866 + $0x68] sm:$0xf]
    %v6894 = vld [vmem:[%s6866 + $0x6c] sm:$0xf]
    %v6895 = vld [vmem:[%s6866 + $0x70] sm:$0xf]
    %v6896 = vld [vmem:[%s6866 + $0x74] sm:$0xf]
    %v6897 = vld [vmem:[%s6866 + $0x78] sm:$0xf]
    %v6898 = vld [vmem:[%s6866 + $0x7c] sm:$0xf]
    %v6899 = vld [vmem:[%s6866 + $0x80] sm:$0xf]
    %v6900 = vld [vmem:[%s6866 + $0x84] sm:$0xf]
    %v6901 = vld [vmem:[%s6866 + $0x88] sm:$0xf]
    %v6902 = vld [vmem:[%s6866 + $0x8c] sm:$0xf]
    %v6903 = vld [vmem:[%s6866 + $0x90] sm:$0xf]
    %v6904 = vld [vmem:[%s6866 + $0x94] sm:$0xf]
    %v6905 = vld [vmem:[%s6866 + $0x98] sm:$0xf]
    %v6906 = vld [vmem:[%s6866 + $0x9c] sm:$0xf]
    %v6907 = vld [vmem:[%s6866 + $0xa0] sm:$0xf]
    %v6908 = vld [vmem:[%s6866 + $0xa4] sm:$0xf]
    %v6909 = vld [vmem:[%s6866 + $0xa8] sm:$0xf]
    %v6910 = vld [vmem:[%s6866 + $0xac] sm:$0xf]
    %v6911 = vld [vmem:[%s6866 + $0xb0] sm:$0xf]
    %v6912 = vld [vmem:[%s6866 + $0xb4] sm:$0xf]
    %v6913 = vld [vmem:[%s6866 + $0xb8] sm:$0xf]
    %v6914 = vld [vmem:[%s6866 + $0xbc] sm:$0xf]
    %v6915 = vld [vmem:[%s6866 + $0xc0] sm:$0xf]
    %v6916 = vld [vmem:[%s6866 + $0xc4] sm:$0xf]
    %v6917 = vld [vmem:[%s6866 + $0xc8] sm:$0xf]
    %v6918 = vld [vmem:[%s6866 + $0xcc] sm:$0xf]
    %v6919 = vld [vmem:[%s6866 + $0xd0] sm:$0xf]
    %v6920 = vld [vmem:[%s6866 + $0xd4] sm:$0xf]
    %v6921 = vld [vmem:[%s6866 + $0xd8] sm:$0xf]
    %v6922 = vld [vmem:[%s6866 + $0xdc] sm:$0xf]
    %v6923 = vld [vmem:[%s6866 + $0xe0] sm:$0xf]
    %v6924 = vld [vmem:[%s6866 + $0xe4] sm:$0xf]
    %v6925 = vld [vmem:[%s6866 + $0xe8] sm:$0xf]
    %v6926 = vld [vmem:[%s6866 + $0xec] sm:$0xf]
    %v6927 = vld [vmem:[%s6866 + $0xf0] sm:$0xf]
    %v6928 = vld [vmem:[%s6866 + $0xf4] sm:$0xf]
    %v6929 = vld [vmem:[%s6866 + $0xf8] sm:$0xf]
    %v6930 = vld [vmem:[%s6866 + $0xfc] sm:$0xf]
    %v6931 = vld [vmem:[%s6866 + $0x100] sm:$0xf]
    %v6932 = vld [vmem:[%s6866 + $0x104] sm:$0xf]
    %v6933 = vld [vmem:[%s6866 + $0x108] sm:$0xf]
    %v6934 = vld [vmem:[%s6866 + $0x10c] sm:$0xf]
    %v6935 = vld [vmem:[%s6866 + $0x110] sm:$0xf]
    %v6936 = vld [vmem:[%s6866 + $0x114] sm:$0xf]
    %v6937 = vld [vmem:[%s6866 + $0x118] sm:$0xf]
    %v6938 = vld [vmem:[%s6866 + $0x11c] sm:$0xf]
    %v6939 = vld [vmem:[%s6866 + $0x120] sm:$0xf]
    %v6940 = vld [vmem:[%s6866 + $0x124] sm:$0xf]
    %v6941 = vld [vmem:[%s6866 + $0x128] sm:$0xf]
    %v6942 = vld [vmem:[%s6866 + $0x12c] sm:$0xf]
    %v6943 = vld [vmem:[%s6866 + $0x130] sm:$0xf]
    %v6944 = vld [vmem:[%s6866 + $0x134] sm:$0xf]
    %v6945 = vld [vmem:[%s6866 + $0x138] sm:$0xf]
    %v6946 = vld [vmem:[%s6866 + $0x13c] sm:$0xf]
    %v6947 = vld [vmem:[%s6866 + $0x140] sm:$0xf]
    %v6948 = vld [vmem:[%s6866 + $0x144] sm:$0xf]
    %v6949 = vld [vmem:[%s6866 + $0x148] sm:$0xf]
    %v6950 = vld [vmem:[%s6866 + $0x14c] sm:$0xf]
    %v6951 = vld [vmem:[%s6866 + $0x150] sm:$0xf]
    %v6952 = vld [vmem:[%s6866 + $0x154] sm:$0xf]
    %v6953 = vld [vmem:[%s6866 + $0x158] sm:$0xf]
    %v6954 = vld [vmem:[%s6866 + $0x15c] sm:$0xf]
    %v6955 = vld [vmem:[%s6866 + $0x160] sm:$0xf]
    %v6956 = vld [vmem:[%s6866 + $0x164] sm:$0xf]
    %v6957 = vld [vmem:[%s6866 + $0x168] sm:$0xf]
    %v6958 = vld [vmem:[%s6866 + $0x16c] sm:$0xf]
    %v6959 = vld [vmem:[%s6866 + $0x170] sm:$0xf]
    %v6960 = vld [vmem:[%s6866 + $0x174] sm:$0xf]
    %v6961 = vld [vmem:[%s6866 + $0x178] sm:$0xf]
    %v6962 = vld [vmem:[%s6866 + $0x17c] sm:$0xf]
    %v6963 = vld [vmem:[%s6866 + $0x180] sm:$0xf]
    %v6964 = vld [vmem:[%s6866 + $0x184] sm:$0xf]
    %v6965 = vld [vmem:[%s6866 + $0x188] sm:$0xf]
    %v6966 = vld [vmem:[%s6866 + $0x18c] sm:$0xf]
    %v6967 = vld [vmem:[%s6866 + $0x190] sm:$0xf]
    %v6968 = vld [vmem:[%s6866 + $0x194] sm:$0xf]
    %v6969 = vld [vmem:[%s6866 + $0x198] sm:$0xf]
    %v6970 = vld [vmem:[%s6866 + $0x19c] sm:$0xf]
    %v6971 = vld [vmem:[%s6866 + $0x1a0] sm:$0xf]
    %v6972 = vld [vmem:[%s6866 + $0x1a4] sm:$0xf]
    %v6973 = vld [vmem:[%s6866 + $0x1a8] sm:$0xf]
    %v6974 = vld [vmem:[%s6866 + $0x1ac] sm:$0xf]
    %v6975 = vld [vmem:[%s6866 + $0x1b0] sm:$0xf]
    %v6976 = vld [vmem:[%s6866 + $0x1b4] sm:$0xf]
    %v6977 = vld [vmem:[%s6866 + $0x1b8] sm:$0xf]
    %v6978 = vld [vmem:[%s6866 + $0x1bc] sm:$0xf]
    %v6979 = vld [vmem:[%s6866 + $0x1c0] sm:$0xf]
    %v6980 = vld [vmem:[%s6866 + $0x1c4] sm:$0xf]
    %v6981 = vld [vmem:[%s6866 + $0x1c8] sm:$0xf]
    %v6982 = vld [vmem:[%s6866 + $0x1cc] sm:$0xf]
    %v6983 = vld [vmem:[%s6866 + $0x1d0] sm:$0xf]
    %v6984 = vld [vmem:[%s6866 + $0x1d4] sm:$0xf]
    %v6985 = vld [vmem:[%s6866 + $0x1d8] sm:$0xf]
    %v6986 = vld [vmem:[%s6866 + $0x1dc] sm:$0xf]
    %v6987 = vld [vmem:[%s6866 + $0x1e0] sm:$0xf]
    %v6988 = vld [vmem:[%s6866 + $0x1e4] sm:$0xf]
    %v6989 = vld [vmem:[%s6866 + $0x1e8] sm:$0xf]
    %v6990 = vld [vmem:[%s6866 + $0x1ec] sm:$0xf]
    %v6991 = vld [vmem:[%s6866 + $0x1f0] sm:$0xf]
    %v6992 = vld [vmem:[%s6866 + $0x1f4] sm:$0xf]
    %v6993 = vld [vmem:[%s6866 + $0x1f8] sm:$0xf]
    %v6994 = vld [vmem:[%s6866 + $0x1fc] sm:$0xf]
    %v6995 = vld [vmem:[%s6866 + $0x200] sm:$0xf]
    %v6996 = vld [vmem:[%s6866 + $0x204] sm:$0xf]
    %v6997 = vld [vmem:[%s6866 + $0x208] sm:$0xf]
    %v6998 = vld [vmem:[%s6866 + $0x20c] sm:$0xf]
    %v6999 = vld [vmem:[%s6866 + $0x210] sm:$0xf]
    %v7000 = vld [vmem:[%s6866 + $0x214] sm:$0xf]
    %v7001 = vld [vmem:[%s6866 + $0x218] sm:$0xf]
    %v7002 = vld [vmem:[%s6866 + $0x21c] sm:$0xf]
    %v7003 = vld [vmem:[%s6866 + $0x220] sm:$0xf]
    %v7004 = vld [vmem:[%s6866 + $0x224] sm:$0xf]
    %v7005 = vld [vmem:[%s6866 + $0x228] sm:$0xf]
    %v7006 = vld [vmem:[%s6866 + $0x22c] sm:$0xf]
    %v7007 = vld [vmem:[%s6866 + $0x230] sm:$0xf]
    %v7008 = vld [vmem:[%s6866 + $0x234] sm:$0xf]
    %v7009 = vld [vmem:[%s6866 + $0x238] sm:$0xf]
    %v7010 = vld [vmem:[%s6866 + $0x23c] sm:$0xf]
    %v7011 = vld [vmem:[%s6866 + $0x240] sm:$0xf]
    %v7012 = vld [vmem:[%s6866 + $0x244] sm:$0xf]
    %v7013 = vld [vmem:[%s6866 + $0x248] sm:$0xf]
    %v7014 = vld [vmem:[%s6866 + $0x24c] sm:$0xf]
    %v7015 = vld [vmem:[%s6866 + $0x250] sm:$0xf]
    %v7016 = vld [vmem:[%s6866 + $0x254] sm:$0xf]
    %v7017 = vld [vmem:[%s6866 + $0x258] sm:$0xf]
    %v7018 = vld [vmem:[%s6866 + $0x25c] sm:$0xf]
    %v7019 = vld [vmem:[%s6866 + $0x260] sm:$0xf]
    %v7020 = vld [vmem:[%s6866 + $0x264] sm:$0xf]
    %v7021 = vld [vmem:[%s6866 + $0x268] sm:$0xf]
    %v7022 = vld [vmem:[%s6866 + $0x26c] sm:$0xf]
    %v7023 = vld [vmem:[%s6866 + $0x270] sm:$0xf]
    %v7024 = vld [vmem:[%s6866 + $0x274] sm:$0xf]
    %v7025 = vld [vmem:[%s6866 + $0x278] sm:$0xf]
    %v7026 = vld [vmem:[%s6866 + $0x27c] sm:$0xf]
    %v7027 = vld [vmem:[%s6866 + $0x280] sm:$0xf]
    %v7028 = vld [vmem:[%s6866 + $0x284] sm:$0xf]
    %v7029 = vld [vmem:[%s6866 + $0x288] sm:$0xf]
    %v7030 = vld [vmem:[%s6866 + $0x28c] sm:$0xf]
    %v7031 = vld [vmem:[%s6866 + $0x290] sm:$0xf]
    %v7032 = vld [vmem:[%s6866 + $0x294] sm:$0xf]
    %v7033 = vld [vmem:[%s6866 + $0x298] sm:$0xf]
    %v7034 = vld [vmem:[%s6866 + $0x29c] sm:$0xf]
    %v7035 = vld [vmem:[%s6866 + $0x2a0] sm:$0xf]
    %v7036 = vld [vmem:[%s6866 + $0x2a4] sm:$0xf]
    %v7037 = vld [vmem:[%s6866 + $0x2a8] sm:$0xf]
    %v7038 = vld [vmem:[%s6866 + $0x2ac] sm:$0xf]
    %v7039 = vld [vmem:[%s6866 + $0x2b0] sm:$0xf]
    %v7040 = vld [vmem:[%s6866 + $0x2b4] sm:$0xf]
    %v7041 = vld [vmem:[%s6866 + $0x2b8] sm:$0xf]
    %v7042 = vld [vmem:[%s6866 + $0x2bc] sm:$0xf]
    %v7043 = vld [vmem:[%s6866 + $0x2c0] sm:$0xf]
    %v7044 = vld [vmem:[%s6866 + $0x2c4] sm:$0xf]
    %v7045 = vld [vmem:[%s6866 + $0x2c8] sm:$0xf]
    %v7046 = vld [vmem:[%s6866 + $0x2cc] sm:$0xf]
    %v7047 = vld [vmem:[%s6866 + $0x2d0] sm:$0xf]
    %v7048 = vld [vmem:[%s6866 + $0x2d4] sm:$0xf]
    %v7049 = vld [vmem:[%s6866 + $0x2d8] sm:$0xf]
    %v7050 = vld [vmem:[%s6866 + $0x2dc] sm:$0xf]
    %v7051 = vld [vmem:[%s6866 + $0x2e0] sm:$0xf]
    %v7052 = vld [vmem:[%s6866 + $0x2e4] sm:$0xf]
    %v7053 = vld [vmem:[%s6866 + $0x2e8] sm:$0xf]
    %v7054 = vld [vmem:[%s6866 + $0x2ec] sm:$0xf]
    %v7055 = vld [vmem:[%s6866 + $0x2f0] sm:$0xf]
    %v7056 = vld [vmem:[%s6866 + $0x2f4] sm:$0xf]
    %v7057 = vld [vmem:[%s6866 + $0x2f8] sm:$0xf]
    %v7058 = vld [vmem:[%s6866 + $0x2fc] sm:$0xf]
    %v7059 = vld [vmem:[%s6866 + $0x300] sm:$0xf]
    %v7060 = vld [vmem:[%s6866 + $0x304] sm:$0xf]
    %v7061 = vld [vmem:[%s6866 + $0x308] sm:$0xf]
    %v7062 = vld [vmem:[%s6866 + $0x30c] sm:$0xf]
    %v7063 = vld [vmem:[%s6866 + $0x310] sm:$0xf]
    %v7064 = vld [vmem:[%s6866 + $0x314] sm:$0xf]
    %v7065 = vld [vmem:[%s6866 + $0x318] sm:$0xf]
    %v7066 = vld [vmem:[%s6866 + $0x31c] sm:$0xf]
    %v7067 = vld [vmem:[%s6866 + $0x320] sm:$0xf]
    %v7068 = vld [vmem:[%s6866 + $0x324] sm:$0xf]
    %v7069 = vld [vmem:[%s6866 + $0x328] sm:$0xf]
    %v7070 = vld [vmem:[%s6866 + $0x32c] sm:$0xf]
    %v7071 = vld [vmem:[%s6866 + $0x330] sm:$0xf]
    %v7072 = vld [vmem:[%s6866 + $0x334] sm:$0xf]
    %v7073 = vld [vmem:[%s6866 + $0x338] sm:$0xf]
    %v7074 = vld [vmem:[%s6866 + $0x33c] sm:$0xf]
    %v7075 = vld [vmem:[%s6866 + $0x340] sm:$0xf]
    %v7076 = vld [vmem:[%s6866 + $0x344] sm:$0xf]
    %v7077 = vld [vmem:[%s6866 + $0x348] sm:$0xf]
    %v7078 = vld [vmem:[%s6866 + $0x34c] sm:$0xf]
    %v7079 = vld [vmem:[%s6866 + $0x350] sm:$0xf]
    %v7080 = vld [vmem:[%s6866 + $0x354] sm:$0xf]
    %v7081 = vld [vmem:[%s6866 + $0x358] sm:$0xf]
    %v7082 = vld [vmem:[%s6866 + $0x35c] sm:$0xf]
    %v7083 = vld [vmem:[%s6866 + $0x360] sm:$0xf]
    %v7084 = vld [vmem:[%s6866 + $0x364] sm:$0xf]
    %v7085 = vld [vmem:[%s6866 + $0x368] sm:$0xf]
    %v7086 = vld [vmem:[%s6866 + $0x36c] sm:$0xf]
    %v7087 = vld [vmem:[%s6866 + $0x370] sm:$0xf]
    %v7088 = vld [vmem:[%s6866 + $0x374] sm:$0xf]
    %v7089 = vld [vmem:[%s6866 + $0x378] sm:$0xf]
    %v7090 = vld [vmem:[%s6866 + $0x37c] sm:$0xf]
    %v7091 = vld [vmem:[%s6866 + $0x380] sm:$0xf]
    %v7092 = vld [vmem:[%s6866 + $0x384] sm:$0xf]
    %v7093 = vld [vmem:[%s6866 + $0x388] sm:$0xf]
    %v7094 = vld [vmem:[%s6866 + $0x38c] sm:$0xf]
    %v7095 = vld [vmem:[%s6866 + $0x390] sm:$0xf]
    %v7096 = vld [vmem:[%s6866 + $0x394] sm:$0xf]
    %v7097 = vld [vmem:[%s6866 + $0x398] sm:$0xf]
    %v7098 = vld [vmem:[%s6866 + $0x39c] sm:$0xf]
    %v7099 = vld [vmem:[%s6866 + $0x3a0] sm:$0xf]
    %v7100 = vld [vmem:[%s6866 + $0x3a4] sm:$0xf]
    %v7101 = vld [vmem:[%s6866 + $0x3a8] sm:$0xf]
    %v7102 = vld [vmem:[%s6866 + $0x3ac] sm:$0xf]
    %v7103 = vld [vmem:[%s6866 + $0x3b0] sm:$0xf]
    %v7104 = vld [vmem:[%s6866 + $0x3b4] sm:$0xf]
    %v7105 = vld [vmem:[%s6866 + $0x3b8] sm:$0xf]
    %v7106 = vld [vmem:[%s6866 + $0x3bc] sm:$0xf]
    %v7107 = vld [vmem:[%s6866 + $0x3c0] sm:$0xf]
    %v7108 = vld [vmem:[%s6866 + $0x3c4] sm:$0xf]
    %v7109 = vld [vmem:[%s6866 + $0x3c8] sm:$0xf]
    %v7110 = vld [vmem:[%s6866 + $0x3cc] sm:$0xf]
    %v7111 = vld [vmem:[%s6866 + $0x3d0] sm:$0xf]
    %v7112 = vld [vmem:[%s6866 + $0x3d4] sm:$0xf]
    %v7113 = vld [vmem:[%s6866 + $0x3d8] sm:$0xf]
    %v7114 = vld [vmem:[%s6866 + $0x3dc] sm:$0xf]
    %v7115 = vld [vmem:[%s6866 + $0x3e0] sm:$0xf]
    %v7116 = vld [vmem:[%s6866 + $0x3e4] sm:$0xf]
    %v7117 = vld [vmem:[%s6866 + $0x3e8] sm:$0xf]
    %v7118 = vld [vmem:[%s6866 + $0x3ec] sm:$0xf]
    %v7119 = vld [vmem:[%s6866 + $0x3f0] sm:$0xf]
    %v7120 = vld [vmem:[%s6866 + $0x3f4] sm:$0xf]
    %v7121 = vld [vmem:[%s6866 + $0x3f8] sm:$0xf]
    %v7122 = vld [vmem:[%s6866 + $0x3fc] sm:$0xf]
    %v7123 = vpack.c.bf16 %v6850, %v6850
    %v7124 = vpack.c.bf16 %v6851, %v6851
    %v7125 = vpack.c.bf16 %v6852, %v6852
    %v7126 = vpack.c.bf16 %v6853, %v6853
    %v7127 = vpack.c.bf16 %v6854, %v6854
    %v7128 = vpack.c.bf16 %v6855, %v6855
    %v7129 = vpack.c.bf16 %v6856, %v6856
    %v7130 = vpack.c.bf16 %v6857, %v6857
    %v7131 = vpack.c.bf16 %v6858, %v6858
    %v7132 = vpack.c.bf16 %v6859, %v6859
    %v7133 = vpack.c.bf16 %v6860, %v6860
    %v7134 = vpack.c.bf16 %v6861, %v6861
    %v7135 = vpack.c.bf16 %v6862, %v6862
    %v7136 = vpack.c.bf16 %v6863, %v6863
    %v7137 = vpack.c.bf16 %v6864, %v6864
    %v7138 = vpack.c.bf16 %v6865, %v6865
    %v7139 = vlaneseq
    %v7140 = vshrl.u32 %v7139, 7
    %v7141 = vsub.s32 6, %v7140
    %v7142 = vrot.slane %v4261, %v7141
    %v7399 = vunpack.c.l.b16 %v6867
    %v7400 = vunpack.c.l.b16 %v6868
    %v7401 = vunpack.c.l.b16 %v6869
    %v7402 = vunpack.c.l.b16 %v6870
    %v7403 = vunpack.c.l.b16 %v6871
    %v7404 = vunpack.c.l.b16 %v6872
    %v7405 = vunpack.c.l.b16 %v6873
    %v7406 = vunpack.c.l.b16 %v6874
    %v7407 = vunpack.c.l.b16 %v6875
    %v7408 = vunpack.c.l.b16 %v6876
    %v7409 = vunpack.c.l.b16 %v6877
    %v7410 = vunpack.c.l.b16 %v6878
    %v7411 = vunpack.c.l.b16 %v6879
    %v7412 = vunpack.c.l.b16 %v6880
    %v7413 = vunpack.c.l.b16 %v6881
    %v7414 = vunpack.c.l.b16 %v6882
    %v7415 = vunpack.c.l.b16 %v6883
    %v7416 = vunpack.c.l.b16 %v6884
    %v7417 = vunpack.c.l.b16 %v6885
    %v7418 = vunpack.c.l.b16 %v6886
    %v7419 = vunpack.c.l.b16 %v6887
    %v7420 = vunpack.c.l.b16 %v6888
    %v7421 = vunpack.c.l.b16 %v6889
    %v7422 = vunpack.c.l.b16 %v6890
    %v7423 = vunpack.c.l.b16 %v6891
    %v7424 = vunpack.c.l.b16 %v6892
    %v7425 = vunpack.c.l.b16 %v6893
    %v7426 = vunpack.c.l.b16 %v6894
    %v7427 = vunpack.c.l.b16 %v6895
    %v7428 = vunpack.c.l.b16 %v6896
    %v7429 = vunpack.c.l.b16 %v6897
    %v7430 = vunpack.c.l.b16 %v6898
    %v7431 = vunpack.c.l.b16 %v6899
    %v7432 = vunpack.c.l.b16 %v6900
    %v7433 = vunpack.c.l.b16 %v6901
    %v7434 = vunpack.c.l.b16 %v6902
    %v7435 = vunpack.c.l.b16 %v6903
    %v7436 = vunpack.c.l.b16 %v6904
    %v7437 = vunpack.c.l.b16 %v6905
    %v7438 = vunpack.c.l.b16 %v6906
    %v7439 = vunpack.c.l.b16 %v6907
    %v7440 = vunpack.c.l.b16 %v6908
    %v7441 = vunpack.c.l.b16 %v6909
    %v7442 = vunpack.c.l.b16 %v6910
    %v7443 = vunpack.c.l.b16 %v6911
    %v7444 = vunpack.c.l.b16 %v6912
    %v7445 = vunpack.c.l.b16 %v6913
    %v7446 = vunpack.c.l.b16 %v6914
    %v7447 = vunpack.c.l.b16 %v6915
    %v7448 = vunpack.c.l.b16 %v6916
    %v7449 = vunpack.c.l.b16 %v6917
    %v7450 = vunpack.c.l.b16 %v6918
    %v7451 = vunpack.c.l.b16 %v6919
    %v7452 = vunpack.c.l.b16 %v6920
    %v7453 = vunpack.c.l.b16 %v6921
    %v7454 = vunpack.c.l.b16 %v6922
    %v7455 = vunpack.c.l.b16 %v6923
    %v7456 = vunpack.c.l.b16 %v6924
    %v7457 = vunpack.c.l.b16 %v6925
    %v7458 = vunpack.c.l.b16 %v6926
    %v7459 = vunpack.c.l.b16 %v6927
    %v7460 = vunpack.c.l.b16 %v6928
    %v7461 = vunpack.c.l.b16 %v6929
    %v7462 = vunpack.c.l.b16 %v6930
    %v7463 = vunpack.c.l.b16 %v6931
    %v7464 = vunpack.c.l.b16 %v6932
    %v7465 = vunpack.c.l.b16 %v6933
    %v7466 = vunpack.c.l.b16 %v6934
    %v7467 = vunpack.c.l.b16 %v6935
    %v7468 = vunpack.c.l.b16 %v6936
    %v7469 = vunpack.c.l.b16 %v6937
    %v7470 = vunpack.c.l.b16 %v6938
    %v7471 = vunpack.c.l.b16 %v6939
    %v7472 = vunpack.c.l.b16 %v6940
    %v7473 = vunpack.c.l.b16 %v6941
    %v7474 = vunpack.c.l.b16 %v6942
    %v7475 = vunpack.c.l.b16 %v6943
    %v7476 = vunpack.c.l.b16 %v6944
    %v7477 = vunpack.c.l.b16 %v6945
    %v7478 = vunpack.c.l.b16 %v6946
    %v7479 = vunpack.c.l.b16 %v6947
    %v7480 = vunpack.c.l.b16 %v6948
    %v7481 = vunpack.c.l.b16 %v6949
    %v7482 = vunpack.c.l.b16 %v6950
    %v7483 = vunpack.c.l.b16 %v6951
    %v7484 = vunpack.c.l.b16 %v6952
    %v7485 = vunpack.c.l.b16 %v6953
    %v7486 = vunpack.c.l.b16 %v6954
    %v7487 = vunpack.c.l.b16 %v6955
    %v7488 = vunpack.c.l.b16 %v6956
    %v7489 = vunpack.c.l.b16 %v6957
    %v7490 = vunpack.c.l.b16 %v6958
    %v7491 = vunpack.c.l.b16 %v6959
    %v7492 = vunpack.c.l.b16 %v6960
    %v7493 = vunpack.c.l.b16 %v6961
    %v7494 = vunpack.c.l.b16 %v6962
    %v7495 = vunpack.c.l.b16 %v6963
    %v7496 = vunpack.c.l.b16 %v6964
    %v7497 = vunpack.c.l.b16 %v6965
    %v7498 = vunpack.c.l.b16 %v6966
    %v7499 = vunpack.c.l.b16 %v6967
    %v7500 = vunpack.c.l.b16 %v6968
    %v7501 = vunpack.c.l.b16 %v6969
    %v7502 = vunpack.c.l.b16 %v6970
    %v7503 = vunpack.c.l.b16 %v6971
    %v7504 = vunpack.c.l.b16 %v6972
    %v7505 = vunpack.c.l.b16 %v6973
    %v7506 = vunpack.c.l.b16 %v6974
    %v7507 = vunpack.c.l.b16 %v6975
    %v7508 = vunpack.c.l.b16 %v6976
    %v7509 = vunpack.c.l.b16 %v6977
    %v7510 = vunpack.c.l.b16 %v6978
    %v7511 = vunpack.c.l.b16 %v6979
    %v7512 = vunpack.c.l.b16 %v6980
    %v7513 = vunpack.c.l.b16 %v6981
    %v7514 = vunpack.c.l.b16 %v6982
    %v7515 = vunpack.c.l.b16 %v6983
    %v7516 = vunpack.c.l.b16 %v6984
    %v7517 = vunpack.c.l.b16 %v6985
    %v7518 = vunpack.c.l.b16 %v6986
    %v7519 = vunpack.c.l.b16 %v6987
    %v7520 = vunpack.c.l.b16 %v6988
    %v7521 = vunpack.c.l.b16 %v6989
    %v7522 = vunpack.c.l.b16 %v6990
    %v7523 = vunpack.c.l.b16 %v6991
    %v7524 = vunpack.c.l.b16 %v6992
    %v7525 = vunpack.c.l.b16 %v6993
    %v7526 = vunpack.c.l.b16 %v6994
    %v7527 = vunpack.c.l.b16 %v6995
    %v7528 = vunpack.c.l.b16 %v6996
    %v7529 = vunpack.c.l.b16 %v6997
    %v7530 = vunpack.c.l.b16 %v6998
    %v7531 = vunpack.c.l.b16 %v6999
    %v7532 = vunpack.c.l.b16 %v7000
    %v7533 = vunpack.c.l.b16 %v7001
    %v7534 = vunpack.c.l.b16 %v7002
    %v7535 = vunpack.c.l.b16 %v7003
    %v7536 = vunpack.c.l.b16 %v7004
    %v7537 = vunpack.c.l.b16 %v7005
    %v7538 = vunpack.c.l.b16 %v7006
    %v7539 = vunpack.c.l.b16 %v7007
    %v7540 = vunpack.c.l.b16 %v7008
    %v7541 = vunpack.c.l.b16 %v7009
    %v7542 = vunpack.c.l.b16 %v7010
    %v7543 = vunpack.c.l.b16 %v7011
    %v7544 = vunpack.c.l.b16 %v7012
    %v7545 = vunpack.c.l.b16 %v7013
    %v7546 = vunpack.c.l.b16 %v7014
    %v7547 = vunpack.c.l.b16 %v7015
    %v7548 = vunpack.c.l.b16 %v7016
    %v7549 = vunpack.c.l.b16 %v7017
    %v7550 = vunpack.c.l.b16 %v7018
    %v7551 = vunpack.c.l.b16 %v7019
    %v7552 = vunpack.c.l.b16 %v7020
    %v7553 = vunpack.c.l.b16 %v7021
    %v7554 = vunpack.c.l.b16 %v7022
    %v7555 = vunpack.c.l.b16 %v7023
    %v7556 = vunpack.c.l.b16 %v7024
    %v7557 = vunpack.c.l.b16 %v7025
    %v7558 = vunpack.c.l.b16 %v7026
    %v7559 = vunpack.c.l.b16 %v7027
    %v7560 = vunpack.c.l.b16 %v7028
    %v7561 = vunpack.c.l.b16 %v7029
    %v7562 = vunpack.c.l.b16 %v7030
    %v7563 = vunpack.c.l.b16 %v7031
    %v7564 = vunpack.c.l.b16 %v7032
    %v7565 = vunpack.c.l.b16 %v7033
    %v7566 = vunpack.c.l.b16 %v7034
    %v7567 = vunpack.c.l.b16 %v7035
    %v7568 = vunpack.c.l.b16 %v7036
    %v7569 = vunpack.c.l.b16 %v7037
    %v7570 = vunpack.c.l.b16 %v7038
    %v7571 = vunpack.c.l.b16 %v7039
    %v7572 = vunpack.c.l.b16 %v7040
    %v7573 = vunpack.c.l.b16 %v7041
    %v7574 = vunpack.c.l.b16 %v7042
    %v7575 = vunpack.c.l.b16 %v7043
    %v7576 = vunpack.c.l.b16 %v7044
    %v7577 = vunpack.c.l.b16 %v7045
    %v7578 = vunpack.c.l.b16 %v7046
    %v7579 = vunpack.c.l.b16 %v7047
    %v7580 = vunpack.c.l.b16 %v7048
    %v7581 = vunpack.c.l.b16 %v7049
    %v7582 = vunpack.c.l.b16 %v7050
    %v7583 = vunpack.c.l.b16 %v7051
    %v7584 = vunpack.c.l.b16 %v7052
    %v7585 = vunpack.c.l.b16 %v7053
    %v7586 = vunpack.c.l.b16 %v7054
    %v7587 = vunpack.c.l.b16 %v7055
    %v7588 = vunpack.c.l.b16 %v7056
    %v7589 = vunpack.c.l.b16 %v7057
    %v7590 = vunpack.c.l.b16 %v7058
    %v7591 = vunpack.c.l.b16 %v7059
    %v7592 = vunpack.c.l.b16 %v7060
    %v7593 = vunpack.c.l.b16 %v7061
    %v7594 = vunpack.c.l.b16 %v7062
    %v7595 = vunpack.c.l.b16 %v7063
    %v7596 = vunpack.c.l.b16 %v7064
    %v7597 = vunpack.c.l.b16 %v7065
    %v7598 = vunpack.c.l.b16 %v7066
    %v7599 = vunpack.c.l.b16 %v7067
    %v7600 = vunpack.c.l.b16 %v7068
    %v7601 = vunpack.c.l.b16 %v7069
    %v7602 = vunpack.c.l.b16 %v7070
    %v7603 = vunpack.c.l.b16 %v7071
    %v7604 = vunpack.c.l.b16 %v7072
    %v7605 = vunpack.c.l.b16 %v7073
    %v7606 = vunpack.c.l.b16 %v7074
    %v7607 = vunpack.c.l.b16 %v7075
    %v7608 = vunpack.c.l.b16 %v7076
    %v7609 = vunpack.c.l.b16 %v7077
    %v7610 = vunpack.c.l.b16 %v7078
    %v7611 = vunpack.c.l.b16 %v7079
    %v7612 = vunpack.c.l.b16 %v7080
    %v7613 = vunpack.c.l.b16 %v7081
    %v7614 = vunpack.c.l.b16 %v7082
    %v7615 = vunpack.c.l.b16 %v7083
    %v7616 = vunpack.c.l.b16 %v7084
    %v7617 = vunpack.c.l.b16 %v7085
    %v7618 = vunpack.c.l.b16 %v7086
    %v7619 = vunpack.c.l.b16 %v7087
    %v7620 = vunpack.c.l.b16 %v7088
    %v7621 = vunpack.c.l.b16 %v7089
    %v7622 = vunpack.c.l.b16 %v7090
    %v7623 = vunpack.c.l.b16 %v7091
    %v7624 = vunpack.c.l.b16 %v7092
    %v7625 = vunpack.c.l.b16 %v7093
    %v7626 = vunpack.c.l.b16 %v7094
    %v7627 = vunpack.c.l.b16 %v7095
    %v7628 = vunpack.c.l.b16 %v7096
    %v7629 = vunpack.c.l.b16 %v7097
    %v7630 = vunpack.c.l.b16 %v7098
    %v7631 = vunpack.c.l.b16 %v7099
    %v7632 = vunpack.c.l.b16 %v7100
    %v7633 = vunpack.c.l.b16 %v7101
    %v7634 = vunpack.c.l.b16 %v7102
    %v7635 = vunpack.c.l.b16 %v7103
    %v7636 = vunpack.c.l.b16 %v7104
    %v7637 = vunpack.c.l.b16 %v7105
    %v7638 = vunpack.c.l.b16 %v7106
    %v7639 = vunpack.c.l.b16 %v7107
    %v7640 = vunpack.c.l.b16 %v7108
    %v7641 = vunpack.c.l.b16 %v7109
    %v7642 = vunpack.c.l.b16 %v7110
    %v7643 = vunpack.c.l.b16 %v7111
    %v7644 = vunpack.c.l.b16 %v7112
    %v7645 = vunpack.c.l.b16 %v7113
    %v7646 = vunpack.c.l.b16 %v7114
    %v7647 = vunpack.c.l.b16 %v7115
    %v7648 = vunpack.c.l.b16 %v7116
    %v7649 = vunpack.c.l.b16 %v7117
    %v7650 = vunpack.c.l.b16 %v7118
    %v7651 = vunpack.c.l.b16 %v7119
    %v7652 = vunpack.c.l.b16 %v7120
    %v7653 = vunpack.c.l.b16 %v7121
    %v7654 = vunpack.c.l.b16 %v7122
    %v7655 = vpack.c.b16 %v7400, %v7399
    %v7656 = vpack.c.b16 %v7402, %v7401
    %v7657 = vpack.c.b16 %v7404, %v7403
    %v7658 = vpack.c.b16 %v7406, %v7405
    %v7659 = vpack.c.b16 %v7408, %v7407
    %v7660 = vpack.c.b16 %v7410, %v7409
    %v7661 = vpack.c.b16 %v7412, %v7411
    %v7662 = vpack.c.b16 %v7414, %v7413
    %v7663 = vpack.c.b16 %v7416, %v7415
    %v7664 = vpack.c.b16 %v7418, %v7417
    %v7665 = vpack.c.b16 %v7420, %v7419
    %v7666 = vpack.c.b16 %v7422, %v7421
    %v7667 = vpack.c.b16 %v7424, %v7423
    %v7668 = vpack.c.b16 %v7426, %v7425
    %v7669 = vpack.c.b16 %v7428, %v7427
    %v7670 = vpack.c.b16 %v7430, %v7429
    %v7671 = vpack.c.b16 %v7432, %v7431
    %v7672 = vpack.c.b16 %v7434, %v7433
    %v7673 = vpack.c.b16 %v7436, %v7435
    %v7674 = vpack.c.b16 %v7438, %v7437
    %v7675 = vpack.c.b16 %v7440, %v7439
    %v7676 = vpack.c.b16 %v7442, %v7441
    %v7677 = vpack.c.b16 %v7444, %v7443
    %v7678 = vpack.c.b16 %v7446, %v7445
    %v7679 = vpack.c.b16 %v7448, %v7447
    %v7680 = vpack.c.b16 %v7450, %v7449
    %v7681 = vpack.c.b16 %v7452, %v7451
    %v7682 = vpack.c.b16 %v7454, %v7453
    %v7683 = vpack.c.b16 %v7456, %v7455
    %v7684 = vpack.c.b16 %v7458, %v7457
    %v7685 = vpack.c.b16 %v7460, %v7459
    %v7686 = vpack.c.b16 %v7462, %v7461
    %v7687 = vpack.c.b16 %v7464, %v7463
    %v7688 = vpack.c.b16 %v7466, %v7465
    %v7689 = vpack.c.b16 %v7468, %v7467
    %v7690 = vpack.c.b16 %v7470, %v7469
    %v7691 = vpack.c.b16 %v7472, %v7471
    %v7692 = vpack.c.b16 %v7474, %v7473
    %v7693 = vpack.c.b16 %v7476, %v7475
    %v7694 = vpack.c.b16 %v7478, %v7477
    %v7695 = vpack.c.b16 %v7480, %v7479
    %v7696 = vpack.c.b16 %v7482, %v7481
    %v7697 = vpack.c.b16 %v7484, %v7483
    %v7698 = vpack.c.b16 %v7486, %v7485
    %v7699 = vpack.c.b16 %v7488, %v7487
    %v7700 = vpack.c.b16 %v7490, %v7489
    %v7701 = vpack.c.b16 %v7492, %v7491
    %v7702 = vpack.c.b16 %v7494, %v7493
    %v7703 = vpack.c.b16 %v7496, %v7495
    %v7704 = vpack.c.b16 %v7498, %v7497
    %v7705 = vpack.c.b16 %v7500, %v7499
    %v7706 = vpack.c.b16 %v7502, %v7501
    %v7707 = vpack.c.b16 %v7504, %v7503
    %v7708 = vpack.c.b16 %v7506, %v7505
    %v7709 = vpack.c.b16 %v7508, %v7507
    %v7710 = vpack.c.b16 %v7510, %v7509
    %v7711 = vpack.c.b16 %v7512, %v7511
    %v7712 = vpack.c.b16 %v7514, %v7513
    %v7713 = vpack.c.b16 %v7516, %v7515
    %v7714 = vpack.c.b16 %v7518, %v7517
    %v7715 = vpack.c.b16 %v7520, %v7519
    %v7716 = vpack.c.b16 %v7522, %v7521
    %v7717 = vpack.c.b16 %v7524, %v7523
    %v7718 = vpack.c.b16 %v7526, %v7525
    %v7719 = vpack.c.b16 %v7528, %v7527
    %v7720 = vpack.c.b16 %v7530, %v7529
    %v7721 = vpack.c.b16 %v7532, %v7531
    %v7722 = vpack.c.b16 %v7534, %v7533
    %v7723 = vpack.c.b16 %v7536, %v7535
    %v7724 = vpack.c.b16 %v7538, %v7537
    %v7725 = vpack.c.b16 %v7540, %v7539
    %v7726 = vpack.c.b16 %v7542, %v7541
    %v7727 = vpack.c.b16 %v7544, %v7543
    %v7728 = vpack.c.b16 %v7546, %v7545
    %v7729 = vpack.c.b16 %v7548, %v7547
    %v7730 = vpack.c.b16 %v7550, %v7549
    %v7731 = vpack.c.b16 %v7552, %v7551
    %v7732 = vpack.c.b16 %v7554, %v7553
    %v7733 = vpack.c.b16 %v7556, %v7555
    %v7734 = vpack.c.b16 %v7558, %v7557
    %v7735 = vpack.c.b16 %v7560, %v7559
    %v7736 = vpack.c.b16 %v7562, %v7561
    %v7737 = vpack.c.b16 %v7564, %v7563
    %v7738 = vpack.c.b16 %v7566, %v7565
    %v7739 = vpack.c.b16 %v7568, %v7567
    %v7740 = vpack.c.b16 %v7570, %v7569
    %v7741 = vpack.c.b16 %v7572, %v7571
    %v7742 = vpack.c.b16 %v7574, %v7573
    %v7743 = vpack.c.b16 %v7576, %v7575
    %v7744 = vpack.c.b16 %v7578, %v7577
    %v7745 = vpack.c.b16 %v7580, %v7579
    %v7746 = vpack.c.b16 %v7582, %v7581
    %v7747 = vpack.c.b16 %v7584, %v7583
    %v7748 = vpack.c.b16 %v7586, %v7585
    %v7749 = vpack.c.b16 %v7588, %v7587
    %v7750 = vpack.c.b16 %v7590, %v7589
    %v7751 = vpack.c.b16 %v7592, %v7591
    %v7752 = vpack.c.b16 %v7594, %v7593
    %v7753 = vpack.c.b16 %v7596, %v7595
    %v7754 = vpack.c.b16 %v7598, %v7597
    %v7755 = vpack.c.b16 %v7600, %v7599
    %v7756 = vpack.c.b16 %v7602, %v7601
    %v7757 = vpack.c.b16 %v7604, %v7603
    %v7758 = vpack.c.b16 %v7606, %v7605
    %v7759 = vpack.c.b16 %v7608, %v7607
    %v7760 = vpack.c.b16 %v7610, %v7609
    %v7761 = vpack.c.b16 %v7612, %v7611
    %v7762 = vpack.c.b16 %v7614, %v7613
    %v7763 = vpack.c.b16 %v7616, %v7615
    %v7764 = vpack.c.b16 %v7618, %v7617
    %v7765 = vpack.c.b16 %v7620, %v7619
    %v7766 = vpack.c.b16 %v7622, %v7621
    %v7767 = vpack.c.b16 %v7624, %v7623
    %v7768 = vpack.c.b16 %v7626, %v7625
    %v7769 = vpack.c.b16 %v7628, %v7627
    %v7770 = vpack.c.b16 %v7630, %v7629
    %v7771 = vpack.c.b16 %v7632, %v7631
    %v7772 = vpack.c.b16 %v7634, %v7633
    %v7773 = vpack.c.b16 %v7636, %v7635
    %v7774 = vpack.c.b16 %v7638, %v7637
    %v7775 = vpack.c.b16 %v7640, %v7639
    %v7776 = vpack.c.b16 %v7642, %v7641
    %v7777 = vpack.c.b16 %v7644, %v7643
    %v7778 = vpack.c.b16 %v7646, %v7645
    %v7779 = vpack.c.b16 %v7648, %v7647
    %v7780 = vpack.c.b16 %v7650, %v7649
    %v7781 = vpack.c.b16 %v7652, %v7651
    %v7782 = vpack.c.b16 %v7654, %v7653
    %7911 = vmatprep.subr.bf16.mxu0 0
    %7912 = vmatpush1.bf16.msra.mxu0 %v7655
    %7913 = vmatprep.subr.bf16.mxu0 0
    %7914 = vmatpush1.bf16.msra.mxu0 %v7656
    %7915 = vmatprep.subr.bf16.mxu0 0
    %7916 = vmatpush1.bf16.msra.mxu0 %v7657
    %7917 = vmatprep.subr.bf16.mxu0 0
    %7918 = vmatpush1.bf16.msra.mxu0 %v7658
    %7919 = vmatprep.subr.bf16.mxu0 0
    %7920 = vmatpush1.bf16.msra.mxu0 %v7659
    %7921 = vmatprep.subr.bf16.mxu0 0
    %7922 = vmatpush1.bf16.msra.mxu0 %v7660
    %7923 = vmatprep.subr.bf16.mxu0 0
    %7924 = vmatpush1.bf16.msra.mxu0 %v7661
    %7925 = vmatprep.subr.bf16.mxu0 0
    %7926 = vmatpush1.bf16.msra.mxu0 %v7662
    %7927 = vmatprep.subr.bf16.mxu0 0
    %7928 = vmatpush1.bf16.msra.mxu0 %v7663
    %7929 = vmatprep.subr.bf16.mxu0 0
    %7930 = vmatpush1.bf16.msra.mxu0 %v7664
    %7931 = vmatprep.subr.bf16.mxu0 0
    %7932 = vmatpush1.bf16.msra.mxu0 %v7665
    %7933 = vmatprep.subr.bf16.mxu0 0
    %7934 = vmatpush1.bf16.msra.mxu0 %v7666
    %7935 = vmatprep.subr.bf16.mxu0 0
    %7936 = vmatpush1.bf16.msra.mxu0 %v7667
    %7937 = vmatprep.subr.bf16.mxu0 0
    %7938 = vmatpush1.bf16.msra.mxu0 %v7668
    %7939 = vmatprep.subr.bf16.mxu0 0
    %7940 = vmatpush1.bf16.msra.mxu0 %v7669
    %7941 = vmatprep.subr.bf16.mxu0 0
    %7942 = vmatpush1.bf16.msra.mxu0 %v7670
    %7943 = vmatprep.mubr.bf16.mxu0 %v7124
    %7944 = vmatmul.mubr.bf16.gmra.mrb[0].mxu0 %v7123
    %v7945 = vpop.f32.mrb[0].mxu0
    %v7946 = vadd.f32 %v7142, %v7945
    %v7947 = vpop.f32.mrb[0].mxu0
    %v7948 = vpop.f32.mrb[0].mxu0
    %v7949 = vpop.f32.mrb[0].mxu0
    %7950 = vdwg.mxu0
    %7951 = vmatprep.subr.bf16.mxu0 0
    %7952 = vmatpush1.bf16.msra.mxu0 %v7671
    %7953 = vmatprep.subr.bf16.mxu0 0
    %7954 = vmatpush1.bf16.msra.mxu0 %v7672
    %7955 = vmatprep.subr.bf16.mxu0 0
    %7956 = vmatpush1.bf16.msra.mxu0 %v7673
    %7957 = vmatprep.subr.bf16.mxu0 0
    %7958 = vmatpush1.bf16.msra.mxu0 %v7674
    %7959 = vmatprep.subr.bf16.mxu0 0
    %7960 = vmatpush1.bf16.msra.mxu0 %v7675
    %7961 = vmatprep.subr.bf16.mxu0 0
    %7962 = vmatpush1.bf16.msra.mxu0 %v7676
    %7963 = vmatprep.subr.bf16.mxu0 0
    %7964 = vmatpush1.bf16.msra.mxu0 %v7677
    %7965 = vmatprep.subr.bf16.mxu0 0
    %7966 = vmatpush1.bf16.msra.mxu0 %v7678
    %7967 = vmatprep.subr.bf16.mxu0 0
    %7968 = vmatpush1.bf16.msra.mxu0 %v7679
    %7969 = vmatprep.subr.bf16.mxu0 0
    %7970 = vmatpush1.bf16.msra.mxu0 %v7680
    %7971 = vmatprep.subr.bf16.mxu0 0
    %7972 = vmatpush1.bf16.msra.mxu0 %v7681
    %7973 = vmatprep.subr.bf16.mxu0 0
    %7974 = vmatpush1.bf16.msra.mxu0 %v7682
    %7975 = vmatprep.subr.bf16.mxu0 0
    %7976 = vmatpush1.bf16.msra.mxu0 %v7683
    %7977 = vmatprep.subr.bf16.mxu0 0
    %7978 = vmatpush1.bf16.msra.mxu0 %v7684
    %7979 = vmatprep.subr.bf16.mxu0 0
    %7980 = vmatpush1.bf16.msra.mxu0 %v7685
    %7981 = vmatprep.subr.bf16.mxu0 0
    %7982 = vmatpush1.bf16.msra.mxu0 %v7686
    %7983 = vmatprep.mubr.bf16.mxu0 %v7126
    %7984 = vmatmul.mubr.bf16.gmra.mrb[0].mxu0 %v7125
    %v7985 = vpop.f32.mrb[0].mxu0
    %v7986 = vadd.f32 %v7946, %v7985
    %v7987 = vpop.f32.mrb[0].mxu0
    %v7988 = vpop.f32.mrb[0].mxu0
    %v7989 = vpop.f32.mrb[0].mxu0
    %7990 = vdwg.mxu0
    %7991 = vmatprep.subr.bf16.mxu0 0
    %7992 = vmatpush1.bf16.msra.mxu0 %v7687
    %7993 = vmatprep.subr.bf16.mxu0 0
    %7994 = vmatpush1.bf16.msra.mxu0 %v7688
    %7995 = vmatprep.subr.bf16.mxu0 0
    %7996 = vmatpush1.bf16.msra.mxu0 %v7689
    %7997 = vmatprep.subr.bf16.mxu0 0
    %7998 = vmatpush1.bf16.msra.mxu0 %v7690
    %7999 = vmatprep.subr.bf16.mxu0 0
    %8000 = vmatpush1.bf16.msra.mxu0 %v7691
    %8001 = vmatprep.subr.bf16.mxu0 0
    %8002 = vmatpush1.bf16.msra.mxu0 %v7692
    %8003 = vmatprep.subr.bf16.mxu0 0
    %8004 = vmatpush1.bf16.msra.mxu0 %v7693
    %8005 = vmatprep.subr.bf16.mxu0 0
    %8006 = vmatpush1.bf16.msra.mxu0 %v7694
    %8007 = vmatprep.subr.bf16.mxu0 0
    %8008 = vmatpush1.bf16.msra.mxu0 %v7695
    %8009 = vmatprep.subr.bf16.mxu0 0
    %8010 = vmatpush1.bf16.msra.mxu0 %v7696
    %8011 = vmatprep.subr.bf16.mxu0 0
    %8012 = vmatpush1.bf16.msra.mxu0 %v7697
    %8013 = vmatprep.subr.bf16.mxu0 0
    %8014 = vmatpush1.bf16.msra.mxu0 %v7698
    %8015 = vmatprep.subr.bf16.mxu0 0
    %8016 = vmatpush1.bf16.msra.mxu0 %v7699
    %8017 = vmatprep.subr.bf16.mxu0 0
    %8018 = vmatpush1.bf16.msra.mxu0 %v7700
    %8019 = vmatprep.subr.bf16.mxu0 0
    %8020 = vmatpush1.bf16.msra.mxu0 %v7701
    %8021 = vmatprep.subr.bf16.mxu0 0
    %8022 = vmatpush1.bf16.msra.mxu0 %v7702
    %8023 = vmatprep.mubr.bf16.mxu0 %v7128
    %8024 = vmatmul.mubr.bf16.gmra.mrb[0].mxu0 %v7127
    %v8025 = vpop.f32.mrb[0].mxu0
    %v8026 = vadd.f32 %v7986, %v8025
    %v8027 = vpop.f32.mrb[0].mxu0
    %v8028 = vpop.f32.mrb[0].mxu0
    %v8029 = vpop.f32.mrb[0].mxu0
    %8030 = vdwg.mxu0
    %8031 = vmatprep.subr.bf16.mxu0 0
    %8032 = vmatpush1.bf16.msra.mxu0 %v7703
    %8033 = vmatprep.subr.bf16.mxu0 0
    %8034 = vmatpush1.bf16.msra.mxu0 %v7704
    %8035 = vmatprep.subr.bf16.mxu0 0
    %8036 = vmatpush1.bf16.msra.mxu0 %v7705
    %8037 = vmatprep.subr.bf16.mxu0 0
    %8038 = vmatpush1.bf16.msra.mxu0 %v7706
    %8039 = vmatprep.subr.bf16.mxu0 0
    %8040 = vmatpush1.bf16.msra.mxu0 %v7707
    %8041 = vmatprep.subr.bf16.mxu0 0
    %8042 = vmatpush1.bf16.msra.mxu0 %v7708
    %8043 = vmatprep.subr.bf16.mxu0 0
    %8044 = vmatpush1.bf16.msra.mxu0 %v7709
    %8045 = vmatprep.subr.bf16.mxu0 0
    %8046 = vmatpush1.bf16.msra.mxu0 %v7710
    %8047 = vmatprep.subr.bf16.mxu0 0
    %8048 = vmatpush1.bf16.msra.mxu0 %v7711
    %8049 = vmatprep.subr.bf16.mxu0 0
    %8050 = vmatpush1.bf16.msra.mxu0 %v7712
    %8051 = vmatprep.subr.bf16.mxu0 0
    %8052 = vmatpush1.bf16.msra.mxu0 %v7713
    %8053 = vmatprep.subr.bf16.mxu0 0
    %8054 = vmatpush1.bf16.msra.mxu0 %v7714
    %8055 = vmatprep.subr.bf16.mxu0 0
    %8056 = vmatpush1.bf16.msra.mxu0 %v7715
    %8057 = vmatprep.subr.bf16.mxu0 0
    %8058 = vmatpush1.bf16.msra.mxu0 %v7716
    %8059 = vmatprep.subr.bf16.mxu0 0
    %8060 = vmatpush1.bf16.msra.mxu0 %v7717
    %8061 = vmatprep.subr.bf16.mxu0 0
    %8062 = vmatpush1.bf16.msra.mxu0 %v7718
    %8063 = vmatprep.mubr.bf16.mxu0 %v7130
    %8064 = vmatmul.mubr.bf16.gmra.mrb[0].mxu0 %v7129
    %v8065 = vpop.f32.mrb[0].mxu0
    %v8066 = vadd.f32 %v8026, %v8065
    %v8067 = vpop.f32.mrb[0].mxu0
    %v8068 = vpop.f32.mrb[0].mxu0
    %v8069 = vpop.f32.mrb[0].mxu0
    %8070 = vdwg.mxu0
    %8071 = vmatprep.subr.bf16.mxu0 0
    %8072 = vmatpush1.bf16.msra.mxu0 %v7719
    %8073 = vmatprep.subr.bf16.mxu0 0
    %8074 = vmatpush1.bf16.msra.mxu0 %v7720
    %8075 = vmatprep.subr.bf16.mxu0 0
    %8076 = vmatpush1.bf16.msra.mxu0 %v7721
    %8077 = vmatprep.subr.bf16.mxu0 0
    %8078 = vmatpush1.bf16.msra.mxu0 %v7722
    %8079 = vmatprep.subr.bf16.mxu0 0
    %8080 = vmatpush1.bf16.msra.mxu0 %v7723
    %8081 = vmatprep.subr.bf16.mxu0 0
    %8082 = vmatpush1.bf16.msra.mxu0 %v7724
    %8083 = vmatprep.subr.bf16.mxu0 0
    %8084 = vmatpush1.bf16.msra.mxu0 %v7725
    %8085 = vmatprep.subr.bf16.mxu0 0
    %8086 = vmatpush1.bf16.msra.mxu0 %v7726
    %8087 = vmatprep.subr.bf16.mxu0 0
    %8088 = vmatpush1.bf16.msra.mxu0 %v7727
    %8089 = vmatprep.subr.bf16.mxu0 0
    %8090 = vmatpush1.bf16.msra.mxu0 %v7728
    %8091 = vmatprep.subr.bf16.mxu0 0
    %8092 = vmatpush1.bf16.msra.mxu0 %v7729
    %8093 = vmatprep.subr.bf16.mxu0 0
    %8094 = vmatpush1.bf16.msra.mxu0 %v7730
    %8095 = vmatprep.subr.bf16.mxu0 0
    %8096 = vmatpush1.bf16.msra.mxu0 %v7731
    %8097 = vmatprep.subr.bf16.mxu0 0
    %8098 = vmatpush1.bf16.msra.mxu0 %v7732
    %8099 = vmatprep.subr.bf16.mxu0 0
    %8100 = vmatpush1.bf16.msra.mxu0 %v7733
    %8101 = vmatprep.subr.bf16.mxu0 0
    %8102 = vmatpush1.bf16.msra.mxu0 %v7734
    %8103 = vmatprep.mubr.bf16.mxu0 %v7132
    %8104 = vmatmul.mubr.bf16.gmra.mrb[0].mxu0 %v7131
    %v8105 = vpop.f32.mrb[0].mxu0
    %v8106 = vadd.f32 %v8066, %v8105
    %v8107 = vpop.f32.mrb[0].mxu0
    %v8108 = vpop.f32.mrb[0].mxu0
    %v8109 = vpop.f32.mrb[0].mxu0
    %8110 = vdwg.mxu0
    %8111 = vmatprep.subr.bf16.mxu0 0
    %8112 = vmatpush1.bf16.msra.mxu0 %v7735
    %8113 = vmatprep.subr.bf16.mxu0 0
    %8114 = vmatpush1.bf16.msra.mxu0 %v7736
    %8115 = vmatprep.subr.bf16.mxu0 0
    %8116 = vmatpush1.bf16.msra.mxu0 %v7737
    %8117 = vmatprep.subr.bf16.mxu0 0
    %8118 = vmatpush1.bf16.msra.mxu0 %v7738
    %8119 = vmatprep.subr.bf16.mxu0 0
    %8120 = vmatpush1.bf16.msra.mxu0 %v7739
    %8121 = vmatprep.subr.bf16.mxu0 0
    %8122 = vmatpush1.bf16.msra.mxu0 %v7740
    %8123 = vmatprep.subr.bf16.mxu0 0
    %8124 = vmatpush1.bf16.msra.mxu0 %v7741
    %8125 = vmatprep.subr.bf16.mxu0 0
    %8126 = vmatpush1.bf16.msra.mxu0 %v7742
    %8127 = vmatprep.subr.bf16.mxu0 0
    %8128 = vmatpush1.bf16.msra.mxu0 %v7743
    %8129 = vmatprep.subr.bf16.mxu0 0
    %8130 = vmatpush1.bf16.msra.mxu0 %v7744
    %8131 = vmatprep.subr.bf16.mxu0 0
    %8132 = vmatpush1.bf16.msra.mxu0 %v7745
    %8133 = vmatprep.subr.bf16.mxu0 0
    %8134 = vmatpush1.bf16.msra.mxu0 %v7746
    %8135 = vmatprep.subr.bf16.mxu0 0
    %8136 = vmatpush1.bf16.msra.mxu0 %v7747
    %8137 = vmatprep.subr.bf16.mxu0 0
    %8138 = vmatpush1.bf16.msra.mxu0 %v7748
    %8139 = vmatprep.subr.bf16.mxu0 0
    %8140 = vmatpush1.bf16.msra.mxu0 %v7749
    %8141 = vmatprep.subr.bf16.mxu0 0
    %8142 = vmatpush1.bf16.msra.mxu0 %v7750
    %8143 = vmatprep.mubr.bf16.mxu0 %v7134
    %8144 = vmatmul.mubr.bf16.gmra.mrb[0].mxu0 %v7133
    %v8145 = vpop.f32.mrb[0].mxu0
    %v8146 = vadd.f32 %v8106, %v8145
    %v8147 = vpop.f32.mrb[0].mxu0
    %v8148 = vpop.f32.mrb[0].mxu0
    %v8149 = vpop.f32.mrb[0].mxu0
    %8150 = vdwg.mxu0
    %8151 = vmatprep.subr.bf16.mxu0 0
    %8152 = vmatpush1.bf16.msra.mxu0 %v7751
    %8153 = vmatprep.subr.bf16.mxu0 0
    %8154 = vmatpush1.bf16.msra.mxu0 %v7752
    %8155 = vmatprep.subr.bf16.mxu0 0
    %8156 = vmatpush1.bf16.msra.mxu0 %v7753
    %8157 = vmatprep.subr.bf16.mxu0 0
    %8158 = vmatpush1.bf16.msra.mxu0 %v7754
    %8159 = vmatprep.subr.bf16.mxu0 0
    %8160 = vmatpush1.bf16.msra.mxu0 %v7755
    %8161 = vmatprep.subr.bf16.mxu0 0
    %8162 = vmatpush1.bf16.msra.mxu0 %v7756
    %8163 = vmatprep.subr.bf16.mxu0 0
    %8164 = vmatpush1.bf16.msra.mxu0 %v7757
    %8165 = vmatprep.subr.bf16.mxu0 0
    %8166 = vmatpush1.bf16.msra.mxu0 %v7758
    %8167 = vmatprep.subr.bf16.mxu0 0
    %8168 = vmatpush1.bf16.msra.mxu0 %v7759
    %8169 = vmatprep.subr.bf16.mxu0 0
    %8170 = vmatpush1.bf16.msra.mxu0 %v7760
    %8171 = vmatprep.subr.bf16.mxu0 0
    %8172 = vmatpush1.bf16.msra.mxu0 %v7761
    %8173 = vmatprep.subr.bf16.mxu0 0
    %8174 = vmatpush1.bf16.msra.mxu0 %v7762
    %8175 = vmatprep.subr.bf16.mxu0 0
    %8176 = vmatpush1.bf16.msra.mxu0 %v7763
    %8177 = vmatprep.subr.bf16.mxu0 0
    %8178 = vmatpush1.bf16.msra.mxu0 %v7764
    %8179 = vmatprep.subr.bf16.mxu0 0
    %8180 = vmatpush1.bf16.msra.mxu0 %v7765
    %8181 = vmatprep.subr.bf16.mxu0 0
    %8182 = vmatpush1.bf16.msra.mxu0 %v7766
    %8183 = vmatprep.mubr.bf16.mxu0 %v7136
    %8184 = vmatmul.mubr.bf16.gmra.mrb[0].mxu0 %v7135
    %v8185 = vpop.f32.mrb[0].mxu0
    %v8186 = vadd.f32 %v8146, %v8185
    %v8187 = vpop.f32.mrb[0].mxu0
    %v8188 = vpop.f32.mrb[0].mxu0
    %v8189 = vpop.f32.mrb[0].mxu0
    %8190 = vdwg.mxu0
    %8191 = vmatprep.subr.bf16.mxu0 0
    %8192 = vmatpush1.bf16.msra.mxu0 %v7767
    %8193 = vmatprep.subr.bf16.mxu0 0
    %8194 = vmatpush1.bf16.msra.mxu0 %v7768
    %8195 = vmatprep.subr.bf16.mxu0 0
    %8196 = vmatpush1.bf16.msra.mxu0 %v7769
    %8197 = vmatprep.subr.bf16.mxu0 0
    %8198 = vmatpush1.bf16.msra.mxu0 %v7770
    %8199 = vmatprep.subr.bf16.mxu0 0
    %8200 = vmatpush1.bf16.msra.mxu0 %v7771
    %8201 = vmatprep.subr.bf16.mxu0 0
    %8202 = vmatpush1.bf16.msra.mxu0 %v7772
    %8203 = vmatprep.subr.bf16.mxu0 0
    %8204 = vmatpush1.bf16.msra.mxu0 %v7773
    %8205 = vmatprep.subr.bf16.mxu0 0
    %8206 = vmatpush1.bf16.msra.mxu0 %v7774
    %8207 = vmatprep.subr.bf16.mxu0 0
    %8208 = vmatpush1.bf16.msra.mxu0 %v7775
    %8209 = vmatprep.subr.bf16.mxu0 0
    %8210 = vmatpush1.bf16.msra.mxu0 %v7776
    %8211 = vmatprep.subr.bf16.mxu0 0
    %8212 = vmatpush1.bf16.msra.mxu0 %v7777
    %8213 = vmatprep.subr.bf16.mxu0 0
    %8214 = vmatpush1.bf16.msra.mxu0 %v7778
    %8215 = vmatprep.subr.bf16.mxu0 0
    %8216 = vmatpush1.bf16.msra.mxu0 %v7779
    %8217 = vmatprep.subr.bf16.mxu0 0
    %8218 = vmatpush1.bf16.msra.mxu0 %v7780
    %8219 = vmatprep.subr.bf16.mxu0 0
    %8220 = vmatpush1.bf16.msra.mxu0 %v7781
    %8221 = vmatprep.subr.bf16.mxu0 0
    %8222 = vmatpush1.bf16.msra.mxu0 %v7782
    %8223 = vmatprep.mubr.bf16.mxu0 %v7138
    %8224 = vmatmul.mubr.bf16.gmra.mrb[0].mxu0 %v7137
    %v8225 = vpop.f32.mrb[0].mxu0
    %v8226 = vadd.f32 %v8186, %v8225
    %v8227 = vpop.f32.mrb[0].mxu0
    %v8228 = vpop.f32.mrb[0].mxu0
    %v8229 = vpop.f32.mrb[0].mxu0
    %8230 = vdwg.mxu0
    %v8233 = vunpack.c.l.s4 1983009808
    %v8234 = vunpack.c.0.s8 %v8233
    %v8235 = vlaneseq
    %v8236 = vshrl.u32 %v8235, 7
    %v8237 = vsub.s32 %v8234, %v8236
    %v8238 = vrot.slane %v8226, %v8237
    %v8239 = vcombine.high %v8238, %v8238
    %v8242 = vadd.f32 %v6035, %v8238
    %v8243 = vadd.f32 %v6036, %v8239
    %v8246 = vcombine.low %v8242, %v8243
    %v8248 = vunpack.c.l.s4 1983009808
    %v8249 = vunpack.c.0.s8 %v8248
    %v8250 = vlaneseq
    %v8251 = vshrl.u32 %v8250, 7
    %v8252 = vsub.s32 %v8249, %v8251
    %v8253 = vrot.slane %v8246, %v8252
    %v8255 = vsel %vm1853, %v8253, 0.0
    %8256 = vadd.xlane.f32.xlu0 %v8255
    %v8257 = vpop.xlane.xlu0 %8256
    %v8258 = vmul.f32 %v8257, %v1857
    %v8261 = vunpack.c.l.s4 269488144
    %v8262 = vunpack.c.0.s8 %v8261
    %v8263 = vlaneseq
    %v8264 = vshrl.u32 %v8263, 7
    %v8265 = vsub.s32 %v8262, %v8264
    %v8266 = vrot.slane %v8258, %v8265
    %v8268 = vunpack.c.l.s4 842150450
    %v8269 = vunpack.c.0.s8 %v8268
    %v8270 = vlaneseq
    %v8271 = vshrl.u32 %v8270, 7
    %v8272 = vsub.s32 %v8269, %v8271
    %v8273 = vrot.slane %v8258, %v8272
    %v8276 = vsub.f32 %v8242, %v8266
    %v8277 = vsub.f32 %v8243, %v8273
    %v8278 = vmul.f32 %v8276, %v8276
    %v8279 = vmul.f32 %v8277, %v8277
    %v8282 = vcombine.low %v8278, %v8279
    %v8284 = vunpack.c.l.s4 1983009808
    %v8285 = vunpack.c.0.s8 %v8284
    %v8286 = vlaneseq
    %v8287 = vshrl.u32 %v8286, 7
    %v8288 = vsub.s32 %v8285, %v8287
    %v8289 = vrot.slane %v8282, %v8288
    %v8291 = vsel %vm1853, %v8289, 0.0
    %8292 = vadd.xlane.f32.xlu0 %v8291
    %v8293 = vpop.xlane.xlu0 %8292
    %v8294 = vmul.f32 %v8293, %v1857
    %v8295 = vadd.f32 %v8294, 1e-05
    %v8296 = vrsqrt.pop %v8295
    %v8299 = vunpack.c.l.s4 269488144
    %v8300 = vunpack.c.0.s8 %v8299
    %v8301 = vlaneseq
    %v8302 = vshrl.u32 %v8301, 7
    %v8303 = vsub.s32 %v8300, %v8302
    %v8304 = vrot.slane %v8296, %v8303
    %v8306 = vunpack.c.l.s4 842150450
    %v8307 = vunpack.c.0.s8 %v8306
    %v8308 = vlaneseq
    %v8309 = vshrl.u32 %v8308, 7
    %v8310 = vsub.s32 %v8307, %v8309
    %v8311 = vrot.slane %v8296, %v8310
    %v8314 = vmul.f32 %v8276, %v8304
    %v8315 = vmul.f32 %v8277, %v8311
    %v8316 = vlaneseq
    %v8317 = vshrl.u32 %v8316, 7
    %v8318 = vsub.s32 7, %v8317
    %v8319 = vrot.slane %v4261, %v8318
    %v8322 = vunpack.c.l.s4 1983009808
    %v8323 = vunpack.c.0.s8 %v8322
    %v8324 = vlaneseq
    %v8325 = vshrl.u32 %v8324, 7
    %v8326 = vsub.s32 %v8323, %v8325
    %v8327 = vrot.slane %v8319, %v8326
    %v8328 = vcombine.high %v8327, %v8327
    %v8331 = vmul.f32 %v8314, %v8327
    %v8332 = vmul.f32 %v8315, %v8328
    %v8333 = vlaneseq
    %v8334 = vshrl.u32 %v8333, 7
    %v8335 = vsub.s32 0, %v8334
    %v8336 = vrot.slane %v4262, %v8335
    %v8339 = vunpack.c.l.s4 1983009808
    %v8340 = vunpack.c.0.s8 %v8339
    %v8341 = vlaneseq
    %v8342 = vshrl.u32 %v8341, 7
    %v8343 = vsub.s32 %v8340, %v8342
    %v8344 = vrot.slane %v8336, %v8343
    %v8345 = vcombine.high %v8344, %v8344
    %v8348 = vadd.f32 %v8331, %v8344
    %v8349 = vadd.f32 %v8332, %v8345
    %s8350 = scalar_lea.vmem %s9, 32
    %v8351 = vld [vmem:[%s8350] sm:$0xff]
    %v8352 = vld [vmem:[%s8350 + $0x8] sm:$0x1]
    %s8353 = scalar_lea.vmem %s4, 128
    %v8354 = vld [vmem:[%s8353] sm:$0xff]
    %v8355 = vld [vmem:[%s8353 + $0x8] sm:$0xff]
    %v8356 = vld [vmem:[%s8353 + $0x10] sm:$0xff]
    %v8357 = vld [vmem:[%s8353 + $0x18] sm:$0xff]
    %v8358 = vld [vmem:[%s8353 + $0x20] sm:$0xff]
    %v8359 = vld [vmem:[%s8353 + $0x28] sm:$0xff]
    %v8360 = vld [vmem:[%s8353 + $0x30] sm:$0xff]
    %v8361 = vld [vmem:[%s8353 + $0x38] sm:$0xff]
    %v8364 = vcombine.low %v8348, %v8349
    %v8366 = vunpack.c.l.s4 1983009808
    %v8367 = vunpack.c.0.s8 %v8366
    %v8368 = vlaneseq
    %v8369 = vshrl.u32 %v8368, 7
    %v8370 = vsub.s32 %v8367, %v8369
    %v8371 = vrot.slane %v8364, %v8370
    %v8373 = vpack.c.bf16 %v8371, %v8371
    %v8382 = vunpack.c.l.b16 %v8354
    %v8383 = vunpack.c.h.b16 %v8354
    %v8384 = vunpack.c.l.b16 %v8355
    %v8385 = vunpack.c.h.b16 %v8355
    %v8386 = vunpack.c.l.b16 %v8356
    %v8387 = vunpack.c.h.b16 %v8356
    %v8388 = vunpack.c.l.b16 %v8357
    %v8389 = vunpack.c.h.b16 %v8357
    %v8390 = vunpack.c.l.b16 %v8358
    %v8391 = vunpack.c.h.b16 %v8358
    %v8392 = vunpack.c.l.b16 %v8359
    %v8393 = vunpack.c.h.b16 %v8359
    %v8394 = vunpack.c.l.b16 %v8360
    %v8395 = vunpack.c.h.b16 %v8360
    %v8396 = vunpack.c.l.b16 %v8361
    %v8397 = vunpack.c.h.b16 %v8361
    %v8398 = vpack.c.b16 %v8384, %v8382
    %v8399 = vpack.c.b16 %v8385, %v8383
    %v8400 = vpack.c.b16 %v8388, %v8386
    %v8401 = vpack.c.b16 %v8389, %v8387
    %v8402 = vpack.c.b16 %v8392, %v8390
    %v8403 = vpack.c.b16 %v8393, %v8391
    %v8404 = vpack.c.b16 %v8396, %v8394
    %v8405 = vpack.c.b16 %v8397, %v8395
    %v8415 = vsel %vm229, %v8373, 0
    %8417 = vmatprep.subr.bf16.mxu0 %v8399
    %8418 = vmatpush1.bf16.msra.mxu0 %v8398
    %8419 = vmatprep.subr.bf16.mxu0 %v8401
    %8420 = vmatpush1.bf16.msra.mxu0 %v8400
    %8421 = vmatprep.subr.bf16.mxu0 %v8403
    %8422 = vmatpush1.bf16.msra.mxu0 %v8402
    %8423 = vmatprep.subr.bf16.mxu0 %v8405
    %8424 = vmatpush1.bf16.msra.mxu0 %v8404
    %8425 = vmatprep.subr.bf16.mxu0 0
    %8426 = vmatpush1.bf16.msra.mxu0 0
    %8427 = vmatprep.subr.bf16.mxu0 0
    %8428 = vmatpush1.bf16.msra.mxu0 0
    %8429 = vmatprep.subr.bf16.mxu0 0
    %8430 = vmatpush1.bf16.msra.mxu0 0
    %8431 = vmatprep.subr.bf16.mxu0 0
    %8432 = vmatpush1.bf16.msra.mxu0 0
    %8433 = vmatprep.subr.bf16.mxu0 0
    %8434 = vmatpush1.bf16.msra.mxu0 0
    %8435 = vmatprep.subr.bf16.mxu0 0
    %8436 = vmatpush1.bf16.msra.mxu0 0
    %8437 = vmatprep.subr.bf16.mxu0 0
    %8438 = vmatpush1.bf16.msra.mxu0 0
    %8439 = vmatprep.subr.bf16.mxu0 0
    %8440 = vmatpush1.bf16.msra.mxu0 0
    %8441 = vmatprep.subr.bf16.mxu0 0
    %8442 = vmatpush1.bf16.msra.mxu0 0
    %8443 = vmatprep.subr.bf16.mxu0 0
    %8444 = vmatpush1.bf16.msra.mxu0 0
    %8445 = vmatprep.subr.bf16.mxu0 0
    %8446 = vmatpush1.bf16.msra.mxu0 0
    %8447 = vmatprep.subr.bf16.mxu0 0
    %8448 = vmatpush1.bf16.msra.mxu0 0
    %8449 = vmatprep.mubr.bf16.mxu0 0
    %8450 = vmatmul.mubr.bf16.gmra.mrb[0].mxu0 %v8415
    %v8451 = vpop.f32.mrb[0].mxu0
    %v8452 = vadd.f32 0.0, %v8451
    %v8453 = vpop.f32.mrb[0].mxu0
    %v8454 = vadd.f32 0.0, %v8453
    %v8455 = vpop.f32.mrb[0].mxu0
    %v8456 = vpop.f32.mrb[0].mxu0
    %8457 = vdwg.mxu0
    %v8458 = vlaneseq
    %v8459 = vshrl.u32 %v8458, 7
    %v8460 = vsub.s32 0, %v8459
    %v8461 = vrot.slane %v8351, %v8460
    %v8462 = vadd.f32 %v8452, %v8461
    %v8463 = vlaneseq
    %v8464 = vshrl.u32 %v8463, 7
    %v8465 = vsub.s32 1, %v8464
    %v8466 = vrot.slane %v8351, %v8465
    %8468 = vrot.lane.b32.xlu0 %v8466, 64
    %v8469 = vpop.permute.xlu0 %8468
    %v8471 = vadd.f32 %v8452, %v8469
    %v8472 = vlaneseq
    %v8473 = vshrl.u32 %v8472, 7
    %v8474 = vsub.s32 2, %v8473
    %v8475 = vrot.slane %v8351, %v8474
    %v8476 = vadd.f32 %v8454, %v8475
    %v8479 = vunpack.c.l.s4 1983009808
    %v8480 = vunpack.c.0.s8 %v8479
    %v8481 = vlaneseq
    %v8482 = vshrl.u32 %v8481, 7
    %v8483 = vsub.s32 %v8480, %v8482
    %v8484 = vrot.slane %v8462, %v8483
    %v8485 = vcombine.high %v8484, %v8484
    %v8488 = vunpack.c.l.s4 1983009808
    %v8489 = vunpack.c.0.s8 %v8488
    %v8490 = vlaneseq
    %v8491 = vshrl.u32 %v8490, 7
    %v8492 = vsub.s32 %v8489, %v8491
    %v8493 = vrot.slane %v8471, %v8492
    %v8494 = vcombine.high %v8493, %v8493
    %v8497 = vunpack.c.l.s4 1983009808
    %v8498 = vunpack.c.0.s8 %v8497
    %v8499 = vlaneseq
    %v8500 = vshrl.u32 %v8499, 7
    %v8501 = vsub.s32 %v8498, %v8500
    %v8502 = vrot.slane %v8476, %v8501
    %v8503 = vcombine.high %v8502, %v8502
    %v8505 = vunpack.c.l.s4 1983009808
    %v8506 = vunpack.c.0.s8 %v8505
    %v8507 = vlaneseq
    %v8508 = vshrl.u32 %v8507, 7
    %v8509 = vsub.s32 %v8506, %v8508
    %v8510 = vrot.slane %v8493, %v8509
    %8511 = vrot.lane.b32.xlu0 %v8510, 64
    %v8512 = vpop.permute.xlu0 %8511
    %v8513 = vsel %vm329, %v8484, 0
    %v8515 = vsel %vm329, %v8512, 0
    %8517 = vmatprep.subr.mxu0 0.0
    %8518 = vmatpush1.xpose.msra.mxu0 %v8515
    %8519 = vmatprep.subr.mxu0 0.0
    %8520 = vmatpush1.xpose.msra.mxu0 0.0
    %8521 = vmatprep.subr.mxu0 0.0
    %8522 = vmatpush1.xpose.msra.mxu0 0.0
    %8523 = vmatprep.subr.mxu0 0.0
    %8524 = vmatpush1.xpose.msra.mxu0 0.0
    %8525 = vmatprep.subr.mxu0 0.0
    %8526 = vmatpush1.xpose.msra.mxu0 0.0
    %8527 = vmatprep.subr.mxu0 0.0
    %8528 = vmatpush1.xpose.msra.mxu0 0.0
    %8529 = vmatprep.subr.mxu0 0.0
    %8530 = vmatpush1.xpose.msra.mxu0 0.0
    %8531 = vmatprep.subr.mxu0 0.0
    %8532 = vmatpush1.xpose.msra.mxu0 0.0
    %8533 = vmatprep.subr.mxu0 0.0
    %8534 = vmatpush1.xpose.msra.mxu0 0.0
    %8535 = vmatprep.subr.mxu0 0.0
    %8536 = vmatpush1.xpose.msra.mxu0 0.0
    %8537 = vmatprep.subr.mxu0 0.0
    %8538 = vmatpush1.xpose.msra.mxu0 0.0
    %8539 = vmatprep.subr.mxu0 0.0
    %8540 = vmatpush1.xpose.msra.mxu0 0.0
    %8541 = vmatprep.subr.mxu0 0.0
    %8542 = vmatpush1.xpose.msra.mxu0 0.0
    %8543 = vmatprep.subr.mxu0 0.0
    %8544 = vmatpush1.xpose.msra.mxu0 0.0
    %8545 = vmatprep.subr.mxu0 0.0
    %8546 = vmatpush1.xpose.msra.mxu0 0.0
    %8547 = vmatprep.subr.mxu0 0.0
    %8548 = vmatpush1.xpose.msra.mxu0 0.0
    %8549 = vmatprep.subr.mxu0 0.0
    %8550 = vmatpush1.xpose.msra.mxu0 0.0
    %8551 = vmatprep.subr.mxu0 0.0
    %8552 = vmatpush1.xpose.msra.mxu0 0.0
    %8553 = vmatprep.subr.mxu0 0.0
    %8554 = vmatpush1.xpose.msra.mxu0 0.0
    %8555 = vmatprep.subr.mxu0 0.0
    %8556 = vmatpush1.xpose.msra.mxu0 0.0
    %8557 = vmatprep.subr.mxu0 0.0
    %8558 = vmatpush1.xpose.msra.mxu0 0.0
    %8559 = vmatprep.subr.mxu0 0.0
    %8560 = vmatpush1.xpose.msra.mxu0 0.0
    %8561 = vmatprep.subr.mxu0 0.0
    %8562 = vmatpush1.xpose.msra.mxu0 0.0
    %8563 = vmatprep.subr.mxu0 0.0
    %8564 = vmatpush1.xpose.msra.mxu0 0.0
    %8565 = vmatprep.subr.mxu0 0.0
    %8566 = vmatpush1.xpose.msra.mxu0 0.0
    %8567 = vmatprep.subr.mxu0 0.0
    %8568 = vmatpush1.xpose.msra.mxu0 0.0
    %8569 = vmatprep.subr.mxu0 0.0
    %8570 = vmatpush1.xpose.msra.mxu0 0.0
    %8571 = vmatprep.subr.mxu0 0.0
    %8572 = vmatpush1.xpose.msra.mxu0 0.0
    %8573 = vmatprep.subr.mxu0 0.0
    %8574 = vmatpush1.xpose.msra.mxu0 0.0
    %8575 = vmatprep.subr.mxu0 0.0
    %8576 = vmatpush1.xpose.msra.mxu0 0.0
    %8577 = vmatprep.subr.mxu0 0.0
    %8578 = vmatpush1.xpose.msra.mxu0 0.0
    %8579 = vmatprep.subr.mxu0 0.0
    %8580 = vmatpush1.xpose.msra.mxu0 0.0
    %8581 = vmatprep.mubr.f32.mxu0 0.0
    %8582 = vmatmul.mubr.f32.gmra.mrb[0].mxu0 %v8513
    %v8583 = vpop.f32.mrb[0].mxu0
    %v8584 = vadd.f32 0.0, %v8583
    %v8585 = vpop.f32.mrb[0].mxu0
    %8586 = vdwg.mxu0
    %v8588 = vunpack.c.l.s4 1983009808
    %v8589 = vunpack.c.0.s8 %v8588
    %v8590 = vlaneseq
    %v8591 = vshrl.u32 %v8590, 7
    %v8592 = vsub.s32 %v8589, %v8591
    %v8593 = vrot.slane %v8494, %v8592
    %8594 = vrot.lane.b32.xlu0 %v8593, 64
    %v8595 = vpop.permute.xlu0 %8594
    %v8596 = vsel %vm329, %v8485, 0
    %v8598 = vsel %vm329, %v8595, 0
    %8600 = vmatprep.subr.mxu0 0.0
    %8601 = vmatpush1.xpose.msra.mxu0 %v8598
    %8602 = vmatprep.subr.mxu0 0.0
    %8603 = vmatpush1.xpose.msra.mxu0 0.0
    %8604 = vmatprep.subr.mxu0 0.0
    %8605 = vmatpush1.xpose.msra.mxu0 0.0
    %8606 = vmatprep.subr.mxu0 0.0
    %8607 = vmatpush1.xpose.msra.mxu0 0.0
    %8608 = vmatprep.subr.mxu0 0.0
    %8609 = vmatpush1.xpose.msra.mxu0 0.0
    %8610 = vmatprep.subr.mxu0 0.0
    %8611 = vmatpush1.xpose.msra.mxu0 0.0
    %8612 = vmatprep.subr.mxu0 0.0
    %8613 = vmatpush1.xpose.msra.mxu0 0.0
    %8614 = vmatprep.subr.mxu0 0.0
    %8615 = vmatpush1.xpose.msra.mxu0 0.0
    %8616 = vmatprep.subr.mxu0 0.0
    %8617 = vmatpush1.xpose.msra.mxu0 0.0
    %8618 = vmatprep.subr.mxu0 0.0
    %8619 = vmatpush1.xpose.msra.mxu0 0.0
    %8620 = vmatprep.subr.mxu0 0.0
    %8621 = vmatpush1.xpose.msra.mxu0 0.0
    %8622 = vmatprep.subr.mxu0 0.0
    %8623 = vmatpush1.xpose.msra.mxu0 0.0
    %8624 = vmatprep.subr.mxu0 0.0
    %8625 = vmatpush1.xpose.msra.mxu0 0.0
    %8626 = vmatprep.subr.mxu0 0.0
    %8627 = vmatpush1.xpose.msra.mxu0 0.0
    %8628 = vmatprep.subr.mxu0 0.0
    %8629 = vmatpush1.xpose.msra.mxu0 0.0
    %8630 = vmatprep.subr.mxu0 0.0
    %8631 = vmatpush1.xpose.msra.mxu0 0.0
    %8632 = vmatprep.subr.mxu0 0.0
    %8633 = vmatpush1.xpose.msra.mxu0 0.0
    %8634 = vmatprep.subr.mxu0 0.0
    %8635 = vmatpush1.xpose.msra.mxu0 0.0
    %8636 = vmatprep.subr.mxu0 0.0
    %8637 = vmatpush1.xpose.msra.mxu0 0.0
    %8638 = vmatprep.subr.mxu0 0.0
    %8639 = vmatpush1.xpose.msra.mxu0 0.0
    %8640 = vmatprep.subr.mxu0 0.0
    %8641 = vmatpush1.xpose.msra.mxu0 0.0
    %8642 = vmatprep.subr.mxu0 0.0
    %8643 = vmatpush1.xpose.msra.mxu0 0.0
    %8644 = vmatprep.subr.mxu0 0.0
    %8645 = vmatpush1.xpose.msra.mxu0 0.0
    %8646 = vmatprep.subr.mxu0 0.0
    %8647 = vmatpush1.xpose.msra.mxu0 0.0
    %8648 = vmatprep.subr.mxu0 0.0
    %8649 = vmatpush1.xpose.msra.mxu0 0.0
    %8650 = vmatprep.subr.mxu0 0.0
    %8651 = vmatpush1.xpose.msra.mxu0 0.0
    %8652 = vmatprep.subr.mxu0 0.0
    %8653 = vmatpush1.xpose.msra.mxu0 0.0
    %8654 = vmatprep.subr.mxu0 0.0
    %8655 = vmatpush1.xpose.msra.mxu0 0.0
    %8656 = vmatprep.subr.mxu0 0.0
    %8657 = vmatpush1.xpose.msra.mxu0 0.0
    %8658 = vmatprep.subr.mxu0 0.0
    %8659 = vmatpush1.xpose.msra.mxu0 0.0
    %8660 = vmatprep.subr.mxu0 0.0
    %8661 = vmatpush1.xpose.msra.mxu0 0.0
    %8662 = vmatprep.subr.mxu0 0.0
    %8663 = vmatpush1.xpose.msra.mxu0 0.0
    %8664 = vmatprep.mubr.f32.mxu0 0.0
    %8665 = vmatmul.mubr.f32.gmra.mrb[0].mxu0 %v8596
    %v8666 = vpop.f32.mrb[0].mxu0
    %v8667 = vadd.f32 0.0, %v8666
    %v8668 = vpop.f32.mrb[0].mxu0
    %8669 = vdwg.mxu0
    %v8670 = vmul.f32 %v8584, 0.25
    %v8671 = vmul.f32 %v8667, 0.25
    %v8672 = vsel %vm489, %v8670, -inf
    %8673 = vmax.xlane.f32.xlu0 %v8672
    %v8674 = vpop.xlane.xlu0 %8673
    %v8675 = vsel %vm489, %v8671, -inf
    %8676 = vmax.xlane.f32.xlu0 %v8675
    %v8677 = vpop.xlane.xlu0 %8676
    %v8678 = vsub.f32 %v8670, %v8674
    %v8679 = vsub.f32 %v8671, %v8677
    %v8680 = vmul.f32 %v8678, 1.442695
    %v8681 = vpow.pop %v8680
    %v8682 = vmul.f32 %v8679, 1.442695
    %v8683 = vpow.pop %v8682
    %v8684 = vsel %vm489, %v8681, 0.0
    %8685 = vadd.xlane.f32.xlu0 %v8684
    %v8686 = vpop.xlane.xlu0 %8685
    %v8687 = vsel %vm489, %v8683, 0.0
    %8688 = vadd.xlane.f32.xlu0 %v8687
    %v8689 = vpop.xlane.xlu0 %8688
    %v8690 = vrcp.pop %v8686
    %v8691 = vrcp.pop %v8689
    %v8692 = vmul.f32 %v8681, %v8690
    %v8693 = vmul.f32 %v8683, %v8691
    %v8695 = vsel %vm512, %v8692, 0
    %v8697 = vsel %vm516, %v8502, 0
    %8699 = vmatprep.subr.mxu0 0.0
    %8700 = vmatpush1.msra.mxu0 %v8697
    %8701 = vmatprep.subr.mxu0 0.0
    %8702 = vmatpush1.msra.mxu0 0.0
    %8703 = vmatprep.subr.mxu0 0.0
    %8704 = vmatpush1.msra.mxu0 0.0
    %8705 = vmatprep.subr.mxu0 0.0
    %8706 = vmatpush1.msra.mxu0 0.0
    %8707 = vmatprep.subr.mxu0 0.0
    %8708 = vmatpush1.msra.mxu0 0.0
    %8709 = vmatprep.subr.mxu0 0.0
    %8710 = vmatpush1.msra.mxu0 0.0
    %8711 = vmatprep.subr.mxu0 0.0
    %8712 = vmatpush1.msra.mxu0 0.0
    %8713 = vmatprep.subr.mxu0 0.0
    %8714 = vmatpush1.msra.mxu0 0.0
    %8715 = vmatprep.subr.mxu0 0.0
    %8716 = vmatpush1.msra.mxu0 0.0
    %8717 = vmatprep.subr.mxu0 0.0
    %8718 = vmatpush1.msra.mxu0 0.0
    %8719 = vmatprep.subr.mxu0 0.0
    %8720 = vmatpush1.msra.mxu0 0.0
    %8721 = vmatprep.subr.mxu0 0.0
    %8722 = vmatpush1.msra.mxu0 0.0
    %8723 = vmatprep.subr.mxu0 0.0
    %8724 = vmatpush1.msra.mxu0 0.0
    %8725 = vmatprep.subr.mxu0 0.0
    %8726 = vmatpush1.msra.mxu0 0.0
    %8727 = vmatprep.subr.mxu0 0.0
    %8728 = vmatpush1.msra.mxu0 0.0
    %8729 = vmatprep.subr.mxu0 0.0
    %8730 = vmatpush1.msra.mxu0 0.0
    %8731 = vmatprep.subr.mxu0 0.0
    %8732 = vmatpush1.msra.mxu0 0.0
    %8733 = vmatprep.subr.mxu0 0.0
    %8734 = vmatpush1.msra.mxu0 0.0
    %8735 = vmatprep.subr.mxu0 0.0
    %8736 = vmatpush1.msra.mxu0 0.0
    %8737 = vmatprep.subr.mxu0 0.0
    %8738 = vmatpush1.msra.mxu0 0.0
    %8739 = vmatprep.subr.mxu0 0.0
    %8740 = vmatpush1.msra.mxu0 0.0
    %8741 = vmatprep.subr.mxu0 0.0
    %8742 = vmatpush1.msra.mxu0 0.0
    %8743 = vmatprep.subr.mxu0 0.0
    %8744 = vmatpush1.msra.mxu0 0.0
    %8745 = vmatprep.subr.mxu0 0.0
    %8746 = vmatpush1.msra.mxu0 0.0
    %8747 = vmatprep.subr.mxu0 0.0
    %8748 = vmatpush1.msra.mxu0 0.0
    %8749 = vmatprep.subr.mxu0 0.0
    %8750 = vmatpush1.msra.mxu0 0.0
    %8751 = vmatprep.subr.mxu0 0.0
    %8752 = vmatpush1.msra.mxu0 0.0
    %8753 = vmatprep.subr.mxu0 0.0
    %8754 = vmatpush1.msra.mxu0 0.0
    %8755 = vmatprep.subr.mxu0 0.0
    %8756 = vmatpush1.msra.mxu0 0.0
    %8757 = vmatprep.subr.mxu0 0.0
    %8758 = vmatpush1.msra.mxu0 0.0
    %8759 = vmatprep.subr.mxu0 0.0
    %8760 = vmatpush1.msra.mxu0 0.0
    %8761 = vmatprep.subr.mxu0 0.0
    %8762 = vmatpush1.msra.mxu0 0.0
    %8763 = vmatprep.mubr.f32.mxu0 0.0
    %8764 = vmatmul.mubr.f32.gmra.mrb[0].mxu0 %v8695
    %v8765 = vpop.f32.mrb[0].mxu0
    %v8766 = vadd.f32 0.0, %v8765
    %v8767 = vpop.f32.mrb[0].mxu0
    %8768 = vdwg.mxu0
    %v8770 = vsel %vm512, %v8693, 0
    %v8772 = vsel %vm516, %v8503, 0
    %8774 = vmatprep.subr.mxu0 0.0
    %8775 = vmatpush1.msra.mxu0 %v8772
    %8776 = vmatprep.subr.mxu0 0.0
    %8777 = vmatpush1.msra.mxu0 0.0
    %8778 = vmatprep.subr.mxu0 0.0
    %8779 = vmatpush1.msra.mxu0 0.0
    %8780 = vmatprep.subr.mxu0 0.0
    %8781 = vmatpush1.msra.mxu0 0.0
    %8782 = vmatprep.subr.mxu0 0.0
    %8783 = vmatpush1.msra.mxu0 0.0
    %8784 = vmatprep.subr.mxu0 0.0
    %8785 = vmatpush1.msra.mxu0 0.0
    %8786 = vmatprep.subr.mxu0 0.0
    %8787 = vmatpush1.msra.mxu0 0.0
    %8788 = vmatprep.subr.mxu0 0.0
    %8789 = vmatpush1.msra.mxu0 0.0
    %8790 = vmatprep.subr.mxu0 0.0
    %8791 = vmatpush1.msra.mxu0 0.0
    %8792 = vmatprep.subr.mxu0 0.0
    %8793 = vmatpush1.msra.mxu0 0.0
    %8794 = vmatprep.subr.mxu0 0.0
    %8795 = vmatpush1.msra.mxu0 0.0
    %8796 = vmatprep.subr.mxu0 0.0
    %8797 = vmatpush1.msra.mxu0 0.0
    %8798 = vmatprep.subr.mxu0 0.0
    %8799 = vmatpush1.msra.mxu0 0.0
    %8800 = vmatprep.subr.mxu0 0.0
    %8801 = vmatpush1.msra.mxu0 0.0
    %8802 = vmatprep.subr.mxu0 0.0
    %8803 = vmatpush1.msra.mxu0 0.0
    %8804 = vmatprep.subr.mxu0 0.0
    %8805 = vmatpush1.msra.mxu0 0.0
    %8806 = vmatprep.subr.mxu0 0.0
    %8807 = vmatpush1.msra.mxu0 0.0
    %8808 = vmatprep.subr.mxu0 0.0
    %8809 = vmatpush1.msra.mxu0 0.0
    %8810 = vmatprep.subr.mxu0 0.0
    %8811 = vmatpush1.msra.mxu0 0.0
    %8812 = vmatprep.subr.mxu0 0.0
    %8813 = vmatpush1.msra.mxu0 0.0
    %8814 = vmatprep.subr.mxu0 0.0
    %8815 = vmatpush1.msra.mxu0 0.0
    %8816 = vmatprep.subr.mxu0 0.0
    %8817 = vmatpush1.msra.mxu0 0.0
    %8818 = vmatprep.subr.mxu0 0.0
    %8819 = vmatpush1.msra.mxu0 0.0
    %8820 = vmatprep.subr.mxu0 0.0
    %8821 = vmatpush1.msra.mxu0 0.0
    %8822 = vmatprep.subr.mxu0 0.0
    %8823 = vmatpush1.msra.mxu0 0.0
    %8824 = vmatprep.subr.mxu0 0.0
    %8825 = vmatpush1.msra.mxu0 0.0
    %8826 = vmatprep.subr.mxu0 0.0
    %8827 = vmatpush1.msra.mxu0 0.0
    %8828 = vmatprep.subr.mxu0 0.0
    %8829 = vmatpush1.msra.mxu0 0.0
    %8830 = vmatprep.subr.mxu0 0.0
    %8831 = vmatpush1.msra.mxu0 0.0
    %8832 = vmatprep.subr.mxu0 0.0
    %8833 = vmatpush1.msra.mxu0 0.0
    %8834 = vmatprep.subr.mxu0 0.0
    %8835 = vmatpush1.msra.mxu0 0.0
    %8836 = vmatprep.subr.mxu0 0.0
    %8837 = vmatpush1.msra.mxu0 0.0
    %8838 = vmatprep.mubr.f32.mxu0 0.0
    %8839 = vmatmul.mubr.f32.gmra.mrb[0].mxu0 %v8770
    %v8840 = vpop.f32.mrb[0].mxu0
    %v8841 = vadd.f32 0.0, %v8840
    %v8842 = vpop.f32.mrb[0].mxu0
    %8843 = vdwg.mxu0
    %v8845 = vunpack.c.l.s4 1983009808
    %v8846 = vunpack.c.0.s8 %v8845
    %v8847 = vlaneseq
    %v8848 = vshrl.u32 %v8847, 7
    %v8849 = vsub.s32 %v8846, %v8848
    %v8850 = vrot.slane %v8484, %v8849
    %8851 = vrot.lane.b32.xlu0 %v8850, 112
    %v8852 = vpop.permute.xlu0 %8851
    %8853 = vrot.lane.b32.xlu0 %v8510, 48
    %v8854 = vpop.permute.xlu0 %8853
    %v8855 = vsel %vm329, %v8852, 0
    %v8857 = vsel %vm329, %v8854, 0
    %8859 = vmatprep.subr.mxu0 0.0
    %8860 = vmatpush1.xpose.msra.mxu0 %v8857
    %8861 = vmatprep.subr.mxu0 0.0
    %8862 = vmatpush1.xpose.msra.mxu0 0.0
    %8863 = vmatprep.subr.mxu0 0.0
    %8864 = vmatpush1.xpose.msra.mxu0 0.0
    %8865 = vmatprep.subr.mxu0 0.0
    %8866 = vmatpush1.xpose.msra.mxu0 0.0
    %8867 = vmatprep.subr.mxu0 0.0
    %8868 = vmatpush1.xpose.msra.mxu0 0.0
    %8869 = vmatprep.subr.mxu0 0.0
    %8870 = vmatpush1.xpose.msra.mxu0 0.0
    %8871 = vmatprep.subr.mxu0 0.0
    %8872 = vmatpush1.xpose.msra.mxu0 0.0
    %8873 = vmatprep.subr.mxu0 0.0
    %8874 = vmatpush1.xpose.msra.mxu0 0.0
    %8875 = vmatprep.subr.mxu0 0.0
    %8876 = vmatpush1.xpose.msra.mxu0 0.0
    %8877 = vmatprep.subr.mxu0 0.0
    %8878 = vmatpush1.xpose.msra.mxu0 0.0
    %8879 = vmatprep.subr.mxu0 0.0
    %8880 = vmatpush1.xpose.msra.mxu0 0.0
    %8881 = vmatprep.subr.mxu0 0.0
    %8882 = vmatpush1.xpose.msra.mxu0 0.0
    %8883 = vmatprep.subr.mxu0 0.0
    %8884 = vmatpush1.xpose.msra.mxu0 0.0
    %8885 = vmatprep.subr.mxu0 0.0
    %8886 = vmatpush1.xpose.msra.mxu0 0.0
    %8887 = vmatprep.subr.mxu0 0.0
    %8888 = vmatpush1.xpose.msra.mxu0 0.0
    %8889 = vmatprep.subr.mxu0 0.0
    %8890 = vmatpush1.xpose.msra.mxu0 0.0
    %8891 = vmatprep.subr.mxu0 0.0
    %8892 = vmatpush1.xpose.msra.mxu0 0.0
    %8893 = vmatprep.subr.mxu0 0.0
    %8894 = vmatpush1.xpose.msra.mxu0 0.0
    %8895 = vmatprep.subr.mxu0 0.0
    %8896 = vmatpush1.xpose.msra.mxu0 0.0
    %8897 = vmatprep.subr.mxu0 0.0
    %8898 = vmatpush1.xpose.msra.mxu0 0.0
    %8899 = vmatprep.subr.mxu0 0.0
    %8900 = vmatpush1.xpose.msra.mxu0 0.0
    %8901 = vmatprep.subr.mxu0 0.0
    %8902 = vmatpush1.xpose.msra.mxu0 0.0
    %8903 = vmatprep.subr.mxu0 0.0
    %8904 = vmatpush1.xpose.msra.mxu0 0.0
    %8905 = vmatprep.subr.mxu0 0.0
    %8906 = vmatpush1.xpose.msra.mxu0 0.0
    %8907 = vmatprep.subr.mxu0 0.0
    %8908 = vmatpush1.xpose.msra.mxu0 0.0
    %8909 = vmatprep.subr.mxu0 0.0
    %8910 = vmatpush1.xpose.msra.mxu0 0.0
    %8911 = vmatprep.subr.mxu0 0.0
    %8912 = vmatpush1.xpose.msra.mxu0 0.0
    %8913 = vmatprep.subr.mxu0 0.0
    %8914 = vmatpush1.xpose.msra.mxu0 0.0
    %8915 = vmatprep.subr.mxu0 0.0
    %8916 = vmatpush1.xpose.msra.mxu0 0.0
    %8917 = vmatprep.subr.mxu0 0.0
    %8918 = vmatpush1.xpose.msra.mxu0 0.0
    %8919 = vmatprep.subr.mxu0 0.0
    %8920 = vmatpush1.xpose.msra.mxu0 0.0
    %8921 = vmatprep.subr.mxu0 0.0
    %8922 = vmatpush1.xpose.msra.mxu0 0.0
    %8923 = vmatprep.mubr.f32.mxu0 0.0
    %8924 = vmatmul.mubr.f32.gmra.mrb[0].mxu0 %v8855
    %v8925 = vpop.f32.mrb[0].mxu0
    %v8926 = vadd.f32 0.0, %v8925
    %v8927 = vpop.f32.mrb[0].mxu0
    %8928 = vdwg.mxu0
    %v8930 = vunpack.c.l.s4 1983009808
    %v8931 = vunpack.c.0.s8 %v8930
    %v8932 = vlaneseq
    %v8933 = vshrl.u32 %v8932, 7
    %v8934 = vsub.s32 %v8931, %v8933
    %v8935 = vrot.slane %v8485, %v8934
    %8936 = vrot.lane.b32.xlu0 %v8935, 112
    %v8937 = vpop.permute.xlu0 %8936
    %8938 = vrot.lane.b32.xlu0 %v8593, 48
    %v8939 = vpop.permute.xlu0 %8938
    %v8940 = vsel %vm329, %v8937, 0
    %v8942 = vsel %vm329, %v8939, 0
    %8944 = vmatprep.subr.mxu0 0.0
    %8945 = vmatpush1.xpose.msra.mxu0 %v8942
    %8946 = vmatprep.subr.mxu0 0.0
    %8947 = vmatpush1.xpose.msra.mxu0 0.0
    %8948 = vmatprep.subr.mxu0 0.0
    %8949 = vmatpush1.xpose.msra.mxu0 0.0
    %8950 = vmatprep.subr.mxu0 0.0
    %8951 = vmatpush1.xpose.msra.mxu0 0.0
    %8952 = vmatprep.subr.mxu0 0.0
    %8953 = vmatpush1.xpose.msra.mxu0 0.0
    %8954 = vmatprep.subr.mxu0 0.0
    %8955 = vmatpush1.xpose.msra.mxu0 0.0
    %8956 = vmatprep.subr.mxu0 0.0
    %8957 = vmatpush1.xpose.msra.mxu0 0.0
    %8958 = vmatprep.subr.mxu0 0.0
    %8959 = vmatpush1.xpose.msra.mxu0 0.0
    %8960 = vmatprep.subr.mxu0 0.0
    %8961 = vmatpush1.xpose.msra.mxu0 0.0
    %8962 = vmatprep.subr.mxu0 0.0
    %8963 = vmatpush1.xpose.msra.mxu0 0.0
    %8964 = vmatprep.subr.mxu0 0.0
    %8965 = vmatpush1.xpose.msra.mxu0 0.0
    %8966 = vmatprep.subr.mxu0 0.0
    %8967 = vmatpush1.xpose.msra.mxu0 0.0
    %8968 = vmatprep.subr.mxu0 0.0
    %8969 = vmatpush1.xpose.msra.mxu0 0.0
    %8970 = vmatprep.subr.mxu0 0.0
    %8971 = vmatpush1.xpose.msra.mxu0 0.0
    %8972 = vmatprep.subr.mxu0 0.0
    %8973 = vmatpush1.xpose.msra.mxu0 0.0
    %8974 = vmatprep.subr.mxu0 0.0
    %8975 = vmatpush1.xpose.msra.mxu0 0.0
    %8976 = vmatprep.subr.mxu0 0.0
    %8977 = vmatpush1.xpose.msra.mxu0 0.0
    %8978 = vmatprep.subr.mxu0 0.0
    %8979 = vmatpush1.xpose.msra.mxu0 0.0
    %8980 = vmatprep.subr.mxu0 0.0
    %8981 = vmatpush1.xpose.msra.mxu0 0.0
    %8982 = vmatprep.subr.mxu0 0.0
    %8983 = vmatpush1.xpose.msra.mxu0 0.0
    %8984 = vmatprep.subr.mxu0 0.0
    %8985 = vmatpush1.xpose.msra.mxu0 0.0
    %8986 = vmatprep.subr.mxu0 0.0
    %8987 = vmatpush1.xpose.msra.mxu0 0.0
    %8988 = vmatprep.subr.mxu0 0.0
    %8989 = vmatpush1.xpose.msra.mxu0 0.0
    %8990 = vmatprep.subr.mxu0 0.0
    %8991 = vmatpush1.xpose.msra.mxu0 0.0
    %8992 = vmatprep.subr.mxu0 0.0
    %8993 = vmatpush1.xpose.msra.mxu0 0.0
    %8994 = vmatprep.subr.mxu0 0.0
    %8995 = vmatpush1.xpose.msra.mxu0 0.0
    %8996 = vmatprep.subr.mxu0 0.0
    %8997 = vmatpush1.xpose.msra.mxu0 0.0
    %8998 = vmatprep.subr.mxu0 0.0
    %8999 = vmatpush1.xpose.msra.mxu0 0.0
    %9000 = vmatprep.subr.mxu0 0.0
    %9001 = vmatpush1.xpose.msra.mxu0 0.0
    %9002 = vmatprep.subr.mxu0 0.0
    %9003 = vmatpush1.xpose.msra.mxu0 0.0
    %9004 = vmatprep.subr.mxu0 0.0
    %9005 = vmatpush1.xpose.msra.mxu0 0.0
    %9006 = vmatprep.subr.mxu0 0.0
    %9007 = vmatpush1.xpose.msra.mxu0 0.0
    %9008 = vmatprep.mubr.f32.mxu0 0.0
    %9009 = vmatmul.mubr.f32.gmra.mrb[0].mxu0 %v8940
    %v9010 = vpop.f32.mrb[0].mxu0
    %v9011 = vadd.f32 0.0, %v9010
    %v9012 = vpop.f32.mrb[0].mxu0
    %9013 = vdwg.mxu0
    %v9014 = vmul.f32 %v8926, 0.25
    %v9015 = vmul.f32 %v9011, 0.25
    %v9016 = vsel %vm489, %v9014, -inf
    %9017 = vmax.xlane.f32.xlu0 %v9016
    %v9018 = vpop.xlane.xlu0 %9017
    %v9019 = vsel %vm489, %v9015, -inf
    %9020 = vmax.xlane.f32.xlu0 %v9019
    %v9021 = vpop.xlane.xlu0 %9020
    %v9022 = vsub.f32 %v9014, %v9018
    %v9023 = vsub.f32 %v9015, %v9021
    %v9024 = vmul.f32 %v9022, 1.442695
    %v9025 = vpow.pop %v9024
    %v9026 = vmul.f32 %v9023, 1.442695
    %v9027 = vpow.pop %v9026
    %v9028 = vsel %vm489, %v9025, 0.0
    %9029 = vadd.xlane.f32.xlu0 %v9028
    %v9030 = vpop.xlane.xlu0 %9029
    %v9031 = vsel %vm489, %v9027, 0.0
    %9032 = vadd.xlane.f32.xlu0 %v9031
    %v9033 = vpop.xlane.xlu0 %9032
    %v9034 = vrcp.pop %v9030
    %v9035 = vrcp.pop %v9033
    %v9036 = vmul.f32 %v9025, %v9034
    %v9037 = vmul.f32 %v9027, %v9035
    %v9039 = vunpack.c.l.s4 1983009808
    %v9040 = vunpack.c.0.s8 %v9039
    %v9041 = vlaneseq
    %v9042 = vshrl.u32 %v9041, 7
    %v9043 = vsub.s32 %v9040, %v9042
    %v9044 = vrot.slane %v8502, %v9043
    %9045 = vrot.lane.b32.xlu0 %v9044, 112
    %v9046 = vpop.permute.xlu0 %9045
    %v9048 = vsel %vm512, %v9036, 0
    %v9050 = vsel %vm516, %v9046, 0
    %9052 = vmatprep.subr.mxu0 0.0
    %9053 = vmatpush1.msra.mxu0 %v9050
    %9054 = vmatprep.subr.mxu0 0.0
    %9055 = vmatpush1.msra.mxu0 0.0
    %9056 = vmatprep.subr.mxu0 0.0
    %9057 = vmatpush1.msra.mxu0 0.0
    %9058 = vmatprep.subr.mxu0 0.0
    %9059 = vmatpush1.msra.mxu0 0.0
    %9060 = vmatprep.subr.mxu0 0.0
    %9061 = vmatpush1.msra.mxu0 0.0
    %9062 = vmatprep.subr.mxu0 0.0
    %9063 = vmatpush1.msra.mxu0 0.0
    %9064 = vmatprep.subr.mxu0 0.0
    %9065 = vmatpush1.msra.mxu0 0.0
    %9066 = vmatprep.subr.mxu0 0.0
    %9067 = vmatpush1.msra.mxu0 0.0
    %9068 = vmatprep.subr.mxu0 0.0
    %9069 = vmatpush1.msra.mxu0 0.0
    %9070 = vmatprep.subr.mxu0 0.0
    %9071 = vmatpush1.msra.mxu0 0.0
    %9072 = vmatprep.subr.mxu0 0.0
    %9073 = vmatpush1.msra.mxu0 0.0
    %9074 = vmatprep.subr.mxu0 0.0
    %9075 = vmatpush1.msra.mxu0 0.0
    %9076 = vmatprep.subr.mxu0 0.0
    %9077 = vmatpush1.msra.mxu0 0.0
    %9078 = vmatprep.subr.mxu0 0.0
    %9079 = vmatpush1.msra.mxu0 0.0
    %9080 = vmatprep.subr.mxu0 0.0
    %9081 = vmatpush1.msra.mxu0 0.0
    %9082 = vmatprep.subr.mxu0 0.0
    %9083 = vmatpush1.msra.mxu0 0.0
    %9084 = vmatprep.subr.mxu0 0.0
    %9085 = vmatpush1.msra.mxu0 0.0
    %9086 = vmatprep.subr.mxu0 0.0
    %9087 = vmatpush1.msra.mxu0 0.0
    %9088 = vmatprep.subr.mxu0 0.0
    %9089 = vmatpush1.msra.mxu0 0.0
    %9090 = vmatprep.subr.mxu0 0.0
    %9091 = vmatpush1.msra.mxu0 0.0
    %9092 = vmatprep.subr.mxu0 0.0
    %9093 = vmatpush1.msra.mxu0 0.0
    %9094 = vmatprep.subr.mxu0 0.0
    %9095 = vmatpush1.msra.mxu0 0.0
    %9096 = vmatprep.subr.mxu0 0.0
    %9097 = vmatpush1.msra.mxu0 0.0
    %9098 = vmatprep.subr.mxu0 0.0
    %9099 = vmatpush1.msra.mxu0 0.0
    %9100 = vmatprep.subr.mxu0 0.0
    %9101 = vmatpush1.msra.mxu0 0.0
    %9102 = vmatprep.subr.mxu0 0.0
    %9103 = vmatpush1.msra.mxu0 0.0
    %9104 = vmatprep.subr.mxu0 0.0
    %9105 = vmatpush1.msra.mxu0 0.0
    %9106 = vmatprep.subr.mxu0 0.0
    %9107 = vmatpush1.msra.mxu0 0.0
    %9108 = vmatprep.subr.mxu0 0.0
    %9109 = vmatpush1.msra.mxu0 0.0
    %9110 = vmatprep.subr.mxu0 0.0
    %9111 = vmatpush1.msra.mxu0 0.0
    %9112 = vmatprep.subr.mxu0 0.0
    %9113 = vmatpush1.msra.mxu0 0.0
    %9114 = vmatprep.subr.mxu0 0.0
    %9115 = vmatpush1.msra.mxu0 0.0
    %9116 = vmatprep.mubr.f32.mxu0 0.0
    %9117 = vmatmul.mubr.f32.gmra.mrb[0].mxu0 %v9048
    %v9118 = vpop.f32.mrb[0].mxu0
    %v9119 = vadd.f32 0.0, %v9118
    %v9120 = vpop.f32.mrb[0].mxu0
    %9121 = vdwg.mxu0
    %v9123 = vunpack.c.l.s4 1983009808
    %v9124 = vunpack.c.0.s8 %v9123
    %v9125 = vlaneseq
    %v9126 = vshrl.u32 %v9125, 7
    %v9127 = vsub.s32 %v9124, %v9126
    %v9128 = vrot.slane %v8503, %v9127
    %9129 = vrot.lane.b32.xlu0 %v9128, 112
    %v9130 = vpop.permute.xlu0 %9129
    %v9132 = vsel %vm512, %v9037, 0
    %v9134 = vsel %vm516, %v9130, 0
    %9136 = vmatprep.subr.mxu0 0.0
    %9137 = vmatpush1.msra.mxu0 %v9134
    %9138 = vmatprep.subr.mxu0 0.0
    %9139 = vmatpush1.msra.mxu0 0.0
    %9140 = vmatprep.subr.mxu0 0.0
    %9141 = vmatpush1.msra.mxu0 0.0
    %9142 = vmatprep.subr.mxu0 0.0
    %9143 = vmatpush1.msra.mxu0 0.0
    %9144 = vmatprep.subr.mxu0 0.0
    %9145 = vmatpush1.msra.mxu0 0.0
    %9146 = vmatprep.subr.mxu0 0.0
    %9147 = vmatpush1.msra.mxu0 0.0
    %9148 = vmatprep.subr.mxu0 0.0
    %9149 = vmatpush1.msra.mxu0 0.0
    %9150 = vmatprep.subr.mxu0 0.0
    %9151 = vmatpush1.msra.mxu0 0.0
    %9152 = vmatprep.subr.mxu0 0.0
    %9153 = vmatpush1.msra.mxu0 0.0
    %9154 = vmatprep.subr.mxu0 0.0
    %9155 = vmatpush1.msra.mxu0 0.0
    %9156 = vmatprep.subr.mxu0 0.0
    %9157 = vmatpush1.msra.mxu0 0.0
    %9158 = vmatprep.subr.mxu0 0.0
    %9159 = vmatpush1.msra.mxu0 0.0
    %9160 = vmatprep.subr.mxu0 0.0
    %9161 = vmatpush1.msra.mxu0 0.0
    %9162 = vmatprep.subr.mxu0 0.0
    %9163 = vmatpush1.msra.mxu0 0.0
    %9164 = vmatprep.subr.mxu0 0.0
    %9165 = vmatpush1.msra.mxu0 0.0
    %9166 = vmatprep.subr.mxu0 0.0
    %9167 = vmatpush1.msra.mxu0 0.0
    %9168 = vmatprep.subr.mxu0 0.0
    %9169 = vmatpush1.msra.mxu0 0.0
    %9170 = vmatprep.subr.mxu0 0.0
    %9171 = vmatpush1.msra.mxu0 0.0
    %9172 = vmatprep.subr.mxu0 0.0
    %9173 = vmatpush1.msra.mxu0 0.0
    %9174 = vmatprep.subr.mxu0 0.0
    %9175 = vmatpush1.msra.mxu0 0.0
    %9176 = vmatprep.subr.mxu0 0.0
    %9177 = vmatpush1.msra.mxu0 0.0
    %9178 = vmatprep.subr.mxu0 0.0
    %9179 = vmatpush1.msra.mxu0 0.0
    %9180 = vmatprep.subr.mxu0 0.0
    %9181 = vmatpush1.msra.mxu0 0.0
    %9182 = vmatprep.subr.mxu0 0.0
    %9183 = vmatpush1.msra.mxu0 0.0
    %9184 = vmatprep.subr.mxu0 0.0
    %9185 = vmatpush1.msra.mxu0 0.0
    %9186 = vmatprep.subr.mxu0 0.0
    %9187 = vmatpush1.msra.mxu0 0.0
    %9188 = vmatprep.subr.mxu0 0.0
    %9189 = vmatpush1.msra.mxu0 0.0
    %9190 = vmatprep.subr.mxu0 0.0
    %9191 = vmatpush1.msra.mxu0 0.0
    %9192 = vmatprep.subr.mxu0 0.0
    %9193 = vmatpush1.msra.mxu0 0.0
    %9194 = vmatprep.subr.mxu0 0.0
    %9195 = vmatpush1.msra.mxu0 0.0
    %9196 = vmatprep.subr.mxu0 0.0
    %9197 = vmatpush1.msra.mxu0 0.0
    %9198 = vmatprep.subr.mxu0 0.0
    %9199 = vmatpush1.msra.mxu0 0.0
    %9200 = vmatprep.mubr.f32.mxu0 0.0
    %9201 = vmatmul.mubr.f32.gmra.mrb[0].mxu0 %v9132
    %v9202 = vpop.f32.mrb[0].mxu0
    %v9203 = vadd.f32 0.0, %v9202
    %v9204 = vpop.f32.mrb[0].mxu0
    %9205 = vdwg.mxu0
    %9206 = vrot.lane.b32.xlu0 %v8850, 96
    %v9207 = vpop.permute.xlu0 %9206
    %9208 = vrot.lane.b32.xlu0 %v8510, 32
    %v9209 = vpop.permute.xlu0 %9208
    %v9210 = vsel %vm329, %v9207, 0
    %v9212 = vsel %vm329, %v9209, 0
    %9214 = vmatprep.subr.mxu0 0.0
    %9215 = vmatpush1.xpose.msra.mxu0 %v9212
    %9216 = vmatprep.subr.mxu0 0.0
    %9217 = vmatpush1.xpose.msra.mxu0 0.0
    %9218 = vmatprep.subr.mxu0 0.0
    %9219 = vmatpush1.xpose.msra.mxu0 0.0
    %9220 = vmatprep.subr.mxu0 0.0
    %9221 = vmatpush1.xpose.msra.mxu0 0.0
    %9222 = vmatprep.subr.mxu0 0.0
    %9223 = vmatpush1.xpose.msra.mxu0 0.0
    %9224 = vmatprep.subr.mxu0 0.0
    %9225 = vmatpush1.xpose.msra.mxu0 0.0
    %9226 = vmatprep.subr.mxu0 0.0
    %9227 = vmatpush1.xpose.msra.mxu0 0.0
    %9228 = vmatprep.subr.mxu0 0.0
    %9229 = vmatpush1.xpose.msra.mxu0 0.0
    %9230 = vmatprep.subr.mxu0 0.0
    %9231 = vmatpush1.xpose.msra.mxu0 0.0
    %9232 = vmatprep.subr.mxu0 0.0
    %9233 = vmatpush1.xpose.msra.mxu0 0.0
    %9234 = vmatprep.subr.mxu0 0.0
    %9235 = vmatpush1.xpose.msra.mxu0 0.0
    %9236 = vmatprep.subr.mxu0 0.0
    %9237 = vmatpush1.xpose.msra.mxu0 0.0
    %9238 = vmatprep.subr.mxu0 0.0
    %9239 = vmatpush1.xpose.msra.mxu0 0.0
    %9240 = vmatprep.subr.mxu0 0.0
    %9241 = vmatpush1.xpose.msra.mxu0 0.0
    %9242 = vmatprep.subr.mxu0 0.0
    %9243 = vmatpush1.xpose.msra.mxu0 0.0
    %9244 = vmatprep.subr.mxu0 0.0
    %9245 = vmatpush1.xpose.msra.mxu0 0.0
    %9246 = vmatprep.subr.mxu0 0.0
    %9247 = vmatpush1.xpose.msra.mxu0 0.0
    %9248 = vmatprep.subr.mxu0 0.0
    %9249 = vmatpush1.xpose.msra.mxu0 0.0
    %9250 = vmatprep.subr.mxu0 0.0
    %9251 = vmatpush1.xpose.msra.mxu0 0.0
    %9252 = vmatprep.subr.mxu0 0.0
    %9253 = vmatpush1.xpose.msra.mxu0 0.0
    %9254 = vmatprep.subr.mxu0 0.0
    %9255 = vmatpush1.xpose.msra.mxu0 0.0
    %9256 = vmatprep.subr.mxu0 0.0
    %9257 = vmatpush1.xpose.msra.mxu0 0.0
    %9258 = vmatprep.subr.mxu0 0.0
    %9259 = vmatpush1.xpose.msra.mxu0 0.0
    %9260 = vmatprep.subr.mxu0 0.0
    %9261 = vmatpush1.xpose.msra.mxu0 0.0
    %9262 = vmatprep.subr.mxu0 0.0
    %9263 = vmatpush1.xpose.msra.mxu0 0.0
    %9264 = vmatprep.subr.mxu0 0.0
    %9265 = vmatpush1.xpose.msra.mxu0 0.0
    %9266 = vmatprep.subr.mxu0 0.0
    %9267 = vmatpush1.xpose.msra.mxu0 0.0
    %9268 = vmatprep.subr.mxu0 0.0
    %9269 = vmatpush1.xpose.msra.mxu0 0.0
    %9270 = vmatprep.subr.mxu0 0.0
    %9271 = vmatpush1.xpose.msra.mxu0 0.0
    %9272 = vmatprep.subr.mxu0 0.0
    %9273 = vmatpush1.xpose.msra.mxu0 0.0
    %9274 = vmatprep.subr.mxu0 0.0
    %9275 = vmatpush1.xpose.msra.mxu0 0.0
    %9276 = vmatprep.subr.mxu0 0.0
    %9277 = vmatpush1.xpose.msra.mxu0 0.0
    %9278 = vmatprep.mubr.f32.mxu0 0.0
    %9279 = vmatmul.mubr.f32.gmra.mrb[0].mxu0 %v9210
    %v9280 = vpop.f32.mrb[0].mxu0
    %v9281 = vadd.f32 0.0, %v9280
    %v9282 = vpop.f32.mrb[0].mxu0
    %9283 = vdwg.mxu0
    %9284 = vrot.lane.b32.xlu0 %v8935, 96
    %v9285 = vpop.permute.xlu0 %9284
    %9286 = vrot.lane.b32.xlu0 %v8593, 32
    %v9287 = vpop.permute.xlu0 %9286
    %v9288 = vsel %vm329, %v9285, 0
    %v9290 = vsel %vm329, %v9287, 0
    %9292 = vmatprep.subr.mxu0 0.0
    %9293 = vmatpush1.xpose.msra.mxu0 %v9290
    %9294 = vmatprep.subr.mxu0 0.0
    %9295 = vmatpush1.xpose.msra.mxu0 0.0
    %9296 = vmatprep.subr.mxu0 0.0
    %9297 = vmatpush1.xpose.msra.mxu0 0.0
    %9298 = vmatprep.subr.mxu0 0.0
    %9299 = vmatpush1.xpose.msra.mxu0 0.0
    %9300 = vmatprep.subr.mxu0 0.0
    %9301 = vmatpush1.xpose.msra.mxu0 0.0
    %9302 = vmatprep.subr.mxu0 0.0
    %9303 = vmatpush1.xpose.msra.mxu0 0.0
    %9304 = vmatprep.subr.mxu0 0.0
    %9305 = vmatpush1.xpose.msra.mxu0 0.0
    %9306 = vmatprep.subr.mxu0 0.0
    %9307 = vmatpush1.xpose.msra.mxu0 0.0
    %9308 = vmatprep.subr.mxu0 0.0
    %9309 = vmatpush1.xpose.msra.mxu0 0.0
    %9310 = vmatprep.subr.mxu0 0.0
    %9311 = vmatpush1.xpose.msra.mxu0 0.0
    %9312 = vmatprep.subr.mxu0 0.0
    %9313 = vmatpush1.xpose.msra.mxu0 0.0
    %9314 = vmatprep.subr.mxu0 0.0
    %9315 = vmatpush1.xpose.msra.mxu0 0.0
    %9316 = vmatprep.subr.mxu0 0.0
    %9317 = vmatpush1.xpose.msra.mxu0 0.0
    %9318 = vmatprep.subr.mxu0 0.0
    %9319 = vmatpush1.xpose.msra.mxu0 0.0
    %9320 = vmatprep.subr.mxu0 0.0
    %9321 = vmatpush1.xpose.msra.mxu0 0.0
    %9322 = vmatprep.subr.mxu0 0.0
    %9323 = vmatpush1.xpose.msra.mxu0 0.0
    %9324 = vmatprep.subr.mxu0 0.0
    %9325 = vmatpush1.xpose.msra.mxu0 0.0
    %9326 = vmatprep.subr.mxu0 0.0
    %9327 = vmatpush1.xpose.msra.mxu0 0.0
    %9328 = vmatprep.subr.mxu0 0.0
    %9329 = vmatpush1.xpose.msra.mxu0 0.0
    %9330 = vmatprep.subr.mxu0 0.0
    %9331 = vmatpush1.xpose.msra.mxu0 0.0
    %9332 = vmatprep.subr.mxu0 0.0
    %9333 = vmatpush1.xpose.msra.mxu0 0.0
    %9334 = vmatprep.subr.mxu0 0.0
    %9335 = vmatpush1.xpose.msra.mxu0 0.0
    %9336 = vmatprep.subr.mxu0 0.0
    %9337 = vmatpush1.xpose.msra.mxu0 0.0
    %9338 = vmatprep.subr.mxu0 0.0
    %9339 = vmatpush1.xpose.msra.mxu0 0.0
    %9340 = vmatprep.subr.mxu0 0.0
    %9341 = vmatpush1.xpose.msra.mxu0 0.0
    %9342 = vmatprep.subr.mxu0 0.0
    %9343 = vmatpush1.xpose.msra.mxu0 0.0
    %9344 = vmatprep.subr.mxu0 0.0
    %9345 = vmatpush1.xpose.msra.mxu0 0.0
    %9346 = vmatprep.subr.mxu0 0.0
    %9347 = vmatpush1.xpose.msra.mxu0 0.0
    %9348 = vmatprep.subr.mxu0 0.0
    %9349 = vmatpush1.xpose.msra.mxu0 0.0
    %9350 = vmatprep.subr.mxu0 0.0
    %9351 = vmatpush1.xpose.msra.mxu0 0.0
    %9352 = vmatprep.subr.mxu0 0.0
    %9353 = vmatpush1.xpose.msra.mxu0 0.0
    %9354 = vmatprep.subr.mxu0 0.0
    %9355 = vmatpush1.xpose.msra.mxu0 0.0
    %9356 = vmatprep.mubr.f32.mxu0 0.0
    %9357 = vmatmul.mubr.f32.gmra.mrb[0].mxu0 %v9288
    %v9358 = vpop.f32.mrb[0].mxu0
    %v9359 = vadd.f32 0.0, %v9358
    %v9360 = vpop.f32.mrb[0].mxu0
    %9361 = vdwg.mxu0
    %v9362 = vmul.f32 %v9281, 0.25
    %v9363 = vmul.f32 %v9359, 0.25
    %v9364 = vsel %vm489, %v9362, -inf
    %9365 = vmax.xlane.f32.xlu0 %v9364
    %v9366 = vpop.xlane.xlu0 %9365
    %v9367 = vsel %vm489, %v9363, -inf
    %9368 = vmax.xlane.f32.xlu0 %v9367
    %v9369 = vpop.xlane.xlu0 %9368
    %v9370 = vsub.f32 %v9362, %v9366
    %v9371 = vsub.f32 %v9363, %v9369
    %v9372 = vmul.f32 %v9370, 1.442695
    %v9373 = vpow.pop %v9372
    %v9374 = vmul.f32 %v9371, 1.442695
    %v9375 = vpow.pop %v9374
    %v9376 = vsel %vm489, %v9373, 0.0
    %9377 = vadd.xlane.f32.xlu0 %v9376
    %v9378 = vpop.xlane.xlu0 %9377
    %v9379 = vsel %vm489, %v9375, 0.0
    %9380 = vadd.xlane.f32.xlu0 %v9379
    %v9381 = vpop.xlane.xlu0 %9380
    %v9382 = vrcp.pop %v9378
    %v9383 = vrcp.pop %v9381
    %v9384 = vmul.f32 %v9373, %v9382
    %v9385 = vmul.f32 %v9375, %v9383
    %9386 = vrot.lane.b32.xlu0 %v9044, 96
    %v9387 = vpop.permute.xlu0 %9386
    %v9389 = vsel %vm512, %v9384, 0
    %v9391 = vsel %vm516, %v9387, 0
    %9393 = vmatprep.subr.mxu0 0.0
    %9394 = vmatpush1.msra.mxu0 %v9391
    %9395 = vmatprep.subr.mxu0 0.0
    %9396 = vmatpush1.msra.mxu0 0.0
    %9397 = vmatprep.subr.mxu0 0.0
    %9398 = vmatpush1.msra.mxu0 0.0
    %9399 = vmatprep.subr.mxu0 0.0
    %9400 = vmatpush1.msra.mxu0 0.0
    %9401 = vmatprep.subr.mxu0 0.0
    %9402 = vmatpush1.msra.mxu0 0.0
    %9403 = vmatprep.subr.mxu0 0.0
    %9404 = vmatpush1.msra.mxu0 0.0
    %9405 = vmatprep.subr.mxu0 0.0
    %9406 = vmatpush1.msra.mxu0 0.0
    %9407 = vmatprep.subr.mxu0 0.0
    %9408 = vmatpush1.msra.mxu0 0.0
    %9409 = vmatprep.subr.mxu0 0.0
    %9410 = vmatpush1.msra.mxu0 0.0
    %9411 = vmatprep.subr.mxu0 0.0
    %9412 = vmatpush1.msra.mxu0 0.0
    %9413 = vmatprep.subr.mxu0 0.0
    %9414 = vmatpush1.msra.mxu0 0.0
    %9415 = vmatprep.subr.mxu0 0.0
    %9416 = vmatpush1.msra.mxu0 0.0
    %9417 = vmatprep.subr.mxu0 0.0
    %9418 = vmatpush1.msra.mxu0 0.0
    %9419 = vmatprep.subr.mxu0 0.0
    %9420 = vmatpush1.msra.mxu0 0.0
    %9421 = vmatprep.subr.mxu0 0.0
    %9422 = vmatpush1.msra.mxu0 0.0
    %9423 = vmatprep.subr.mxu0 0.0
    %9424 = vmatpush1.msra.mxu0 0.0
    %9425 = vmatprep.subr.mxu0 0.0
    %9426 = vmatpush1.msra.mxu0 0.0
    %9427 = vmatprep.subr.mxu0 0.0
    %9428 = vmatpush1.msra.mxu0 0.0
    %9429 = vmatprep.subr.mxu0 0.0
    %9430 = vmatpush1.msra.mxu0 0.0
    %9431 = vmatprep.subr.mxu0 0.0
    %9432 = vmatpush1.msra.mxu0 0.0
    %9433 = vmatprep.subr.mxu0 0.0
    %9434 = vmatpush1.msra.mxu0 0.0
    %9435 = vmatprep.subr.mxu0 0.0
    %9436 = vmatpush1.msra.mxu0 0.0
    %9437 = vmatprep.subr.mxu0 0.0
    %9438 = vmatpush1.msra.mxu0 0.0
    %9439 = vmatprep.subr.mxu0 0.0
    %9440 = vmatpush1.msra.mxu0 0.0
    %9441 = vmatprep.subr.mxu0 0.0
    %9442 = vmatpush1.msra.mxu0 0.0
    %9443 = vmatprep.subr.mxu0 0.0
    %9444 = vmatpush1.msra.mxu0 0.0
    %9445 = vmatprep.subr.mxu0 0.0
    %9446 = vmatpush1.msra.mxu0 0.0
    %9447 = vmatprep.subr.mxu0 0.0
    %9448 = vmatpush1.msra.mxu0 0.0
    %9449 = vmatprep.subr.mxu0 0.0
    %9450 = vmatpush1.msra.mxu0 0.0
    %9451 = vmatprep.subr.mxu0 0.0
    %9452 = vmatpush1.msra.mxu0 0.0
    %9453 = vmatprep.subr.mxu0 0.0
    %9454 = vmatpush1.msra.mxu0 0.0
    %9455 = vmatprep.subr.mxu0 0.0
    %9456 = vmatpush1.msra.mxu0 0.0
    %9457 = vmatprep.mubr.f32.mxu0 0.0
    %9458 = vmatmul.mubr.f32.gmra.mrb[0].mxu0 %v9389
    %v9459 = vpop.f32.mrb[0].mxu0
    %v9460 = vadd.f32 0.0, %v9459
    %v9461 = vpop.f32.mrb[0].mxu0
    %9462 = vdwg.mxu0
    %9463 = vrot.lane.b32.xlu0 %v9128, 96
    %v9464 = vpop.permute.xlu0 %9463
    %v9466 = vsel %vm512, %v9385, 0
    %v9468 = vsel %vm516, %v9464, 0
    %9470 = vmatprep.subr.mxu0 0.0
    %9471 = vmatpush1.msra.mxu0 %v9468
    %9472 = vmatprep.subr.mxu0 0.0
    %9473 = vmatpush1.msra.mxu0 0.0
    %9474 = vmatprep.subr.mxu0 0.0
    %9475 = vmatpush1.msra.mxu0 0.0
    %9476 = vmatprep.subr.mxu0 0.0
    %9477 = vmatpush1.msra.mxu0 0.0
    %9478 = vmatprep.subr.mxu0 0.0
    %9479 = vmatpush1.msra.mxu0 0.0
    %9480 = vmatprep.subr.mxu0 0.0
    %9481 = vmatpush1.msra.mxu0 0.0
    %9482 = vmatprep.subr.mxu0 0.0
    %9483 = vmatpush1.msra.mxu0 0.0
    %9484 = vmatprep.subr.mxu0 0.0
    %9485 = vmatpush1.msra.mxu0 0.0
    %9486 = vmatprep.subr.mxu0 0.0
    %9487 = vmatpush1.msra.mxu0 0.0
    %9488 = vmatprep.subr.mxu0 0.0
    %9489 = vmatpush1.msra.mxu0 0.0
    %9490 = vmatprep.subr.mxu0 0.0
    %9491 = vmatpush1.msra.mxu0 0.0
    %9492 = vmatprep.subr.mxu0 0.0
    %9493 = vmatpush1.msra.mxu0 0.0
    %9494 = vmatprep.subr.mxu0 0.0
    %9495 = vmatpush1.msra.mxu0 0.0
    %9496 = vmatprep.subr.mxu0 0.0
    %9497 = vmatpush1.msra.mxu0 0.0
    %9498 = vmatprep.subr.mxu0 0.0
    %9499 = vmatpush1.msra.mxu0 0.0
    %9500 = vmatprep.subr.mxu0 0.0
    %9501 = vmatpush1.msra.mxu0 0.0
    %9502 = vmatprep.subr.mxu0 0.0
    %9503 = vmatpush1.msra.mxu0 0.0
    %9504 = vmatprep.subr.mxu0 0.0
    %9505 = vmatpush1.msra.mxu0 0.0
    %9506 = vmatprep.subr.mxu0 0.0
    %9507 = vmatpush1.msra.mxu0 0.0
    %9508 = vmatprep.subr.mxu0 0.0
    %9509 = vmatpush1.msra.mxu0 0.0
    %9510 = vmatprep.subr.mxu0 0.0
    %9511 = vmatpush1.msra.mxu0 0.0
    %9512 = vmatprep.subr.mxu0 0.0
    %9513 = vmatpush1.msra.mxu0 0.0
    %9514 = vmatprep.subr.mxu0 0.0
    %9515 = vmatpush1.msra.mxu0 0.0
    %9516 = vmatprep.subr.mxu0 0.0
    %9517 = vmatpush1.msra.mxu0 0.0
    %9518 = vmatprep.subr.mxu0 0.0
    %9519 = vmatpush1.msra.mxu0 0.0
    %9520 = vmatprep.subr.mxu0 0.0
    %9521 = vmatpush1.msra.mxu0 0.0
    %9522 = vmatprep.subr.mxu0 0.0
    %9523 = vmatpush1.msra.mxu0 0.0
    %9524 = vmatprep.subr.mxu0 0.0
    %9525 = vmatpush1.msra.mxu0 0.0
    %9526 = vmatprep.subr.mxu0 0.0
    %9527 = vmatpush1.msra.mxu0 0.0
    %9528 = vmatprep.subr.mxu0 0.0
    %9529 = vmatpush1.msra.mxu0 0.0
    %9530 = vmatprep.subr.mxu0 0.0
    %9531 = vmatpush1.msra.mxu0 0.0
    %9532 = vmatprep.subr.mxu0 0.0
    %9533 = vmatpush1.msra.mxu0 0.0
    %9534 = vmatprep.mubr.f32.mxu0 0.0
    %9535 = vmatmul.mubr.f32.gmra.mrb[0].mxu0 %v9466
    %v9536 = vpop.f32.mrb[0].mxu0
    %v9537 = vadd.f32 0.0, %v9536
    %v9538 = vpop.f32.mrb[0].mxu0
    %9539 = vdwg.mxu0
    %9540 = vrot.lane.b32.xlu0 %v8850, 80
    %v9541 = vpop.permute.xlu0 %9540
    %9542 = vrot.lane.b32.xlu0 %v8510, 16
    %v9543 = vpop.permute.xlu0 %9542
    %v9544 = vsel %vm329, %v9541, 0
    %v9546 = vsel %vm329, %v9543, 0
    %9548 = vmatprep.subr.mxu0 0.0
    %9549 = vmatpush1.xpose.msra.mxu0 %v9546
    %9550 = vmatprep.subr.mxu0 0.0
    %9551 = vmatpush1.xpose.msra.mxu0 0.0
    %9552 = vmatprep.subr.mxu0 0.0
    %9553 = vmatpush1.xpose.msra.mxu0 0.0
    %9554 = vmatprep.subr.mxu0 0.0
    %9555 = vmatpush1.xpose.msra.mxu0 0.0
    %9556 = vmatprep.subr.mxu0 0.0
    %9557 = vmatpush1.xpose.msra.mxu0 0.0
    %9558 = vmatprep.subr.mxu0 0.0
    %9559 = vmatpush1.xpose.msra.mxu0 0.0
    %9560 = vmatprep.subr.mxu0 0.0
    %9561 = vmatpush1.xpose.msra.mxu0 0.0
    %9562 = vmatprep.subr.mxu0 0.0
    %9563 = vmatpush1.xpose.msra.mxu0 0.0
    %9564 = vmatprep.subr.mxu0 0.0
    %9565 = vmatpush1.xpose.msra.mxu0 0.0
    %9566 = vmatprep.subr.mxu0 0.0
    %9567 = vmatpush1.xpose.msra.mxu0 0.0
    %9568 = vmatprep.subr.mxu0 0.0
    %9569 = vmatpush1.xpose.msra.mxu0 0.0
    %9570 = vmatprep.subr.mxu0 0.0
    %9571 = vmatpush1.xpose.msra.mxu0 0.0
    %9572 = vmatprep.subr.mxu0 0.0
    %9573 = vmatpush1.xpose.msra.mxu0 0.0
    %9574 = vmatprep.subr.mxu0 0.0
    %9575 = vmatpush1.xpose.msra.mxu0 0.0
    %9576 = vmatprep.subr.mxu0 0.0
    %9577 = vmatpush1.xpose.msra.mxu0 0.0
    %9578 = vmatprep.subr.mxu0 0.0
    %9579 = vmatpush1.xpose.msra.mxu0 0.0
    %9580 = vmatprep.subr.mxu0 0.0
    %9581 = vmatpush1.xpose.msra.mxu0 0.0
    %9582 = vmatprep.subr.mxu0 0.0
    %9583 = vmatpush1.xpose.msra.mxu0 0.0
    %9584 = vmatprep.subr.mxu0 0.0
    %9585 = vmatpush1.xpose.msra.mxu0 0.0
    %9586 = vmatprep.subr.mxu0 0.0
    %9587 = vmatpush1.xpose.msra.mxu0 0.0
    %9588 = vmatprep.subr.mxu0 0.0
    %9589 = vmatpush1.xpose.msra.mxu0 0.0
    %9590 = vmatprep.subr.mxu0 0.0
    %9591 = vmatpush1.xpose.msra.mxu0 0.0
    %9592 = vmatprep.subr.mxu0 0.0
    %9593 = vmatpush1.xpose.msra.mxu0 0.0
    %9594 = vmatprep.subr.mxu0 0.0
    %9595 = vmatpush1.xpose.msra.mxu0 0.0
    %9596 = vmatprep.subr.mxu0 0.0
    %9597 = vmatpush1.xpose.msra.mxu0 0.0
    %9598 = vmatprep.subr.mxu0 0.0
    %9599 = vmatpush1.xpose.msra.mxu0 0.0
    %9600 = vmatprep.subr.mxu0 0.0
    %9601 = vmatpush1.xpose.msra.mxu0 0.0
    %9602 = vmatprep.subr.mxu0 0.0
    %9603 = vmatpush1.xpose.msra.mxu0 0.0
    %9604 = vmatprep.subr.mxu0 0.0
    %9605 = vmatpush1.xpose.msra.mxu0 0.0
    %9606 = vmatprep.subr.mxu0 0.0
    %9607 = vmatpush1.xpose.msra.mxu0 0.0
    %9608 = vmatprep.subr.mxu0 0.0
    %9609 = vmatpush1.xpose.msra.mxu0 0.0
    %9610 = vmatprep.subr.mxu0 0.0
    %9611 = vmatpush1.xpose.msra.mxu0 0.0
    %9612 = vmatprep.mubr.f32.mxu0 0.0
    %9613 = vmatmul.mubr.f32.gmra.mrb[0].mxu0 %v9544
    %v9614 = vpop.f32.mrb[0].mxu0
    %v9615 = vadd.f32 0.0, %v9614
    %v9616 = vpop.f32.mrb[0].mxu0
    %9617 = vdwg.mxu0
    %9618 = vrot.lane.b32.xlu0 %v8935, 80
    %v9619 = vpop.permute.xlu0 %9618
    %9620 = vrot.lane.b32.xlu0 %v8593, 16
    %v9621 = vpop.permute.xlu0 %9620
    %v9622 = vsel %vm329, %v9619, 0
    %v9624 = vsel %vm329, %v9621, 0
    %9626 = vmatprep.subr.mxu0 0.0
    %9627 = vmatpush1.xpose.msra.mxu0 %v9624
    %9628 = vmatprep.subr.mxu0 0.0
    %9629 = vmatpush1.xpose.msra.mxu0 0.0
    %9630 = vmatprep.subr.mxu0 0.0
    %9631 = vmatpush1.xpose.msra.mxu0 0.0
    %9632 = vmatprep.subr.mxu0 0.0
    %9633 = vmatpush1.xpose.msra.mxu0 0.0
    %9634 = vmatprep.subr.mxu0 0.0
    %9635 = vmatpush1.xpose.msra.mxu0 0.0
    %9636 = vmatprep.subr.mxu0 0.0
    %9637 = vmatpush1.xpose.msra.mxu0 0.0
    %9638 = vmatprep.subr.mxu0 0.0
    %9639 = vmatpush1.xpose.msra.mxu0 0.0
    %9640 = vmatprep.subr.mxu0 0.0
    %9641 = vmatpush1.xpose.msra.mxu0 0.0
    %9642 = vmatprep.subr.mxu0 0.0
    %9643 = vmatpush1.xpose.msra.mxu0 0.0
    %9644 = vmatprep.subr.mxu0 0.0
    %9645 = vmatpush1.xpose.msra.mxu0 0.0
    %9646 = vmatprep.subr.mxu0 0.0
    %9647 = vmatpush1.xpose.msra.mxu0 0.0
    %9648 = vmatprep.subr.mxu0 0.0
    %9649 = vmatpush1.xpose.msra.mxu0 0.0
    %9650 = vmatprep.subr.mxu0 0.0
    %9651 = vmatpush1.xpose.msra.mxu0 0.0
    %9652 = vmatprep.subr.mxu0 0.0
    %9653 = vmatpush1.xpose.msra.mxu0 0.0
    %9654 = vmatprep.subr.mxu0 0.0
    %9655 = vmatpush1.xpose.msra.mxu0 0.0
    %9656 = vmatprep.subr.mxu0 0.0
    %9657 = vmatpush1.xpose.msra.mxu0 0.0
    %9658 = vmatprep.subr.mxu0 0.0
    %9659 = vmatpush1.xpose.msra.mxu0 0.0
    %9660 = vmatprep.subr.mxu0 0.0
    %9661 = vmatpush1.xpose.msra.mxu0 0.0
    %9662 = vmatprep.subr.mxu0 0.0
    %9663 = vmatpush1.xpose.msra.mxu0 0.0
    %9664 = vmatprep.subr.mxu0 0.0
    %9665 = vmatpush1.xpose.msra.mxu0 0.0
    %9666 = vmatprep.subr.mxu0 0.0
    %9667 = vmatpush1.xpose.msra.mxu0 0.0
    %9668 = vmatprep.subr.mxu0 0.0
    %9669 = vmatpush1.xpose.msra.mxu0 0.0
    %9670 = vmatprep.subr.mxu0 0.0
    %9671 = vmatpush1.xpose.msra.mxu0 0.0
    %9672 = vmatprep.subr.mxu0 0.0
    %9673 = vmatpush1.xpose.msra.mxu0 0.0
    %9674 = vmatprep.subr.mxu0 0.0
    %9675 = vmatpush1.xpose.msra.mxu0 0.0
    %9676 = vmatprep.subr.mxu0 0.0
    %9677 = vmatpush1.xpose.msra.mxu0 0.0
    %9678 = vmatprep.subr.mxu0 0.0
    %9679 = vmatpush1.xpose.msra.mxu0 0.0
    %9680 = vmatprep.subr.mxu0 0.0
    %9681 = vmatpush1.xpose.msra.mxu0 0.0
    %9682 = vmatprep.subr.mxu0 0.0
    %9683 = vmatpush1.xpose.msra.mxu0 0.0
    %9684 = vmatprep.subr.mxu0 0.0
    %9685 = vmatpush1.xpose.msra.mxu0 0.0
    %9686 = vmatprep.subr.mxu0 0.0
    %9687 = vmatpush1.xpose.msra.mxu0 0.0
    %9688 = vmatprep.subr.mxu0 0.0
    %9689 = vmatpush1.xpose.msra.mxu0 0.0
    %9690 = vmatprep.mubr.f32.mxu0 0.0
    %9691 = vmatmul.mubr.f32.gmra.mrb[0].mxu0 %v9622
    %v9692 = vpop.f32.mrb[0].mxu0
    %v9693 = vadd.f32 0.0, %v9692
    %v9694 = vpop.f32.mrb[0].mxu0
    %9695 = vdwg.mxu0
    %v9696 = vmul.f32 %v9615, 0.25
    %v9697 = vmul.f32 %v9693, 0.25
    %v9698 = vsel %vm489, %v9696, -inf
    %9699 = vmax.xlane.f32.xlu0 %v9698
    %v9700 = vpop.xlane.xlu0 %9699
    %v9701 = vsel %vm489, %v9697, -inf
    %9702 = vmax.xlane.f32.xlu0 %v9701
    %v9703 = vpop.xlane.xlu0 %9702
    %v9704 = vsub.f32 %v9696, %v9700
    %v9705 = vsub.f32 %v9697, %v9703
    %v9706 = vmul.f32 %v9704, 1.442695
    %v9707 = vpow.pop %v9706
    %v9708 = vmul.f32 %v9705, 1.442695
    %v9709 = vpow.pop %v9708
    %v9710 = vsel %vm489, %v9707, 0.0
    %9711 = vadd.xlane.f32.xlu0 %v9710
    %v9712 = vpop.xlane.xlu0 %9711
    %v9713 = vsel %vm489, %v9709, 0.0
    %9714 = vadd.xlane.f32.xlu0 %v9713
    %v9715 = vpop.xlane.xlu0 %9714
    %v9716 = vrcp.pop %v9712
    %v9717 = vrcp.pop %v9715
    %v9718 = vmul.f32 %v9707, %v9716
    %v9719 = vmul.f32 %v9709, %v9717
    %9720 = vrot.lane.b32.xlu0 %v9044, 80
    %v9721 = vpop.permute.xlu0 %9720
    %v9723 = vsel %vm512, %v9718, 0
    %v9725 = vsel %vm516, %v9721, 0
    %9727 = vmatprep.subr.mxu0 0.0
    %9728 = vmatpush1.msra.mxu0 %v9725
    %9729 = vmatprep.subr.mxu0 0.0
    %9730 = vmatpush1.msra.mxu0 0.0
    %9731 = vmatprep.subr.mxu0 0.0
    %9732 = vmatpush1.msra.mxu0 0.0
    %9733 = vmatprep.subr.mxu0 0.0
    %9734 = vmatpush1.msra.mxu0 0.0
    %9735 = vmatprep.subr.mxu0 0.0
    %9736 = vmatpush1.msra.mxu0 0.0
    %9737 = vmatprep.subr.mxu0 0.0
    %9738 = vmatpush1.msra.mxu0 0.0
    %9739 = vmatprep.subr.mxu0 0.0
    %9740 = vmatpush1.msra.mxu0 0.0
    %9741 = vmatprep.subr.mxu0 0.0
    %9742 = vmatpush1.msra.mxu0 0.0
    %9743 = vmatprep.subr.mxu0 0.0
    %9744 = vmatpush1.msra.mxu0 0.0
    %9745 = vmatprep.subr.mxu0 0.0
    %9746 = vmatpush1.msra.mxu0 0.0
    %9747 = vmatprep.subr.mxu0 0.0
    %9748 = vmatpush1.msra.mxu0 0.0
    %9749 = vmatprep.subr.mxu0 0.0
    %9750 = vmatpush1.msra.mxu0 0.0
    %9751 = vmatprep.subr.mxu0 0.0
    %9752 = vmatpush1.msra.mxu0 0.0
    %9753 = vmatprep.subr.mxu0 0.0
    %9754 = vmatpush1.msra.mxu0 0.0
    %9755 = vmatprep.subr.mxu0 0.0
    %9756 = vmatpush1.msra.mxu0 0.0
    %9757 = vmatprep.subr.mxu0 0.0
    %9758 = vmatpush1.msra.mxu0 0.0
    %9759 = vmatprep.subr.mxu0 0.0
    %9760 = vmatpush1.msra.mxu0 0.0
    %9761 = vmatprep.subr.mxu0 0.0
    %9762 = vmatpush1.msra.mxu0 0.0
    %9763 = vmatprep.subr.mxu0 0.0
    %9764 = vmatpush1.msra.mxu0 0.0
    %9765 = vmatprep.subr.mxu0 0.0
    %9766 = vmatpush1.msra.mxu0 0.0
    %9767 = vmatprep.subr.mxu0 0.0
    %9768 = vmatpush1.msra.mxu0 0.0
    %9769 = vmatprep.subr.mxu0 0.0
    %9770 = vmatpush1.msra.mxu0 0.0
    %9771 = vmatprep.subr.mxu0 0.0
    %9772 = vmatpush1.msra.mxu0 0.0
    %9773 = vmatprep.subr.mxu0 0.0
    %9774 = vmatpush1.msra.mxu0 0.0
    %9775 = vmatprep.subr.mxu0 0.0
    %9776 = vmatpush1.msra.mxu0 0.0
    %9777 = vmatprep.subr.mxu0 0.0
    %9778 = vmatpush1.msra.mxu0 0.0
    %9779 = vmatprep.subr.mxu0 0.0
    %9780 = vmatpush1.msra.mxu0 0.0
    %9781 = vmatprep.subr.mxu0 0.0
    %9782 = vmatpush1.msra.mxu0 0.0
    %9783 = vmatprep.subr.mxu0 0.0
    %9784 = vmatpush1.msra.mxu0 0.0
    %9785 = vmatprep.subr.mxu0 0.0
    %9786 = vmatpush1.msra.mxu0 0.0
    %9787 = vmatprep.subr.mxu0 0.0
    %9788 = vmatpush1.msra.mxu0 0.0
    %9789 = vmatprep.subr.mxu0 0.0
    %9790 = vmatpush1.msra.mxu0 0.0
    %9791 = vmatprep.mubr.f32.mxu0 0.0
    %9792 = vmatmul.mubr.f32.gmra.mrb[0].mxu0 %v9723
    %v9793 = vpop.f32.mrb[0].mxu0
    %v9794 = vadd.f32 0.0, %v9793
    %v9795 = vpop.f32.mrb[0].mxu0
    %9796 = vdwg.mxu0
    %9797 = vrot.lane.b32.xlu0 %v9128, 80
    %v9798 = vpop.permute.xlu0 %9797
    %v9800 = vsel %vm512, %v9719, 0
    %v9802 = vsel %vm516, %v9798, 0
    %9804 = vmatprep.subr.mxu0 0.0
    %9805 = vmatpush1.msra.mxu0 %v9802
    %9806 = vmatprep.subr.mxu0 0.0
    %9807 = vmatpush1.msra.mxu0 0.0
    %9808 = vmatprep.subr.mxu0 0.0
    %9809 = vmatpush1.msra.mxu0 0.0
    %9810 = vmatprep.subr.mxu0 0.0
    %9811 = vmatpush1.msra.mxu0 0.0
    %9812 = vmatprep.subr.mxu0 0.0
    %9813 = vmatpush1.msra.mxu0 0.0
    %9814 = vmatprep.subr.mxu0 0.0
    %9815 = vmatpush1.msra.mxu0 0.0
    %9816 = vmatprep.subr.mxu0 0.0
    %9817 = vmatpush1.msra.mxu0 0.0
    %9818 = vmatprep.subr.mxu0 0.0
    %9819 = vmatpush1.msra.mxu0 0.0
    %9820 = vmatprep.subr.mxu0 0.0
    %9821 = vmatpush1.msra.mxu0 0.0
    %9822 = vmatprep.subr.mxu0 0.0
    %9823 = vmatpush1.msra.mxu0 0.0
    %9824 = vmatprep.subr.mxu0 0.0
    %9825 = vmatpush1.msra.mxu0 0.0
    %9826 = vmatprep.subr.mxu0 0.0
    %9827 = vmatpush1.msra.mxu0 0.0
    %9828 = vmatprep.subr.mxu0 0.0
    %9829 = vmatpush1.msra.mxu0 0.0
    %9830 = vmatprep.subr.mxu0 0.0
    %9831 = vmatpush1.msra.mxu0 0.0
    %9832 = vmatprep.subr.mxu0 0.0
    %9833 = vmatpush1.msra.mxu0 0.0
    %9834 = vmatprep.subr.mxu0 0.0
    %9835 = vmatpush1.msra.mxu0 0.0
    %9836 = vmatprep.subr.mxu0 0.0
    %9837 = vmatpush1.msra.mxu0 0.0
    %9838 = vmatprep.subr.mxu0 0.0
    %9839 = vmatpush1.msra.mxu0 0.0
    %9840 = vmatprep.subr.mxu0 0.0
    %9841 = vmatpush1.msra.mxu0 0.0
    %9842 = vmatprep.subr.mxu0 0.0
    %9843 = vmatpush1.msra.mxu0 0.0
    %9844 = vmatprep.subr.mxu0 0.0
    %9845 = vmatpush1.msra.mxu0 0.0
    %9846 = vmatprep.subr.mxu0 0.0
    %9847 = vmatpush1.msra.mxu0 0.0
    %9848 = vmatprep.subr.mxu0 0.0
    %9849 = vmatpush1.msra.mxu0 0.0
    %9850 = vmatprep.subr.mxu0 0.0
    %9851 = vmatpush1.msra.mxu0 0.0
    %9852 = vmatprep.subr.mxu0 0.0
    %9853 = vmatpush1.msra.mxu0 0.0
    %9854 = vmatprep.subr.mxu0 0.0
    %9855 = vmatpush1.msra.mxu0 0.0
    %9856 = vmatprep.subr.mxu0 0.0
    %9857 = vmatpush1.msra.mxu0 0.0
    %9858 = vmatprep.subr.mxu0 0.0
    %9859 = vmatpush1.msra.mxu0 0.0
    %9860 = vmatprep.subr.mxu0 0.0
    %9861 = vmatpush1.msra.mxu0 0.0
    %9862 = vmatprep.subr.mxu0 0.0
    %9863 = vmatpush1.msra.mxu0 0.0
    %9864 = vmatprep.subr.mxu0 0.0
    %9865 = vmatpush1.msra.mxu0 0.0
    %9866 = vmatprep.subr.mxu0 0.0
    %9867 = vmatpush1.msra.mxu0 0.0
    %9868 = vmatprep.mubr.f32.mxu0 0.0
    %9869 = vmatmul.mubr.f32.gmra.mrb[0].mxu0 %v9800
    %v9870 = vpop.f32.mrb[0].mxu0
    %v9871 = vadd.f32 0.0, %v9870
    %v9872 = vpop.f32.mrb[0].mxu0
    %9873 = vdwg.mxu0
    %v9876 = vcombine.low %v8766, %v8841
    %v9878 = vunpack.c.l.s4 1983009808
    %v9879 = vunpack.c.0.s8 %v9878
    %v9880 = vlaneseq
    %v9881 = vshrl.u32 %v9880, 7
    %v9882 = vsub.s32 %v9879, %v9881
    %v9883 = vrot.slane %v9876, %v9882
    %v9887 = vcombine.low %v9119, %v9203
    %v9889 = vunpack.c.l.s4 1983009808
    %v9890 = vunpack.c.0.s8 %v9889
    %v9891 = vlaneseq
    %v9892 = vshrl.u32 %v9891, 7
    %v9893 = vsub.s32 %v9890, %v9892
    %v9894 = vrot.slane %v9887, %v9893
    %9895 = vrot.lane.b32.xlu0 %v9894, 16
    %v9896 = vpop.permute.xlu0 %9895
    %v9900 = vcombine.low %v9460, %v9537
    %v9902 = vunpack.c.l.s4 1983009808
    %v9903 = vunpack.c.0.s8 %v9902
    %v9904 = vlaneseq
    %v9905 = vshrl.u32 %v9904, 7
    %v9906 = vsub.s32 %v9903, %v9905
    %v9907 = vrot.slane %v9900, %v9906
    %9908 = vrot.lane.b32.xlu0 %v9907, 32
    %v9909 = vpop.permute.xlu0 %9908
    %v9913 = vcombine.low %v9794, %v9871
    %v9915 = vunpack.c.l.s4 1983009808
    %v9916 = vunpack.c.0.s8 %v9915
    %v9917 = vlaneseq
    %v9918 = vshrl.u32 %v9917, 7
    %v9919 = vsub.s32 %v9916, %v9918
    %v9920 = vrot.slane %v9913, %v9919
    %9921 = vrot.lane.b32.xlu0 %v9920, 48
    %v9922 = vpop.permute.xlu0 %9921
    %v9924 = vsel %vm329, %v9883, %v9896
    %v9925 = vsel %vm1745, %v9924, %v9909
    %v9926 = vsel %vm1747, %v9925, %v9922
    %s9927 = scalar_lea.vmem %s5, 64
    %v9928 = vld [vmem:[%s9927] sm:$0xf]
    %v9929 = vld [vmem:[%s9927 + $0x4] sm:$0xf]
    %v9930 = vld [vmem:[%s9927 + $0x8] sm:$0xf]
    %v9931 = vld [vmem:[%s9927 + $0xc] sm:$0xf]
    %v9932 = vld [vmem:[%s9927 + $0x10] sm:$0xf]
    %v9933 = vld [vmem:[%s9927 + $0x14] sm:$0xf]
    %v9934 = vld [vmem:[%s9927 + $0x18] sm:$0xf]
    %v9935 = vld [vmem:[%s9927 + $0x1c] sm:$0xf]
    %v9936 = vpack.c.bf16 %v9926, %v9926
    %v9937 = vlaneseq
    %v9938 = vshrl.u32 %v9937, 7
    %v9939 = vsub.s32 3, %v9938
    %v9940 = vrot.slane %v8351, %v9939
    %v9949 = vunpack.c.l.b16 %v9928
    %v9950 = vunpack.c.l.b16 %v9929
    %v9951 = vunpack.c.l.b16 %v9930
    %v9952 = vunpack.c.l.b16 %v9931
    %v9953 = vunpack.c.l.b16 %v9932
    %v9954 = vunpack.c.l.b16 %v9933
    %v9955 = vunpack.c.l.b16 %v9934
    %v9956 = vunpack.c.l.b16 %v9935
    %v9957 = vpack.c.b16 %v9950, %v9949
    %v9958 = vpack.c.b16 %v9952, %v9951
    %v9959 = vpack.c.b16 %v9954, %v9953
    %v9960 = vpack.c.b16 %v9956, %v9955
    %v9966 = vsel %vm229, %v9936, 0
    %9968 = vmatprep.subr.bf16.mxu0 0
    %9969 = vmatpush1.bf16.msra.mxu0 %v9957
    %9970 = vmatprep.subr.bf16.mxu0 0
    %9971 = vmatpush1.bf16.msra.mxu0 %v9958
    %9972 = vmatprep.subr.bf16.mxu0 0
    %9973 = vmatpush1.bf16.msra.mxu0 %v9959
    %9974 = vmatprep.subr.bf16.mxu0 0
    %9975 = vmatpush1.bf16.msra.mxu0 %v9960
    %9976 = vmatprep.subr.bf16.mxu0 0
    %9977 = vmatpush1.bf16.msra.mxu0 0
    %9978 = vmatprep.subr.bf16.mxu0 0
    %9979 = vmatpush1.bf16.msra.mxu0 0
    %9980 = vmatprep.subr.bf16.mxu0 0
    %9981 = vmatpush1.bf16.msra.mxu0 0
    %9982 = vmatprep.subr.bf16.mxu0 0
    %9983 = vmatpush1.bf16.msra.mxu0 0
    %9984 = vmatprep.subr.bf16.mxu0 0
    %9985 = vmatpush1.bf16.msra.mxu0 0
    %9986 = vmatprep.subr.bf16.mxu0 0
    %9987 = vmatpush1.bf16.msra.mxu0 0
    %9988 = vmatprep.subr.bf16.mxu0 0
    %9989 = vmatpush1.bf16.msra.mxu0 0
    %9990 = vmatprep.subr.bf16.mxu0 0
    %9991 = vmatpush1.bf16.msra.mxu0 0
    %9992 = vmatprep.subr.bf16.mxu0 0
    %9993 = vmatpush1.bf16.msra.mxu0 0
    %9994 = vmatprep.subr.bf16.mxu0 0
    %9995 = vmatpush1.bf16.msra.mxu0 0
    %9996 = vmatprep.subr.bf16.mxu0 0
    %9997 = vmatpush1.bf16.msra.mxu0 0
    %9998 = vmatprep.subr.bf16.mxu0 0
    %9999 = vmatpush1.bf16.msra.mxu0 0
    %10000 = vmatprep.mubr.bf16.mxu0 0
    %10001 = vmatmul.mubr.bf16.gmra.mrb[0].mxu0 %v9966
    %v10002 = vpop.f32.mrb[0].mxu0
    %v10003 = vadd.f32 %v9940, %v10002
    %v10004 = vpop.f32.mrb[0].mxu0
    %v10005 = vpop.f32.mrb[0].mxu0
    %v10006 = vpop.f32.mrb[0].mxu0
    %10007 = vdwg.mxu0
    %v10010 = vunpack.c.l.s4 1983009808
    %v10011 = vunpack.c.0.s8 %v10010
    %v10012 = vlaneseq
    %v10013 = vshrl.u32 %v10012, 7
    %v10014 = vsub.s32 %v10011, %v10013
    %v10015 = vrot.slane %v10003, %v10014
    %v10016 = vcombine.high %v10015, %v10015
    %v10019 = vadd.f32 %v8348, %v10015
    %v10020 = vadd.f32 %v8349, %v10016
    %v10023 = vcombine.low %v10019, %v10020
    %v10025 = vunpack.c.l.s4 1983009808
    %v10026 = vunpack.c.0.s8 %v10025
    %v10027 = vlaneseq
    %v10028 = vshrl.u32 %v10027, 7
    %v10029 = vsub.s32 %v10026, %v10028
    %v10030 = vrot.slane %v10023, %v10029
    %v10032 = vsel %vm1853, %v10030, 0.0
    %10033 = vadd.xlane.f32.xlu0 %v10032
    %v10034 = vpop.xlane.xlu0 %10033
    %v10035 = vmul.f32 %v10034, %v1857
    %v10038 = vunpack.c.l.s4 269488144
    %v10039 = vunpack.c.0.s8 %v10038
    %v10040 = vlaneseq
    %v10041 = vshrl.u32 %v10040, 7
    %v10042 = vsub.s32 %v10039, %v10041
    %v10043 = vrot.slane %v10035, %v10042
    %v10045 = vunpack.c.l.s4 842150450
    %v10046 = vunpack.c.0.s8 %v10045
    %v10047 = vlaneseq
    %v10048 = vshrl.u32 %v10047, 7
    %v10049 = vsub.s32 %v10046, %v10048
    %v10050 = vrot.slane %v10035, %v10049
    %v10053 = vsub.f32 %v10019, %v10043
    %v10054 = vsub.f32 %v10020, %v10050
    %v10055 = vmul.f32 %v10053, %v10053
    %v10056 = vmul.f32 %v10054, %v10054
    %v10059 = vcombine.low %v10055, %v10056
    %v10061 = vunpack.c.l.s4 1983009808
    %v10062 = vunpack.c.0.s8 %v10061
    %v10063 = vlaneseq
    %v10064 = vshrl.u32 %v10063, 7
    %v10065 = vsub.s32 %v10062, %v10064
    %v10066 = vrot.slane %v10059, %v10065
    %v10068 = vsel %vm1853, %v10066, 0.0
    %10069 = vadd.xlane.f32.xlu0 %v10068
    %v10070 = vpop.xlane.xlu0 %10069
    %v10071 = vmul.f32 %v10070, %v1857
    %v10072 = vadd.f32 %v10071, 1e-05
    %v10073 = vrsqrt.pop %v10072
    %v10076 = vunpack.c.l.s4 269488144
    %v10077 = vunpack.c.0.s8 %v10076
    %v10078 = vlaneseq
    %v10079 = vshrl.u32 %v10078, 7
    %v10080 = vsub.s32 %v10077, %v10079
    %v10081 = vrot.slane %v10073, %v10080
    %v10083 = vunpack.c.l.s4 842150450
    %v10084 = vunpack.c.0.s8 %v10083
    %v10085 = vlaneseq
    %v10086 = vshrl.u32 %v10085, 7
    %v10087 = vsub.s32 %v10084, %v10086
    %v10088 = vrot.slane %v10073, %v10087
    %v10091 = vmul.f32 %v10053, %v10081
    %v10092 = vmul.f32 %v10054, %v10088
    %v10093 = vlaneseq
    %v10094 = vshrl.u32 %v10093, 7
    %v10095 = vsub.s32 4, %v10094
    %v10096 = vrot.slane %v8351, %v10095
    %v10099 = vunpack.c.l.s4 1983009808
    %v10100 = vunpack.c.0.s8 %v10099
    %v10101 = vlaneseq
    %v10102 = vshrl.u32 %v10101, 7
    %v10103 = vsub.s32 %v10100, %v10102
    %v10104 = vrot.slane %v10096, %v10103
    %v10105 = vcombine.high %v10104, %v10104
    %v10108 = vmul.f32 %v10091, %v10104
    %v10109 = vmul.f32 %v10092, %v10105
    %v10110 = vlaneseq
    %v10111 = vshrl.u32 %v10110, 7
    %v10112 = vsub.s32 5, %v10111
    %v10113 = vrot.slane %v8351, %v10112
    %v10116 = vunpack.c.l.s4 1983009808
    %v10117 = vunpack.c.0.s8 %v10116
    %v10118 = vlaneseq
    %v10119 = vshrl.u32 %v10118, 7
    %v10120 = vsub.s32 %v10117, %v10119
    %v10121 = vrot.slane %v10113, %v10120
    %v10122 = vcombine.high %v10121, %v10121
    %v10125 = vadd.f32 %v10108, %v10121
    %v10126 = vadd.f32 %v10109, %v10122
    %s10127 = scalar_lea.vmem %s6, 1024
    %v10128 = vld [vmem:[%s10127] sm:$0xff]
    %v10129 = vld [vmem:[%s10127 + $0x8] sm:$0xff]
    %v10130 = vld [vmem:[%s10127 + $0x10] sm:$0xff]
    %v10131 = vld [vmem:[%s10127 + $0x18] sm:$0xff]
    %v10132 = vld [vmem:[%s10127 + $0x20] sm:$0xff]
    %v10133 = vld [vmem:[%s10127 + $0x28] sm:$0xff]
    %v10134 = vld [vmem:[%s10127 + $0x30] sm:$0xff]
    %v10135 = vld [vmem:[%s10127 + $0x38] sm:$0xff]
    %v10136 = vld [vmem:[%s10127 + $0x40] sm:$0xff]
    %v10137 = vld [vmem:[%s10127 + $0x48] sm:$0xff]
    %v10138 = vld [vmem:[%s10127 + $0x50] sm:$0xff]
    %v10139 = vld [vmem:[%s10127 + $0x58] sm:$0xff]
    %v10140 = vld [vmem:[%s10127 + $0x60] sm:$0xff]
    %v10141 = vld [vmem:[%s10127 + $0x68] sm:$0xff]
    %v10142 = vld [vmem:[%s10127 + $0x70] sm:$0xff]
    %v10143 = vld [vmem:[%s10127 + $0x78] sm:$0xff]
    %v10144 = vld [vmem:[%s10127 + $0x80] sm:$0xff]
    %v10145 = vld [vmem:[%s10127 + $0x88] sm:$0xff]
    %v10146 = vld [vmem:[%s10127 + $0x90] sm:$0xff]
    %v10147 = vld [vmem:[%s10127 + $0x98] sm:$0xff]
    %v10148 = vld [vmem:[%s10127 + $0xa0] sm:$0xff]
    %v10149 = vld [vmem:[%s10127 + $0xa8] sm:$0xff]
    %v10150 = vld [vmem:[%s10127 + $0xb0] sm:$0xff]
    %v10151 = vld [vmem:[%s10127 + $0xb8] sm:$0xff]
    %v10152 = vld [vmem:[%s10127 + $0xc0] sm:$0xff]
    %v10153 = vld [vmem:[%s10127 + $0xc8] sm:$0xff]
    %v10154 = vld [vmem:[%s10127 + $0xd0] sm:$0xff]
    %v10155 = vld [vmem:[%s10127 + $0xd8] sm:$0xff]
    %v10156 = vld [vmem:[%s10127 + $0xe0] sm:$0xff]
    %v10157 = vld [vmem:[%s10127 + $0xe8] sm:$0xff]
    %v10158 = vld [vmem:[%s10127 + $0xf0] sm:$0xff]
    %v10159 = vld [vmem:[%s10127 + $0xf8] sm:$0xff]
    %v10160 = vld [vmem:[%s10127 + $0x100] sm:$0xff]
    %v10161 = vld [vmem:[%s10127 + $0x108] sm:$0xff]
    %v10162 = vld [vmem:[%s10127 + $0x110] sm:$0xff]
    %v10163 = vld [vmem:[%s10127 + $0x118] sm:$0xff]
    %v10164 = vld [vmem:[%s10127 + $0x120] sm:$0xff]
    %v10165 = vld [vmem:[%s10127 + $0x128] sm:$0xff]
    %v10166 = vld [vmem:[%s10127 + $0x130] sm:$0xff]
    %v10167 = vld [vmem:[%s10127 + $0x138] sm:$0xff]
    %v10168 = vld [vmem:[%s10127 + $0x140] sm:$0xff]
    %v10169 = vld [vmem:[%s10127 + $0x148] sm:$0xff]
    %v10170 = vld [vmem:[%s10127 + $0x150] sm:$0xff]
    %v10171 = vld [vmem:[%s10127 + $0x158] sm:$0xff]
    %v10172 = vld [vmem:[%s10127 + $0x160] sm:$0xff]
    %v10173 = vld [vmem:[%s10127 + $0x168] sm:$0xff]
    %v10174 = vld [vmem:[%s10127 + $0x170] sm:$0xff]
    %v10175 = vld [vmem:[%s10127 + $0x178] sm:$0xff]
    %v10176 = vld [vmem:[%s10127 + $0x180] sm:$0xff]
    %v10177 = vld [vmem:[%s10127 + $0x188] sm:$0xff]
    %v10178 = vld [vmem:[%s10127 + $0x190] sm:$0xff]
    %v10179 = vld [vmem:[%s10127 + $0x198] sm:$0xff]
    %v10180 = vld [vmem:[%s10127 + $0x1a0] sm:$0xff]
    %v10181 = vld [vmem:[%s10127 + $0x1a8] sm:$0xff]
    %v10182 = vld [vmem:[%s10127 + $0x1b0] sm:$0xff]
    %v10183 = vld [vmem:[%s10127 + $0x1b8] sm:$0xff]
    %v10184 = vld [vmem:[%s10127 + $0x1c0] sm:$0xff]
    %v10185 = vld [vmem:[%s10127 + $0x1c8] sm:$0xff]
    %v10186 = vld [vmem:[%s10127 + $0x1d0] sm:$0xff]
    %v10187 = vld [vmem:[%s10127 + $0x1d8] sm:$0xff]
    %v10188 = vld [vmem:[%s10127 + $0x1e0] sm:$0xff]
    %v10189 = vld [vmem:[%s10127 + $0x1e8] sm:$0xff]
    %v10190 = vld [vmem:[%s10127 + $0x1f0] sm:$0xff]
    %v10191 = vld [vmem:[%s10127 + $0x1f8] sm:$0xff]
    %v10194 = vcombine.low %v10125, %v10126
    %v10196 = vunpack.c.l.s4 1983009808
    %v10197 = vunpack.c.0.s8 %v10196
    %v10198 = vlaneseq
    %v10199 = vshrl.u32 %v10198, 7
    %v10200 = vsub.s32 %v10197, %v10199
    %v10201 = vrot.slane %v10194, %v10200
    %v10203 = vpack.c.bf16 %v10201, %v10201
    %s10204 = scalar_lea.vmem %s7, 32
    %v10205 = vld [vmem:[%s10204] sm:$0xff]
    %v10206 = vld [vmem:[%s10204 + $0x8] sm:$0xff]
    %v10209 = vlaneseq
    %v10210 = vshrl.u32 %v10209, 7
    %v10211 = vsub.s32 0, %v10210
    %v10212 = vrot.slane %v10205, %v10211
    %v10213 = vlaneseq
    %v10214 = vshrl.u32 %v10213, 7
    %v10215 = vsub.s32 1, %v10214
    %v10216 = vrot.slane %v10205, %v10215
    %v10217 = vlaneseq
    %v10218 = vshrl.u32 %v10217, 7
    %v10219 = vsub.s32 2, %v10218
    %v10220 = vrot.slane %v10205, %v10219
    %v10221 = vlaneseq
    %v10222 = vshrl.u32 %v10221, 7
    %v10223 = vsub.s32 3, %v10222
    %v10224 = vrot.slane %v10205, %v10223
    %v10225 = vlaneseq
    %v10226 = vshrl.u32 %v10225, 7
    %v10227 = vsub.s32 4, %v10226
    %v10228 = vrot.slane %v10205, %v10227
    %v10229 = vlaneseq
    %v10230 = vshrl.u32 %v10229, 7
    %v10231 = vsub.s32 5, %v10230
    %v10232 = vrot.slane %v10205, %v10231
    %v10233 = vlaneseq
    %v10234 = vshrl.u32 %v10233, 7
    %v10235 = vsub.s32 6, %v10234
    %v10236 = vrot.slane %v10205, %v10235
    %v10237 = vlaneseq
    %v10238 = vshrl.u32 %v10237, 7
    %v10239 = vsub.s32 7, %v10238
    %v10240 = vrot.slane %v10205, %v10239
    %v10241 = vlaneseq
    %v10242 = vshrl.u32 %v10241, 7
    %v10243 = vsub.s32 0, %v10242
    %v10244 = vrot.slane %v10206, %v10243
    %v10245 = vlaneseq
    %v10246 = vshrl.u32 %v10245, 7
    %v10247 = vsub.s32 1, %v10246
    %v10248 = vrot.slane %v10206, %v10247
    %v10249 = vlaneseq
    %v10250 = vshrl.u32 %v10249, 7
    %v10251 = vsub.s32 2, %v10250
    %v10252 = vrot.slane %v10206, %v10251
    %v10253 = vlaneseq
    %v10254 = vshrl.u32 %v10253, 7
    %v10255 = vsub.s32 3, %v10254
    %v10256 = vrot.slane %v10206, %v10255
    %v10257 = vlaneseq
    %v10258 = vshrl.u32 %v10257, 7
    %v10259 = vsub.s32 4, %v10258
    %v10260 = vrot.slane %v10206, %v10259
    %v10261 = vlaneseq
    %v10262 = vshrl.u32 %v10261, 7
    %v10263 = vsub.s32 5, %v10262
    %v10264 = vrot.slane %v10206, %v10263
    %v10265 = vlaneseq
    %v10266 = vshrl.u32 %v10265, 7
    %v10267 = vsub.s32 6, %v10266
    %v10268 = vrot.slane %v10206, %v10267
    %v10269 = vlaneseq
    %v10270 = vshrl.u32 %v10269, 7
    %v10271 = vsub.s32 7, %v10270
    %v10272 = vrot.slane %v10206, %v10271
    %v10353 = vunpack.c.l.b16 %v10128
    %v10354 = vunpack.c.h.b16 %v10128
    %v10355 = vunpack.c.l.b16 %v10129
    %v10356 = vunpack.c.h.b16 %v10129
    %v10357 = vunpack.c.l.b16 %v10130
    %v10358 = vunpack.c.h.b16 %v10130
    %v10359 = vunpack.c.l.b16 %v10131
    %v10360 = vunpack.c.h.b16 %v10131
    %v10361 = vunpack.c.l.b16 %v10132
    %v10362 = vunpack.c.h.b16 %v10132
    %v10363 = vunpack.c.l.b16 %v10133
    %v10364 = vunpack.c.h.b16 %v10133
    %v10365 = vunpack.c.l.b16 %v10134
    %v10366 = vunpack.c.h.b16 %v10134
    %v10367 = vunpack.c.l.b16 %v10135
    %v10368 = vunpack.c.h.b16 %v10135
    %v10369 = vunpack.c.l.b16 %v10136
    %v10370 = vunpack.c.h.b16 %v10136
    %v10371 = vunpack.c.l.b16 %v10137
    %v10372 = vunpack.c.h.b16 %v10137
    %v10373 = vunpack.c.l.b16 %v10138
    %v10374 = vunpack.c.h.b16 %v10138
    %v10375 = vunpack.c.l.b16 %v10139
    %v10376 = vunpack.c.h.b16 %v10139
    %v10377 = vunpack.c.l.b16 %v10140
    %v10378 = vunpack.c.h.b16 %v10140
    %v10379 = vunpack.c.l.b16 %v10141
    %v10380 = vunpack.c.h.b16 %v10141
    %v10381 = vunpack.c.l.b16 %v10142
    %v10382 = vunpack.c.h.b16 %v10142
    %v10383 = vunpack.c.l.b16 %v10143
    %v10384 = vunpack.c.h.b16 %v10143
    %v10385 = vunpack.c.l.b16 %v10144
    %v10386 = vunpack.c.h.b16 %v10144
    %v10387 = vunpack.c.l.b16 %v10145
    %v10388 = vunpack.c.h.b16 %v10145
    %v10389 = vunpack.c.l.b16 %v10146
    %v10390 = vunpack.c.h.b16 %v10146
    %v10391 = vunpack.c.l.b16 %v10147
    %v10392 = vunpack.c.h.b16 %v10147
    %v10393 = vunpack.c.l.b16 %v10148
    %v10394 = vunpack.c.h.b16 %v10148
    %v10395 = vunpack.c.l.b16 %v10149
    %v10396 = vunpack.c.h.b16 %v10149
    %v10397 = vunpack.c.l.b16 %v10150
    %v10398 = vunpack.c.h.b16 %v10150
    %v10399 = vunpack.c.l.b16 %v10151
    %v10400 = vunpack.c.h.b16 %v10151
    %v10401 = vunpack.c.l.b16 %v10152
    %v10402 = vunpack.c.h.b16 %v10152
    %v10403 = vunpack.c.l.b16 %v10153
    %v10404 = vunpack.c.h.b16 %v10153
    %v10405 = vunpack.c.l.b16 %v10154
    %v10406 = vunpack.c.h.b16 %v10154
    %v10407 = vunpack.c.l.b16 %v10155
    %v10408 = vunpack.c.h.b16 %v10155
    %v10409 = vunpack.c.l.b16 %v10156
    %v10410 = vunpack.c.h.b16 %v10156
    %v10411 = vunpack.c.l.b16 %v10157
    %v10412 = vunpack.c.h.b16 %v10157
    %v10413 = vunpack.c.l.b16 %v10158
    %v10414 = vunpack.c.h.b16 %v10158
    %v10415 = vunpack.c.l.b16 %v10159
    %v10416 = vunpack.c.h.b16 %v10159
    %v10417 = vunpack.c.l.b16 %v10160
    %v10418 = vunpack.c.h.b16 %v10160
    %v10419 = vunpack.c.l.b16 %v10161
    %v10420 = vunpack.c.h.b16 %v10161
    %v10421 = vunpack.c.l.b16 %v10162
    %v10422 = vunpack.c.h.b16 %v10162
    %v10423 = vunpack.c.l.b16 %v10163
    %v10424 = vunpack.c.h.b16 %v10163
    %v10425 = vunpack.c.l.b16 %v10164
    %v10426 = vunpack.c.h.b16 %v10164
    %v10427 = vunpack.c.l.b16 %v10165
    %v10428 = vunpack.c.h.b16 %v10165
    %v10429 = vunpack.c.l.b16 %v10166
    %v10430 = vunpack.c.h.b16 %v10166
    %v10431 = vunpack.c.l.b16 %v10167
    %v10432 = vunpack.c.h.b16 %v10167
    %v10433 = vunpack.c.l.b16 %v10168
    %v10434 = vunpack.c.h.b16 %v10168
    %v10435 = vunpack.c.l.b16 %v10169
    %v10436 = vunpack.c.h.b16 %v10169
    %v10437 = vunpack.c.l.b16 %v10170
    %v10438 = vunpack.c.h.b16 %v10170
    %v10439 = vunpack.c.l.b16 %v10171
    %v10440 = vunpack.c.h.b16 %v10171
    %v10441 = vunpack.c.l.b16 %v10172
    %v10442 = vunpack.c.h.b16 %v10172
    %v10443 = vunpack.c.l.b16 %v10173
    %v10444 = vunpack.c.h.b16 %v10173
    %v10445 = vunpack.c.l.b16 %v10174
    %v10446 = vunpack.c.h.b16 %v10174
    %v10447 = vunpack.c.l.b16 %v10175
    %v10448 = vunpack.c.h.b16 %v10175
    %v10449 = vunpack.c.l.b16 %v10176
    %v10450 = vunpack.c.h.b16 %v10176
    %v10451 = vunpack.c.l.b16 %v10177
    %v10452 = vunpack.c.h.b16 %v10177
    %v10453 = vunpack.c.l.b16 %v10178
    %v10454 = vunpack.c.h.b16 %v10178
    %v10455 = vunpack.c.l.b16 %v10179
    %v10456 = vunpack.c.h.b16 %v10179
    %v10457 = vunpack.c.l.b16 %v10180
    %v10458 = vunpack.c.h.b16 %v10180
    %v10459 = vunpack.c.l.b16 %v10181
    %v10460 = vunpack.c.h.b16 %v10181
    %v10461 = vunpack.c.l.b16 %v10182
    %v10462 = vunpack.c.h.b16 %v10182
    %v10463 = vunpack.c.l.b16 %v10183
    %v10464 = vunpack.c.h.b16 %v10183
    %v10465 = vunpack.c.l.b16 %v10184
    %v10466 = vunpack.c.h.b16 %v10184
    %v10467 = vunpack.c.l.b16 %v10185
    %v10468 = vunpack.c.h.b16 %v10185
    %v10469 = vunpack.c.l.b16 %v10186
    %v10470 = vunpack.c.h.b16 %v10186
    %v10471 = vunpack.c.l.b16 %v10187
    %v10472 = vunpack.c.h.b16 %v10187
    %v10473 = vunpack.c.l.b16 %v10188
    %v10474 = vunpack.c.h.b16 %v10188
    %v10475 = vunpack.c.l.b16 %v10189
    %v10476 = vunpack.c.h.b16 %v10189
    %v10477 = vunpack.c.l.b16 %v10190
    %v10478 = vunpack.c.h.b16 %v10190
    %v10479 = vunpack.c.l.b16 %v10191
    %v10480 = vunpack.c.h.b16 %v10191
    %v10481 = vpack.c.b16 %v10369, %v10353
    %v10482 = vpack.c.b16 %v10370, %v10354
    %v10483 = vpack.c.b16 %v10371, %v10355
    %v10484 = vpack.c.b16 %v10372, %v10356
    %v10485 = vpack.c.b16 %v10373, %v10357
    %v10486 = vpack.c.b16 %v10374, %v10358
    %v10487 = vpack.c.b16 %v10375, %v10359
    %v10488 = vpack.c.b16 %v10376, %v10360
    %v10489 = vpack.c.b16 %v10377, %v10361
    %v10490 = vpack.c.b16 %v10378, %v10362
    %v10491 = vpack.c.b16 %v10379, %v10363
    %v10492 = vpack.c.b16 %v10380, %v10364
    %v10493 = vpack.c.b16 %v10381, %v10365
    %v10494 = vpack.c.b16 %v10382, %v10366
    %v10495 = vpack.c.b16 %v10383, %v10367
    %v10496 = vpack.c.b16 %v10384, %v10368
    %v10497 = vpack.c.b16 %v10401, %v10385
    %v10498 = vpack.c.b16 %v10402, %v10386
    %v10499 = vpack.c.b16 %v10403, %v10387
    %v10500 = vpack.c.b16 %v10404, %v10388
    %v10501 = vpack.c.b16 %v10405, %v10389
    %v10502 = vpack.c.b16 %v10406, %v10390
    %v10503 = vpack.c.b16 %v10407, %v10391
    %v10504 = vpack.c.b16 %v10408, %v10392
    %v10505 = vpack.c.b16 %v10409, %v10393
    %v10506 = vpack.c.b16 %v10410, %v10394
    %v10507 = vpack.c.b16 %v10411, %v10395
    %v10508 = vpack.c.b16 %v10412, %v10396
    %v10509 = vpack.c.b16 %v10413, %v10397
    %v10510 = vpack.c.b16 %v10414, %v10398
    %v10511 = vpack.c.b16 %v10415, %v10399
    %v10512 = vpack.c.b16 %v10416, %v10400
    %v10513 = vpack.c.b16 %v10433, %v10417
    %v10514 = vpack.c.b16 %v10434, %v10418
    %v10515 = vpack.c.b16 %v10435, %v10419
    %v10516 = vpack.c.b16 %v10436, %v10420
    %v10517 = vpack.c.b16 %v10437, %v10421
    %v10518 = vpack.c.b16 %v10438, %v10422
    %v10519 = vpack.c.b16 %v10439, %v10423
    %v10520 = vpack.c.b16 %v10440, %v10424
    %v10521 = vpack.c.b16 %v10441, %v10425
    %v10522 = vpack.c.b16 %v10442, %v10426
    %v10523 = vpack.c.b16 %v10443, %v10427
    %v10524 = vpack.c.b16 %v10444, %v10428
    %v10525 = vpack.c.b16 %v10445, %v10429
    %v10526 = vpack.c.b16 %v10446, %v10430
    %v10527 = vpack.c.b16 %v10447, %v10431
    %v10528 = vpack.c.b16 %v10448, %v10432
    %v10529 = vpack.c.b16 %v10465, %v10449
    %v10530 = vpack.c.b16 %v10466, %v10450
    %v10531 = vpack.c.b16 %v10467, %v10451
    %v10532 = vpack.c.b16 %v10468, %v10452
    %v10533 = vpack.c.b16 %v10469, %v10453
    %v10534 = vpack.c.b16 %v10470, %v10454
    %v10535 = vpack.c.b16 %v10471, %v10455
    %v10536 = vpack.c.b16 %v10472, %v10456
    %v10537 = vpack.c.b16 %v10473, %v10457
    %v10538 = vpack.c.b16 %v10474, %v10458
    %v10539 = vpack.c.b16 %v10475, %v10459
    %v10540 = vpack.c.b16 %v10476, %v10460
    %v10541 = vpack.c.b16 %v10477, %v10461
    %v10542 = vpack.c.b16 %v10478, %v10462
    %v10543 = vpack.c.b16 %v10479, %v10463
    %v10544 = vpack.c.b16 %v10480, %v10464
    %v10610 = vsel %vm229, %v10203, 0
    %10612 = vmatprep.subr.bf16.mxu0 %v10482
    %10613 = vmatpush1.bf16.msra.mxu0 %v10481
    %10614 = vmatprep.subr.bf16.mxu0 %v10498
    %10615 = vmatpush1.bf16.msra.mxu0 %v10497
    %10616 = vmatprep.subr.bf16.mxu0 %v10514
    %10617 = vmatpush1.bf16.msra.mxu0 %v10513
    %10618 = vmatprep.subr.bf16.mxu0 %v10530
    %10619 = vmatpush1.bf16.msra.mxu0 %v10529
    %10620 = vmatprep.subr.bf16.mxu0 0
    %10621 = vmatpush1.bf16.msra.mxu0 0
    %10622 = vmatprep.subr.bf16.mxu0 0
    %10623 = vmatpush1.bf16.msra.mxu0 0
    %10624 = vmatprep.subr.bf16.mxu0 0
    %10625 = vmatpush1.bf16.msra.mxu0 0
    %10626 = vmatprep.subr.bf16.mxu0 0
    %10627 = vmatpush1.bf16.msra.mxu0 0
    %10628 = vmatprep.subr.bf16.mxu0 0
    %10629 = vmatpush1.bf16.msra.mxu0 0
    %10630 = vmatprep.subr.bf16.mxu0 0
    %10631 = vmatpush1.bf16.msra.mxu0 0
    %10632 = vmatprep.subr.bf16.mxu0 0
    %10633 = vmatpush1.bf16.msra.mxu0 0
    %10634 = vmatprep.subr.bf16.mxu0 0
    %10635 = vmatpush1.bf16.msra.mxu0 0
    %10636 = vmatprep.subr.bf16.mxu0 0
    %10637 = vmatpush1.bf16.msra.mxu0 0
    %10638 = vmatprep.subr.bf16.mxu0 0
    %10639 = vmatpush1.bf16.msra.mxu0 0
    %10640 = vmatprep.subr.bf16.mxu0 0
    %10641 = vmatpush1.bf16.msra.mxu0 0
    %10642 = vmatprep.subr.bf16.mxu0 0
    %10643 = vmatpush1.bf16.msra.mxu0 0
    %10644 = vmatprep.mubr.bf16.mxu0 0
    %10645 = vmatmul.mubr.bf16.gmra.mrb[0].mxu0 %v10610
    %v10646 = vpop.f32.mrb[0].mxu0
    %v10647 = vadd.f32 %v10212, %v10646
    %v10648 = vpop.f32.mrb[0].mxu0
    %v10649 = vadd.f32 %v10216, %v10648
    %v10650 = vpop.f32.mrb[0].mxu0
    %v10651 = vpop.f32.mrb[0].mxu0
    %10652 = vdwg.mxu0
    %10653 = vmatprep.subr.bf16.mxu0 %v10484
    %10654 = vmatpush1.bf16.msra.mxu0 %v10483
    %10655 = vmatprep.subr.bf16.mxu0 %v10500
    %10656 = vmatpush1.bf16.msra.mxu0 %v10499
    %10657 = vmatprep.subr.bf16.mxu0 %v10516
    %10658 = vmatpush1.bf16.msra.mxu0 %v10515
    %10659 = vmatprep.subr.bf16.mxu0 %v10532
    %10660 = vmatpush1.bf16.msra.mxu0 %v10531
    %10661 = vmatprep.subr.bf16.mxu0 0
    %10662 = vmatpush1.bf16.msra.mxu0 0
    %10663 = vmatprep.subr.bf16.mxu0 0
    %10664 = vmatpush1.bf16.msra.mxu0 0
    %10665 = vmatprep.subr.bf16.mxu0 0
    %10666 = vmatpush1.bf16.msra.mxu0 0
    %10667 = vmatprep.subr.bf16.mxu0 0
    %10668 = vmatpush1.bf16.msra.mxu0 0
    %10669 = vmatprep.subr.bf16.mxu0 0
    %10670 = vmatpush1.bf16.msra.mxu0 0
    %10671 = vmatprep.subr.bf16.mxu0 0
    %10672 = vmatpush1.bf16.msra.mxu0 0
    %10673 = vmatprep.subr.bf16.mxu0 0
    %10674 = vmatpush1.bf16.msra.mxu0 0
    %10675 = vmatprep.subr.bf16.mxu0 0
    %10676 = vmatpush1.bf16.msra.mxu0 0
    %10677 = vmatprep.subr.bf16.mxu0 0
    %10678 = vmatpush1.bf16.msra.mxu0 0
    %10679 = vmatprep.subr.bf16.mxu0 0
    %10680 = vmatpush1.bf16.msra.mxu0 0
    %10681 = vmatprep.subr.bf16.mxu0 0
    %10682 = vmatpush1.bf16.msra.mxu0 0
    %10683 = vmatprep.subr.bf16.mxu0 0
    %10684 = vmatpush1.bf16.msra.mxu0 0
    %10685 = vmatprep.mubr.bf16.mxu0 0
    %10686 = vmatmul.mubr.bf16.gmra.mrb[0].mxu0 %v10610
    %v10687 = vpop.f32.mrb[0].mxu0
    %v10688 = vadd.f32 %v10220, %v10687
    %v10689 = vpop.f32.mrb[0].mxu0
    %v10690 = vadd.f32 %v10224, %v10689
    %v10691 = vpop.f32.mrb[0].mxu0
    %v10692 = vpop.f32.mrb[0].mxu0
    %10693 = vdwg.mxu0
    %10694 = vmatprep.subr.bf16.mxu0 %v10486
    %10695 = vmatpush1.bf16.msra.mxu0 %v10485
    %10696 = vmatprep.subr.bf16.mxu0 %v10502
    %10697 = vmatpush1.bf16.msra.mxu0 %v10501
    %10698 = vmatprep.subr.bf16.mxu0 %v10518
    %10699 = vmatpush1.bf16.msra.mxu0 %v10517
    %10700 = vmatprep.subr.bf16.mxu0 %v10534
    %10701 = vmatpush1.bf16.msra.mxu0 %v10533
    %10702 = vmatprep.subr.bf16.mxu0 0
    %10703 = vmatpush1.bf16.msra.mxu0 0
    %10704 = vmatprep.subr.bf16.mxu0 0
    %10705 = vmatpush1.bf16.msra.mxu0 0
    %10706 = vmatprep.subr.bf16.mxu0 0
    %10707 = vmatpush1.bf16.msra.mxu0 0
    %10708 = vmatprep.subr.bf16.mxu0 0
    %10709 = vmatpush1.bf16.msra.mxu0 0
    %10710 = vmatprep.subr.bf16.mxu0 0
    %10711 = vmatpush1.bf16.msra.mxu0 0
    %10712 = vmatprep.subr.bf16.mxu0 0
    %10713 = vmatpush1.bf16.msra.mxu0 0
    %10714 = vmatprep.subr.bf16.mxu0 0
    %10715 = vmatpush1.bf16.msra.mxu0 0
    %10716 = vmatprep.subr.bf16.mxu0 0
    %10717 = vmatpush1.bf16.msra.mxu0 0
    %10718 = vmatprep.subr.bf16.mxu0 0
    %10719 = vmatpush1.bf16.msra.mxu0 0
    %10720 = vmatprep.subr.bf16.mxu0 0
    %10721 = vmatpush1.bf16.msra.mxu0 0
    %10722 = vmatprep.subr.bf16.mxu0 0
    %10723 = vmatpush1.bf16.msra.mxu0 0
    %10724 = vmatprep.subr.bf16.mxu0 0
    %10725 = vmatpush1.bf16.msra.mxu0 0
    %10726 = vmatprep.mubr.bf16.mxu0 0
    %10727 = vmatmul.mubr.bf16.gmra.mrb[0].mxu0 %v10610
    %v10728 = vpop.f32.mrb[0].mxu0
    %v10729 = vadd.f32 %v10228, %v10728
    %v10730 = vpop.f32.mrb[0].mxu0
    %v10731 = vadd.f32 %v10232, %v10730
    %v10732 = vpop.f32.mrb[0].mxu0
    %v10733 = vpop.f32.mrb[0].mxu0
    %10734 = vdwg.mxu0
    %10735 = vmatprep.subr.bf16.mxu0 %v10488
    %10736 = vmatpush1.bf16.msra.mxu0 %v10487
    %10737 = vmatprep.subr.bf16.mxu0 %v10504
    %10738 = vmatpush1.bf16.msra.mxu0 %v10503
    %10739 = vmatprep.subr.bf16.mxu0 %v10520
    %10740 = vmatpush1.bf16.msra.mxu0 %v10519
    %10741 = vmatprep.subr.bf16.mxu0 %v10536
    %10742 = vmatpush1.bf16.msra.mxu0 %v10535
    %10743 = vmatprep.subr.bf16.mxu0 0
    %10744 = vmatpush1.bf16.msra.mxu0 0
    %10745 = vmatprep.subr.bf16.mxu0 0
    %10746 = vmatpush1.bf16.msra.mxu0 0
    %10747 = vmatprep.subr.bf16.mxu0 0
    %10748 = vmatpush1.bf16.msra.mxu0 0
    %10749 = vmatprep.subr.bf16.mxu0 0
    %10750 = vmatpush1.bf16.msra.mxu0 0
    %10751 = vmatprep.subr.bf16.mxu0 0
    %10752 = vmatpush1.bf16.msra.mxu0 0
    %10753 = vmatprep.subr.bf16.mxu0 0
    %10754 = vmatpush1.bf16.msra.mxu0 0
    %10755 = vmatprep.subr.bf16.mxu0 0
    %10756 = vmatpush1.bf16.msra.mxu0 0
    %10757 = vmatprep.subr.bf16.mxu0 0
    %10758 = vmatpush1.bf16.msra.mxu0 0
    %10759 = vmatprep.subr.bf16.mxu0 0
    %10760 = vmatpush1.bf16.msra.mxu0 0
    %10761 = vmatprep.subr.bf16.mxu0 0
    %10762 = vmatpush1.bf16.msra.mxu0 0
    %10763 = vmatprep.subr.bf16.mxu0 0
    %10764 = vmatpush1.bf16.msra.mxu0 0
    %10765 = vmatprep.subr.bf16.mxu0 0
    %10766 = vmatpush1.bf16.msra.mxu0 0
    %10767 = vmatprep.mubr.bf16.mxu0 0
    %10768 = vmatmul.mubr.bf16.gmra.mrb[0].mxu0 %v10610
    %v10769 = vpop.f32.mrb[0].mxu0
    %v10770 = vadd.f32 %v10236, %v10769
    %v10771 = vpop.f32.mrb[0].mxu0
    %v10772 = vadd.f32 %v10240, %v10771
    %v10773 = vpop.f32.mrb[0].mxu0
    %v10774 = vpop.f32.mrb[0].mxu0
    %10775 = vdwg.mxu0
    %10776 = vmatprep.subr.bf16.mxu0 %v10490
    %10777 = vmatpush1.bf16.msra.mxu0 %v10489
    %10778 = vmatprep.subr.bf16.mxu0 %v10506
    %10779 = vmatpush1.bf16.msra.mxu0 %v10505
    %10780 = vmatprep.subr.bf16.mxu0 %v10522
    %10781 = vmatpush1.bf16.msra.mxu0 %v10521
    %10782 = vmatprep.subr.bf16.mxu0 %v10538
    %10783 = vmatpush1.bf16.msra.mxu0 %v10537
    %10784 = vmatprep.subr.bf16.mxu0 0
    %10785 = vmatpush1.bf16.msra.mxu0 0
    %10786 = vmatprep.subr.bf16.mxu0 0
    %10787 = vmatpush1.bf16.msra.mxu0 0
    %10788 = vmatprep.subr.bf16.mxu0 0
    %10789 = vmatpush1.bf16.msra.mxu0 0
    %10790 = vmatprep.subr.bf16.mxu0 0
    %10791 = vmatpush1.bf16.msra.mxu0 0
    %10792 = vmatprep.subr.bf16.mxu0 0
    %10793 = vmatpush1.bf16.msra.mxu0 0
    %10794 = vmatprep.subr.bf16.mxu0 0
    %10795 = vmatpush1.bf16.msra.mxu0 0
    %10796 = vmatprep.subr.bf16.mxu0 0
    %10797 = vmatpush1.bf16.msra.mxu0 0
    %10798 = vmatprep.subr.bf16.mxu0 0
    %10799 = vmatpush1.bf16.msra.mxu0 0
    %10800 = vmatprep.subr.bf16.mxu0 0
    %10801 = vmatpush1.bf16.msra.mxu0 0
    %10802 = vmatprep.subr.bf16.mxu0 0
    %10803 = vmatpush1.bf16.msra.mxu0 0
    %10804 = vmatprep.subr.bf16.mxu0 0
    %10805 = vmatpush1.bf16.msra.mxu0 0
    %10806 = vmatprep.subr.bf16.mxu0 0
    %10807 = vmatpush1.bf16.msra.mxu0 0
    %10808 = vmatprep.mubr.bf16.mxu0 0
    %10809 = vmatmul.mubr.bf16.gmra.mrb[0].mxu0 %v10610
    %v10810 = vpop.f32.mrb[0].mxu0
    %v10811 = vadd.f32 %v10244, %v10810
    %v10812 = vpop.f32.mrb[0].mxu0
    %v10813 = vadd.f32 %v10248, %v10812
    %v10814 = vpop.f32.mrb[0].mxu0
    %v10815 = vpop.f32.mrb[0].mxu0
    %10816 = vdwg.mxu0
    %10817 = vmatprep.subr.bf16.mxu0 %v10492
    %10818 = vmatpush1.bf16.msra.mxu0 %v10491
    %10819 = vmatprep.subr.bf16.mxu0 %v10508
    %10820 = vmatpush1.bf16.msra.mxu0 %v10507
    %10821 = vmatprep.subr.bf16.mxu0 %v10524
    %10822 = vmatpush1.bf16.msra.mxu0 %v10523
    %10823 = vmatprep.subr.bf16.mxu0 %v10540
    %10824 = vmatpush1.bf16.msra.mxu0 %v10539
    %10825 = vmatprep.subr.bf16.mxu0 0
    %10826 = vmatpush1.bf16.msra.mxu0 0
    %10827 = vmatprep.subr.bf16.mxu0 0
    %10828 = vmatpush1.bf16.msra.mxu0 0
    %10829 = vmatprep.subr.bf16.mxu0 0
    %10830 = vmatpush1.bf16.msra.mxu0 0
    %10831 = vmatprep.subr.bf16.mxu0 0
    %10832 = vmatpush1.bf16.msra.mxu0 0
    %10833 = vmatprep.subr.bf16.mxu0 0
    %10834 = vmatpush1.bf16.msra.mxu0 0
    %10835 = vmatprep.subr.bf16.mxu0 0
    %10836 = vmatpush1.bf16.msra.mxu0 0
    %10837 = vmatprep.subr.bf16.mxu0 0
    %10838 = vmatpush1.bf16.msra.mxu0 0
    %10839 = vmatprep.subr.bf16.mxu0 0
    %10840 = vmatpush1.bf16.msra.mxu0 0
    %10841 = vmatprep.subr.bf16.mxu0 0
    %10842 = vmatpush1.bf16.msra.mxu0 0
    %10843 = vmatprep.subr.bf16.mxu0 0
    %10844 = vmatpush1.bf16.msra.mxu0 0
    %10845 = vmatprep.subr.bf16.mxu0 0
    %10846 = vmatpush1.bf16.msra.mxu0 0
    %10847 = vmatprep.subr.bf16.mxu0 0
    %10848 = vmatpush1.bf16.msra.mxu0 0
    %10849 = vmatprep.mubr.bf16.mxu0 0
    %10850 = vmatmul.mubr.bf16.gmra.mrb[0].mxu0 %v10610
    %v10851 = vpop.f32.mrb[0].mxu0
    %v10852 = vadd.f32 %v10252, %v10851
    %v10853 = vpop.f32.mrb[0].mxu0
    %v10854 = vadd.f32 %v10256, %v10853
    %v10855 = vpop.f32.mrb[0].mxu0
    %v10856 = vpop.f32.mrb[0].mxu0
    %10857 = vdwg.mxu0
    %10858 = vmatprep.subr.bf16.mxu0 %v10494
    %10859 = vmatpush1.bf16.msra.mxu0 %v10493
    %10860 = vmatprep.subr.bf16.mxu0 %v10510
    %10861 = vmatpush1.bf16.msra.mxu0 %v10509
    %10862 = vmatprep.subr.bf16.mxu0 %v10526
    %10863 = vmatpush1.bf16.msra.mxu0 %v10525
    %10864 = vmatprep.subr.bf16.mxu0 %v10542
    %10865 = vmatpush1.bf16.msra.mxu0 %v10541
    %10866 = vmatprep.subr.bf16.mxu0 0
    %10867 = vmatpush1.bf16.msra.mxu0 0
    %10868 = vmatprep.subr.bf16.mxu0 0
    %10869 = vmatpush1.bf16.msra.mxu0 0
    %10870 = vmatprep.subr.bf16.mxu0 0
    %10871 = vmatpush1.bf16.msra.mxu0 0
    %10872 = vmatprep.subr.bf16.mxu0 0
    %10873 = vmatpush1.bf16.msra.mxu0 0
    %10874 = vmatprep.subr.bf16.mxu0 0
    %10875 = vmatpush1.bf16.msra.mxu0 0
    %10876 = vmatprep.subr.bf16.mxu0 0
    %10877 = vmatpush1.bf16.msra.mxu0 0
    %10878 = vmatprep.subr.bf16.mxu0 0
    %10879 = vmatpush1.bf16.msra.mxu0 0
    %10880 = vmatprep.subr.bf16.mxu0 0
    %10881 = vmatpush1.bf16.msra.mxu0 0
    %10882 = vmatprep.subr.bf16.mxu0 0
    %10883 = vmatpush1.bf16.msra.mxu0 0
    %10884 = vmatprep.subr.bf16.mxu0 0
    %10885 = vmatpush1.bf16.msra.mxu0 0
    %10886 = vmatprep.subr.bf16.mxu0 0
    %10887 = vmatpush1.bf16.msra.mxu0 0
    %10888 = vmatprep.subr.bf16.mxu0 0
    %10889 = vmatpush1.bf16.msra.mxu0 0
    %10890 = vmatprep.mubr.bf16.mxu0 0
    %10891 = vmatmul.mubr.bf16.gmra.mrb[0].mxu0 %v10610
    %v10892 = vpop.f32.mrb[0].mxu0
    %v10893 = vadd.f32 %v10260, %v10892
    %v10894 = vpop.f32.mrb[0].mxu0
    %v10895 = vadd.f32 %v10264, %v10894
    %v10896 = vpop.f32.mrb[0].mxu0
    %v10897 = vpop.f32.mrb[0].mxu0
    %10898 = vdwg.mxu0
    %10899 = vmatprep.subr.bf16.mxu0 %v10496
    %10900 = vmatpush1.bf16.msra.mxu0 %v10495
    %10901 = vmatprep.subr.bf16.mxu0 %v10512
    %10902 = vmatpush1.bf16.msra.mxu0 %v10511
    %10903 = vmatprep.subr.bf16.mxu0 %v10528
    %10904 = vmatpush1.bf16.msra.mxu0 %v10527
    %10905 = vmatprep.subr.bf16.mxu0 %v10544
    %10906 = vmatpush1.bf16.msra.mxu0 %v10543
    %10907 = vmatprep.subr.bf16.mxu0 0
    %10908 = vmatpush1.bf16.msra.mxu0 0
    %10909 = vmatprep.subr.bf16.mxu0 0
    %10910 = vmatpush1.bf16.msra.mxu0 0
    %10911 = vmatprep.subr.bf16.mxu0 0
    %10912 = vmatpush1.bf16.msra.mxu0 0
    %10913 = vmatprep.subr.bf16.mxu0 0
    %10914 = vmatpush1.bf16.msra.mxu0 0
    %10915 = vmatprep.subr.bf16.mxu0 0
    %10916 = vmatpush1.bf16.msra.mxu0 0
    %10917 = vmatprep.subr.bf16.mxu0 0
    %10918 = vmatpush1.bf16.msra.mxu0 0
    %10919 = vmatprep.subr.bf16.mxu0 0
    %10920 = vmatpush1.bf16.msra.mxu0 0
    %10921 = vmatprep.subr.bf16.mxu0 0
    %10922 = vmatpush1.bf16.msra.mxu0 0
    %10923 = vmatprep.subr.bf16.mxu0 0
    %10924 = vmatpush1.bf16.msra.mxu0 0
    %10925 = vmatprep.subr.bf16.mxu0 0
    %10926 = vmatpush1.bf16.msra.mxu0 0
    %10927 = vmatprep.subr.bf16.mxu0 0
    %10928 = vmatpush1.bf16.msra.mxu0 0
    %10929 = vmatprep.subr.bf16.mxu0 0
    %10930 = vmatpush1.bf16.msra.mxu0 0
    %10931 = vmatprep.mubr.bf16.mxu0 0
    %10932 = vmatmul.mubr.bf16.gmra.mrb[0].mxu0 %v10610
    %v10933 = vpop.f32.mrb[0].mxu0
    %v10934 = vadd.f32 %v10268, %v10933
    %v10935 = vpop.f32.mrb[0].mxu0
    %v10936 = vadd.f32 %v10272, %v10935
    %v10937 = vpop.f32.mrb[0].mxu0
    %v10938 = vpop.f32.mrb[0].mxu0
    %10939 = vdwg.mxu0
    %v10940 = vmax.f32 %v10647, 0.0
    %v10941 = vmax.f32 %v10649, 0.0
    %v10942 = vmax.f32 %v10688, 0.0
    %v10943 = vmax.f32 %v10690, 0.0
    %v10944 = vmax.f32 %v10729, 0.0
    %v10945 = vmax.f32 %v10731, 0.0
    %v10946 = vmax.f32 %v10770, 0.0
    %v10947 = vmax.f32 %v10772, 0.0
    %v10948 = vmax.f32 %v10811, 0.0
    %v10949 = vmax.f32 %v10813, 0.0
    %v10950 = vmax.f32 %v10852, 0.0
    %v10951 = vmax.f32 %v10854, 0.0
    %v10952 = vmax.f32 %v10893, 0.0
    %v10953 = vmax.f32 %v10895, 0.0
    %v10954 = vmax.f32 %v10934, 0.0
    %v10955 = vmax.f32 %v10936, 0.0
    %s10956 = scalar_lea.vmem %s8, 2048
    %v10957 = vld [vmem:[%s10956] sm:$0xf]
    %v10958 = vld [vmem:[%s10956 + $0x4] sm:$0xf]
    %v10959 = vld [vmem:[%s10956 + $0x8] sm:$0xf]
    %v10960 = vld [vmem:[%s10956 + $0xc] sm:$0xf]
    %v10961 = vld [vmem:[%s10956 + $0x10] sm:$0xf]
    %v10962 = vld [vmem:[%s10956 + $0x14] sm:$0xf]
    %v10963 = vld [vmem:[%s10956 + $0x18] sm:$0xf]
    %v10964 = vld [vmem:[%s10956 + $0x1c] sm:$0xf]
    %v10965 = vld [vmem:[%s10956 + $0x20] sm:$0xf]
    %v10966 = vld [vmem:[%s10956 + $0x24] sm:$0xf]
    %v10967 = vld [vmem:[%s10956 + $0x28] sm:$0xf]
    %v10968 = vld [vmem:[%s10956 + $0x2c] sm:$0xf]
    %v10969 = vld [vmem:[%s10956 + $0x30] sm:$0xf]
    %v10970 = vld [vmem:[%s10956 + $0x34] sm:$0xf]
    %v10971 = vld [vmem:[%s10956 + $0x38] sm:$0xf]
    %v10972 = vld [vmem:[%s10956 + $0x3c] sm:$0xf]
    %v10973 = vld [vmem:[%s10956 + $0x40] sm:$0xf]
    %v10974 = vld [vmem:[%s10956 + $0x44] sm:$0xf]
    %v10975 = vld [vmem:[%s10956 + $0x48] sm:$0xf]
    %v10976 = vld [vmem:[%s10956 + $0x4c] sm:$0xf]
    %v10977 = vld [vmem:[%s10956 + $0x50] sm:$0xf]
    %v10978 = vld [vmem:[%s10956 + $0x54] sm:$0xf]
    %v10979 = vld [vmem:[%s10956 + $0x58] sm:$0xf]
    %v10980 = vld [vmem:[%s10956 + $0x5c] sm:$0xf]
    %v10981 = vld [vmem:[%s10956 + $0x60] sm:$0xf]
    %v10982 = vld [vmem:[%s10956 + $0x64] sm:$0xf]
    %v10983 = vld [vmem:[%s10956 + $0x68] sm:$0xf]
    %v10984 = vld [vmem:[%s10956 + $0x6c] sm:$0xf]
    %v10985 = vld [vmem:[%s10956 + $0x70] sm:$0xf]
    %v10986 = vld [vmem:[%s10956 + $0x74] sm:$0xf]
    %v10987 = vld [vmem:[%s10956 + $0x78] sm:$0xf]
    %v10988 = vld [vmem:[%s10956 + $0x7c] sm:$0xf]
    %v10989 = vld [vmem:[%s10956 + $0x80] sm:$0xf]
    %v10990 = vld [vmem:[%s10956 + $0x84] sm:$0xf]
    %v10991 = vld [vmem:[%s10956 + $0x88] sm:$0xf]
    %v10992 = vld [vmem:[%s10956 + $0x8c] sm:$0xf]
    %v10993 = vld [vmem:[%s10956 + $0x90] sm:$0xf]
    %v10994 = vld [vmem:[%s10956 + $0x94] sm:$0xf]
    %v10995 = vld [vmem:[%s10956 + $0x98] sm:$0xf]
    %v10996 = vld [vmem:[%s10956 + $0x9c] sm:$0xf]
    %v10997 = vld [vmem:[%s10956 + $0xa0] sm:$0xf]
    %v10998 = vld [vmem:[%s10956 + $0xa4] sm:$0xf]
    %v10999 = vld [vmem:[%s10956 + $0xa8] sm:$0xf]
    %v11000 = vld [vmem:[%s10956 + $0xac] sm:$0xf]
    %v11001 = vld [vmem:[%s10956 + $0xb0] sm:$0xf]
    %v11002 = vld [vmem:[%s10956 + $0xb4] sm:$0xf]
    %v11003 = vld [vmem:[%s10956 + $0xb8] sm:$0xf]
    %v11004 = vld [vmem:[%s10956 + $0xbc] sm:$0xf]
    %v11005 = vld [vmem:[%s10956 + $0xc0] sm:$0xf]
    %v11006 = vld [vmem:[%s10956 + $0xc4] sm:$0xf]
    %v11007 = vld [vmem:[%s10956 + $0xc8] sm:$0xf]
    %v11008 = vld [vmem:[%s10956 + $0xcc] sm:$0xf]
    %v11009 = vld [vmem:[%s10956 + $0xd0] sm:$0xf]
    %v11010 = vld [vmem:[%s10956 + $0xd4] sm:$0xf]
    %v11011 = vld [vmem:[%s10956 + $0xd8] sm:$0xf]
    %v11012 = vld [vmem:[%s10956 + $0xdc] sm:$0xf]
    %v11013 = vld [vmem:[%s10956 + $0xe0] sm:$0xf]
    %v11014 = vld [vmem:[%s10956 + $0xe4] sm:$0xf]
    %v11015 = vld [vmem:[%s10956 + $0xe8] sm:$0xf]
    %v11016 = vld [vmem:[%s10956 + $0xec] sm:$0xf]
    %v11017 = vld [vmem:[%s10956 + $0xf0] sm:$0xf]
    %v11018 = vld [vmem:[%s10956 + $0xf4] sm:$0xf]
    %v11019 = vld [vmem:[%s10956 + $0xf8] sm:$0xf]
    %v11020 = vld [vmem:[%s10956 + $0xfc] sm:$0xf]
    %v11021 = vld [vmem:[%s10956 + $0x100] sm:$0xf]
    %v11022 = vld [vmem:[%s10956 + $0x104] sm:$0xf]
    %v11023 = vld [vmem:[%s10956 + $0x108] sm:$0xf]
    %v11024 = vld [vmem:[%s10956 + $0x10c] sm:$0xf]
    %v11025 = vld [vmem:[%s10956 + $0x110] sm:$0xf]
    %v11026 = vld [vmem:[%s10956 + $0x114] sm:$0xf]
    %v11027 = vld [vmem:[%s10956 + $0x118] sm:$0xf]
    %v11028 = vld [vmem:[%s10956 + $0x11c] sm:$0xf]
    %v11029 = vld [vmem:[%s10956 + $0x120] sm:$0xf]
    %v11030 = vld [vmem:[%s10956 + $0x124] sm:$0xf]
    %v11031 = vld [vmem:[%s10956 + $0x128] sm:$0xf]
    %v11032 = vld [vmem:[%s10956 + $0x12c] sm:$0xf]
    %v11033 = vld [vmem:[%s10956 + $0x130] sm:$0xf]
    %v11034 = vld [vmem:[%s10956 + $0x134] sm:$0xf]
    %v11035 = vld [vmem:[%s10956 + $0x138] sm:$0xf]
    %v11036 = vld [vmem:[%s10956 + $0x13c] sm:$0xf]
    %v11037 = vld [vmem:[%s10956 + $0x140] sm:$0xf]
    %v11038 = vld [vmem:[%s10956 + $0x144] sm:$0xf]
    %v11039 = vld [vmem:[%s10956 + $0x148] sm:$0xf]
    %v11040 = vld [vmem:[%s10956 + $0x14c] sm:$0xf]
    %v11041 = vld [vmem:[%s10956 + $0x150] sm:$0xf]
    %v11042 = vld [vmem:[%s10956 + $0x154] sm:$0xf]
    %v11043 = vld [vmem:[%s10956 + $0x158] sm:$0xf]
    %v11044 = vld [vmem:[%s10956 + $0x15c] sm:$0xf]
    %v11045 = vld [vmem:[%s10956 + $0x160] sm:$0xf]
    %v11046 = vld [vmem:[%s10956 + $0x164] sm:$0xf]
    %v11047 = vld [vmem:[%s10956 + $0x168] sm:$0xf]
    %v11048 = vld [vmem:[%s10956 + $0x16c] sm:$0xf]
    %v11049 = vld [vmem:[%s10956 + $0x170] sm:$0xf]
    %v11050 = vld [vmem:[%s10956 + $0x174] sm:$0xf]
    %v11051 = vld [vmem:[%s10956 + $0x178] sm:$0xf]
    %v11052 = vld [vmem:[%s10956 + $0x17c] sm:$0xf]
    %v11053 = vld [vmem:[%s10956 + $0x180] sm:$0xf]
    %v11054 = vld [vmem:[%s10956 + $0x184] sm:$0xf]
    %v11055 = vld [vmem:[%s10956 + $0x188] sm:$0xf]
    %v11056 = vld [vmem:[%s10956 + $0x18c] sm:$0xf]
    %v11057 = vld [vmem:[%s10956 + $0x190] sm:$0xf]
    %v11058 = vld [vmem:[%s10956 + $0x194] sm:$0xf]
    %v11059 = vld [vmem:[%s10956 + $0x198] sm:$0xf]
    %v11060 = vld [vmem:[%s10956 + $0x19c] sm:$0xf]
    %v11061 = vld [vmem:[%s10956 + $0x1a0] sm:$0xf]
    %v11062 = vld [vmem:[%s10956 + $0x1a4] sm:$0xf]
    %v11063 = vld [vmem:[%s10956 + $0x1a8] sm:$0xf]
    %v11064 = vld [vmem:[%s10956 + $0x1ac] sm:$0xf]
    %v11065 = vld [vmem:[%s10956 + $0x1b0] sm:$0xf]
    %v11066 = vld [vmem:[%s10956 + $0x1b4] sm:$0xf]
    %v11067 = vld [vmem:[%s10956 + $0x1b8] sm:$0xf]
    %v11068 = vld [vmem:[%s10956 + $0x1bc] sm:$0xf]
    %v11069 = vld [vmem:[%s10956 + $0x1c0] sm:$0xf]
    %v11070 = vld [vmem:[%s10956 + $0x1c4] sm:$0xf]
    %v11071 = vld [vmem:[%s10956 + $0x1c8] sm:$0xf]
    %v11072 = vld [vmem:[%s10956 + $0x1cc] sm:$0xf]
    %v11073 = vld [vmem:[%s10956 + $0x1d0] sm:$0xf]
    %v11074 = vld [vmem:[%s10956 + $0x1d4] sm:$0xf]
    %v11075 = vld [vmem:[%s10956 + $0x1d8] sm:$0xf]
    %v11076 = vld [vmem:[%s10956 + $0x1dc] sm:$0xf]
    %v11077 = vld [vmem:[%s10956 + $0x1e0] sm:$0xf]
    %v11078 = vld [vmem:[%s10956 + $0x1e4] sm:$0xf]
    %v11079 = vld [vmem:[%s10956 + $0x1e8] sm:$0xf]
    %v11080 = vld [vmem:[%s10956 + $0x1ec] sm:$0xf]
    %v11081 = vld [vmem:[%s10956 + $0x1f0] sm:$0xf]
    %v11082 = vld [vmem:[%s10956 + $0x1f4] sm:$0xf]
    %v11083 = vld [vmem:[%s10956 + $0x1f8] sm:$0xf]
    %v11084 = vld [vmem:[%s10956 + $0x1fc] sm:$0xf]
    %v11085 = vld [vmem:[%s10956 + $0x200] sm:$0xf]
    %v11086 = vld [vmem:[%s10956 + $0x204] sm:$0xf]
    %v11087 = vld [vmem:[%s10956 + $0x208] sm:$0xf]
    %v11088 = vld [vmem:[%s10956 + $0x20c] sm:$0xf]
    %v11089 = vld [vmem:[%s10956 + $0x210] sm:$0xf]
    %v11090 = vld [vmem:[%s10956 + $0x214] sm:$0xf]
    %v11091 = vld [vmem:[%s10956 + $0x218] sm:$0xf]
    %v11092 = vld [vmem:[%s10956 + $0x21c] sm:$0xf]
    %v11093 = vld [vmem:[%s10956 + $0x220] sm:$0xf]
    %v11094 = vld [vmem:[%s10956 + $0x224] sm:$0xf]
    %v11095 = vld [vmem:[%s10956 + $0x228] sm:$0xf]
    %v11096 = vld [vmem:[%s10956 + $0x22c] sm:$0xf]
    %v11097 = vld [vmem:[%s10956 + $0x230] sm:$0xf]
    %v11098 = vld [vmem:[%s10956 + $0x234] sm:$0xf]
    %v11099 = vld [vmem:[%s10956 + $0x238] sm:$0xf]
    %v11100 = vld [vmem:[%s10956 + $0x23c] sm:$0xf]
    %v11101 = vld [vmem:[%s10956 + $0x240] sm:$0xf]
    %v11102 = vld [vmem:[%s10956 + $0x244] sm:$0xf]
    %v11103 = vld [vmem:[%s10956 + $0x248] sm:$0xf]
    %v11104 = vld [vmem:[%s10956 + $0x24c] sm:$0xf]
    %v11105 = vld [vmem:[%s10956 + $0x250] sm:$0xf]
    %v11106 = vld [vmem:[%s10956 + $0x254] sm:$0xf]
    %v11107 = vld [vmem:[%s10956 + $0x258] sm:$0xf]
    %v11108 = vld [vmem:[%s10956 + $0x25c] sm:$0xf]
    %v11109 = vld [vmem:[%s10956 + $0x260] sm:$0xf]
    %v11110 = vld [vmem:[%s10956 + $0x264] sm:$0xf]
    %v11111 = vld [vmem:[%s10956 + $0x268] sm:$0xf]
    %v11112 = vld [vmem:[%s10956 + $0x26c] sm:$0xf]
    %v11113 = vld [vmem:[%s10956 + $0x270] sm:$0xf]
    %v11114 = vld [vmem:[%s10956 + $0x274] sm:$0xf]
    %v11115 = vld [vmem:[%s10956 + $0x278] sm:$0xf]
    %v11116 = vld [vmem:[%s10956 + $0x27c] sm:$0xf]
    %v11117 = vld [vmem:[%s10956 + $0x280] sm:$0xf]
    %v11118 = vld [vmem:[%s10956 + $0x284] sm:$0xf]
    %v11119 = vld [vmem:[%s10956 + $0x288] sm:$0xf]
    %v11120 = vld [vmem:[%s10956 + $0x28c] sm:$0xf]
    %v11121 = vld [vmem:[%s10956 + $0x290] sm:$0xf]
    %v11122 = vld [vmem:[%s10956 + $0x294] sm:$0xf]
    %v11123 = vld [vmem:[%s10956 + $0x298] sm:$0xf]
    %v11124 = vld [vmem:[%s10956 + $0x29c] sm:$0xf]
    %v11125 = vld [vmem:[%s10956 + $0x2a0] sm:$0xf]
    %v11126 = vld [vmem:[%s10956 + $0x2a4] sm:$0xf]
    %v11127 = vld [vmem:[%s10956 + $0x2a8] sm:$0xf]
    %v11128 = vld [vmem:[%s10956 + $0x2ac] sm:$0xf]
    %v11129 = vld [vmem:[%s10956 + $0x2b0] sm:$0xf]
    %v11130 = vld [vmem:[%s10956 + $0x2b4] sm:$0xf]
    %v11131 = vld [vmem:[%s10956 + $0x2b8] sm:$0xf]
    %v11132 = vld [vmem:[%s10956 + $0x2bc] sm:$0xf]
    %v11133 = vld [vmem:[%s10956 + $0x2c0] sm:$0xf]
    %v11134 = vld [vmem:[%s10956 + $0x2c4] sm:$0xf]
    %v11135 = vld [vmem:[%s10956 + $0x2c8] sm:$0xf]
    %v11136 = vld [vmem:[%s10956 + $0x2cc] sm:$0xf]
    %v11137 = vld [vmem:[%s10956 + $0x2d0] sm:$0xf]
    %v11138 = vld [vmem:[%s10956 + $0x2d4] sm:$0xf]
    %v11139 = vld [vmem:[%s10956 + $0x2d8] sm:$0xf]
    %v11140 = vld [vmem:[%s10956 + $0x2dc] sm:$0xf]
    %v11141 = vld [vmem:[%s10956 + $0x2e0] sm:$0xf]
    %v11142 = vld [vmem:[%s10956 + $0x2e4] sm:$0xf]
    %v11143 = vld [vmem:[%s10956 + $0x2e8] sm:$0xf]
    %v11144 = vld [vmem:[%s10956 + $0x2ec] sm:$0xf]
    %v11145 = vld [vmem:[%s10956 + $0x2f0] sm:$0xf]
    %v11146 = vld [vmem:[%s10956 + $0x2f4] sm:$0xf]
    %v11147 = vld [vmem:[%s10956 + $0x2f8] sm:$0xf]
    %v11148 = vld [vmem:[%s10956 + $0x2fc] sm:$0xf]
    %v11149 = vld [vmem:[%s10956 + $0x300] sm:$0xf]
    %v11150 = vld [vmem:[%s10956 + $0x304] sm:$0xf]
    %v11151 = vld [vmem:[%s10956 + $0x308] sm:$0xf]
    %v11152 = vld [vmem:[%s10956 + $0x30c] sm:$0xf]
    %v11153 = vld [vmem:[%s10956 + $0x310] sm:$0xf]
    %v11154 = vld [vmem:[%s10956 + $0x314] sm:$0xf]
    %v11155 = vld [vmem:[%s10956 + $0x318] sm:$0xf]
    %v11156 = vld [vmem:[%s10956 + $0x31c] sm:$0xf]
    %v11157 = vld [vmem:[%s10956 + $0x320] sm:$0xf]
    %v11158 = vld [vmem:[%s10956 + $0x324] sm:$0xf]
    %v11159 = vld [vmem:[%s10956 + $0x328] sm:$0xf]
    %v11160 = vld [vmem:[%s10956 + $0x32c] sm:$0xf]
    %v11161 = vld [vmem:[%s10956 + $0x330] sm:$0xf]
    %v11162 = vld [vmem:[%s10956 + $0x334] sm:$0xf]
    %v11163 = vld [vmem:[%s10956 + $0x338] sm:$0xf]
    %v11164 = vld [vmem:[%s10956 + $0x33c] sm:$0xf]
    %v11165 = vld [vmem:[%s10956 + $0x340] sm:$0xf]
    %v11166 = vld [vmem:[%s10956 + $0x344] sm:$0xf]
    %v11167 = vld [vmem:[%s10956 + $0x348] sm:$0xf]
    %v11168 = vld [vmem:[%s10956 + $0x34c] sm:$0xf]
    %v11169 = vld [vmem:[%s10956 + $0x350] sm:$0xf]
    %v11170 = vld [vmem:[%s10956 + $0x354] sm:$0xf]
    %v11171 = vld [vmem:[%s10956 + $0x358] sm:$0xf]
    %v11172 = vld [vmem:[%s10956 + $0x35c] sm:$0xf]
    %v11173 = vld [vmem:[%s10956 + $0x360] sm:$0xf]
    %v11174 = vld [vmem:[%s10956 + $0x364] sm:$0xf]
    %v11175 = vld [vmem:[%s10956 + $0x368] sm:$0xf]
    %v11176 = vld [vmem:[%s10956 + $0x36c] sm:$0xf]
    %v11177 = vld [vmem:[%s10956 + $0x370] sm:$0xf]
    %v11178 = vld [vmem:[%s10956 + $0x374] sm:$0xf]
    %v11179 = vld [vmem:[%s10956 + $0x378] sm:$0xf]
    %v11180 = vld [vmem:[%s10956 + $0x37c] sm:$0xf]
    %v11181 = vld [vmem:[%s10956 + $0x380] sm:$0xf]
    %v11182 = vld [vmem:[%s10956 + $0x384] sm:$0xf]
    %v11183 = vld [vmem:[%s10956 + $0x388] sm:$0xf]
    %v11184 = vld [vmem:[%s10956 + $0x38c] sm:$0xf]
    %v11185 = vld [vmem:[%s10956 + $0x390] sm:$0xf]
    %v11186 = vld [vmem:[%s10956 + $0x394] sm:$0xf]
    %v11187 = vld [vmem:[%s10956 + $0x398] sm:$0xf]
    %v11188 = vld [vmem:[%s10956 + $0x39c] sm:$0xf]
    %v11189 = vld [vmem:[%s10956 + $0x3a0] sm:$0xf]
    %v11190 = vld [vmem:[%s10956 + $0x3a4] sm:$0xf]
    %v11191 = vld [vmem:[%s10956 + $0x3a8] sm:$0xf]
    %v11192 = vld [vmem:[%s10956 + $0x3ac] sm:$0xf]
    %v11193 = vld [vmem:[%s10956 + $0x3b0] sm:$0xf]
    %v11194 = vld [vmem:[%s10956 + $0x3b4] sm:$0xf]
    %v11195 = vld [vmem:[%s10956 + $0x3b8] sm:$0xf]
    %v11196 = vld [vmem:[%s10956 + $0x3bc] sm:$0xf]
    %v11197 = vld [vmem:[%s10956 + $0x3c0] sm:$0xf]
    %v11198 = vld [vmem:[%s10956 + $0x3c4] sm:$0xf]
    %v11199 = vld [vmem:[%s10956 + $0x3c8] sm:$0xf]
    %v11200 = vld [vmem:[%s10956 + $0x3cc] sm:$0xf]
    %v11201 = vld [vmem:[%s10956 + $0x3d0] sm:$0xf]
    %v11202 = vld [vmem:[%s10956 + $0x3d4] sm:$0xf]
    %v11203 = vld [vmem:[%s10956 + $0x3d8] sm:$0xf]
    %v11204 = vld [vmem:[%s10956 + $0x3dc] sm:$0xf]
    %v11205 = vld [vmem:[%s10956 + $0x3e0] sm:$0xf]
    %v11206 = vld [vmem:[%s10956 + $0x3e4] sm:$0xf]
    %v11207 = vld [vmem:[%s10956 + $0x3e8] sm:$0xf]
    %v11208 = vld [vmem:[%s10956 + $0x3ec] sm:$0xf]
    %v11209 = vld [vmem:[%s10956 + $0x3f0] sm:$0xf]
    %v11210 = vld [vmem:[%s10956 + $0x3f4] sm:$0xf]
    %v11211 = vld [vmem:[%s10956 + $0x3f8] sm:$0xf]
    %v11212 = vld [vmem:[%s10956 + $0x3fc] sm:$0xf]
    %v11213 = vpack.c.bf16 %v10940, %v10940
    %v11214 = vpack.c.bf16 %v10941, %v10941
    %v11215 = vpack.c.bf16 %v10942, %v10942
    %v11216 = vpack.c.bf16 %v10943, %v10943
    %v11217 = vpack.c.bf16 %v10944, %v10944
    %v11218 = vpack.c.bf16 %v10945, %v10945
    %v11219 = vpack.c.bf16 %v10946, %v10946
    %v11220 = vpack.c.bf16 %v10947, %v10947
    %v11221 = vpack.c.bf16 %v10948, %v10948
    %v11222 = vpack.c.bf16 %v10949, %v10949
    %v11223 = vpack.c.bf16 %v10950, %v10950
    %v11224 = vpack.c.bf16 %v10951, %v10951
    %v11225 = vpack.c.bf16 %v10952, %v10952
    %v11226 = vpack.c.bf16 %v10953, %v10953
    %v11227 = vpack.c.bf16 %v10954, %v10954
    %v11228 = vpack.c.bf16 %v10955, %v10955
    %v11229 = vlaneseq
    %v11230 = vshrl.u32 %v11229, 7
    %v11231 = vsub.s32 6, %v11230
    %v11232 = vrot.slane %v8351, %v11231
    %v11489 = vunpack.c.l.b16 %v10957
    %v11490 = vunpack.c.l.b16 %v10958
    %v11491 = vunpack.c.l.b16 %v10959
    %v11492 = vunpack.c.l.b16 %v10960
    %v11493 = vunpack.c.l.b16 %v10961
    %v11494 = vunpack.c.l.b16 %v10962
    %v11495 = vunpack.c.l.b16 %v10963
    %v11496 = vunpack.c.l.b16 %v10964
    %v11497 = vunpack.c.l.b16 %v10965
    %v11498 = vunpack.c.l.b16 %v10966
    %v11499 = vunpack.c.l.b16 %v10967
    %v11500 = vunpack.c.l.b16 %v10968
    %v11501 = vunpack.c.l.b16 %v10969
    %v11502 = vunpack.c.l.b16 %v10970
    %v11503 = vunpack.c.l.b16 %v10971
    %v11504 = vunpack.c.l.b16 %v10972
    %v11505 = vunpack.c.l.b16 %v10973
    %v11506 = vunpack.c.l.b16 %v10974
    %v11507 = vunpack.c.l.b16 %v10975
    %v11508 = vunpack.c.l.b16 %v10976
    %v11509 = vunpack.c.l.b16 %v10977
    %v11510 = vunpack.c.l.b16 %v10978
    %v11511 = vunpack.c.l.b16 %v10979
    %v11512 = vunpack.c.l.b16 %v10980
    %v11513 = vunpack.c.l.b16 %v10981
    %v11514 = vunpack.c.l.b16 %v10982
    %v11515 = vunpack.c.l.b16 %v10983
    %v11516 = vunpack.c.l.b16 %v10984
    %v11517 = vunpack.c.l.b16 %v10985
    %v11518 = vunpack.c.l.b16 %v10986
    %v11519 = vunpack.c.l.b16 %v10987
    %v11520 = vunpack.c.l.b16 %v10988
    %v11521 = vunpack.c.l.b16 %v10989
    %v11522 = vunpack.c.l.b16 %v10990
    %v11523 = vunpack.c.l.b16 %v10991
    %v11524 = vunpack.c.l.b16 %v10992
    %v11525 = vunpack.c.l.b16 %v10993
    %v11526 = vunpack.c.l.b16 %v10994
    %v11527 = vunpack.c.l.b16 %v10995
    %v11528 = vunpack.c.l.b16 %v10996
    %v11529 = vunpack.c.l.b16 %v10997
    %v11530 = vunpack.c.l.b16 %v10998
    %v11531 = vunpack.c.l.b16 %v10999
    %v11532 = vunpack.c.l.b16 %v11000
    %v11533 = vunpack.c.l.b16 %v11001
    %v11534 = vunpack.c.l.b16 %v11002
    %v11535 = vunpack.c.l.b16 %v11003
    %v11536 = vunpack.c.l.b16 %v11004
    %v11537 = vunpack.c.l.b16 %v11005
    %v11538 = vunpack.c.l.b16 %v11006
    %v11539 = vunpack.c.l.b16 %v11007
    %v11540 = vunpack.c.l.b16 %v11008
    %v11541 = vunpack.c.l.b16 %v11009
    %v11542 = vunpack.c.l.b16 %v11010
    %v11543 = vunpack.c.l.b16 %v11011
    %v11544 = vunpack.c.l.b16 %v11012
    %v11545 = vunpack.c.l.b16 %v11013
    %v11546 = vunpack.c.l.b16 %v11014
    %v11547 = vunpack.c.l.b16 %v11015
    %v11548 = vunpack.c.l.b16 %v11016
    %v11549 = vunpack.c.l.b16 %v11017
    %v11550 = vunpack.c.l.b16 %v11018
    %v11551 = vunpack.c.l.b16 %v11019
    %v11552 = vunpack.c.l.b16 %v11020
    %v11553 = vunpack.c.l.b16 %v11021
    %v11554 = vunpack.c.l.b16 %v11022
    %v11555 = vunpack.c.l.b16 %v11023
    %v11556 = vunpack.c.l.b16 %v11024
    %v11557 = vunpack.c.l.b16 %v11025
    %v11558 = vunpack.c.l.b16 %v11026
    %v11559 = vunpack.c.l.b16 %v11027
    %v11560 = vunpack.c.l.b16 %v11028
    %v11561 = vunpack.c.l.b16 %v11029
    %v11562 = vunpack.c.l.b16 %v11030
    %v11563 = vunpack.c.l.b16 %v11031
    %v11564 = vunpack.c.l.b16 %v11032
    %v11565 = vunpack.c.l.b16 %v11033
    %v11566 = vunpack.c.l.b16 %v11034
    %v11567 = vunpack.c.l.b16 %v11035
    %v11568 = vunpack.c.l.b16 %v11036
    %v11569 = vunpack.c.l.b16 %v11037
    %v11570 = vunpack.c.l.b16 %v11038
    %v11571 = vunpack.c.l.b16 %v11039
    %v11572 = vunpack.c.l.b16 %v11040
    %v11573 = vunpack.c.l.b16 %v11041
    %v11574 = vunpack.c.l.b16 %v11042
    %v11575 = vunpack.c.l.b16 %v11043
    %v11576 = vunpack.c.l.b16 %v11044
    %v11577 = vunpack.c.l.b16 %v11045
    %v11578 = vunpack.c.l.b16 %v11046
    %v11579 = vunpack.c.l.b16 %v11047
    %v11580 = vunpack.c.l.b16 %v11048
    %v11581 = vunpack.c.l.b16 %v11049
    %v11582 = vunpack.c.l.b16 %v11050
    %v11583 = vunpack.c.l.b16 %v11051
    %v11584 = vunpack.c.l.b16 %v11052
    %v11585 = vunpack.c.l.b16 %v11053
    %v11586 = vunpack.c.l.b16 %v11054
    %v11587 = vunpack.c.l.b16 %v11055
    %v11588 = vunpack.c.l.b16 %v11056
    %v11589 = vunpack.c.l.b16 %v11057
    %v11590 = vunpack.c.l.b16 %v11058
    %v11591 = vunpack.c.l.b16 %v11059
    %v11592 = vunpack.c.l.b16 %v11060
    %v11593 = vunpack.c.l.b16 %v11061
    %v11594 = vunpack.c.l.b16 %v11062
    %v11595 = vunpack.c.l.b16 %v11063
    %v11596 = vunpack.c.l.b16 %v11064
    %v11597 = vunpack.c.l.b16 %v11065
    %v11598 = vunpack.c.l.b16 %v11066
    %v11599 = vunpack.c.l.b16 %v11067
    %v11600 = vunpack.c.l.b16 %v11068
    %v11601 = vunpack.c.l.b16 %v11069
    %v11602 = vunpack.c.l.b16 %v11070
    %v11603 = vunpack.c.l.b16 %v11071
    %v11604 = vunpack.c.l.b16 %v11072
    %v11605 = vunpack.c.l.b16 %v11073
    %v11606 = vunpack.c.l.b16 %v11074
    %v11607 = vunpack.c.l.b16 %v11075
    %v11608 = vunpack.c.l.b16 %v11076
    %v11609 = vunpack.c.l.b16 %v11077
    %v11610 = vunpack.c.l.b16 %v11078
    %v11611 = vunpack.c.l.b16 %v11079
    %v11612 = vunpack.c.l.b16 %v11080
    %v11613 = vunpack.c.l.b16 %v11081
    %v11614 = vunpack.c.l.b16 %v11082
    %v11615 = vunpack.c.l.b16 %v11083
    %v11616 = vunpack.c.l.b16 %v11084
    %v11617 = vunpack.c.l.b16 %v11085
    %v11618 = vunpack.c.l.b16 %v11086
    %v11619 = vunpack.c.l.b16 %v11087
    %v11620 = vunpack.c.l.b16 %v11088
    %v11621 = vunpack.c.l.b16 %v11089
    %v11622 = vunpack.c.l.b16 %v11090
    %v11623 = vunpack.c.l.b16 %v11091
    %v11624 = vunpack.c.l.b16 %v11092
    %v11625 = vunpack.c.l.b16 %v11093
    %v11626 = vunpack.c.l.b16 %v11094
    %v11627 = vunpack.c.l.b16 %v11095
    %v11628 = vunpack.c.l.b16 %v11096
    %v11629 = vunpack.c.l.b16 %v11097
    %v11630 = vunpack.c.l.b16 %v11098
    %v11631 = vunpack.c.l.b16 %v11099
    %v11632 = vunpack.c.l.b16 %v11100
    %v11633 = vunpack.c.l.b16 %v11101
    %v11634 = vunpack.c.l.b16 %v11102
    %v11635 = vunpack.c.l.b16 %v11103
    %v11636 = vunpack.c.l.b16 %v11104
    %v11637 = vunpack.c.l.b16 %v11105
    %v11638 = vunpack.c.l.b16 %v11106
    %v11639 = vunpack.c.l.b16 %v11107
    %v11640 = vunpack.c.l.b16 %v11108
    %v11641 = vunpack.c.l.b16 %v11109
    %v11642 = vunpack.c.l.b16 %v11110
    %v11643 = vunpack.c.l.b16 %v11111
    %v11644 = vunpack.c.l.b16 %v11112
    %v11645 = vunpack.c.l.b16 %v11113
    %v11646 = vunpack.c.l.b16 %v11114
    %v11647 = vunpack.c.l.b16 %v11115
    %v11648 = vunpack.c.l.b16 %v11116
    %v11649 = vunpack.c.l.b16 %v11117
    %v11650 = vunpack.c.l.b16 %v11118
    %v11651 = vunpack.c.l.b16 %v11119
    %v11652 = vunpack.c.l.b16 %v11120
    %v11653 = vunpack.c.l.b16 %v11121
    %v11654 = vunpack.c.l.b16 %v11122
    %v11655 = vunpack.c.l.b16 %v11123
    %v11656 = vunpack.c.l.b16 %v11124
    %v11657 = vunpack.c.l.b16 %v11125
    %v11658 = vunpack.c.l.b16 %v11126
    %v11659 = vunpack.c.l.b16 %v11127
    %v11660 = vunpack.c.l.b16 %v11128
    %v11661 = vunpack.c.l.b16 %v11129
    %v11662 = vunpack.c.l.b16 %v11130
    %v11663 = vunpack.c.l.b16 %v11131
    %v11664 = vunpack.c.l.b16 %v11132
    %v11665 = vunpack.c.l.b16 %v11133
    %v11666 = vunpack.c.l.b16 %v11134
    %v11667 = vunpack.c.l.b16 %v11135
    %v11668 = vunpack.c.l.b16 %v11136
    %v11669 = vunpack.c.l.b16 %v11137
    %v11670 = vunpack.c.l.b16 %v11138
    %v11671 = vunpack.c.l.b16 %v11139
    %v11672 = vunpack.c.l.b16 %v11140
    %v11673 = vunpack.c.l.b16 %v11141
    %v11674 = vunpack.c.l.b16 %v11142
    %v11675 = vunpack.c.l.b16 %v11143
    %v11676 = vunpack.c.l.b16 %v11144
    %v11677 = vunpack.c.l.b16 %v11145
    %v11678 = vunpack.c.l.b16 %v11146
    %v11679 = vunpack.c.l.b16 %v11147
    %v11680 = vunpack.c.l.b16 %v11148
    %v11681 = vunpack.c.l.b16 %v11149
    %v11682 = vunpack.c.l.b16 %v11150
    %v11683 = vunpack.c.l.b16 %v11151
    %v11684 = vunpack.c.l.b16 %v11152
    %v11685 = vunpack.c.l.b16 %v11153
    %v11686 = vunpack.c.l.b16 %v11154
    %v11687 = vunpack.c.l.b16 %v11155
    %v11688 = vunpack.c.l.b16 %v11156
    %v11689 = vunpack.c.l.b16 %v11157
    %v11690 = vunpack.c.l.b16 %v11158
    %v11691 = vunpack.c.l.b16 %v11159
    %v11692 = vunpack.c.l.b16 %v11160
    %v11693 = vunpack.c.l.b16 %v11161
    %v11694 = vunpack.c.l.b16 %v11162
    %v11695 = vunpack.c.l.b16 %v11163
    %v11696 = vunpack.c.l.b16 %v11164
    %v11697 = vunpack.c.l.b16 %v11165
    %v11698 = vunpack.c.l.b16 %v11166
    %v11699 = vunpack.c.l.b16 %v11167
    %v11700 = vunpack.c.l.b16 %v11168
    %v11701 = vunpack.c.l.b16 %v11169
    %v11702 = vunpack.c.l.b16 %v11170
    %v11703 = vunpack.c.l.b16 %v11171
    %v11704 = vunpack.c.l.b16 %v11172
    %v11705 = vunpack.c.l.b16 %v11173
    %v11706 = vunpack.c.l.b16 %v11174
    %v11707 = vunpack.c.l.b16 %v11175
    %v11708 = vunpack.c.l.b16 %v11176
    %v11709 = vunpack.c.l.b16 %v11177
    %v11710 = vunpack.c.l.b16 %v11178
    %v11711 = vunpack.c.l.b16 %v11179
    %v11712 = vunpack.c.l.b16 %v11180
    %v11713 = vunpack.c.l.b16 %v11181
    %v11714 = vunpack.c.l.b16 %v11182
    %v11715 = vunpack.c.l.b16 %v11183
    %v11716 = vunpack.c.l.b16 %v11184
    %v11717 = vunpack.c.l.b16 %v11185
    %v11718 = vunpack.c.l.b16 %v11186
    %v11719 = vunpack.c.l.b16 %v11187
    %v11720 = vunpack.c.l.b16 %v11188
    %v11721 = vunpack.c.l.b16 %v11189
    %v11722 = vunpack.c.l.b16 %v11190
    %v11723 = vunpack.c.l.b16 %v11191
    %v11724 = vunpack.c.l.b16 %v11192
    %v11725 = vunpack.c.l.b16 %v11193
    %v11726 = vunpack.c.l.b16 %v11194
    %v11727 = vunpack.c.l.b16 %v11195
    %v11728 = vunpack.c.l.b16 %v11196
    %v11729 = vunpack.c.l.b16 %v11197
    %v11730 = vunpack.c.l.b16 %v11198
    %v11731 = vunpack.c.l.b16 %v11199
    %v11732 = vunpack.c.l.b16 %v11200
    %v11733 = vunpack.c.l.b16 %v11201
    %v11734 = vunpack.c.l.b16 %v11202
    %v11735 = vunpack.c.l.b16 %v11203
    %v11736 = vunpack.c.l.b16 %v11204
    %v11737 = vunpack.c.l.b16 %v11205
    %v11738 = vunpack.c.l.b16 %v11206
    %v11739 = vunpack.c.l.b16 %v11207
    %v11740 = vunpack.c.l.b16 %v11208
    %v11741 = vunpack.c.l.b16 %v11209
    %v11742 = vunpack.c.l.b16 %v11210
    %v11743 = vunpack.c.l.b16 %v11211
    %v11744 = vunpack.c.l.b16 %v11212
    %v11745 = vpack.c.b16 %v11490, %v11489
    %v11746 = vpack.c.b16 %v11492, %v11491
    %v11747 = vpack.c.b16 %v11494, %v11493
    %v11748 = vpack.c.b16 %v11496, %v11495
    %v11749 = vpack.c.b16 %v11498, %v11497
    %v11750 = vpack.c.b16 %v11500, %v11499
    %v11751 = vpack.c.b16 %v11502, %v11501
    %v11752 = vpack.c.b16 %v11504, %v11503
    %v11753 = vpack.c.b16 %v11506, %v11505
    %v11754 = vpack.c.b16 %v11508, %v11507
    %v11755 = vpack.c.b16 %v11510, %v11509
    %v11756 = vpack.c.b16 %v11512, %v11511
    %v11757 = vpack.c.b16 %v11514, %v11513
    %v11758 = vpack.c.b16 %v11516, %v11515
    %v11759 = vpack.c.b16 %v11518, %v11517
    %v11760 = vpack.c.b16 %v11520, %v11519
    %v11761 = vpack.c.b16 %v11522, %v11521
    %v11762 = vpack.c.b16 %v11524, %v11523
    %v11763 = vpack.c.b16 %v11526, %v11525
    %v11764 = vpack.c.b16 %v11528, %v11527
    %v11765 = vpack.c.b16 %v11530, %v11529
    %v11766 = vpack.c.b16 %v11532, %v11531
    %v11767 = vpack.c.b16 %v11534, %v11533
    %v11768 = vpack.c.b16 %v11536, %v11535
    %v11769 = vpack.c.b16 %v11538, %v11537
    %v11770 = vpack.c.b16 %v11540, %v11539
    %v11771 = vpack.c.b16 %v11542, %v11541
    %v11772 = vpack.c.b16 %v11544, %v11543
    %v11773 = vpack.c.b16 %v11546, %v11545
    %v11774 = vpack.c.b16 %v11548, %v11547
    %v11775 = vpack.c.b16 %v11550, %v11549
    %v11776 = vpack.c.b16 %v11552, %v11551
    %v11777 = vpack.c.b16 %v11554, %v11553
    %v11778 = vpack.c.b16 %v11556, %v11555
    %v11779 = vpack.c.b16 %v11558, %v11557
    %v11780 = vpack.c.b16 %v11560, %v11559
    %v11781 = vpack.c.b16 %v11562, %v11561
    %v11782 = vpack.c.b16 %v11564, %v11563
    %v11783 = vpack.c.b16 %v11566, %v11565
    %v11784 = vpack.c.b16 %v11568, %v11567
    %v11785 = vpack.c.b16 %v11570, %v11569
    %v11786 = vpack.c.b16 %v11572, %v11571
    %v11787 = vpack.c.b16 %v11574, %v11573
    %v11788 = vpack.c.b16 %v11576, %v11575
    %v11789 = vpack.c.b16 %v11578, %v11577
    %v11790 = vpack.c.b16 %v11580, %v11579
    %v11791 = vpack.c.b16 %v11582, %v11581
    %v11792 = vpack.c.b16 %v11584, %v11583
    %v11793 = vpack.c.b16 %v11586, %v11585
    %v11794 = vpack.c.b16 %v11588, %v11587
    %v11795 = vpack.c.b16 %v11590, %v11589
    %v11796 = vpack.c.b16 %v11592, %v11591
    %v11797 = vpack.c.b16 %v11594, %v11593
    %v11798 = vpack.c.b16 %v11596, %v11595
    %v11799 = vpack.c.b16 %v11598, %v11597
    %v11800 = vpack.c.b16 %v11600, %v11599
    %v11801 = vpack.c.b16 %v11602, %v11601
    %v11802 = vpack.c.b16 %v11604, %v11603
    %v11803 = vpack.c.b16 %v11606, %v11605
    %v11804 = vpack.c.b16 %v11608, %v11607
    %v11805 = vpack.c.b16 %v11610, %v11609
    %v11806 = vpack.c.b16 %v11612, %v11611
    %v11807 = vpack.c.b16 %v11614, %v11613
    %v11808 = vpack.c.b16 %v11616, %v11615
    %v11809 = vpack.c.b16 %v11618, %v11617
    %v11810 = vpack.c.b16 %v11620, %v11619
    %v11811 = vpack.c.b16 %v11622, %v11621
    %v11812 = vpack.c.b16 %v11624, %v11623
    %v11813 = vpack.c.b16 %v11626, %v11625
    %v11814 = vpack.c.b16 %v11628, %v11627
    %v11815 = vpack.c.b16 %v11630, %v11629
    %v11816 = vpack.c.b16 %v11632, %v11631
    %v11817 = vpack.c.b16 %v11634, %v11633
    %v11818 = vpack.c.b16 %v11636, %v11635
    %v11819 = vpack.c.b16 %v11638, %v11637
    %v11820 = vpack.c.b16 %v11640, %v11639
    %v11821 = vpack.c.b16 %v11642, %v11641
    %v11822 = vpack.c.b16 %v11644, %v11643
    %v11823 = vpack.c.b16 %v11646, %v11645
    %v11824 = vpack.c.b16 %v11648, %v11647
    %v11825 = vpack.c.b16 %v11650, %v11649
    %v11826 = vpack.c.b16 %v11652, %v11651
    %v11827 = vpack.c.b16 %v11654, %v11653
    %v11828 = vpack.c.b16 %v11656, %v11655
    %v11829 = vpack.c.b16 %v11658, %v11657
    %v11830 = vpack.c.b16 %v11660, %v11659
    %v11831 = vpack.c.b16 %v11662, %v11661
    %v11832 = vpack.c.b16 %v11664, %v11663
    %v11833 = vpack.c.b16 %v11666, %v11665
    %v11834 = vpack.c.b16 %v11668, %v11667
    %v11835 = vpack.c.b16 %v11670, %v11669
    %v11836 = vpack.c.b16 %v11672, %v11671
    %v11837 = vpack.c.b16 %v11674, %v11673
    %v11838 = vpack.c.b16 %v11676, %v11675
    %v11839 = vpack.c.b16 %v11678, %v11677
    %v11840 = vpack.c.b16 %v11680, %v11679
    %v11841 = vpack.c.b16 %v11682, %v11681
    %v11842 = vpack.c.b16 %v11684, %v11683
    %v11843 = vpack.c.b16 %v11686, %v11685
    %v11844 = vpack.c.b16 %v11688, %v11687
    %v11845 = vpack.c.b16 %v11690, %v11689
    %v11846 = vpack.c.b16 %v11692, %v11691
    %v11847 = vpack.c.b16 %v11694, %v11693
    %v11848 = vpack.c.b16 %v11696, %v11695
    %v11849 = vpack.c.b16 %v11698, %v11697
    %v11850 = vpack.c.b16 %v11700, %v11699
    %v11851 = vpack.c.b16 %v11702, %v11701
    %v11852 = vpack.c.b16 %v11704, %v11703
    %v11853 = vpack.c.b16 %v11706, %v11705
    %v11854 = vpack.c.b16 %v11708, %v11707
    %v11855 = vpack.c.b16 %v11710, %v11709
    %v11856 = vpack.c.b16 %v11712, %v11711
    %v11857 = vpack.c.b16 %v11714, %v11713
    %v11858 = vpack.c.b16 %v11716, %v11715
    %v11859 = vpack.c.b16 %v11718, %v11717
    %v11860 = vpack.c.b16 %v11720, %v11719
    %v11861 = vpack.c.b16 %v11722, %v11721
    %v11862 = vpack.c.b16 %v11724, %v11723
    %v11863 = vpack.c.b16 %v11726, %v11725
    %v11864 = vpack.c.b16 %v11728, %v11727
    %v11865 = vpack.c.b16 %v11730, %v11729
    %v11866 = vpack.c.b16 %v11732, %v11731
    %v11867 = vpack.c.b16 %v11734, %v11733
    %v11868 = vpack.c.b16 %v11736, %v11735
    %v11869 = vpack.c.b16 %v11738, %v11737
    %v11870 = vpack.c.b16 %v11740, %v11739
    %v11871 = vpack.c.b16 %v11742, %v11741
    %v11872 = vpack.c.b16 %v11744, %v11743
    %12001 = vmatprep.subr.bf16.mxu0 0
    %12002 = vmatpush1.bf16.msra.mxu0 %v11745
    %12003 = vmatprep.subr.bf16.mxu0 0
    %12004 = vmatpush1.bf16.msra.mxu0 %v11746
    %12005 = vmatprep.subr.bf16.mxu0 0
    %12006 = vmatpush1.bf16.msra.mxu0 %v11747
    %12007 = vmatprep.subr.bf16.mxu0 0
    %12008 = vmatpush1.bf16.msra.mxu0 %v11748
    %12009 = vmatprep.subr.bf16.mxu0 0
    %12010 = vmatpush1.bf16.msra.mxu0 %v11749
    %12011 = vmatprep.subr.bf16.mxu0 0
    %12012 = vmatpush1.bf16.msra.mxu0 %v11750
    %12013 = vmatprep.subr.bf16.mxu0 0
    %12014 = vmatpush1.bf16.msra.mxu0 %v11751
    %12015 = vmatprep.subr.bf16.mxu0 0
    %12016 = vmatpush1.bf16.msra.mxu0 %v11752
    %12017 = vmatprep.subr.bf16.mxu0 0
    %12018 = vmatpush1.bf16.msra.mxu0 %v11753
    %12019 = vmatprep.subr.bf16.mxu0 0
    %12020 = vmatpush1.bf16.msra.mxu0 %v11754
    %12021 = vmatprep.subr.bf16.mxu0 0
    %12022 = vmatpush1.bf16.msra.mxu0 %v11755
    %12023 = vmatprep.subr.bf16.mxu0 0
    %12024 = vmatpush1.bf16.msra.mxu0 %v11756
    %12025 = vmatprep.subr.bf16.mxu0 0
    %12026 = vmatpush1.bf16.msra.mxu0 %v11757
    %12027 = vmatprep.subr.bf16.mxu0 0
    %12028 = vmatpush1.bf16.msra.mxu0 %v11758
    %12029 = vmatprep.subr.bf16.mxu0 0
    %12030 = vmatpush1.bf16.msra.mxu0 %v11759
    %12031 = vmatprep.subr.bf16.mxu0 0
    %12032 = vmatpush1.bf16.msra.mxu0 %v11760
    %12033 = vmatprep.mubr.bf16.mxu0 %v11214
    %12034 = vmatmul.mubr.bf16.gmra.mrb[0].mxu0 %v11213
    %v12035 = vpop.f32.mrb[0].mxu0
    %v12036 = vadd.f32 %v11232, %v12035
    %v12037 = vpop.f32.mrb[0].mxu0
    %v12038 = vpop.f32.mrb[0].mxu0
    %v12039 = vpop.f32.mrb[0].mxu0
    %12040 = vdwg.mxu0
    %12041 = vmatprep.subr.bf16.mxu0 0
    %12042 = vmatpush1.bf16.msra.mxu0 %v11761
    %12043 = vmatprep.subr.bf16.mxu0 0
    %12044 = vmatpush1.bf16.msra.mxu0 %v11762
    %12045 = vmatprep.subr.bf16.mxu0 0
    %12046 = vmatpush1.bf16.msra.mxu0 %v11763
    %12047 = vmatprep.subr.bf16.mxu0 0
    %12048 = vmatpush1.bf16.msra.mxu0 %v11764
    %12049 = vmatprep.subr.bf16.mxu0 0
    %12050 = vmatpush1.bf16.msra.mxu0 %v11765
    %12051 = vmatprep.subr.bf16.mxu0 0
    %12052 = vmatpush1.bf16.msra.mxu0 %v11766
    %12053 = vmatprep.subr.bf16.mxu0 0
    %12054 = vmatpush1.bf16.msra.mxu0 %v11767
    %12055 = vmatprep.subr.bf16.mxu0 0
    %12056 = vmatpush1.bf16.msra.mxu0 %v11768
    %12057 = vmatprep.subr.bf16.mxu0 0
    %12058 = vmatpush1.bf16.msra.mxu0 %v11769
    %12059 = vmatprep.subr.bf16.mxu0 0
    %12060 = vmatpush1.bf16.msra.mxu0 %v11770
    %12061 = vmatprep.subr.bf16.mxu0 0
    %12062 = vmatpush1.bf16.msra.mxu0 %v11771
    %12063 = vmatprep.subr.bf16.mxu0 0
    %12064 = vmatpush1.bf16.msra.mxu0 %v11772
    %12065 = vmatprep.subr.bf16.mxu0 0
    %12066 = vmatpush1.bf16.msra.mxu0 %v11773
    %12067 = vmatprep.subr.bf16.mxu0 0
    %12068 = vmatpush1.bf16.msra.mxu0 %v11774
    %12069 = vmatprep.subr.bf16.mxu0 0
    %12070 = vmatpush1.bf16.msra.mxu0 %v11775
    %12071 = vmatprep.subr.bf16.mxu0 0
    %12072 = vmatpush1.bf16.msra.mxu0 %v11776
    %12073 = vmatprep.mubr.bf16.mxu0 %v11216
    %12074 = vmatmul.mubr.bf16.gmra.mrb[0].mxu0 %v11215
    %v12075 = vpop.f32.mrb[0].mxu0
    %v12076 = vadd.f32 %v12036, %v12075
    %v12077 = vpop.f32.mrb[0].mxu0
    %v12078 = vpop.f32.mrb[0].mxu0
    %v12079 = vpop.f32.mrb[0].mxu0
    %12080 = vdwg.mxu0
    %12081 = vmatprep.subr.bf16.mxu0 0
    %12082 = vmatpush1.bf16.msra.mxu0 %v11777
    %12083 = vmatprep.subr.bf16.mxu0 0
    %12084 = vmatpush1.bf16.msra.mxu0 %v11778
    %12085 = vmatprep.subr.bf16.mxu0 0
    %12086 = vmatpush1.bf16.msra.mxu0 %v11779
    %12087 = vmatprep.subr.bf16.mxu0 0
    %12088 = vmatpush1.bf16.msra.mxu0 %v11780
    %12089 = vmatprep.subr.bf16.mxu0 0
    %12090 = vmatpush1.bf16.msra.mxu0 %v11781
    %12091 = vmatprep.subr.bf16.mxu0 0
    %12092 = vmatpush1.bf16.msra.mxu0 %v11782
    %12093 = vmatprep.subr.bf16.mxu0 0
    %12094 = vmatpush1.bf16.msra.mxu0 %v11783
    %12095 = vmatprep.subr.bf16.mxu0 0
    %12096 = vmatpush1.bf16.msra.mxu0 %v11784
    %12097 = vmatprep.subr.bf16.mxu0 0
    %12098 = vmatpush1.bf16.msra.mxu0 %v11785
    %12099 = vmatprep.subr.bf16.mxu0 0
    %12100 = vmatpush1.bf16.msra.mxu0 %v11786
    %12101 = vmatprep.subr.bf16.mxu0 0
    %12102 = vmatpush1.bf16.msra.mxu0 %v11787
    %12103 = vmatprep.subr.bf16.mxu0 0
    %12104 = vmatpush1.bf16.msra.mxu0 %v11788
    %12105 = vmatprep.subr.bf16.mxu0 0
    %12106 = vmatpush1.bf16.msra.mxu0 %v11789
    %12107 = vmatprep.subr.bf16.mxu0 0
    %12108 = vmatpush1.bf16.msra.mxu0 %v11790
    %12109 = vmatprep.subr.bf16.mxu0 0
    %12110 = vmatpush1.bf16.msra.mxu0 %v11791
    %12111 = vmatprep.subr.bf16.mxu0 0
    %12112 = vmatpush1.bf16.msra.mxu0 %v11792
    %12113 = vmatprep.mubr.bf16.mxu0 %v11218
    %12114 = vmatmul.mubr.bf16.gmra.mrb[0].mxu0 %v11217
    %v12115 = vpop.f32.mrb[0].mxu0
    %v12116 = vadd.f32 %v12076, %v12115
    %v12117 = vpop.f32.mrb[0].mxu0
    %v12118 = vpop.f32.mrb[0].mxu0
    %v12119 = vpop.f32.mrb[0].mxu0
    %12120 = vdwg.mxu0
    %12121 = vmatprep.subr.bf16.mxu0 0
    %12122 = vmatpush1.bf16.msra.mxu0 %v11793
    %12123 = vmatprep.subr.bf16.mxu0 0
    %12124 = vmatpush1.bf16.msra.mxu0 %v11794
    %12125 = vmatprep.subr.bf16.mxu0 0
    %12126 = vmatpush1.bf16.msra.mxu0 %v11795
    %12127 = vmatprep.subr.bf16.mxu0 0
    %12128 = vmatpush1.bf16.msra.mxu0 %v11796
    %12129 = vmatprep.subr.bf16.mxu0 0
    %12130 = vmatpush1.bf16.msra.mxu0 %v11797
    %12131 = vmatprep.subr.bf16.mxu0 0
    %12132 = vmatpush1.bf16.msra.mxu0 %v11798
    %12133 = vmatprep.subr.bf16.mxu0 0
    %12134 = vmatpush1.bf16.msra.mxu0 %v11799
    %12135 = vmatprep.subr.bf16.mxu0 0
    %12136 = vmatpush1.bf16.msra.mxu0 %v11800
    %12137 = vmatprep.subr.bf16.mxu0 0
    %12138 = vmatpush1.bf16.msra.mxu0 %v11801
    %12139 = vmatprep.subr.bf16.mxu0 0
    %12140 = vmatpush1.bf16.msra.mxu0 %v11802
    %12141 = vmatprep.subr.bf16.mxu0 0
    %12142 = vmatpush1.bf16.msra.mxu0 %v11803
    %12143 = vmatprep.subr.bf16.mxu0 0
    %12144 = vmatpush1.bf16.msra.mxu0 %v11804
    %12145 = vmatprep.subr.bf16.mxu0 0
    %12146 = vmatpush1.bf16.msra.mxu0 %v11805
    %12147 = vmatprep.subr.bf16.mxu0 0
    %12148 = vmatpush1.bf16.msra.mxu0 %v11806
    %12149 = vmatprep.subr.bf16.mxu0 0
    %12150 = vmatpush1.bf16.msra.mxu0 %v11807
    %12151 = vmatprep.subr.bf16.mxu0 0
    %12152 = vmatpush1.bf16.msra.mxu0 %v11808
    %12153 = vmatprep.mubr.bf16.mxu0 %v11220
    %12154 = vmatmul.mubr.bf16.gmra.mrb[0].mxu0 %v11219
    %v12155 = vpop.f32.mrb[0].mxu0
    %v12156 = vadd.f32 %v12116, %v12155
    %v12157 = vpop.f32.mrb[0].mxu0
    %v12158 = vpop.f32.mrb[0].mxu0
    %v12159 = vpop.f32.mrb[0].mxu0
    %12160 = vdwg.mxu0
    %12161 = vmatprep.subr.bf16.mxu0 0
    %12162 = vmatpush1.bf16.msra.mxu0 %v11809
    %12163 = vmatprep.subr.bf16.mxu0 0
    %12164 = vmatpush1.bf16.msra.mxu0 %v11810
    %12165 = vmatprep.subr.bf16.mxu0 0
    %12166 = vmatpush1.bf16.msra.mxu0 %v11811
    %12167 = vmatprep.subr.bf16.mxu0 0
    %12168 = vmatpush1.bf16.msra.mxu0 %v11812
    %12169 = vmatprep.subr.bf16.mxu0 0
    %12170 = vmatpush1.bf16.msra.mxu0 %v11813
    %12171 = vmatprep.subr.bf16.mxu0 0
    %12172 = vmatpush1.bf16.msra.mxu0 %v11814
    %12173 = vmatprep.subr.bf16.mxu0 0
    %12174 = vmatpush1.bf16.msra.mxu0 %v11815
    %12175 = vmatprep.subr.bf16.mxu0 0
    %12176 = vmatpush1.bf16.msra.mxu0 %v11816
    %12177 = vmatprep.subr.bf16.mxu0 0
    %12178 = vmatpush1.bf16.msra.mxu0 %v11817
    %12179 = vmatprep.subr.bf16.mxu0 0
    %12180 = vmatpush1.bf16.msra.mxu0 %v11818
    %12181 = vmatprep.subr.bf16.mxu0 0
    %12182 = vmatpush1.bf16.msra.mxu0 %v11819
    %12183 = vmatprep.subr.bf16.mxu0 0
    %12184 = vmatpush1.bf16.msra.mxu0 %v11820
    %12185 = vmatprep.subr.bf16.mxu0 0
    %12186 = vmatpush1.bf16.msra.mxu0 %v11821
    %12187 = vmatprep.subr.bf16.mxu0 0
    %12188 = vmatpush1.bf16.msra.mxu0 %v11822
    %12189 = vmatprep.subr.bf16.mxu0 0
    %12190 = vmatpush1.bf16.msra.mxu0 %v11823
    %12191 = vmatprep.subr.bf16.mxu0 0
    %12192 = vmatpush1.bf16.msra.mxu0 %v11824
    %12193 = vmatprep.mubr.bf16.mxu0 %v11222
    %12194 = vmatmul.mubr.bf16.gmra.mrb[0].mxu0 %v11221
    %v12195 = vpop.f32.mrb[0].mxu0
    %v12196 = vadd.f32 %v12156, %v12195
    %v12197 = vpop.f32.mrb[0].mxu0
    %v12198 = vpop.f32.mrb[0].mxu0
    %v12199 = vpop.f32.mrb[0].mxu0
    %12200 = vdwg.mxu0
    %12201 = vmatprep.subr.bf16.mxu0 0
    %12202 = vmatpush1.bf16.msra.mxu0 %v11825
    %12203 = vmatprep.subr.bf16.mxu0 0
    %12204 = vmatpush1.bf16.msra.mxu0 %v11826
    %12205 = vmatprep.subr.bf16.mxu0 0
    %12206 = vmatpush1.bf16.msra.mxu0 %v11827
    %12207 = vmatprep.subr.bf16.mxu0 0
    %12208 = vmatpush1.bf16.msra.mxu0 %v11828
    %12209 = vmatprep.subr.bf16.mxu0 0
    %12210 = vmatpush1.bf16.msra.mxu0 %v11829
    %12211 = vmatprep.subr.bf16.mxu0 0
    %12212 = vmatpush1.bf16.msra.mxu0 %v11830
    %12213 = vmatprep.subr.bf16.mxu0 0
    %12214 = vmatpush1.bf16.msra.mxu0 %v11831
    %12215 = vmatprep.subr.bf16.mxu0 0
    %12216 = vmatpush1.bf16.msra.mxu0 %v11832
    %12217 = vmatprep.subr.bf16.mxu0 0
    %12218 = vmatpush1.bf16.msra.mxu0 %v11833
    %12219 = vmatprep.subr.bf16.mxu0 0
    %12220 = vmatpush1.bf16.msra.mxu0 %v11834
    %12221 = vmatprep.subr.bf16.mxu0 0
    %12222 = vmatpush1.bf16.msra.mxu0 %v11835
    %12223 = vmatprep.subr.bf16.mxu0 0
    %12224 = vmatpush1.bf16.msra.mxu0 %v11836
    %12225 = vmatprep.subr.bf16.mxu0 0
    %12226 = vmatpush1.bf16.msra.mxu0 %v11837
    %12227 = vmatprep.subr.bf16.mxu0 0
    %12228 = vmatpush1.bf16.msra.mxu0 %v11838
    %12229 = vmatprep.subr.bf16.mxu0 0
    %12230 = vmatpush1.bf16.msra.mxu0 %v11839
    %12231 = vmatprep.subr.bf16.mxu0 0
    %12232 = vmatpush1.bf16.msra.mxu0 %v11840
    %12233 = vmatprep.mubr.bf16.mxu0 %v11224
    %12234 = vmatmul.mubr.bf16.gmra.mrb[0].mxu0 %v11223
    %v12235 = vpop.f32.mrb[0].mxu0
    %v12236 = vadd.f32 %v12196, %v12235
    %v12237 = vpop.f32.mrb[0].mxu0
    %v12238 = vpop.f32.mrb[0].mxu0
    %v12239 = vpop.f32.mrb[0].mxu0
    %12240 = vdwg.mxu0
    %12241 = vmatprep.subr.bf16.mxu0 0
    %12242 = vmatpush1.bf16.msra.mxu0 %v11841
    %12243 = vmatprep.subr.bf16.mxu0 0
    %12244 = vmatpush1.bf16.msra.mxu0 %v11842
    %12245 = vmatprep.subr.bf16.mxu0 0
    %12246 = vmatpush1.bf16.msra.mxu0 %v11843
    %12247 = vmatprep.subr.bf16.mxu0 0
    %12248 = vmatpush1.bf16.msra.mxu0 %v11844
    %12249 = vmatprep.subr.bf16.mxu0 0
    %12250 = vmatpush1.bf16.msra.mxu0 %v11845
    %12251 = vmatprep.subr.bf16.mxu0 0
    %12252 = vmatpush1.bf16.msra.mxu0 %v11846
    %12253 = vmatprep.subr.bf16.mxu0 0
    %12254 = vmatpush1.bf16.msra.mxu0 %v11847
    %12255 = vmatprep.subr.bf16.mxu0 0
    %12256 = vmatpush1.bf16.msra.mxu0 %v11848
    %12257 = vmatprep.subr.bf16.mxu0 0
    %12258 = vmatpush1.bf16.msra.mxu0 %v11849
    %12259 = vmatprep.subr.bf16.mxu0 0
    %12260 = vmatpush1.bf16.msra.mxu0 %v11850
    %12261 = vmatprep.subr.bf16.mxu0 0
    %12262 = vmatpush1.bf16.msra.mxu0 %v11851
    %12263 = vmatprep.subr.bf16.mxu0 0
    %12264 = vmatpush1.bf16.msra.mxu0 %v11852
    %12265 = vmatprep.subr.bf16.mxu0 0
    %12266 = vmatpush1.bf16.msra.mxu0 %v11853
    %12267 = vmatprep.subr.bf16.mxu0 0
    %12268 = vmatpush1.bf16.msra.mxu0 %v11854
    %12269 = vmatprep.subr.bf16.mxu0 0
    %12270 = vmatpush1.bf16.msra.mxu0 %v11855
    %12271 = vmatprep.subr.bf16.mxu0 0
    %12272 = vmatpush1.bf16.msra.mxu0 %v11856
    %12273 = vmatprep.mubr.bf16.mxu0 %v11226
    %12274 = vmatmul.mubr.bf16.gmra.mrb[0].mxu0 %v11225
    %v12275 = vpop.f32.mrb[0].mxu0
    %v12276 = vadd.f32 %v12236, %v12275
    %v12277 = vpop.f32.mrb[0].mxu0
    %v12278 = vpop.f32.mrb[0].mxu0
    %v12279 = vpop.f32.mrb[0].mxu0
    %12280 = vdwg.mxu0
    %12281 = vmatprep.subr.bf16.mxu0 0
    %12282 = vmatpush1.bf16.msra.mxu0 %v11857
    %12283 = vmatprep.subr.bf16.mxu0 0
    %12284 = vmatpush1.bf16.msra.mxu0 %v11858
    %12285 = vmatprep.subr.bf16.mxu0 0
    %12286 = vmatpush1.bf16.msra.mxu0 %v11859
    %12287 = vmatprep.subr.bf16.mxu0 0
    %12288 = vmatpush1.bf16.msra.mxu0 %v11860
    %12289 = vmatprep.subr.bf16.mxu0 0
    %12290 = vmatpush1.bf16.msra.mxu0 %v11861
    %12291 = vmatprep.subr.bf16.mxu0 0
    %12292 = vmatpush1.bf16.msra.mxu0 %v11862
    %12293 = vmatprep.subr.bf16.mxu0 0
    %12294 = vmatpush1.bf16.msra.mxu0 %v11863
    %12295 = vmatprep.subr.bf16.mxu0 0
    %12296 = vmatpush1.bf16.msra.mxu0 %v11864
    %12297 = vmatprep.subr.bf16.mxu0 0
    %12298 = vmatpush1.bf16.msra.mxu0 %v11865
    %12299 = vmatprep.subr.bf16.mxu0 0
    %12300 = vmatpush1.bf16.msra.mxu0 %v11866
    %12301 = vmatprep.subr.bf16.mxu0 0
    %12302 = vmatpush1.bf16.msra.mxu0 %v11867
    %12303 = vmatprep.subr.bf16.mxu0 0
    %12304 = vmatpush1.bf16.msra.mxu0 %v11868
    %12305 = vmatprep.subr.bf16.mxu0 0
    %12306 = vmatpush1.bf16.msra.mxu0 %v11869
    %12307 = vmatprep.subr.bf16.mxu0 0
    %12308 = vmatpush1.bf16.msra.mxu0 %v11870
    %12309 = vmatprep.subr.bf16.mxu0 0
    %12310 = vmatpush1.bf16.msra.mxu0 %v11871
    %12311 = vmatprep.subr.bf16.mxu0 0
    %12312 = vmatpush1.bf16.msra.mxu0 %v11872
    %12313 = vmatprep.mubr.bf16.mxu0 %v11228
    %12314 = vmatmul.mubr.bf16.gmra.mrb[0].mxu0 %v11227
    %v12315 = vpop.f32.mrb[0].mxu0
    %v12316 = vadd.f32 %v12276, %v12315
    %v12317 = vpop.f32.mrb[0].mxu0
    %v12318 = vpop.f32.mrb[0].mxu0
    %v12319 = vpop.f32.mrb[0].mxu0
    %12320 = vdwg.mxu0
    %v12323 = vunpack.c.l.s4 1983009808
    %v12324 = vunpack.c.0.s8 %v12323
    %v12325 = vlaneseq
    %v12326 = vshrl.u32 %v12325, 7
    %v12327 = vsub.s32 %v12324, %v12326
    %v12328 = vrot.slane %v12316, %v12327
    %v12329 = vcombine.high %v12328, %v12328
    %v12332 = vadd.f32 %v10125, %v12328
    %v12333 = vadd.f32 %v10126, %v12329
    %v12336 = vcombine.low %v12332, %v12333
    %v12338 = vunpack.c.l.s4 1983009808
    %v12339 = vunpack.c.0.s8 %v12338
    %v12340 = vlaneseq
    %v12341 = vshrl.u32 %v12340, 7
    %v12342 = vsub.s32 %v12339, %v12341
    %v12343 = vrot.slane %v12336, %v12342
    %v12345 = vsel %vm1853, %v12343, 0.0
    %12346 = vadd.xlane.f32.xlu0 %v12345
    %v12347 = vpop.xlane.xlu0 %12346
    %v12348 = vmul.f32 %v12347, %v1857
    %v12351 = vunpack.c.l.s4 269488144
    %v12352 = vunpack.c.0.s8 %v12351
    %v12353 = vlaneseq
    %v12354 = vshrl.u32 %v12353, 7
    %v12355 = vsub.s32 %v12352, %v12354
    %v12356 = vrot.slane %v12348, %v12355
    %v12358 = vunpack.c.l.s4 842150450
    %v12359 = vunpack.c.0.s8 %v12358
    %v12360 = vlaneseq
    %v12361 = vshrl.u32 %v12360, 7
    %v12362 = vsub.s32 %v12359, %v12361
    %v12363 = vrot.slane %v12348, %v12362
    %v12366 = vsub.f32 %v12332, %v12356
    %v12367 = vsub.f32 %v12333, %v12363
    %v12368 = vmul.f32 %v12366, %v12366
    %v12369 = vmul.f32 %v12367, %v12367
    %v12372 = vcombine.low %v12368, %v12369
    %v12374 = vunpack.c.l.s4 1983009808
    %v12375 = vunpack.c.0.s8 %v12374
    %v12376 = vlaneseq
    %v12377 = vshrl.u32 %v12376, 7
    %v12378 = vsub.s32 %v12375, %v12377
    %v12379 = vrot.slane %v12372, %v12378
    %v12381 = vsel %vm1853, %v12379, 0.0
    %12382 = vadd.xlane.f32.xlu0 %v12381
    %v12383 = vpop.xlane.xlu0 %12382
    %v12384 = vmul.f32 %v12383, %v1857
    %v12385 = vadd.f32 %v12384, 1e-05
    %v12386 = vrsqrt.pop %v12385
    %v12389 = vunpack.c.l.s4 269488144
    %v12390 = vunpack.c.0.s8 %v12389
    %v12391 = vlaneseq
    %v12392 = vshrl.u32 %v12391, 7
    %v12393 = vsub.s32 %v12390, %v12392
    %v12394 = vrot.slane %v12386, %v12393
    %v12396 = vunpack.c.l.s4 842150450
    %v12397 = vunpack.c.0.s8 %v12396
    %v12398 = vlaneseq
    %v12399 = vshrl.u32 %v12398, 7
    %v12400 = vsub.s32 %v12397, %v12399
    %v12401 = vrot.slane %v12386, %v12400
    %v12404 = vmul.f32 %v12366, %v12394
    %v12405 = vmul.f32 %v12367, %v12401
    %v12406 = vlaneseq
    %v12407 = vshrl.u32 %v12406, 7
    %v12408 = vsub.s32 7, %v12407
    %v12409 = vrot.slane %v8351, %v12408
    %v12412 = vunpack.c.l.s4 1983009808
    %v12413 = vunpack.c.0.s8 %v12412
    %v12414 = vlaneseq
    %v12415 = vshrl.u32 %v12414, 7
    %v12416 = vsub.s32 %v12413, %v12415
    %v12417 = vrot.slane %v12409, %v12416
    %v12418 = vcombine.high %v12417, %v12417
    %v12421 = vmul.f32 %v12404, %v12417
    %v12422 = vmul.f32 %v12405, %v12418
    %v12423 = vlaneseq
    %v12424 = vshrl.u32 %v12423, 7
    %v12425 = vsub.s32 0, %v12424
    %v12426 = vrot.slane %v8352, %v12425
    %v12429 = vunpack.c.l.s4 1983009808
    %v12430 = vunpack.c.0.s8 %v12429
    %v12431 = vlaneseq
    %v12432 = vshrl.u32 %v12431, 7
    %v12433 = vsub.s32 %v12430, %v12432
    %v12434 = vrot.slane %v12426, %v12433
    %v12435 = vcombine.high %v12434, %v12434
    %v12438 = vadd.f32 %v12421, %v12434
    %v12439 = vadd.f32 %v12422, %v12435
    %vm12440 = vcmask 517120
    %v12441 = vsel %vm12440, %v12438, 0.0
    %v12442 = vsel %vm12440, %v12439, 0.0
    %v12443 = vadd.f32 %v12441, %v12442
    %v12444 = vrcp.pop 2.0
    %v12445 = vmul.f32 %v12443, %v12444
    %v12446 = vld [vmem:[%s10] sm:$0xf]
    %v12447 = vld [vmem:[%s10 + $0x4] sm:$0xf]
    %v12448 = vld [vmem:[%s10 + $0x8] sm:$0xf]
    %v12449 = vld [vmem:[%s10 + $0xc] sm:$0xf]
    %v12450 = vld [vmem:[%s10 + $0x10] sm:$0xf]
    %v12451 = vld [vmem:[%s10 + $0x14] sm:$0xf]
    %v12452 = vld [vmem:[%s10 + $0x18] sm:$0xf]
    %v12453 = vld [vmem:[%s10 + $0x1c] sm:$0xf]
    %v12454 = vpack.c.bf16 %v12445, %v12445
    %v12455 = vld [vmem:[%s11] sm:$0x1]
    %v12457 = vlaneseq
    %v12458 = vshrl.u32 %v12457, 7
    %v12459 = vsub.s32 0, %v12458
    %v12460 = vrot.slane %v12455, %v12459
    %v12470 = vunpack.c.l.b16 %v12446
    %v12471 = vunpack.c.l.b16 %v12447
    %v12472 = vunpack.c.l.b16 %v12448
    %v12473 = vunpack.c.l.b16 %v12449
    %v12474 = vunpack.c.l.b16 %v12450
    %v12475 = vunpack.c.l.b16 %v12451
    %v12476 = vunpack.c.l.b16 %v12452
    %v12477 = vunpack.c.l.b16 %v12453
    %v12478 = vpack.c.b16 %v12471, %v12470
    %v12479 = vpack.c.b16 %v12473, %v12472
    %v12480 = vpack.c.b16 %v12475, %v12474
    %v12481 = vpack.c.b16 %v12477, %v12476
    %v12487 = vsel %vm229, %v12454, 0
    %12489 = vmatprep.subr.bf16.mxu0 0
    %12490 = vmatpush1.bf16.msra.mxu0 %v12478
    %12491 = vmatprep.subr.bf16.mxu0 0
    %12492 = vmatpush1.bf16.msra.mxu0 %v12479
    %12493 = vmatprep.subr.bf16.mxu0 0
    %12494 = vmatpush1.bf16.msra.mxu0 %v12480
    %12495 = vmatprep.subr.bf16.mxu0 0
    %12496 = vmatpush1.bf16.msra.mxu0 %v12481
    %12497 = vmatprep.subr.bf16.mxu0 0
    %12498 = vmatpush1.bf16.msra.mxu0 0
    %12499 = vmatprep.subr.bf16.mxu0 0
    %12500 = vmatpush1.bf16.msra.mxu0 0
    %12501 = vmatprep.subr.bf16.mxu0 0
    %12502 = vmatpush1.bf16.msra.mxu0 0
    %12503 = vmatprep.subr.bf16.mxu0 0
    %12504 = vmatpush1.bf16.msra.mxu0 0
    %12505 = vmatprep.subr.bf16.mxu0 0
    %12506 = vmatpush1.bf16.msra.mxu0 0
    %12507 = vmatprep.subr.bf16.mxu0 0
    %12508 = vmatpush1.bf16.msra.mxu0 0
    %12509 = vmatprep.subr.bf16.mxu0 0
    %12510 = vmatpush1.bf16.msra.mxu0 0
    %12511 = vmatprep.subr.bf16.mxu0 0
    %12512 = vmatpush1.bf16.msra.mxu0 0
    %12513 = vmatprep.subr.bf16.mxu0 0
    %12514 = vmatpush1.bf16.msra.mxu0 0
    %12515 = vmatprep.subr.bf16.mxu0 0
    %12516 = vmatpush1.bf16.msra.mxu0 0
    %12517 = vmatprep.subr.bf16.mxu0 0
    %12518 = vmatpush1.bf16.msra.mxu0 0
    %12519 = vmatprep.subr.bf16.mxu0 0
    %12520 = vmatpush1.bf16.msra.mxu0 0
    %12521 = vmatprep.mubr.bf16.mxu0 0
    %12522 = vmatmul.mubr.bf16.gmra.mrb[0].mxu0 %v12487
    %v12523 = vpop.f32.mrb[0].mxu0
    %v12524 = vadd.f32 %v12460, %v12523
    %v12525 = vpop.f32.mrb[0].mxu0
    %v12526 = vpop.f32.mrb[0].mxu0
    %v12527 = vpop.f32.mrb[0].mxu0
    %12528 = vdwg.mxu0
    %12529 = vst [vmem:[#allocation2] sm:$0x3] %v12524
    // Predicated region
    $region50: #{patchtst_forward.1} parent=1 // pred_check
      _
    $region51: #{patchtst_forward.1} parent=1 // pred_check_branch
      %12531 = sbr.rel (0) target = $region53
    $region52: #{patchtst_forward.1} parent=1 // pred_region
      %s12533 = ssub.s32 32, 32
      %12534 = vsyncadd [#allocation3], %s12533
      %s12536 = sshll.u32 [#allocation2], 4
      %s12537 = int_to_ptr.vmem [resolvable:$true] %s12536
      %12539 = dma.vmem_to_hbm [thread:$0]  %s12537, 32, %s12, [#allocation3]
    $region53: #{patchtst_forward.1} parent=1 // pred_fallthru
      _
    // Predicated region
    $region54: #{patchtst_forward.1} parent=1 // pred_check
      _
    $region55: #{patchtst_forward.1} parent=1 // pred_check_branch
      %12541 = sbr.rel (0) target = $region57
    $region56: #{patchtst_forward.1} parent=1 // pred_region
      %12542 = dma.done [#allocation3], 32
    $region57: #{patchtst_forward.1} parent=1 // pred_fallthru
      _
    %12543 = vsyncpa [#allocation3], 1

</llo_original>
